<compile_context>
chip_gen: v7x
topology: tpu7x:2x2x1
jax: 0.10.0
libtpu: 0.0.40
codegen_flags: <defaults>
</compile_context>

<pallas_src>
import functools

import jax
import jax.numpy as jnp
import numpy as np
from jax.experimental import pallas as pl
from jax.experimental.pallas import tpu as pltpu

C_HID = 16       # hidden channel width of every layer
W_STRIDE = 256   # lane stride between per-layer weight slabs (128-aligned slices)

# (ksize, cin, cout, stride, silu, zero_init) -- mirrors the nn.Sequential
LAYER_CFG = [
    (3, 3,  16, 1, True,  False),
    (1, 16, 16, 1, True,  False),
    (3, 16, 16, 1, True,  False),
    (3, 16, 16, 2, True,  False),
    (3, 16, 16, 1, True,  False),
    (3, 16, 16, 2, True,  False),
    (3, 16, 16, 1, True,  False),
    (3, 16, 16, 2, True,  False),
    (1, 16, 16, 1, True,  False),
    (3, 16, 16, 1, False, True),   # zero_module(Conv2d(16,16,3,padding=1)), no SiLU
]


def _deint_matrix(Wp, Wn):
    """(Wp, 2*Wn+1) 0/1 matrix: cols [0, Wn] pick even input cols 0,2,...,2Wn;
    cols [Wn+1, 2Wn] pick odd input cols 1,3,...,2Wn-1 (tiny, built once per
    stride-2 layer; replaces the old O(pixels^2) selection matmul)."""
    r = jax.lax.broadcasted_iota(jnp.int32, (Wp, 2 * Wn + 1), 0)
    c = jax.lax.broadcasted_iota(jnp.int32, (Wp, 2 * Wn + 1), 1)
    even = (c <= Wn) & (r == 2 * c)
    odd = (c > Wn) & (r == 2 * (c - (Wn + 1)) + 1)
    return jnp.where(even | odd, 1.0, 0.0).astype(jnp.float32)


def _mask_junk(acc, Wp, Wc):
    """Zero the 2 junk columns of every flattened row so that ONE contiguous
    store restages the activation and re-zeros the padded borders it covers."""
    L = acc.shape[1]
    lane = jax.lax.broadcasted_iota(jnp.int32, (1, L), 1)
    return jnp.where(lane % Wp < Wc, acc, 0.0)


def _fused_kernel(x_ref, w_ref, b_ref, o_ref, buf, *, H, W, cfgs):
    """One image per grid step; the whole 10-layer chain runs VMEM-resident.

    Activation layout: buf[ci, r*Wp + c] = padded activation at (row r, col c),
    channel ci, with Wp = Wc + 2 the current stage's padded width.  3x3 taps
    are contiguous lane slices; junk columns (the inter-row border pairs) are
    computed but kept at zero so they double as the zero padding of the next
    stage.
    """
    f32 = jnp.float32
    C = C_HID
    cin0 = x_ref.shape[1]
    n_layers = len(cfgs)

    # ---- stage the host-padded input image --------------------------------
    # Zero once (covers borders + channels cin0..15 for the whole chain), then
    # drop the padded image into channels [0, cin0) with one store.
    buf[...] = jnp.zeros_like(buf)
    buf[0:cin0, :] = x_ref[0].astype(f32)

    Hc, Wc = H, W
    for li, (ks, _cin, _cout, stride, silu, _zero) in enumerate(cfgs):
        Wp = Wc + 2
        L = (Hc - 1) * Wp + Wc                    # flat extent incl. junk cols
        b_col = b_ref[:, li:li + 1]               # (16, 1) per-channel bias
        w_off = li * W_STRIDE
        last = li == n_layers - 1

        if ks == 3 and stride == 2:
            # ---- 3x3 stride-2: compute only the kept output positions ------
            Hn, Wn = Hc // 2, Wc // 2
            w144 = w_ref[:, w_off:w_off + 9 * C]                  # (16, 144)
            D = _deint_matrix(Wp, Wn)
            # Column de-interleave every needed padded row (rows 0 .. 2*Hn).
            dint = [jnp.dot(buf[:, r * Wp:r * Wp + Wp], D,
                            preferred_element_type=f32)
                    for r in range(2 * Hn + 1)]                   # (16, 2Wn+1)
            # Region shrinks: zero the new padded region before writing rows
            # (border-zero caution from the review).
            Wpn = Wn + 2
            buf[:, 0:(Hn + 2) * Wpn] = jnp.zeros((C, (Hn + 2) * Wpn), f32)
            for ho in range(Hn):
                taps = []
                for kh in range(3):
                    d = dint[2 * ho + kh]
                    taps.append(d[:, 0:Wn])                 # kw = 0 (even cols)
                    taps.append(d[:, Wn + 1:2 * Wn + 1])    # kw = 1 (odd cols)
                    taps.append(d[:, 1:Wn + 1])             # kw = 2 (even cols +1)
                col = jnp.concatenate(taps, axis=0)                    # (144, Wn)
                row = jnp.dot(w144, col, preferred_element_type=f32) + b_col
                if silu:
                    row = row * jax.nn.sigmoid(row)
                buf[:, (ho + 1) * Wpn + 1:(ho + 1) * Wpn + 1 + Wn] = row
            Hc, Wc = Hn, Wn
            continue

        if ks == 1:
            # ---- 1x1 conv: one matmul against the centre "tap" slab --------
            w16 = w_ref[:, w_off:w_off + C]                        # (16, 16)
            acc = jnp.dot(w16, buf[:, Wp + 1:Wp + 1 + L],
                          preferred_element_type=f32)              # (16, L)
        else:
            # ---- 3x3 stride-1: 9 contiguous tap slabs -> im2col -> 1 matmul -
            w144 = w_ref[:, w_off:w_off + 9 * C]                   # (16, 144)
            taps = [buf[:, kh * Wp + kw:kh * Wp + kw + L]
                    for kh in range(3) for kw in range(3)]
            col = jnp.concatenate(taps, axis=0)                    # (144, L)
            acc = jnp.dot(w144, col, preferred_element_type=f32)   # (16, L)

        acc = acc + b_col
        if silu:
            acc = acc * jax.nn.sigmoid(acc)                        # SiLU

        if last:
            # Final layer: write straight to the output block (spatial stays
            # flattened on lanes -> reshapes to NCHW for free on the host).
            for h in range(Hc):
                o_ref[0, :, h * Wc:(h + 1) * Wc] = (
                    acc[:, h * Wp:h * Wp + Wc].astype(o_ref.dtype))
        else:
            # Restage for the next layer: one contiguous store; masked junk
            # columns land exactly on the padded borders (and re-zero them).
            acc = _mask_junk(acc, Wp, Wc)
            buf[:, Wp + 1:Wp + 1 + L] = acc


def _pack_params(params):
    """Pack 10 HWIO weights / biases into 2 arrays.

    w_all (16, 10*256): layer l's slab at lanes [l*256, l*256 + ks*ks*16) with
    rows = Cout and columns ordered (kh, kw, cin) to match the im2col concat.
    b_all (16, 10): per-layer bias columns.
    """
    slabs, bcols = [], []
    for (w, b), (ks, cin, cout, *_rest) in zip(params, LAYER_CFG):
        w = jnp.asarray(w, jnp.float32)
        if cin < C_HID:
            w = jnp.pad(w, ((0, 0), (0, 0), (0, C_HID - cin), (0, 0)))
        w2 = jnp.transpose(w, (3, 0, 1, 2)).reshape(cout, ks * ks * C_HID)
        slab = jnp.zeros((C_HID, W_STRIDE), jnp.float32)
        slab = slab.at[:, :ks * ks * C_HID].set(w2)
        slabs.append(slab)
        bcols.append(jnp.asarray(b, jnp.float32).reshape(C_HID, 1))
    return jnp.concatenate(slabs, axis=1), jnp.concatenate(bcols, axis=1)


def _cost_estimate(N, H, W, cfgs):
    flops = 0
    trans = 0
    h, w = H, W
    for (ks, _cin, cout, stride, silu, _zero) in cfgs:
        ho, wo = (h // 2, w // 2) if stride == 2 else (h, w)
        flops += 2 * ks * ks * C_HID * cout * ho * wo       # kept outputs only
        if stride == 2:                                     # per-row de-interleave
            flops += (2 * ho + 1) * 2 * C_HID * (w + 2) * (2 * wo + 1)
        if silu:
            trans += ho * wo * cout
        h, w = ho, wo
    in_bytes = N * 3 * (H + 2) * (W + 2) * 4
    out_bytes = N * C_HID * (H // 8) * (W // 8) * 4
    param_bytes = C_HID * (len(cfgs) * W_STRIDE + len(cfgs)) * 4
    return pl.CostEstimate(flops=int(N * flops), transcendentals=int(N * trans),
                           bytes_accessed=int(in_bytes + out_bytes + param_bytes))


def cond_downsample_block(x_nchw, params):
    """Forward pass of CondDownsamplBlock.  Input/output are NCHW like PyTorch."""
    N, cin, H, W = x_nchw.shape
    assert H % 8 == 0 and W % 8 == 0, "three stride-2 layers need H, W % 8 == 0"
    Ho, Wo = H // 8, W // 8
    P0 = (H + 2) * (W + 2)

    w_all, b_all = _pack_params(params)

    # Host-side zero pad + row flattening (free layout ops); the kernel then
    # stages each image with a single contiguous store.
    xp = jnp.pad(x_nchw.astype(jnp.float32),
                 ((0, 0), (0, 0), (1, 1), (1, 1))).reshape(N, cin, P0)

    kernel = functools.partial(_fused_kernel, H=H, W=W, cfgs=LAYER_CFG)

    out = pl.pallas_call(
        kernel,
        out_shape=jax.ShapeDtypeStruct((N, C_HID, Ho * Wo), x_nchw.dtype),
        grid=(N,),
        in_specs=[
            pl.BlockSpec((1, cin, P0), lambda n: (n, 0, 0)),
            pl.BlockSpec(w_all.shape, lambda n: (0, 0)),
            pl.BlockSpec(b_all.shape, lambda n: (0, 0)),
        ],
        out_specs=pl.BlockSpec((1, C_HID, Ho * Wo), lambda n: (n, 0, 0)),
        scratch_shapes=[pltpu.VMEM((C_HID, P0), jnp.float32)],
        compiler_params=pltpu.CompilerParams(
            dimension_semantics=("parallel",),
            vmem_limit_bytes=32 * 1024 * 1024),
        cost_estimate=_cost_estimate(N, H, W, LAYER_CFG),
    )(xp, w_all, b_all)

    return out.reshape(N, C_HID, Ho, Wo)                    # already NCHW


def init_params(key, zero_last=True):
    """PyTorch-Conv2d-style init (uniform +-1/sqrt(fan_in)); last layer zeroed
    to match zero_module() unless zero_last=False (used for validation)."""
    params = []
    for i, (ks, cin, cout, _stride, _silu, zero) in enumerate(LAYER_CFG):
        if zero and zero_last:
            w = jnp.zeros((ks, ks, cin, cout), jnp.float32)
            b = jnp.zeros((cout,), jnp.float32)
        else:
            wk, bk = jax.random.split(jax.random.fold_in(key, i))
            bound = 1.0 / float(np.sqrt(ks * ks * cin))
            w = jax.random.uniform(wk, (ks, ks, cin, cout), jnp.float32, -bound, bound)
            b = jax.random.uniform(bk, (cout,), jnp.float32, -bound, bound)
        params.append((w, b))
    return params


def _ref_forward_nhwc(x_nhwc, params, cfgs):
    """Pure-JAX reference (lax conv, HIGHEST precision) for validation."""
    y = x_nhwc
    for (w, b), (ks, _cin, _cout, stride, silu, _zero) in zip(params, cfgs):
        pad = 1 if ks == 3 else 0
        y = jax.lax.conv_general_dilated(
            y, w, window_strides=(stride, stride),
            padding=((pad, pad), (pad, pad)),
            dimension_numbers=("NHWC", "HWIO", "NHWC"),
            precision=jax.lax.Precision.HIGHEST)
        y = y + b.reshape(1, 1, 1, -1)
        if silu:
            y = y * jax.nn.sigmoid(y)
    return y


if __name__ == "__main__":
    key = jax.random.PRNGKey(0)
    params = init_params(key)

    # NCHW input matching nn.Conv2d(3, 16, ...): (batch=2, channels=3, 16x16)
    x_nchw = jax.random.normal(jax.random.fold_in(key, 1234), (2, 3, 16, 16),
                               jnp.float32)
    x_nhwc = jnp.transpose(x_nchw, (0, 2, 3, 1))

    fwd = jax.jit(cond_downsample_block)

    # Real module params (last conv zero-initialized).
    out_nchw = jax.block_until_ready(fwd(x_nchw, params))
    assert out_nchw.shape == (2, 16, 2, 2), out_nchw.shape
    ref = jnp.transpose(_ref_forward_nhwc(x_nhwc, params, LAYER_CFG), (0, 3, 1, 2))
    np.testing.assert_allclose(np.asarray(out_nchw), np.asarray(ref),
                               atol=1e-3, rtol=1e-3)

    # Exercise the full fused chain (including the final conv) with non-zero weights.
    params_nz = init_params(jax.random.fold_in(key, 7), zero_last=False)
    out_nz = jax.block_until_ready(fwd(x_nchw, params_nz))
    ref_nz = jnp.transpose(_ref_forward_nhwc(x_nhwc, params_nz, LAYER_CFG), (0, 3, 1, 2))
    np.testing.assert_allclose(np.asarray(out_nz), np.asarray(ref_nz),
                               atol=1e-3, rtol=1e-3)

    print("KERNEL_OK")
</pallas_src>

<mosaic_0001>
module attributes {stable_mosaic.version = 11 : i64} {
  func.func @_fused_kernel(%arg0: i32, %arg1: memref<1x3x324xf32, #tpu.memory_space<vmem>>, %arg2: memref<16x2560xf32, #tpu.memory_space<vmem>>, %arg3: memref<16x10xf32, #tpu.memory_space<vmem>>, %arg4: memref<1x16x4xf32, #tpu.memory_space<vmem>>, %arg5: memref<16x324xf32, #tpu.memory_space<vmem>>) attributes {dimension_semantics = [#tpu.dimension_semantics<parallel>], iteration_bounds = array<i64: 2>, scalar_prefetch = 0 : i64, scratch_operands = 1 : i64, tpu.core_type = #tpu.core_type<tc>, window_params = [{transform_indices = @transform_0, window_bounds = array<i64: 1, 3, 324>}, {pipeline_mode = #tpu.pipeline_mode<synchronous>, transform_indices = @transform_1, window_bounds = array<i64: 16, 2560>}, {pipeline_mode = #tpu.pipeline_mode<synchronous>, transform_indices = @transform_2, window_bounds = array<i64: 16, 10>}, {transform_indices = @transform_3, window_bounds = array<i64: 1, 16, 4>}]} {
    %cst = arith.constant 0.000000e+00 : f32
    %0 = vector.broadcast %cst : f32 to vector<16x324xf32>
    %c0 = arith.constant 0 : index
    %c0_0 = arith.constant 0 : index
    %1 = vector.load %arg5[%c0, %c0_0] : memref<16x324xf32, #tpu.memory_space<vmem>>, vector<16x324xf32>
    tpu.vector_store %arg5[%c0, %c0_0], %0 {strides = array<i32>} : memref<16x324xf32, #tpu.memory_space<vmem>>, vector<16x324xf32>,
    %c0_1 = arith.constant 0 : index
    %c0_2 = arith.constant 0 : index
    %c0_3 = arith.constant 0 : index
    %2 = vector.load %arg1[%c0_1, %c0_2, %c0_3] : memref<1x3x324xf32, #tpu.memory_space<vmem>>, vector<1x3x324xf32>
    %3 = vector.shape_cast %2 : vector<1x3x324xf32> to vector<3x324xf32>
    %c0_4 = arith.constant 0 : index
    %c0_5 = arith.constant 0 : index
    %4 = vector.load %arg5[%c0_4, %c0_5] : memref<16x324xf32, #tpu.memory_space<vmem>>, vector<3x324xf32>
    tpu.vector_store %arg5[%c0_4, %c0_5], %3 {strides = array<i32>} : memref<16x324xf32, #tpu.memory_space<vmem>>, vector<3x324xf32>,
    %c0_6 = arith.constant 0 : index
    %c0_7 = arith.constant 0 : index
    %5 = vector.load %arg3[%c0_6, %c0_7] : memref<16x10xf32, #tpu.memory_space<vmem>>, vector<16x1xf32>
    %c0_8 = arith.constant 0 : index
    %c0_9 = arith.constant 0 : index
    %6 = vector.load %arg2[%c0_8, %c0_9] : memref<16x2560xf32, #tpu.memory_space<vmem>>, vector<16x144xf32>
    %c0_10 = arith.constant 0 : index
    %c0_11 = arith.constant 0 : index
    %7 = vector.load %arg5[%c0_10, %c0_11] : memref<16x324xf32, #tpu.memory_space<vmem>>, vector<16x286xf32>
    %c0_12 = arith.constant 0 : index
    %c1 = arith.constant 1 : index
    %8 = vector.load %arg5[%c0_12, %c1] : memref<16x324xf32, #tpu.memory_space<vmem>>, vector<16x286xf32>
    %c0_13 = arith.constant 0 : index
    %c2 = arith.constant 2 : index
    %9 = vector.load %arg5[%c0_13, %c2] : memref<16x324xf32, #tpu.memory_space<vmem>>, vector<16x286xf32>
    %c0_14 = arith.constant 0 : index
    %c18 = arith.constant 18 : index
    %10 = vector.load %arg5[%c0_14, %c18] : memref<16x324xf32, #tpu.memory_space<vmem>>, vector<16x286xf32>
    %c0_15 = arith.constant 0 : index
    %c19 = arith.constant 19 : index
    %11 = vector.load %arg5[%c0_15, %c19] : memref<16x324xf32, #tpu.memory_space<vmem>>, vector<16x286xf32>
    %c0_16 = arith.constant 0 : index
    %c20 = arith.constant 20 : index
    %12 = vector.load %arg5[%c0_16, %c20] : memref<16x324xf32, #tpu.memory_space<vmem>>, vector<16x286xf32>
    %c0_17 = arith.constant 0 : index
    %c36 = arith.constant 36 : index
    %13 = vector.load %arg5[%c0_17, %c36] : memref<16x324xf32, #tpu.memory_space<vmem>>, vector<16x286xf32>
    %c0_18 = arith.constant 0 : index
    %c37 = arith.constant 37 : index
    %14 = vector.load %arg5[%c0_18, %c37] : memref<16x324xf32, #tpu.memory_space<vmem>>, vector<16x286xf32>
    %c0_19 = arith.constant 0 : index
    %c38 = arith.constant 38 : index
    %15 = vector.load %arg5[%c0_19, %c38] : memref<16x324xf32, #tpu.memory_space<vmem>>, vector<16x286xf32>
    %16 = tpu.concatenate %7, %8, %9, %10, %11, %12, %13, %14, %15 in 0 : vector<16x286xf32>, vector<16x286xf32>, vector<16x286xf32>, vector<16x286xf32>, vector<16x286xf32>, vector<16x286xf32>, vector<16x286xf32>, vector<16x286xf32>, vector<16x286xf32> -> vector<144x286xf32>
    %cst_20 = arith.constant dense<0.000000e+00> : vector<16x286xf32>
    %17 = tpu.matmul %6, %16, %cst_20 {dimension_numbers = #tpu.dot_dimension_numbers<[1], [0], [0], [1], [0, 0, 1, 1], [], []>} : vector<16x144xf32>, vector<144x286xf32>, vector<16x286xf32> -> vector<16x286xf32>
    %18 = vector.broadcast %5 : vector<16x1xf32> to vector<16x286xf32>
    %19 = arith.addf %17, %18 : vector<16x286xf32>
    %20 = arith.negf %19 : vector<16x286xf32>
    %21 = math.exp %20 : vector<16x286xf32>
    %cst_21 = arith.constant 1.000000e+00 : f32
    %22 = vector.broadcast %cst_21 : f32 to vector<16x286xf32>
    %23 = arith.addf %22, %21 : vector<16x286xf32>
    %24 = arith.divf %22, %23 : vector<16x286xf32>
    %25 = arith.mulf %19, %24 : vector<16x286xf32>
    %26 = tpu.iota {dimensions = array<i32: 1>} : vector<1x286xi32>
    %c18_i32 = arith.constant 18 : i32
    %c0_i32 = arith.constant 0 : i32
    %27 = arith.cmpi eq, %c18_i32, %c0_i32 : i32
    %c1_i32 = arith.constant 1 : i32
    %28 = arith.select %27, %c1_i32, %c18_i32 : i32
    %29 = vector.broadcast %28 : i32 to vector<1x286xi32>
    %30 = arith.remsi %26, %29 : vector<1x286xi32>
    %c0_i32_22 = arith.constant 0 : i32
    %31 = vector.broadcast %c0_i32_22 : i32 to vector<1x286xi32>
    %32 = arith.cmpi ne, %30, %31 : vector<1x286xi32>
    %c0_i32_23 = arith.constant 0 : i32
    %33 = vector.broadcast %c0_i32_23 : i32 to vector<1x286xi32>
    %34 = arith.cmpi slt, %30, %33 : vector<1x286xi32>
    %c0_i32_24 = arith.constant 0 : i32
    %35 = arith.cmpi slt, %28, %c0_i32_24 : i32
    %36 = vector.broadcast %35 : i1 to vector<1x286xi1>
    %37 = vector.broadcast %36 : vector<1x286xi1> to vector<1x286xi1>
    %38 = arith.xori %34, %37 : vector<1x286xi1>
    %39 = arith.andi %38, %32 : vector<1x286xi1>
    %40 = vector.broadcast %28 : i32 to vector<1x286xi32>
    %41 = arith.addi %30, %40 : vector<1x286xi32>
    %42 = arith.select %39, %41, %30 : vector<1x286xi1>, vector<1x286xi32>
    %c16_i32 = arith.constant 16 : i32
    %43 = vector.broadcast %c16_i32 : i32 to vector<1x286xi32>
    %44 = arith.cmpi slt, %42, %43 : vector<1x286xi32>
    %cst_25 = arith.constant 0.000000e+00 : f32
    %45 = vector.shape_cast %44 : vector<1x286xi1> to vector<1x286xi1>
    %46 = vector.broadcast %45 : vector<1x286xi1> to vector<16x286xi1>
    %47 = vector.broadcast %cst_25 : f32 to vector<16x286xf32>
    %48 = arith.select %46, %25, %47 : vector<16x286xi1>, vector<16x286xf32>
    %c0_26 = arith.constant 0 : index
    %c19_27 = arith.constant 19 : index
    %49 = vector.load %arg5[%c0_26, %c19_27] : memref<16x324xf32, #tpu.memory_space<vmem>>, vector<16x286xf32>
    tpu.vector_store %arg5[%c0_26, %c19_27], %48 {strides = array<i32>} : memref<16x324xf32, #tpu.memory_space<vmem>>, vector<16x286xf32>,
    %c0_28 = arith.constant 0 : index
    %c1_29 = arith.constant 1 : index
    %50 = vector.load %arg3[%c0_28, %c1_29] : memref<16x10xf32, #tpu.memory_space<vmem>>, vector<16x1xf32>
    %c0_30 = arith.constant 0 : index
    %c256 = arith.constant 256 : index
    %51 = vector.load %arg2[%c0_30, %c256] : memref<16x2560xf32, #tpu.memory_space<vmem>>, vector<16x16xf32>
    %c0_31 = arith.constant 0 : index
    %c19_32 = arith.constant 19 : index
    %52 = vector.load %arg5[%c0_31, %c19_32] : memref<16x324xf32, #tpu.memory_space<vmem>>, vector<16x286xf32>
    %cst_33 = arith.constant dense<0.000000e+00> : vector<16x286xf32>
    %53 = tpu.matmul %51, %52, %cst_33 {dimension_numbers = #tpu.dot_dimension_numbers<[1], [0], [0], [1], [0, 0, 1, 1], [], []>} : vector<16x16xf32>, vector<16x286xf32>, vector<16x286xf32> -> vector<16x286xf32>
    %54 = vector.broadcast %50 : vector<16x1xf32> to vector<16x286xf32>
    %55 = arith.addf %53, %54 : vector<16x286xf32>
    %56 = arith.negf %55 : vector<16x286xf32>
    %57 = math.exp %56 : vector<16x286xf32>
    %cst_34 = arith.constant 1.000000e+00 : f32
    %58 = vector.broadcast %cst_34 : f32 to vector<16x286xf32>
    %59 = arith.addf %58, %57 : vector<16x286xf32>
    %60 = arith.divf %58, %59 : vector<16x286xf32>
    %61 = arith.mulf %55, %60 : vector<16x286xf32>
    %62 = tpu.iota {dimensions = array<i32: 1>} : vector<1x286xi32>
    %c18_i32_35 = arith.constant 18 : i32
    %c0_i32_36 = arith.constant 0 : i32
    %63 = arith.cmpi eq, %c18_i32_35, %c0_i32_36 : i32
    %c1_i32_37 = arith.constant 1 : i32
    %64 = arith.select %63, %c1_i32_37, %c18_i32_35 : i32
    %65 = vector.broadcast %64 : i32 to vector<1x286xi32>
    %66 = arith.remsi %62, %65 : vector<1x286xi32>
    %c0_i32_38 = arith.constant 0 : i32
    %67 = vector.broadcast %c0_i32_38 : i32 to vector<1x286xi32>
    %68 = arith.cmpi ne, %66, %67 : vector<1x286xi32>
    %c0_i32_39 = arith.constant 0 : i32
    %69 = vector.broadcast %c0_i32_39 : i32 to vector<1x286xi32>
    %70 = arith.cmpi slt, %66, %69 : vector<1x286xi32>
    %c0_i32_40 = arith.constant 0 : i32
    %71 = arith.cmpi slt, %64, %c0_i32_40 : i32
    %72 = vector.broadcast %71 : i1 to vector<1x286xi1>
    %73 = vector.broadcast %72 : vector<1x286xi1> to vector<1x286xi1>
    %74 = arith.xori %70, %73 : vector<1x286xi1>
    %75 = arith.andi %74, %68 : vector<1x286xi1>
    %76 = vector.broadcast %64 : i32 to vector<1x286xi32>
    %77 = arith.addi %66, %76 : vector<1x286xi32>
    %78 = arith.select %75, %77, %66 : vector<1x286xi1>, vector<1x286xi32>
    %c16_i32_41 = arith.constant 16 : i32
    %79 = vector.broadcast %c16_i32_41 : i32 to vector<1x286xi32>
    %80 = arith.cmpi slt, %78, %79 : vector<1x286xi32>
    %cst_42 = arith.constant 0.000000e+00 : f32
    %81 = vector.shape_cast %80 : vector<1x286xi1> to vector<1x286xi1>
    %82 = vector.broadcast %81 : vector<1x286xi1> to vector<16x286xi1>
    %83 = vector.broadcast %cst_42 : f32 to vector<16x286xf32>
    %84 = arith.select %82, %61, %83 : vector<16x286xi1>, vector<16x286xf32>
    %c0_43 = arith.constant 0 : index
    %c19_44 = arith.constant 19 : index
    %85 = vector.load %arg5[%c0_43, %c19_44] : memref<16x324xf32, #tpu.memory_space<vmem>>, vector<16x286xf32>
    tpu.vector_store %arg5[%c0_43, %c19_44], %84 {strides = array<i32>} : memref<16x324xf32, #tpu.memory_space<vmem>>, vector<16x286xf32>,
    %c0_45 = arith.constant 0 : index
    %c2_46 = arith.constant 2 : index
    %86 = vector.load %arg3[%c0_45, %c2_46] : memref<16x10xf32, #tpu.memory_space<vmem>>, vector<16x1xf32>
    %c0_47 = arith.constant 0 : index
    %c512 = arith.constant 512 : index
    %87 = vector.load %arg2[%c0_47, %c512] : memref<16x2560xf32, #tpu.memory_space<vmem>>, vector<16x144xf32>
    %c0_48 = arith.constant 0 : index
    %c0_49 = arith.constant 0 : index
    %88 = vector.load %arg5[%c0_48, %c0_49] : memref<16x324xf32, #tpu.memory_space<vmem>>, vector<16x286xf32>
    %c0_50 = arith.constant 0 : index
    %c1_51 = arith.constant 1 : index
    %89 = vector.load %arg5[%c0_50, %c1_51] : memref<16x324xf32, #tpu.memory_space<vmem>>, vector<16x286xf32>
    %c0_52 = arith.constant 0 : index
    %c2_53 = arith.constant 2 : index
    %90 = vector.load %arg5[%c0_52, %c2_53] : memref<16x324xf32, #tpu.memory_space<vmem>>, vector<16x286xf32>
    %c0_54 = arith.constant 0 : index
    %c18_55 = arith.constant 18 : index
    %91 = vector.load %arg5[%c0_54, %c18_55] : memref<16x324xf32, #tpu.memory_space<vmem>>, vector<16x286xf32>
    %c0_56 = arith.constant 0 : index
    %c19_57 = arith.constant 19 : index
    %92 = vector.load %arg5[%c0_56, %c19_57] : memref<16x324xf32, #tpu.memory_space<vmem>>, vector<16x286xf32>
    %c0_58 = arith.constant 0 : index
    %c20_59 = arith.constant 20 : index
    %93 = vector.load %arg5[%c0_58, %c20_59] : memref<16x324xf32, #tpu.memory_space<vmem>>, vector<16x286xf32>
    %c0_60 = arith.constant 0 : index
    %c36_61 = arith.constant 36 : index
    %94 = vector.load %arg5[%c0_60, %c36_61] : memref<16x324xf32, #tpu.memory_space<vmem>>, vector<16x286xf32>
    %c0_62 = arith.constant 0 : index
    %c37_63 = arith.constant 37 : index
    %95 = vector.load %arg5[%c0_62, %c37_63] : memref<16x324xf32, #tpu.memory_space<vmem>>, vector<16x286xf32>
    %c0_64 = arith.constant 0 : index
    %c38_65 = arith.constant 38 : index
    %96 = vector.load %arg5[%c0_64, %c38_65] : memref<16x324xf32, #tpu.memory_space<vmem>>, vector<16x286xf32>
    %97 = tpu.concatenate %88, %89, %90, %91, %92, %93, %94, %95, %96 in 0 : vector<16x286xf32>, vector<16x286xf32>, vector<16x286xf32>, vector<16x286xf32>, vector<16x286xf32>, vector<16x286xf32>, vector<16x286xf32>, vector<16x286xf32>, vector<16x286xf32> -> vector<144x286xf32>
    %cst_66 = arith.constant dense<0.000000e+00> : vector<16x286xf32>
    %98 = tpu.matmul %87, %97, %cst_66 {dimension_numbers = #tpu.dot_dimension_numbers<[1], [0], [0], [1], [0, 0, 1, 1], [], []>} : vector<16x144xf32>, vector<144x286xf32>, vector<16x286xf32> -> vector<16x286xf32>
    %99 = vector.broadcast %86 : vector<16x1xf32> to vector<16x286xf32>
    %100 = arith.addf %98, %99 : vector<16x286xf32>
    %101 = arith.negf %100 : vector<16x286xf32>
    %102 = math.exp %101 : vector<16x286xf32>
    %cst_67 = arith.constant 1.000000e+00 : f32
    %103 = vector.broadcast %cst_67 : f32 to vector<16x286xf32>
    %104 = arith.addf %103, %102 : vector<16x286xf32>
    %105 = arith.divf %103, %104 : vector<16x286xf32>
    %106 = arith.mulf %100, %105 : vector<16x286xf32>
    %107 = tpu.iota {dimensions = array<i32: 1>} : vector<1x286xi32>
    %c18_i32_68 = arith.constant 18 : i32
    %c0_i32_69 = arith.constant 0 : i32
    %108 = arith.cmpi eq, %c18_i32_68, %c0_i32_69 : i32
    %c1_i32_70 = arith.constant 1 : i32
    %109 = arith.select %108, %c1_i32_70, %c18_i32_68 : i32
    %110 = vector.broadcast %109 : i32 to vector<1x286xi32>
    %111 = arith.remsi %107, %110 : vector<1x286xi32>
    %c0_i32_71 = arith.constant 0 : i32
    %112 = vector.broadcast %c0_i32_71 : i32 to vector<1x286xi32>
    %113 = arith.cmpi ne, %111, %112 : vector<1x286xi32>
    %c0_i32_72 = arith.constant 0 : i32
    %114 = vector.broadcast %c0_i32_72 : i32 to vector<1x286xi32>
    %115 = arith.cmpi slt, %111, %114 : vector<1x286xi32>
    %c0_i32_73 = arith.constant 0 : i32
    %116 = arith.cmpi slt, %109, %c0_i32_73 : i32
    %117 = vector.broadcast %116 : i1 to vector<1x286xi1>
    %118 = vector.broadcast %117 : vector<1x286xi1> to vector<1x286xi1>
    %119 = arith.xori %115, %118 : vector<1x286xi1>
    %120 = arith.andi %119, %113 : vector<1x286xi1>
    %121 = vector.broadcast %109 : i32 to vector<1x286xi32>
    %122 = arith.addi %111, %121 : vector<1x286xi32>
    %123 = arith.select %120, %122, %111 : vector<1x286xi1>, vector<1x286xi32>
    %c16_i32_74 = arith.constant 16 : i32
    %124 = vector.broadcast %c16_i32_74 : i32 to vector<1x286xi32>
    %125 = arith.cmpi slt, %123, %124 : vector<1x286xi32>
    %cst_75 = arith.constant 0.000000e+00 : f32
    %126 = vector.shape_cast %125 : vector<1x286xi1> to vector<1x286xi1>
    %127 = vector.broadcast %126 : vector<1x286xi1> to vector<16x286xi1>
    %128 = vector.broadcast %cst_75 : f32 to vector<16x286xf32>
    %129 = arith.select %127, %106, %128 : vector<16x286xi1>, vector<16x286xf32>
    %c0_76 = arith.constant 0 : index
    %c19_77 = arith.constant 19 : index
    %130 = vector.load %arg5[%c0_76, %c19_77] : memref<16x324xf32, #tpu.memory_space<vmem>>, vector<16x286xf32>
    tpu.vector_store %arg5[%c0_76, %c19_77], %129 {strides = array<i32>} : memref<16x324xf32, #tpu.memory_space<vmem>>, vector<16x286xf32>,
    %c0_78 = arith.constant 0 : index
    %c3 = arith.constant 3 : index
    %131 = vector.load %arg3[%c0_78, %c3] : memref<16x10xf32, #tpu.memory_space<vmem>>, vector<16x1xf32>
    %c0_79 = arith.constant 0 : index
    %c768 = arith.constant 768 : index
    %132 = vector.load %arg2[%c0_79, %c768] : memref<16x2560xf32, #tpu.memory_space<vmem>>, vector<16x144xf32>
    %133 = tpu.iota {dimensions = array<i32: 0>} : vector<18x17xi32>
    %134 = tpu.iota {dimensions = array<i32: 1>} : vector<18x17xi32>
    %c8_i32 = arith.constant 8 : i32
    %135 = vector.broadcast %c8_i32 : i32 to vector<18x17xi32>
    %136 = arith.cmpi sle, %134, %135 : vector<18x17xi32>
    %c2_i32 = arith.constant 2 : i32
    %137 = vector.broadcast %c2_i32 : i32 to vector<18x17xi32>
    %138 = arith.muli %137, %134 : vector<18x17xi32>
    %139 = arith.cmpi eq, %133, %138 : vector<18x17xi32>
    %140 = arith.andi %136, %139 : vector<18x17xi1>
    %c8_i32_80 = arith.constant 8 : i32
    %141 = vector.broadcast %c8_i32_80 : i32 to vector<18x17xi32>
    %142 = arith.cmpi sgt, %134, %141 : vector<18x17xi32>
    %c9_i32 = arith.constant 9 : i32
    %143 = vector.broadcast %c9_i32 : i32 to vector<18x17xi32>
    %144 = arith.subi %134, %143 : vector<18x17xi32>
    %c2_i32_81 = arith.constant 2 : i32
    %145 = vector.broadcast %c2_i32_81 : i32 to vector<18x17xi32>
    %146 = arith.muli %145, %144 : vector<18x17xi32>
    %c1_i32_82 = arith.constant 1 : i32
    %147 = vector.broadcast %c1_i32_82 : i32 to vector<18x17xi32>
    %148 = arith.addi %146, %147 : vector<18x17xi32>
    %149 = arith.cmpi eq, %133, %148 : vector<18x17xi32>
    %150 = arith.andi %142, %149 : vector<18x17xi1>
    %151 = arith.ori %140, %150 : vector<18x17xi1>
    %cst_83 = arith.constant 1.000000e+00 : f32
    %cst_84 = arith.constant 0.000000e+00 : f32
    %152 = vector.broadcast %cst_83 : f32 to vector<18x17xf32>
    %153 = vector.broadcast %cst_84 : f32 to vector<18x17xf32>
    %154 = arith.select %151, %152, %153 : vector<18x17xi1>, vector<18x17xf32>
    %c0_85 = arith.constant 0 : index
    %c0_86 = arith.constant 0 : index
    %155 = vector.load %arg5[%c0_85, %c0_86] : memref<16x324xf32, #tpu.memory_space<vmem>>, vector<16x18xf32>
    %cst_87 = arith.constant dense<0.000000e+00> : vector<16x17xf32>
    %156 = tpu.matmul %155, %154, %cst_87 {dimension_numbers = #tpu.dot_dimension_numbers<[1], [0], [0], [1], [0, 0, 1, 1], [], []>} : vector<16x18xf32>, vector<18x17xf32>, vector<16x17xf32> -> vector<16x17xf32>
    %c0_88 = arith.constant 0 : index
    %c18_89 = arith.constant 18 : index
    %157 = vector.load %arg5[%c0_88, %c18_89] : memref<16x324xf32, #tpu.memory_space<vmem>>, vector<16x18xf32>
    %cst_90 = arith.constant dense<0.000000e+00> : vector<16x17xf32>
    %158 = tpu.matmul %157, %154, %cst_90 {dimension_numbers = #tpu.dot_dimension_numbers<[1], [0], [0], [1], [0, 0, 1, 1], [], []>} : vector<16x18xf32>, vector<18x17xf32>, vector<16x17xf32> -> vector<16x17xf32>
    %c0_91 = arith.constant 0 : index
    %c36_92 = arith.constant 36 : index
    %159 = vector.load %arg5[%c0_91, %c36_92] : memref<16x324xf32, #tpu.memory_space<vmem>>, vector<16x18xf32>
    %cst_93 = arith.constant dense<0.000000e+00> : vector<16x17xf32>
    %160 = tpu.matmul %159, %154, %cst_93 {dimension_numbers = #tpu.dot_dimension_numbers<[1], [0], [0], [1], [0, 0, 1, 1], [], []>} : vector<16x18xf32>, vector<18x17xf32>, vector<16x17xf32> -> vector<16x17xf32>
    %c0_94 = arith.constant 0 : index
    %c54 = arith.constant 54 : index
    %161 = vector.load %arg5[%c0_94, %c54] : memref<16x324xf32, #tpu.memory_space<vmem>>, vector<16x18xf32>
    %cst_95 = arith.constant dense<0.000000e+00> : vector<16x17xf32>
    %162 = tpu.matmul %161, %154, %cst_95 {dimension_numbers = #tpu.dot_dimension_numbers<[1], [0], [0], [1], [0, 0, 1, 1], [], []>} : vector<16x18xf32>, vector<18x17xf32>, vector<16x17xf32> -> vector<16x17xf32>
    %c0_96 = arith.constant 0 : index
    %c72 = arith.constant 72 : index
    %163 = vector.load %arg5[%c0_96, %c72] : memref<16x324xf32, #tpu.memory_space<vmem>>, vector<16x18xf32>
    %cst_97 = arith.constant dense<0.000000e+00> : vector<16x17xf32>
    %164 = tpu.matmul %163, %154, %cst_97 {dimension_numbers = #tpu.dot_dimension_numbers<[1], [0], [0], [1], [0, 0, 1, 1], [], []>} : vector<16x18xf32>, vector<18x17xf32>, vector<16x17xf32> -> vector<16x17xf32>
    %c0_98 = arith.constant 0 : index
    %c90 = arith.constant 90 : index
    %165 = vector.load %arg5[%c0_98, %c90] : memref<16x324xf32, #tpu.memory_space<vmem>>, vector<16x18xf32>
    %cst_99 = arith.constant dense<0.000000e+00> : vector<16x17xf32>
    %166 = tpu.matmul %165, %154, %cst_99 {dimension_numbers = #tpu.dot_dimension_numbers<[1], [0], [0], [1], [0, 0, 1, 1], [], []>} : vector<16x18xf32>, vector<18x17xf32>, vector<16x17xf32> -> vector<16x17xf32>
    %c0_100 = arith.constant 0 : index
    %c108 = arith.constant 108 : index
    %167 = vector.load %arg5[%c0_100, %c108] : memref<16x324xf32, #tpu.memory_space<vmem>>, vector<16x18xf32>
    %cst_101 = arith.constant dense<0.000000e+00> : vector<16x17xf32>
    %168 = tpu.matmul %167, %154, %cst_101 {dimension_numbers = #tpu.dot_dimension_numbers<[1], [0], [0], [1], [0, 0, 1, 1], [], []>} : vector<16x18xf32>, vector<18x17xf32>, vector<16x17xf32> -> vector<16x17xf32>
    %c0_102 = arith.constant 0 : index
    %c126 = arith.constant 126 : index
    %169 = vector.load %arg5[%c0_102, %c126] : memref<16x324xf32, #tpu.memory_space<vmem>>, vector<16x18xf32>
    %cst_103 = arith.constant dense<0.000000e+00> : vector<16x17xf32>
    %170 = tpu.matmul %169, %154, %cst_103 {dimension_numbers = #tpu.dot_dimension_numbers<[1], [0], [0], [1], [0, 0, 1, 1], [], []>} : vector<16x18xf32>, vector<18x17xf32>, vector<16x17xf32> -> vector<16x17xf32>
    %c0_104 = arith.constant 0 : index
    %c144 = arith.constant 144 : index
    %171 = vector.load %arg5[%c0_104, %c144] : memref<16x324xf32, #tpu.memory_space<vmem>>, vector<16x18xf32>
    %cst_105 = arith.constant dense<0.000000e+00> : vector<16x17xf32>
    %172 = tpu.matmul %171, %154, %cst_105 {dimension_numbers = #tpu.dot_dimension_numbers<[1], [0], [0], [1], [0, 0, 1, 1], [], []>} : vector<16x18xf32>, vector<18x17xf32>, vector<16x17xf32> -> vector<16x17xf32>
    %c0_106 = arith.constant 0 : index
    %c162 = arith.constant 162 : index
    %173 = vector.load %arg5[%c0_106, %c162] : memref<16x324xf32, #tpu.memory_space<vmem>>, vector<16x18xf32>
    %cst_107 = arith.constant dense<0.000000e+00> : vector<16x17xf32>
    %174 = tpu.matmul %173, %154, %cst_107 {dimension_numbers = #tpu.dot_dimension_numbers<[1], [0], [0], [1], [0, 0, 1, 1], [], []>} : vector<16x18xf32>, vector<18x17xf32>, vector<16x17xf32> -> vector<16x17xf32>
    %c0_108 = arith.constant 0 : index
    %c180 = arith.constant 180 : index
    %175 = vector.load %arg5[%c0_108, %c180] : memref<16x324xf32, #tpu.memory_space<vmem>>, vector<16x18xf32>
    %cst_109 = arith.constant dense<0.000000e+00> : vector<16x17xf32>
    %176 = tpu.matmul %175, %154, %cst_109 {dimension_numbers = #tpu.dot_dimension_numbers<[1], [0], [0], [1], [0, 0, 1, 1], [], []>} : vector<16x18xf32>, vector<18x17xf32>, vector<16x17xf32> -> vector<16x17xf32>
    %c0_110 = arith.constant 0 : index
    %c198 = arith.constant 198 : index
    %177 = vector.load %arg5[%c0_110, %c198] : memref<16x324xf32, #tpu.memory_space<vmem>>, vector<16x18xf32>
    %cst_111 = arith.constant dense<0.000000e+00> : vector<16x17xf32>
    %178 = tpu.matmul %177, %154, %cst_111 {dimension_numbers = #tpu.dot_dimension_numbers<[1], [0], [0], [1], [0, 0, 1, 1], [], []>} : vector<16x18xf32>, vector<18x17xf32>, vector<16x17xf32> -> vector<16x17xf32>
    %c0_112 = arith.constant 0 : index
    %c216 = arith.constant 216 : index
    %179 = vector.load %arg5[%c0_112, %c216] : memref<16x324xf32, #tpu.memory_space<vmem>>, vector<16x18xf32>
    %cst_113 = arith.constant dense<0.000000e+00> : vector<16x17xf32>
    %180 = tpu.matmul %179, %154, %cst_113 {dimension_numbers = #tpu.dot_dimension_numbers<[1], [0], [0], [1], [0, 0, 1, 1], [], []>} : vector<16x18xf32>, vector<18x17xf32>, vector<16x17xf32> -> vector<16x17xf32>
    %c0_114 = arith.constant 0 : index
    %c234 = arith.constant 234 : index
    %181 = vector.load %arg5[%c0_114, %c234] : memref<16x324xf32, #tpu.memory_space<vmem>>, vector<16x18xf32>
    %cst_115 = arith.constant dense<0.000000e+00> : vector<16x17xf32>
    %182 = tpu.matmul %181, %154, %cst_115 {dimension_numbers = #tpu.dot_dimension_numbers<[1], [0], [0], [1], [0, 0, 1, 1], [], []>} : vector<16x18xf32>, vector<18x17xf32>, vector<16x17xf32> -> vector<16x17xf32>
    %c0_116 = arith.constant 0 : index
    %c252 = arith.constant 252 : index
    %183 = vector.load %arg5[%c0_116, %c252] : memref<16x324xf32, #tpu.memory_space<vmem>>, vector<16x18xf32>
    %cst_117 = arith.constant dense<0.000000e+00> : vector<16x17xf32>
    %184 = tpu.matmul %183, %154, %cst_117 {dimension_numbers = #tpu.dot_dimension_numbers<[1], [0], [0], [1], [0, 0, 1, 1], [], []>} : vector<16x18xf32>, vector<18x17xf32>, vector<16x17xf32> -> vector<16x17xf32>
    %c0_118 = arith.constant 0 : index
    %c270 = arith.constant 270 : index
    %185 = vector.load %arg5[%c0_118, %c270] : memref<16x324xf32, #tpu.memory_space<vmem>>, vector<16x18xf32>
    %cst_119 = arith.constant dense<0.000000e+00> : vector<16x17xf32>
    %186 = tpu.matmul %185, %154, %cst_119 {dimension_numbers = #tpu.dot_dimension_numbers<[1], [0], [0], [1], [0, 0, 1, 1], [], []>} : vector<16x18xf32>, vector<18x17xf32>, vector<16x17xf32> -> vector<16x17xf32>
    %c0_120 = arith.constant 0 : index
    %c288 = arith.constant 288 : index
    %187 = vector.load %arg5[%c0_120, %c288] : memref<16x324xf32, #tpu.memory_space<vmem>>, vector<16x18xf32>
    %cst_121 = arith.constant dense<0.000000e+00> : vector<16x17xf32>
    %188 = tpu.matmul %187, %154, %cst_121 {dimension_numbers = #tpu.dot_dimension_numbers<[1], [0], [0], [1], [0, 0, 1, 1], [], []>} : vector<16x18xf32>, vector<18x17xf32>, vector<16x17xf32> -> vector<16x17xf32>
    %cst_122 = arith.constant 0.000000e+00 : f32
    %189 = vector.broadcast %cst_122 : f32 to vector<16x100xf32>
    %c0_123 = arith.constant 0 : index
    %c0_124 = arith.constant 0 : index
    %190 = vector.load %arg5[%c0_123, %c0_124] : memref<16x324xf32, #tpu.memory_space<vmem>>, vector<16x100xf32>
    tpu.vector_store %arg5[%c0_123, %c0_124], %189 {strides = array<i32>} : memref<16x324xf32, #tpu.memory_space<vmem>>, vector<16x100xf32>,
    %191 = vector.extract_strided_slice %156 {offsets = [0, 0], sizes = [16, 8], strides = [1, 1]} : vector<16x17xf32> to vector<16x8xf32>
    %192 = vector.extract_strided_slice %156 {offsets = [0, 9], sizes = [16, 8], strides = [1, 1]} : vector<16x17xf32> to vector<16x8xf32>
    %193 = vector.extract_strided_slice %156 {offsets = [0, 1], sizes = [16, 8], strides = [1, 1]} : vector<16x17xf32> to vector<16x8xf32>
    %194 = vector.extract_strided_slice %158 {offsets = [0, 0], sizes = [16, 8], strides = [1, 1]} : vector<16x17xf32> to vector<16x8xf32>
    %195 = vector.extract_strided_slice %158 {offsets = [0, 9], sizes = [16, 8], strides = [1, 1]} : vector<16x17xf32> to vector<16x8xf32>
    %196 = vector.extract_strided_slice %158 {offsets = [0, 1], sizes = [16, 8], strides = [1, 1]} : vector<16x17xf32> to vector<16x8xf32>
    %197 = vector.extract_strided_slice %160 {offsets = [0, 0], sizes = [16, 8], strides = [1, 1]} : vector<16x17xf32> to vector<16x8xf32>
    %198 = vector.extract_strided_slice %160 {offsets = [0, 9], sizes = [16, 8], strides = [1, 1]} : vector<16x17xf32> to vector<16x8xf32>
    %199 = vector.extract_strided_slice %160 {offsets = [0, 1], sizes = [16, 8], strides = [1, 1]} : vector<16x17xf32> to vector<16x8xf32>
    %200 = tpu.concatenate %191, %192, %193, %194, %195, %196, %197, %198, %199 in 0 : vector<16x8xf32>, vector<16x8xf32>, vector<16x8xf32>, vector<16x8xf32>, vector<16x8xf32>, vector<16x8xf32>, vector<16x8xf32>, vector<16x8xf32>, vector<16x8xf32> -> vector<144x8xf32>
    %cst_125 = arith.constant dense<0.000000e+00> : vector<16x8xf32>
    %201 = tpu.matmul %132, %200, %cst_125 {dimension_numbers = #tpu.dot_dimension_numbers<[1], [0], [0], [1], [0, 0, 1, 1], [], []>} : vector<16x144xf32>, vector<144x8xf32>, vector<16x8xf32> -> vector<16x8xf32>
    %202 = vector.broadcast %131 : vector<16x1xf32> to vector<16x8xf32>
    %203 = arith.addf %201, %202 : vector<16x8xf32>
    %204 = arith.negf %203 : vector<16x8xf32>
    %205 = math.exp %204 : vector<16x8xf32>
    %cst_126 = arith.constant 1.000000e+00 : f32
    %206 = vector.broadcast %cst_126 : f32 to vector<16x8xf32>
    %207 = arith.addf %206, %205 : vector<16x8xf32>
    %208 = arith.divf %206, %207 : vector<16x8xf32>
    %209 = arith.mulf %203, %208 : vector<16x8xf32>
    %c0_127 = arith.constant 0 : index
    %c11 = arith.constant 11 : index
    %210 = vector.load %arg5[%c0_127, %c11] : memref<16x324xf32, #tpu.memory_space<vmem>>, vector<16x8xf32>
    tpu.vector_store %arg5[%c0_127, %c11], %209 {strides = array<i32>} : memref<16x324xf32, #tpu.memory_space<vmem>>, vector<16x8xf32>,
    %211 = vector.extract_strided_slice %160 {offsets = [0, 0], sizes = [16, 8], strides = [1, 1]} : vector<16x17xf32> to vector<16x8xf32>
    %212 = vector.extract_strided_slice %160 {offsets = [0, 9], sizes = [16, 8], strides = [1, 1]} : vector<16x17xf32> to vector<16x8xf32>
    %213 = vector.extract_strided_slice %160 {offsets = [0, 1], sizes = [16, 8], strides = [1, 1]} : vector<16x17xf32> to vector<16x8xf32>
    %214 = vector.extract_strided_slice %162 {offsets = [0, 0], sizes = [16, 8], strides = [1, 1]} : vector<16x17xf32> to vector<16x8xf32>
    %215 = vector.extract_strided_slice %162 {offsets = [0, 9], sizes = [16, 8], strides = [1, 1]} : vector<16x17xf32> to vector<16x8xf32>
    %216 = vector.extract_strided_slice %162 {offsets = [0, 1], sizes = [16, 8], strides = [1, 1]} : vector<16x17xf32> to vector<16x8xf32>
    %217 = vector.extract_strided_slice %164 {offsets = [0, 0], sizes = [16, 8], strides = [1, 1]} : vector<16x17xf32> to vector<16x8xf32>
    %218 = vector.extract_strided_slice %164 {offsets = [0, 9], sizes = [16, 8], strides = [1, 1]} : vector<16x17xf32> to vector<16x8xf32>
    %219 = vector.extract_strided_slice %164 {offsets = [0, 1], sizes = [16, 8], strides = [1, 1]} : vector<16x17xf32> to vector<16x8xf32>
    %220 = tpu.concatenate %211, %212, %213, %214, %215, %216, %217, %218, %219 in 0 : vector<16x8xf32>, vector<16x8xf32>, vector<16x8xf32>, vector<16x8xf32>, vector<16x8xf32>, vector<16x8xf32>, vector<16x8xf32>, vector<16x8xf32>, vector<16x8xf32> -> vector<144x8xf32>
    %cst_128 = arith.constant dense<0.000000e+00> : vector<16x8xf32>
    %221 = tpu.matmul %132, %220, %cst_128 {dimension_numbers = #tpu.dot_dimension_numbers<[1], [0], [0], [1], [0, 0, 1, 1], [], []>} : vector<16x144xf32>, vector<144x8xf32>, vector<16x8xf32> -> vector<16x8xf32>
    %222 = vector.broadcast %131 : vector<16x1xf32> to vector<16x8xf32>
    %223 = arith.addf %221, %222 : vector<16x8xf32>
    %224 = arith.negf %223 : vector<16x8xf32>
    %225 = math.exp %224 : vector<16x8xf32>
    %cst_129 = arith.constant 1.000000e+00 : f32
    %226 = vector.broadcast %cst_129 : f32 to vector<16x8xf32>
    %227 = arith.addf %226, %225 : vector<16x8xf32>
    %228 = arith.divf %226, %227 : vector<16x8xf32>
    %229 = arith.mulf %223, %228 : vector<16x8xf32>
    %c0_130 = arith.constant 0 : index
    %c21 = arith.constant 21 : index
    %230 = vector.load %arg5[%c0_130, %c21] : memref<16x324xf32, #tpu.memory_space<vmem>>, vector<16x8xf32>
    tpu.vector_store %arg5[%c0_130, %c21], %229 {strides = array<i32>} : memref<16x324xf32, #tpu.memory_space<vmem>>, vector<16x8xf32>,
    %231 = vector.extract_strided_slice %164 {offsets = [0, 0], sizes = [16, 8], strides = [1, 1]} : vector<16x17xf32> to vector<16x8xf32>
    %232 = vector.extract_strided_slice %164 {offsets = [0, 9], sizes = [16, 8], strides = [1, 1]} : vector<16x17xf32> to vector<16x8xf32>
    %233 = vector.extract_strided_slice %164 {offsets = [0, 1], sizes = [16, 8], strides = [1, 1]} : vector<16x17xf32> to vector<16x8xf32>
    %234 = vector.extract_strided_slice %166 {offsets = [0, 0], sizes = [16, 8], strides = [1, 1]} : vector<16x17xf32> to vector<16x8xf32>
    %235 = vector.extract_strided_slice %166 {offsets = [0, 9], sizes = [16, 8], strides = [1, 1]} : vector<16x17xf32> to vector<16x8xf32>
    %236 = vector.extract_strided_slice %166 {offsets = [0, 1], sizes = [16, 8], strides = [1, 1]} : vector<16x17xf32> to vector<16x8xf32>
    %237 = vector.extract_strided_slice %168 {offsets = [0, 0], sizes = [16, 8], strides = [1, 1]} : vector<16x17xf32> to vector<16x8xf32>
    %238 = vector.extract_strided_slice %168 {offsets = [0, 9], sizes = [16, 8], strides = [1, 1]} : vector<16x17xf32> to vector<16x8xf32>
    %239 = vector.extract_strided_slice %168 {offsets = [0, 1], sizes = [16, 8], strides = [1, 1]} : vector<16x17xf32> to vector<16x8xf32>
    %240 = tpu.concatenate %231, %232, %233, %234, %235, %236, %237, %238, %239 in 0 : vector<16x8xf32>, vector<16x8xf32>, vector<16x8xf32>, vector<16x8xf32>, vector<16x8xf32>, vector<16x8xf32>, vector<16x8xf32>, vector<16x8xf32>, vector<16x8xf32> -> vector<144x8xf32>
    %cst_131 = arith.constant dense<0.000000e+00> : vector<16x8xf32>
    %241 = tpu.matmul %132, %240, %cst_131 {dimension_numbers = #tpu.dot_dimension_numbers<[1], [0], [0], [1], [0, 0, 1, 1], [], []>} : vector<16x144xf32>, vector<144x8xf32>, vector<16x8xf32> -> vector<16x8xf32>
    %242 = vector.broadcast %131 : vector<16x1xf32> to vector<16x8xf32>
    %243 = arith.addf %241, %242 : vector<16x8xf32>
    %244 = arith.negf %243 : vector<16x8xf32>
    %245 = math.exp %244 : vector<16x8xf32>
    %cst_132 = arith.constant 1.000000e+00 : f32
    %246 = vector.broadcast %cst_132 : f32 to vector<16x8xf32>
    %247 = arith.addf %246, %245 : vector<16x8xf32>
    %248 = arith.divf %246, %247 : vector<16x8xf32>
    %249 = arith.mulf %243, %248 : vector<16x8xf32>
    %c0_133 = arith.constant 0 : index
    %c31 = arith.constant 31 : index
    %250 = vector.load %arg5[%c0_133, %c31] : memref<16x324xf32, #tpu.memory_space<vmem>>, vector<16x8xf32>
    tpu.vector_store %arg5[%c0_133, %c31], %249 {strides = array<i32>} : memref<16x324xf32, #tpu.memory_space<vmem>>, vector<16x8xf32>,
    %251 = vector.extract_strided_slice %168 {offsets = [0, 0], sizes = [16, 8], strides = [1, 1]} : vector<16x17xf32> to vector<16x8xf32>
    %252 = vector.extract_strided_slice %168 {offsets = [0, 9], sizes = [16, 8], strides = [1, 1]} : vector<16x17xf32> to vector<16x8xf32>
    %253 = vector.extract_strided_slice %168 {offsets = [0, 1], sizes = [16, 8], strides = [1, 1]} : vector<16x17xf32> to vector<16x8xf32>
    %254 = vector.extract_strided_slice %170 {offsets = [0, 0], sizes = [16, 8], strides = [1, 1]} : vector<16x17xf32> to vector<16x8xf32>
    %255 = vector.extract_strided_slice %170 {offsets = [0, 9], sizes = [16, 8], strides = [1, 1]} : vector<16x17xf32> to vector<16x8xf32>
    %256 = vector.extract_strided_slice %170 {offsets = [0, 1], sizes = [16, 8], strides = [1, 1]} : vector<16x17xf32> to vector<16x8xf32>
    %257 = vector.extract_strided_slice %172 {offsets = [0, 0], sizes = [16, 8], strides = [1, 1]} : vector<16x17xf32> to vector<16x8xf32>
    %258 = vector.extract_strided_slice %172 {offsets = [0, 9], sizes = [16, 8], strides = [1, 1]} : vector<16x17xf32> to vector<16x8xf32>
    %259 = vector.extract_strided_slice %172 {offsets = [0, 1], sizes = [16, 8], strides = [1, 1]} : vector<16x17xf32> to vector<16x8xf32>
    %260 = tpu.concatenate %251, %252, %253, %254, %255, %256, %257, %258, %259 in 0 : vector<16x8xf32>, vector<16x8xf32>, vector<16x8xf32>, vector<16x8xf32>, vector<16x8xf32>, vector<16x8xf32>, vector<16x8xf32>, vector<16x8xf32>, vector<16x8xf32> -> vector<144x8xf32>
    %cst_134 = arith.constant dense<0.000000e+00> : vector<16x8xf32>
    %261 = tpu.matmul %132, %260, %cst_134 {dimension_numbers = #tpu.dot_dimension_numbers<[1], [0], [0], [1], [0, 0, 1, 1], [], []>} : vector<16x144xf32>, vector<144x8xf32>, vector<16x8xf32> -> vector<16x8xf32>
    %262 = vector.broadcast %131 : vector<16x1xf32> to vector<16x8xf32>
    %263 = arith.addf %261, %262 : vector<16x8xf32>
    %264 = arith.negf %263 : vector<16x8xf32>
    %265 = math.exp %264 : vector<16x8xf32>
    %cst_135 = arith.constant 1.000000e+00 : f32
    %266 = vector.broadcast %cst_135 : f32 to vector<16x8xf32>
    %267 = arith.addf %266, %265 : vector<16x8xf32>
    %268 = arith.divf %266, %267 : vector<16x8xf32>
    %269 = arith.mulf %263, %268 : vector<16x8xf32>
    %c0_136 = arith.constant 0 : index
    %c41 = arith.constant 41 : index
    %270 = vector.load %arg5[%c0_136, %c41] : memref<16x324xf32, #tpu.memory_space<vmem>>, vector<16x8xf32>
    tpu.vector_store %arg5[%c0_136, %c41], %269 {strides = array<i32>} : memref<16x324xf32, #tpu.memory_space<vmem>>, vector<16x8xf32>,
    %271 = vector.extract_strided_slice %172 {offsets = [0, 0], sizes = [16, 8], strides = [1, 1]} : vector<16x17xf32> to vector<16x8xf32>
    %272 = vector.extract_strided_slice %172 {offsets = [0, 9], sizes = [16, 8], strides = [1, 1]} : vector<16x17xf32> to vector<16x8xf32>
    %273 = vector.extract_strided_slice %172 {offsets = [0, 1], sizes = [16, 8], strides = [1, 1]} : vector<16x17xf32> to vector<16x8xf32>
    %274 = vector.extract_strided_slice %174 {offsets = [0, 0], sizes = [16, 8], strides = [1, 1]} : vector<16x17xf32> to vector<16x8xf32>
    %275 = vector.extract_strided_slice %174 {offsets = [0, 9], sizes = [16, 8], strides = [1, 1]} : vector<16x17xf32> to vector<16x8xf32>
    %276 = vector.extract_strided_slice %174 {offsets = [0, 1], sizes = [16, 8], strides = [1, 1]} : vector<16x17xf32> to vector<16x8xf32>
    %277 = vector.extract_strided_slice %176 {offsets = [0, 0], sizes = [16, 8], strides = [1, 1]} : vector<16x17xf32> to vector<16x8xf32>
    %278 = vector.extract_strided_slice %176 {offsets = [0, 9], sizes = [16, 8], strides = [1, 1]} : vector<16x17xf32> to vector<16x8xf32>
    %279 = vector.extract_strided_slice %176 {offsets = [0, 1], sizes = [16, 8], strides = [1, 1]} : vector<16x17xf32> to vector<16x8xf32>
    %280 = tpu.concatenate %271, %272, %273, %274, %275, %276, %277, %278, %279 in 0 : vector<16x8xf32>, vector<16x8xf32>, vector<16x8xf32>, vector<16x8xf32>, vector<16x8xf32>, vector<16x8xf32>, vector<16x8xf32>, vector<16x8xf32>, vector<16x8xf32> -> vector<144x8xf32>
    %cst_137 = arith.constant dense<0.000000e+00> : vector<16x8xf32>
    %281 = tpu.matmul %132, %280, %cst_137 {dimension_numbers = #tpu.dot_dimension_numbers<[1], [0], [0], [1], [0, 0, 1, 1], [], []>} : vector<16x144xf32>, vector<144x8xf32>, vector<16x8xf32> -> vector<16x8xf32>
    %282 = vector.broadcast %131 : vector<16x1xf32> to vector<16x8xf32>
    %283 = arith.addf %281, %282 : vector<16x8xf32>
    %284 = arith.negf %283 : vector<16x8xf32>
    %285 = math.exp %284 : vector<16x8xf32>
    %cst_138 = arith.constant 1.000000e+00 : f32
    %286 = vector.broadcast %cst_138 : f32 to vector<16x8xf32>
    %287 = arith.addf %286, %285 : vector<16x8xf32>
    %288 = arith.divf %286, %287 : vector<16x8xf32>
    %289 = arith.mulf %283, %288 : vector<16x8xf32>
    %c0_139 = arith.constant 0 : index
    %c51 = arith.constant 51 : index
    %290 = vector.load %arg5[%c0_139, %c51] : memref<16x324xf32, #tpu.memory_space<vmem>>, vector<16x8xf32>
    tpu.vector_store %arg5[%c0_139, %c51], %289 {strides = array<i32>} : memref<16x324xf32, #tpu.memory_space<vmem>>, vector<16x8xf32>,
    %291 = vector.extract_strided_slice %176 {offsets = [0, 0], sizes = [16, 8], strides = [1, 1]} : vector<16x17xf32> to vector<16x8xf32>
    %292 = vector.extract_strided_slice %176 {offsets = [0, 9], sizes = [16, 8], strides = [1, 1]} : vector<16x17xf32> to vector<16x8xf32>
    %293 = vector.extract_strided_slice %176 {offsets = [0, 1], sizes = [16, 8], strides = [1, 1]} : vector<16x17xf32> to vector<16x8xf32>
    %294 = vector.extract_strided_slice %178 {offsets = [0, 0], sizes = [16, 8], strides = [1, 1]} : vector<16x17xf32> to vector<16x8xf32>
    %295 = vector.extract_strided_slice %178 {offsets = [0, 9], sizes = [16, 8], strides = [1, 1]} : vector<16x17xf32> to vector<16x8xf32>
    %296 = vector.extract_strided_slice %178 {offsets = [0, 1], sizes = [16, 8], strides = [1, 1]} : vector<16x17xf32> to vector<16x8xf32>
    %297 = vector.extract_strided_slice %180 {offsets = [0, 0], sizes = [16, 8], strides = [1, 1]} : vector<16x17xf32> to vector<16x8xf32>
    %298 = vector.extract_strided_slice %180 {offsets = [0, 9], sizes = [16, 8], strides = [1, 1]} : vector<16x17xf32> to vector<16x8xf32>
    %299 = vector.extract_strided_slice %180 {offsets = [0, 1], sizes = [16, 8], strides = [1, 1]} : vector<16x17xf32> to vector<16x8xf32>
    %300 = tpu.concatenate %291, %292, %293, %294, %295, %296, %297, %298, %299 in 0 : vector<16x8xf32>, vector<16x8xf32>, vector<16x8xf32>, vector<16x8xf32>, vector<16x8xf32>, vector<16x8xf32>, vector<16x8xf32>, vector<16x8xf32>, vector<16x8xf32> -> vector<144x8xf32>
    %cst_140 = arith.constant dense<0.000000e+00> : vector<16x8xf32>
    %301 = tpu.matmul %132, %300, %cst_140 {dimension_numbers = #tpu.dot_dimension_numbers<[1], [0], [0], [1], [0, 0, 1, 1], [], []>} : vector<16x144xf32>, vector<144x8xf32>, vector<16x8xf32> -> vector<16x8xf32>
    %302 = vector.broadcast %131 : vector<16x1xf32> to vector<16x8xf32>
    %303 = arith.addf %301, %302 : vector<16x8xf32>
    %304 = arith.negf %303 : vector<16x8xf32>
    %305 = math.exp %304 : vector<16x8xf32>
    %cst_141 = arith.constant 1.000000e+00 : f32
    %306 = vector.broadcast %cst_141 : f32 to vector<16x8xf32>
    %307 = arith.addf %306, %305 : vector<16x8xf32>
    %308 = arith.divf %306, %307 : vector<16x8xf32>
    %309 = arith.mulf %303, %308 : vector<16x8xf32>
    %c0_142 = arith.constant 0 : index
    %c61 = arith.constant 61 : index
    %310 = vector.load %arg5[%c0_142, %c61] : memref<16x324xf32, #tpu.memory_space<vmem>>, vector<16x8xf32>
    tpu.vector_store %arg5[%c0_142, %c61], %309 {strides = array<i32>} : memref<16x324xf32, #tpu.memory_space<vmem>>, vector<16x8xf32>,
    %311 = vector.extract_strided_slice %180 {offsets = [0, 0], sizes = [16, 8], strides = [1, 1]} : vector<16x17xf32> to vector<16x8xf32>
    %312 = vector.extract_strided_slice %180 {offsets = [0, 9], sizes = [16, 8], strides = [1, 1]} : vector<16x17xf32> to vector<16x8xf32>
    %313 = vector.extract_strided_slice %180 {offsets = [0, 1], sizes = [16, 8], strides = [1, 1]} : vector<16x17xf32> to vector<16x8xf32>
    %314 = vector.extract_strided_slice %182 {offsets = [0, 0], sizes = [16, 8], strides = [1, 1]} : vector<16x17xf32> to vector<16x8xf32>
    %315 = vector.extract_strided_slice %182 {offsets = [0, 9], sizes = [16, 8], strides = [1, 1]} : vector<16x17xf32> to vector<16x8xf32>
    %316 = vector.extract_strided_slice %182 {offsets = [0, 1], sizes = [16, 8], strides = [1, 1]} : vector<16x17xf32> to vector<16x8xf32>
    %317 = vector.extract_strided_slice %184 {offsets = [0, 0], sizes = [16, 8], strides = [1, 1]} : vector<16x17xf32> to vector<16x8xf32>
    %318 = vector.extract_strided_slice %184 {offsets = [0, 9], sizes = [16, 8], strides = [1, 1]} : vector<16x17xf32> to vector<16x8xf32>
    %319 = vector.extract_strided_slice %184 {offsets = [0, 1], sizes = [16, 8], strides = [1, 1]} : vector<16x17xf32> to vector<16x8xf32>
    %320 = tpu.concatenate %311, %312, %313, %314, %315, %316, %317, %318, %319 in 0 : vector<16x8xf32>, vector<16x8xf32>, vector<16x8xf32>, vector<16x8xf32>, vector<16x8xf32>, vector<16x8xf32>, vector<16x8xf32>, vector<16x8xf32>, vector<16x8xf32> -> vector<144x8xf32>
    %cst_143 = arith.constant dense<0.000000e+00> : vector<16x8xf32>
    %321 = tpu.matmul %132, %320, %cst_143 {dimension_numbers = #tpu.dot_dimension_numbers<[1], [0], [0], [1], [0, 0, 1, 1], [], []>} : vector<16x144xf32>, vector<144x8xf32>, vector<16x8xf32> -> vector<16x8xf32>
    %322 = vector.broadcast %131 : vector<16x1xf32> to vector<16x8xf32>
    %323 = arith.addf %321, %322 : vector<16x8xf32>
    %324 = arith.negf %323 : vector<16x8xf32>
    %325 = math.exp %324 : vector<16x8xf32>
    %cst_144 = arith.constant 1.000000e+00 : f32
    %326 = vector.broadcast %cst_144 : f32 to vector<16x8xf32>
    %327 = arith.addf %326, %325 : vector<16x8xf32>
    %328 = arith.divf %326, %327 : vector<16x8xf32>
    %329 = arith.mulf %323, %328 : vector<16x8xf32>
    %c0_145 = arith.constant 0 : index
    %c71 = arith.constant 71 : index
    %330 = vector.load %arg5[%c0_145, %c71] : memref<16x324xf32, #tpu.memory_space<vmem>>, vector<16x8xf32>
    tpu.vector_store %arg5[%c0_145, %c71], %329 {strides = array<i32>} : memref<16x324xf32, #tpu.memory_space<vmem>>, vector<16x8xf32>,
    %331 = vector.extract_strided_slice %184 {offsets = [0, 0], sizes = [16, 8], strides = [1, 1]} : vector<16x17xf32> to vector<16x8xf32>
    %332 = vector.extract_strided_slice %184 {offsets = [0, 9], sizes = [16, 8], strides = [1, 1]} : vector<16x17xf32> to vector<16x8xf32>
    %333 = vector.extract_strided_slice %184 {offsets = [0, 1], sizes = [16, 8], strides = [1, 1]} : vector<16x17xf32> to vector<16x8xf32>
    %334 = vector.extract_strided_slice %186 {offsets = [0, 0], sizes = [16, 8], strides = [1, 1]} : vector<16x17xf32> to vector<16x8xf32>
    %335 = vector.extract_strided_slice %186 {offsets = [0, 9], sizes = [16, 8], strides = [1, 1]} : vector<16x17xf32> to vector<16x8xf32>
    %336 = vector.extract_strided_slice %186 {offsets = [0, 1], sizes = [16, 8], strides = [1, 1]} : vector<16x17xf32> to vector<16x8xf32>
    %337 = vector.extract_strided_slice %188 {offsets = [0, 0], sizes = [16, 8], strides = [1, 1]} : vector<16x17xf32> to vector<16x8xf32>
    %338 = vector.extract_strided_slice %188 {offsets = [0, 9], sizes = [16, 8], strides = [1, 1]} : vector<16x17xf32> to vector<16x8xf32>
    %339 = vector.extract_strided_slice %188 {offsets = [0, 1], sizes = [16, 8], strides = [1, 1]} : vector<16x17xf32> to vector<16x8xf32>
    %340 = tpu.concatenate %331, %332, %333, %334, %335, %336, %337, %338, %339 in 0 : vector<16x8xf32>, vector<16x8xf32>, vector<16x8xf32>, vector<16x8xf32>, vector<16x8xf32>, vector<16x8xf32>, vector<16x8xf32>, vector<16x8xf32>, vector<16x8xf32> -> vector<144x8xf32>
    %cst_146 = arith.constant dense<0.000000e+00> : vector<16x8xf32>
    %341 = tpu.matmul %132, %340, %cst_146 {dimension_numbers = #tpu.dot_dimension_numbers<[1], [0], [0], [1], [0, 0, 1, 1], [], []>} : vector<16x144xf32>, vector<144x8xf32>, vector<16x8xf32> -> vector<16x8xf32>
    %342 = vector.broadcast %131 : vector<16x1xf32> to vector<16x8xf32>
    %343 = arith.addf %341, %342 : vector<16x8xf32>
    %344 = arith.negf %343 : vector<16x8xf32>
    %345 = math.exp %344 : vector<16x8xf32>
    %cst_147 = arith.constant 1.000000e+00 : f32
    %346 = vector.broadcast %cst_147 : f32 to vector<16x8xf32>
    %347 = arith.addf %346, %345 : vector<16x8xf32>
    %348 = arith.divf %346, %347 : vector<16x8xf32>
    %349 = arith.mulf %343, %348 : vector<16x8xf32>
    %c0_148 = arith.constant 0 : index
    %c81 = arith.constant 81 : index
    %350 = vector.load %arg5[%c0_148, %c81] : memref<16x324xf32, #tpu.memory_space<vmem>>, vector<16x8xf32>
    tpu.vector_store %arg5[%c0_148, %c81], %349 {strides = array<i32>} : memref<16x324xf32, #tpu.memory_space<vmem>>, vector<16x8xf32>,
    %c0_149 = arith.constant 0 : index
    %c4 = arith.constant 4 : index
    %351 = vector.load %arg3[%c0_149, %c4] : memref<16x10xf32, #tpu.memory_space<vmem>>, vector<16x1xf32>
    %c0_150 = arith.constant 0 : index
    %c1024 = arith.constant 1024 : index
    %352 = vector.load %arg2[%c0_150, %c1024] : memref<16x2560xf32, #tpu.memory_space<vmem>>, vector<16x144xf32>
    %c0_151 = arith.constant 0 : index
    %c0_152 = arith.constant 0 : index
    %353 = vector.load %arg5[%c0_151, %c0_152] : memref<16x324xf32, #tpu.memory_space<vmem>>, vector<16x78xf32>
    %c0_153 = arith.constant 0 : index
    %c1_154 = arith.constant 1 : index
    %354 = vector.load %arg5[%c0_153, %c1_154] : memref<16x324xf32, #tpu.memory_space<vmem>>, vector<16x78xf32>
    %c0_155 = arith.constant 0 : index
    %c2_156 = arith.constant 2 : index
    %355 = vector.load %arg5[%c0_155, %c2_156] : memref<16x324xf32, #tpu.memory_space<vmem>>, vector<16x78xf32>
    %c0_157 = arith.constant 0 : index
    %c10 = arith.constant 10 : index
    %356 = vector.load %arg5[%c0_157, %c10] : memref<16x324xf32, #tpu.memory_space<vmem>>, vector<16x78xf32>
    %c0_158 = arith.constant 0 : index
    %c11_159 = arith.constant 11 : index
    %357 = vector.load %arg5[%c0_158, %c11_159] : memref<16x324xf32, #tpu.memory_space<vmem>>, vector<16x78xf32>
    %c0_160 = arith.constant 0 : index
    %c12 = arith.constant 12 : index
    %358 = vector.load %arg5[%c0_160, %c12] : memref<16x324xf32, #tpu.memory_space<vmem>>, vector<16x78xf32>
    %c0_161 = arith.constant 0 : index
    %c20_162 = arith.constant 20 : index
    %359 = vector.load %arg5[%c0_161, %c20_162] : memref<16x324xf32, #tpu.memory_space<vmem>>, vector<16x78xf32>
    %c0_163 = arith.constant 0 : index
    %c21_164 = arith.constant 21 : index
    %360 = vector.load %arg5[%c0_163, %c21_164] : memref<16x324xf32, #tpu.memory_space<vmem>>, vector<16x78xf32>
    %c0_165 = arith.constant 0 : index
    %c22 = arith.constant 22 : index
    %361 = vector.load %arg5[%c0_165, %c22] : memref<16x324xf32, #tpu.memory_space<vmem>>, vector<16x78xf32>
    %362 = tpu.concatenate %353, %354, %355, %356, %357, %358, %359, %360, %361 in 0 : vector<16x78xf32>, vector<16x78xf32>, vector<16x78xf32>, vector<16x78xf32>, vector<16x78xf32>, vector<16x78xf32>, vector<16x78xf32>, vector<16x78xf32>, vector<16x78xf32> -> vector<144x78xf32>
    %cst_166 = arith.constant dense<0.000000e+00> : vector<16x78xf32>
    %363 = tpu.matmul %352, %362, %cst_166 {dimension_numbers = #tpu.dot_dimension_numbers<[1], [0], [0], [1], [0, 0, 1, 1], [], []>} : vector<16x144xf32>, vector<144x78xf32>, vector<16x78xf32> -> vector<16x78xf32>
    %364 = vector.broadcast %351 : vector<16x1xf32> to vector<16x78xf32>
    %365 = arith.addf %363, %364 : vector<16x78xf32>
    %366 = arith.negf %365 : vector<16x78xf32>
    %367 = math.exp %366 : vector<16x78xf32>
    %cst_167 = arith.constant 1.000000e+00 : f32
    %368 = vector.broadcast %cst_167 : f32 to vector<16x78xf32>
    %369 = arith.addf %368, %367 : vector<16x78xf32>
    %370 = arith.divf %368, %369 : vector<16x78xf32>
    %371 = arith.mulf %365, %370 : vector<16x78xf32>
    %372 = tpu.iota {dimensions = array<i32: 1>} : vector<1x78xi32>
    %c10_i32 = arith.constant 10 : i32
    %c0_i32_168 = arith.constant 0 : i32
    %373 = arith.cmpi eq, %c10_i32, %c0_i32_168 : i32
    %c1_i32_169 = arith.constant 1 : i32
    %374 = arith.select %373, %c1_i32_169, %c10_i32 : i32
    %375 = vector.broadcast %374 : i32 to vector<1x78xi32>
    %376 = arith.remsi %372, %375 : vector<1x78xi32>
    %c0_i32_170 = arith.constant 0 : i32
    %377 = vector.broadcast %c0_i32_170 : i32 to vector<1x78xi32>
    %378 = arith.cmpi ne, %376, %377 : vector<1x78xi32>
    %c0_i32_171 = arith.constant 0 : i32
    %379 = vector.broadcast %c0_i32_171 : i32 to vector<1x78xi32>
    %380 = arith.cmpi slt, %376, %379 : vector<1x78xi32>
    %c0_i32_172 = arith.constant 0 : i32
    %381 = arith.cmpi slt, %374, %c0_i32_172 : i32
    %382 = vector.broadcast %381 : i1 to vector<1x78xi1>
    %383 = vector.broadcast %382 : vector<1x78xi1> to vector<1x78xi1>
    %384 = arith.xori %380, %383 : vector<1x78xi1>
    %385 = arith.andi %384, %378 : vector<1x78xi1>
    %386 = vector.broadcast %374 : i32 to vector<1x78xi32>
    %387 = arith.addi %376, %386 : vector<1x78xi32>
    %388 = arith.select %385, %387, %376 : vector<1x78xi1>, vector<1x78xi32>
    %c8_i32_173 = arith.constant 8 : i32
    %389 = vector.broadcast %c8_i32_173 : i32 to vector<1x78xi32>
    %390 = arith.cmpi slt, %388, %389 : vector<1x78xi32>
    %cst_174 = arith.constant 0.000000e+00 : f32
    %391 = vector.shape_cast %390 : vector<1x78xi1> to vector<1x78xi1>
    %392 = vector.broadcast %391 : vector<1x78xi1> to vector<16x78xi1>
    %393 = vector.broadcast %cst_174 : f32 to vector<16x78xf32>
    %394 = arith.select %392, %371, %393 : vector<16x78xi1>, vector<16x78xf32>
    %c0_175 = arith.constant 0 : index
    %c11_176 = arith.constant 11 : index
    %395 = vector.load %arg5[%c0_175, %c11_176] : memref<16x324xf32, #tpu.memory_space<vmem>>, vector<16x78xf32>
    tpu.vector_store %arg5[%c0_175, %c11_176], %394 {strides = array<i32>} : memref<16x324xf32, #tpu.memory_space<vmem>>, vector<16x78xf32>,
    %c0_177 = arith.constant 0 : index
    %c5 = arith.constant 5 : index
    %396 = vector.load %arg3[%c0_177, %c5] : memref<16x10xf32, #tpu.memory_space<vmem>>, vector<16x1xf32>
    %c0_178 = arith.constant 0 : index
    %c1280 = arith.constant 1280 : index
    %397 = vector.load %arg2[%c0_178, %c1280] : memref<16x2560xf32, #tpu.memory_space<vmem>>, vector<16x144xf32>
    %398 = tpu.iota {dimensions = array<i32: 0>} : vector<10x9xi32>
    %399 = tpu.iota {dimensions = array<i32: 1>} : vector<10x9xi32>
    %c4_i32 = arith.constant 4 : i32
    %400 = vector.broadcast %c4_i32 : i32 to vector<10x9xi32>
    %401 = arith.cmpi sle, %399, %400 : vector<10x9xi32>
    %c2_i32_179 = arith.constant 2 : i32
    %402 = vector.broadcast %c2_i32_179 : i32 to vector<10x9xi32>
    %403 = arith.muli %402, %399 : vector<10x9xi32>
    %404 = arith.cmpi eq, %398, %403 : vector<10x9xi32>
    %405 = arith.andi %401, %404 : vector<10x9xi1>
    %c4_i32_180 = arith.constant 4 : i32
    %406 = vector.broadcast %c4_i32_180 : i32 to vector<10x9xi32>
    %407 = arith.cmpi sgt, %399, %406 : vector<10x9xi32>
    %c5_i32 = arith.constant 5 : i32
    %408 = vector.broadcast %c5_i32 : i32 to vector<10x9xi32>
    %409 = arith.subi %399, %408 : vector<10x9xi32>
    %c2_i32_181 = arith.constant 2 : i32
    %410 = vector.broadcast %c2_i32_181 : i32 to vector<10x9xi32>
    %411 = arith.muli %410, %409 : vector<10x9xi32>
    %c1_i32_182 = arith.constant 1 : i32
    %412 = vector.broadcast %c1_i32_182 : i32 to vector<10x9xi32>
    %413 = arith.addi %411, %412 : vector<10x9xi32>
    %414 = arith.cmpi eq, %398, %413 : vector<10x9xi32>
    %415 = arith.andi %407, %414 : vector<10x9xi1>
    %416 = arith.ori %405, %415 : vector<10x9xi1>
    %cst_183 = arith.constant 1.000000e+00 : f32
    %cst_184 = arith.constant 0.000000e+00 : f32
    %417 = vector.broadcast %cst_183 : f32 to vector<10x9xf32>
    %418 = vector.broadcast %cst_184 : f32 to vector<10x9xf32>
    %419 = arith.select %416, %417, %418 : vector<10x9xi1>, vector<10x9xf32>
    %c0_185 = arith.constant 0 : index
    %c0_186 = arith.constant 0 : index
    %420 = vector.load %arg5[%c0_185, %c0_186] : memref<16x324xf32, #tpu.memory_space<vmem>>, vector<16x10xf32>
    %cst_187 = arith.constant dense<0.000000e+00> : vector<16x9xf32>
    %421 = tpu.matmul %420, %419, %cst_187 {dimension_numbers = #tpu.dot_dimension_numbers<[1], [0], [0], [1], [0, 0, 1, 1], [], []>} : vector<16x10xf32>, vector<10x9xf32>, vector<16x9xf32> -> vector<16x9xf32>
    %c0_188 = arith.constant 0 : index
    %c10_189 = arith.constant 10 : index
    %422 = vector.load %arg5[%c0_188, %c10_189] : memref<16x324xf32, #tpu.memory_space<vmem>>, vector<16x10xf32>
    %cst_190 = arith.constant dense<0.000000e+00> : vector<16x9xf32>
    %423 = tpu.matmul %422, %419, %cst_190 {dimension_numbers = #tpu.dot_dimension_numbers<[1], [0], [0], [1], [0, 0, 1, 1], [], []>} : vector<16x10xf32>, vector<10x9xf32>, vector<16x9xf32> -> vector<16x9xf32>
    %c0_191 = arith.constant 0 : index
    %c20_192 = arith.constant 20 : index
    %424 = vector.load %arg5[%c0_191, %c20_192] : memref<16x324xf32, #tpu.memory_space<vmem>>, vector<16x10xf32>
    %cst_193 = arith.constant dense<0.000000e+00> : vector<16x9xf32>
    %425 = tpu.matmul %424, %419, %cst_193 {dimension_numbers = #tpu.dot_dimension_numbers<[1], [0], [0], [1], [0, 0, 1, 1], [], []>} : vector<16x10xf32>, vector<10x9xf32>, vector<16x9xf32> -> vector<16x9xf32>
    %c0_194 = arith.constant 0 : index
    %c30 = arith.constant 30 : index
    %426 = vector.load %arg5[%c0_194, %c30] : memref<16x324xf32, #tpu.memory_space<vmem>>, vector<16x10xf32>
    %cst_195 = arith.constant dense<0.000000e+00> : vector<16x9xf32>
    %427 = tpu.matmul %426, %419, %cst_195 {dimension_numbers = #tpu.dot_dimension_numbers<[1], [0], [0], [1], [0, 0, 1, 1], [], []>} : vector<16x10xf32>, vector<10x9xf32>, vector<16x9xf32> -> vector<16x9xf32>
    %c0_196 = arith.constant 0 : index
    %c40 = arith.constant 40 : index
    %428 = vector.load %arg5[%c0_196, %c40] : memref<16x324xf32, #tpu.memory_space<vmem>>, vector<16x10xf32>
    %cst_197 = arith.constant dense<0.000000e+00> : vector<16x9xf32>
    %429 = tpu.matmul %428, %419, %cst_197 {dimension_numbers = #tpu.dot_dimension_numbers<[1], [0], [0], [1], [0, 0, 1, 1], [], []>} : vector<16x10xf32>, vector<10x9xf32>, vector<16x9xf32> -> vector<16x9xf32>
    %c0_198 = arith.constant 0 : index
    %c50 = arith.constant 50 : index
    %430 = vector.load %arg5[%c0_198, %c50] : memref<16x324xf32, #tpu.memory_space<vmem>>, vector<16x10xf32>
    %cst_199 = arith.constant dense<0.000000e+00> : vector<16x9xf32>
    %431 = tpu.matmul %430, %419, %cst_199 {dimension_numbers = #tpu.dot_dimension_numbers<[1], [0], [0], [1], [0, 0, 1, 1], [], []>} : vector<16x10xf32>, vector<10x9xf32>, vector<16x9xf32> -> vector<16x9xf32>
    %c0_200 = arith.constant 0 : index
    %c60 = arith.constant 60 : index
    %432 = vector.load %arg5[%c0_200, %c60] : memref<16x324xf32, #tpu.memory_space<vmem>>, vector<16x10xf32>
    %cst_201 = arith.constant dense<0.000000e+00> : vector<16x9xf32>
    %433 = tpu.matmul %432, %419, %cst_201 {dimension_numbers = #tpu.dot_dimension_numbers<[1], [0], [0], [1], [0, 0, 1, 1], [], []>} : vector<16x10xf32>, vector<10x9xf32>, vector<16x9xf32> -> vector<16x9xf32>
    %c0_202 = arith.constant 0 : index
    %c70 = arith.constant 70 : index
    %434 = vector.load %arg5[%c0_202, %c70] : memref<16x324xf32, #tpu.memory_space<vmem>>, vector<16x10xf32>
    %cst_203 = arith.constant dense<0.000000e+00> : vector<16x9xf32>
    %435 = tpu.matmul %434, %419, %cst_203 {dimension_numbers = #tpu.dot_dimension_numbers<[1], [0], [0], [1], [0, 0, 1, 1], [], []>} : vector<16x10xf32>, vector<10x9xf32>, vector<16x9xf32> -> vector<16x9xf32>
    %c0_204 = arith.constant 0 : index
    %c80 = arith.constant 80 : index
    %436 = vector.load %arg5[%c0_204, %c80] : memref<16x324xf32, #tpu.memory_space<vmem>>, vector<16x10xf32>
    %cst_205 = arith.constant dense<0.000000e+00> : vector<16x9xf32>
    %437 = tpu.matmul %436, %419, %cst_205 {dimension_numbers = #tpu.dot_dimension_numbers<[1], [0], [0], [1], [0, 0, 1, 1], [], []>} : vector<16x10xf32>, vector<10x9xf32>, vector<16x9xf32> -> vector<16x9xf32>
    %cst_206 = arith.constant 0.000000e+00 : f32
    %438 = vector.broadcast %cst_206 : f32 to vector<16x36xf32>
    %c0_207 = arith.constant 0 : index
    %c0_208 = arith.constant 0 : index
    %439 = vector.load %arg5[%c0_207, %c0_208] : memref<16x324xf32, #tpu.memory_space<vmem>>, vector<16x36xf32>
    tpu.vector_store %arg5[%c0_207, %c0_208], %438 {strides = array<i32>} : memref<16x324xf32, #tpu.memory_space<vmem>>, vector<16x36xf32>,
    %440 = vector.extract_strided_slice %421 {offsets = [0, 0], sizes = [16, 4], strides = [1, 1]} : vector<16x9xf32> to vector<16x4xf32>
    %441 = vector.extract_strided_slice %421 {offsets = [0, 5], sizes = [16, 4], strides = [1, 1]} : vector<16x9xf32> to vector<16x4xf32>
    %442 = vector.extract_strided_slice %421 {offsets = [0, 1], sizes = [16, 4], strides = [1, 1]} : vector<16x9xf32> to vector<16x4xf32>
    %443 = vector.extract_strided_slice %423 {offsets = [0, 0], sizes = [16, 4], strides = [1, 1]} : vector<16x9xf32> to vector<16x4xf32>
    %444 = vector.extract_strided_slice %423 {offsets = [0, 5], sizes = [16, 4], strides = [1, 1]} : vector<16x9xf32> to vector<16x4xf32>
    %445 = vector.extract_strided_slice %423 {offsets = [0, 1], sizes = [16, 4], strides = [1, 1]} : vector<16x9xf32> to vector<16x4xf32>
    %446 = vector.extract_strided_slice %425 {offsets = [0, 0], sizes = [16, 4], strides = [1, 1]} : vector<16x9xf32> to vector<16x4xf32>
    %447 = vector.extract_strided_slice %425 {offsets = [0, 5], sizes = [16, 4], strides = [1, 1]} : vector<16x9xf32> to vector<16x4xf32>
    %448 = vector.extract_strided_slice %425 {offsets = [0, 1], sizes = [16, 4], strides = [1, 1]} : vector<16x9xf32> to vector<16x4xf32>
    %449 = tpu.concatenate %440, %441, %442, %443, %444, %445, %446, %447, %448 in 0 : vector<16x4xf32>, vector<16x4xf32>, vector<16x4xf32>, vector<16x4xf32>, vector<16x4xf32>, vector<16x4xf32>, vector<16x4xf32>, vector<16x4xf32>, vector<16x4xf32> -> vector<144x4xf32>
    %cst_209 = arith.constant dense<0.000000e+00> : vector<16x4xf32>
    %450 = tpu.matmul %397, %449, %cst_209 {dimension_numbers = #tpu.dot_dimension_numbers<[1], [0], [0], [1], [0, 0, 1, 1], [], []>} : vector<16x144xf32>, vector<144x4xf32>, vector<16x4xf32> -> vector<16x4xf32>
    %451 = vector.broadcast %396 : vector<16x1xf32> to vector<16x4xf32>
    %452 = arith.addf %450, %451 : vector<16x4xf32>
    %453 = arith.negf %452 : vector<16x4xf32>
    %454 = math.exp %453 : vector<16x4xf32>
    %cst_210 = arith.constant 1.000000e+00 : f32
    %455 = vector.broadcast %cst_210 : f32 to vector<16x4xf32>
    %456 = arith.addf %455, %454 : vector<16x4xf32>
    %457 = arith.divf %455, %456 : vector<16x4xf32>
    %458 = arith.mulf %452, %457 : vector<16x4xf32>
    %c0_211 = arith.constant 0 : index
    %c7 = arith.constant 7 : index
    %459 = vector.load %arg5[%c0_211, %c7] : memref<16x324xf32, #tpu.memory_space<vmem>>, vector<16x4xf32>
    tpu.vector_store %arg5[%c0_211, %c7], %458 {strides = array<i32>} : memref<16x324xf32, #tpu.memory_space<vmem>>, vector<16x4xf32>,
    %460 = vector.extract_strided_slice %425 {offsets = [0, 0], sizes = [16, 4], strides = [1, 1]} : vector<16x9xf32> to vector<16x4xf32>
    %461 = vector.extract_strided_slice %425 {offsets = [0, 5], sizes = [16, 4], strides = [1, 1]} : vector<16x9xf32> to vector<16x4xf32>
    %462 = vector.extract_strided_slice %425 {offsets = [0, 1], sizes = [16, 4], strides = [1, 1]} : vector<16x9xf32> to vector<16x4xf32>
    %463 = vector.extract_strided_slice %427 {offsets = [0, 0], sizes = [16, 4], strides = [1, 1]} : vector<16x9xf32> to vector<16x4xf32>
    %464 = vector.extract_strided_slice %427 {offsets = [0, 5], sizes = [16, 4], strides = [1, 1]} : vector<16x9xf32> to vector<16x4xf32>
    %465 = vector.extract_strided_slice %427 {offsets = [0, 1], sizes = [16, 4], strides = [1, 1]} : vector<16x9xf32> to vector<16x4xf32>
    %466 = vector.extract_strided_slice %429 {offsets = [0, 0], sizes = [16, 4], strides = [1, 1]} : vector<16x9xf32> to vector<16x4xf32>
    %467 = vector.extract_strided_slice %429 {offsets = [0, 5], sizes = [16, 4], strides = [1, 1]} : vector<16x9xf32> to vector<16x4xf32>
    %468 = vector.extract_strided_slice %429 {offsets = [0, 1], sizes = [16, 4], strides = [1, 1]} : vector<16x9xf32> to vector<16x4xf32>
    %469 = tpu.concatenate %460, %461, %462, %463, %464, %465, %466, %467, %468 in 0 : vector<16x4xf32>, vector<16x4xf32>, vector<16x4xf32>, vector<16x4xf32>, vector<16x4xf32>, vector<16x4xf32>, vector<16x4xf32>, vector<16x4xf32>, vector<16x4xf32> -> vector<144x4xf32>
    %cst_212 = arith.constant dense<0.000000e+00> : vector<16x4xf32>
    %470 = tpu.matmul %397, %469, %cst_212 {dimension_numbers = #tpu.dot_dimension_numbers<[1], [0], [0], [1], [0, 0, 1, 1], [], []>} : vector<16x144xf32>, vector<144x4xf32>, vector<16x4xf32> -> vector<16x4xf32>
    %471 = vector.broadcast %396 : vector<16x1xf32> to vector<16x4xf32>
    %472 = arith.addf %470, %471 : vector<16x4xf32>
    %473 = arith.negf %472 : vector<16x4xf32>
    %474 = math.exp %473 : vector<16x4xf32>
    %cst_213 = arith.constant 1.000000e+00 : f32
    %475 = vector.broadcast %cst_213 : f32 to vector<16x4xf32>
    %476 = arith.addf %475, %474 : vector<16x4xf32>
    %477 = arith.divf %475, %476 : vector<16x4xf32>
    %478 = arith.mulf %472, %477 : vector<16x4xf32>
    %c0_214 = arith.constant 0 : index
    %c13 = arith.constant 13 : index
    %479 = vector.load %arg5[%c0_214, %c13] : memref<16x324xf32, #tpu.memory_space<vmem>>, vector<16x4xf32>
    tpu.vector_store %arg5[%c0_214, %c13], %478 {strides = array<i32>} : memref<16x324xf32, #tpu.memory_space<vmem>>, vector<16x4xf32>,
    %480 = vector.extract_strided_slice %429 {offsets = [0, 0], sizes = [16, 4], strides = [1, 1]} : vector<16x9xf32> to vector<16x4xf32>
    %481 = vector.extract_strided_slice %429 {offsets = [0, 5], sizes = [16, 4], strides = [1, 1]} : vector<16x9xf32> to vector<16x4xf32>
    %482 = vector.extract_strided_slice %429 {offsets = [0, 1], sizes = [16, 4], strides = [1, 1]} : vector<16x9xf32> to vector<16x4xf32>
    %483 = vector.extract_strided_slice %431 {offsets = [0, 0], sizes = [16, 4], strides = [1, 1]} : vector<16x9xf32> to vector<16x4xf32>
    %484 = vector.extract_strided_slice %431 {offsets = [0, 5], sizes = [16, 4], strides = [1, 1]} : vector<16x9xf32> to vector<16x4xf32>
    %485 = vector.extract_strided_slice %431 {offsets = [0, 1], sizes = [16, 4], strides = [1, 1]} : vector<16x9xf32> to vector<16x4xf32>
    %486 = vector.extract_strided_slice %433 {offsets = [0, 0], sizes = [16, 4], strides = [1, 1]} : vector<16x9xf32> to vector<16x4xf32>
    %487 = vector.extract_strided_slice %433 {offsets = [0, 5], sizes = [16, 4], strides = [1, 1]} : vector<16x9xf32> to vector<16x4xf32>
    %488 = vector.extract_strided_slice %433 {offsets = [0, 1], sizes = [16, 4], strides = [1, 1]} : vector<16x9xf32> to vector<16x4xf32>
    %489 = tpu.concatenate %480, %481, %482, %483, %484, %485, %486, %487, %488 in 0 : vector<16x4xf32>, vector<16x4xf32>, vector<16x4xf32>, vector<16x4xf32>, vector<16x4xf32>, vector<16x4xf32>, vector<16x4xf32>, vector<16x4xf32>, vector<16x4xf32> -> vector<144x4xf32>
    %cst_215 = arith.constant dense<0.000000e+00> : vector<16x4xf32>
    %490 = tpu.matmul %397, %489, %cst_215 {dimension_numbers = #tpu.dot_dimension_numbers<[1], [0], [0], [1], [0, 0, 1, 1], [], []>} : vector<16x144xf32>, vector<144x4xf32>, vector<16x4xf32> -> vector<16x4xf32>
    %491 = vector.broadcast %396 : vector<16x1xf32> to vector<16x4xf32>
    %492 = arith.addf %490, %491 : vector<16x4xf32>
    %493 = arith.negf %492 : vector<16x4xf32>
    %494 = math.exp %493 : vector<16x4xf32>
    %cst_216 = arith.constant 1.000000e+00 : f32
    %495 = vector.broadcast %cst_216 : f32 to vector<16x4xf32>
    %496 = arith.addf %495, %494 : vector<16x4xf32>
    %497 = arith.divf %495, %496 : vector<16x4xf32>
    %498 = arith.mulf %492, %497 : vector<16x4xf32>
    %c0_217 = arith.constant 0 : index
    %c19_218 = arith.constant 19 : index
    %499 = vector.load %arg5[%c0_217, %c19_218] : memref<16x324xf32, #tpu.memory_space<vmem>>, vector<16x4xf32>
    tpu.vector_store %arg5[%c0_217, %c19_218], %498 {strides = array<i32>} : memref<16x324xf32, #tpu.memory_space<vmem>>, vector<16x4xf32>,
    %500 = vector.extract_strided_slice %433 {offsets = [0, 0], sizes = [16, 4], strides = [1, 1]} : vector<16x9xf32> to vector<16x4xf32>
    %501 = vector.extract_strided_slice %433 {offsets = [0, 5], sizes = [16, 4], strides = [1, 1]} : vector<16x9xf32> to vector<16x4xf32>
    %502 = vector.extract_strided_slice %433 {offsets = [0, 1], sizes = [16, 4], strides = [1, 1]} : vector<16x9xf32> to vector<16x4xf32>
    %503 = vector.extract_strided_slice %435 {offsets = [0, 0], sizes = [16, 4], strides = [1, 1]} : vector<16x9xf32> to vector<16x4xf32>
    %504 = vector.extract_strided_slice %435 {offsets = [0, 5], sizes = [16, 4], strides = [1, 1]} : vector<16x9xf32> to vector<16x4xf32>
    %505 = vector.extract_strided_slice %435 {offsets = [0, 1], sizes = [16, 4], strides = [1, 1]} : vector<16x9xf32> to vector<16x4xf32>
    %506 = vector.extract_strided_slice %437 {offsets = [0, 0], sizes = [16, 4], strides = [1, 1]} : vector<16x9xf32> to vector<16x4xf32>
    %507 = vector.extract_strided_slice %437 {offsets = [0, 5], sizes = [16, 4], strides = [1, 1]} : vector<16x9xf32> to vector<16x4xf32>
    %508 = vector.extract_strided_slice %437 {offsets = [0, 1], sizes = [16, 4], strides = [1, 1]} : vector<16x9xf32> to vector<16x4xf32>
    %509 = tpu.concatenate %500, %501, %502, %503, %504, %505, %506, %507, %508 in 0 : vector<16x4xf32>, vector<16x4xf32>, vector<16x4xf32>, vector<16x4xf32>, vector<16x4xf32>, vector<16x4xf32>, vector<16x4xf32>, vector<16x4xf32>, vector<16x4xf32> -> vector<144x4xf32>
    %cst_219 = arith.constant dense<0.000000e+00> : vector<16x4xf32>
    %510 = tpu.matmul %397, %509, %cst_219 {dimension_numbers = #tpu.dot_dimension_numbers<[1], [0], [0], [1], [0, 0, 1, 1], [], []>} : vector<16x144xf32>, vector<144x4xf32>, vector<16x4xf32> -> vector<16x4xf32>
    %511 = vector.broadcast %396 : vector<16x1xf32> to vector<16x4xf32>
    %512 = arith.addf %510, %511 : vector<16x4xf32>
    %513 = arith.negf %512 : vector<16x4xf32>
    %514 = math.exp %513 : vector<16x4xf32>
    %cst_220 = arith.constant 1.000000e+00 : f32
    %515 = vector.broadcast %cst_220 : f32 to vector<16x4xf32>
    %516 = arith.addf %515, %514 : vector<16x4xf32>
    %517 = arith.divf %515, %516 : vector<16x4xf32>
    %518 = arith.mulf %512, %517 : vector<16x4xf32>
    %c0_221 = arith.constant 0 : index
    %c25 = arith.constant 25 : index
    %519 = vector.load %arg5[%c0_221, %c25] : memref<16x324xf32, #tpu.memory_space<vmem>>, vector<16x4xf32>
    tpu.vector_store %arg5[%c0_221, %c25], %518 {strides = array<i32>} : memref<16x324xf32, #tpu.memory_space<vmem>>, vector<16x4xf32>,
    %c0_222 = arith.constant 0 : index
    %c6 = arith.constant 6 : index
    %520 = vector.load %arg3[%c0_222, %c6] : memref<16x10xf32, #tpu.memory_space<vmem>>, vector<16x1xf32>
    %c0_223 = arith.constant 0 : index
    %c1536 = arith.constant 1536 : index
    %521 = vector.load %arg2[%c0_223, %c1536] : memref<16x2560xf32, #tpu.memory_space<vmem>>, vector<16x144xf32>
    %c0_224 = arith.constant 0 : index
    %c0_225 = arith.constant 0 : index
    %522 = vector.load %arg5[%c0_224, %c0_225] : memref<16x324xf32, #tpu.memory_space<vmem>>, vector<16x22xf32>
    %c0_226 = arith.constant 0 : index
    %c1_227 = arith.constant 1 : index
    %523 = vector.load %arg5[%c0_226, %c1_227] : memref<16x324xf32, #tpu.memory_space<vmem>>, vector<16x22xf32>
    %c0_228 = arith.constant 0 : index
    %c2_229 = arith.constant 2 : index
    %524 = vector.load %arg5[%c0_228, %c2_229] : memref<16x324xf32, #tpu.memory_space<vmem>>, vector<16x22xf32>
    %c0_230 = arith.constant 0 : index
    %c6_231 = arith.constant 6 : index
    %525 = vector.load %arg5[%c0_230, %c6_231] : memref<16x324xf32, #tpu.memory_space<vmem>>, vector<16x22xf32>
    %c0_232 = arith.constant 0 : index
    %c7_233 = arith.constant 7 : index
    %526 = vector.load %arg5[%c0_232, %c7_233] : memref<16x324xf32, #tpu.memory_space<vmem>>, vector<16x22xf32>
    %c0_234 = arith.constant 0 : index
    %c8 = arith.constant 8 : index
    %527 = vector.load %arg5[%c0_234, %c8] : memref<16x324xf32, #tpu.memory_space<vmem>>, vector<16x22xf32>
    %c0_235 = arith.constant 0 : index
    %c12_236 = arith.constant 12 : index
    %528 = vector.load %arg5[%c0_235, %c12_236] : memref<16x324xf32, #tpu.memory_space<vmem>>, vector<16x22xf32>
    %c0_237 = arith.constant 0 : index
    %c13_238 = arith.constant 13 : index
    %529 = vector.load %arg5[%c0_237, %c13_238] : memref<16x324xf32, #tpu.memory_space<vmem>>, vector<16x22xf32>
    %c0_239 = arith.constant 0 : index
    %c14 = arith.constant 14 : index
    %530 = vector.load %arg5[%c0_239, %c14] : memref<16x324xf32, #tpu.memory_space<vmem>>, vector<16x22xf32>
    %531 = tpu.concatenate %522, %523, %524, %525, %526, %527, %528, %529, %530 in 0 : vector<16x22xf32>, vector<16x22xf32>, vector<16x22xf32>, vector<16x22xf32>, vector<16x22xf32>, vector<16x22xf32>, vector<16x22xf32>, vector<16x22xf32>, vector<16x22xf32> -> vector<144x22xf32>
    %cst_240 = arith.constant dense<0.000000e+00> : vector<16x22xf32>
    %532 = tpu.matmul %521, %531, %cst_240 {dimension_numbers = #tpu.dot_dimension_numbers<[1], [0], [0], [1], [0, 0, 1, 1], [], []>} : vector<16x144xf32>, vector<144x22xf32>, vector<16x22xf32> -> vector<16x22xf32>
    %533 = vector.broadcast %520 : vector<16x1xf32> to vector<16x22xf32>
    %534 = arith.addf %532, %533 : vector<16x22xf32>
    %535 = arith.negf %534 : vector<16x22xf32>
    %536 = math.exp %535 : vector<16x22xf32>
    %cst_241 = arith.constant 1.000000e+00 : f32
    %537 = vector.broadcast %cst_241 : f32 to vector<16x22xf32>
    %538 = arith.addf %537, %536 : vector<16x22xf32>
    %539 = arith.divf %537, %538 : vector<16x22xf32>
    %540 = arith.mulf %534, %539 : vector<16x22xf32>
    %541 = tpu.iota {dimensions = array<i32: 1>} : vector<1x22xi32>
    %c6_i32 = arith.constant 6 : i32
    %c0_i32_242 = arith.constant 0 : i32
    %542 = arith.cmpi eq, %c6_i32, %c0_i32_242 : i32
    %c1_i32_243 = arith.constant 1 : i32
    %543 = arith.select %542, %c1_i32_243, %c6_i32 : i32
    %544 = vector.broadcast %543 : i32 to vector<1x22xi32>
    %545 = arith.remsi %541, %544 : vector<1x22xi32>
    %c0_i32_244 = arith.constant 0 : i32
    %546 = vector.broadcast %c0_i32_244 : i32 to vector<1x22xi32>
    %547 = arith.cmpi ne, %545, %546 : vector<1x22xi32>
    %c0_i32_245 = arith.constant 0 : i32
    %548 = vector.broadcast %c0_i32_245 : i32 to vector<1x22xi32>
    %549 = arith.cmpi slt, %545, %548 : vector<1x22xi32>
    %c0_i32_246 = arith.constant 0 : i32
    %550 = arith.cmpi slt, %543, %c0_i32_246 : i32
    %551 = vector.broadcast %550 : i1 to vector<1x22xi1>
    %552 = vector.broadcast %551 : vector<1x22xi1> to vector<1x22xi1>
    %553 = arith.xori %549, %552 : vector<1x22xi1>
    %554 = arith.andi %553, %547 : vector<1x22xi1>
    %555 = vector.broadcast %543 : i32 to vector<1x22xi32>
    %556 = arith.addi %545, %555 : vector<1x22xi32>
    %557 = arith.select %554, %556, %545 : vector<1x22xi1>, vector<1x22xi32>
    %c4_i32_247 = arith.constant 4 : i32
    %558 = vector.broadcast %c4_i32_247 : i32 to vector<1x22xi32>
    %559 = arith.cmpi slt, %557, %558 : vector<1x22xi32>
    %cst_248 = arith.constant 0.000000e+00 : f32
    %560 = vector.shape_cast %559 : vector<1x22xi1> to vector<1x22xi1>
    %561 = vector.broadcast %560 : vector<1x22xi1> to vector<16x22xi1>
    %562 = vector.broadcast %cst_248 : f32 to vector<16x22xf32>
    %563 = arith.select %561, %540, %562 : vector<16x22xi1>, vector<16x22xf32>
    %c0_249 = arith.constant 0 : index
    %c7_250 = arith.constant 7 : index
    %564 = vector.load %arg5[%c0_249, %c7_250] : memref<16x324xf32, #tpu.memory_space<vmem>>, vector<16x22xf32>
    tpu.vector_store %arg5[%c0_249, %c7_250], %563 {strides = array<i32>} : memref<16x324xf32, #tpu.memory_space<vmem>>, vector<16x22xf32>,
    %c0_251 = arith.constant 0 : index
    %c7_252 = arith.constant 7 : index
    %565 = vector.load %arg3[%c0_251, %c7_252] : memref<16x10xf32, #tpu.memory_space<vmem>>, vector<16x1xf32>
    %c0_253 = arith.constant 0 : index
    %c1792 = arith.constant 1792 : index
    %566 = vector.load %arg2[%c0_253, %c1792] : memref<16x2560xf32, #tpu.memory_space<vmem>>, vector<16x144xf32>
    %567 = tpu.iota {dimensions = array<i32: 0>} : vector<6x5xi32>
    %568 = tpu.iota {dimensions = array<i32: 1>} : vector<6x5xi32>
    %c2_i32_254 = arith.constant 2 : i32
    %569 = vector.broadcast %c2_i32_254 : i32 to vector<6x5xi32>
    %570 = arith.cmpi sle, %568, %569 : vector<6x5xi32>
    %c2_i32_255 = arith.constant 2 : i32
    %571 = vector.broadcast %c2_i32_255 : i32 to vector<6x5xi32>
    %572 = arith.muli %571, %568 : vector<6x5xi32>
    %573 = arith.cmpi eq, %567, %572 : vector<6x5xi32>
    %574 = arith.andi %570, %573 : vector<6x5xi1>
    %c2_i32_256 = arith.constant 2 : i32
    %575 = vector.broadcast %c2_i32_256 : i32 to vector<6x5xi32>
    %576 = arith.cmpi sgt, %568, %575 : vector<6x5xi32>
    %c3_i32 = arith.constant 3 : i32
    %577 = vector.broadcast %c3_i32 : i32 to vector<6x5xi32>
    %578 = arith.subi %568, %577 : vector<6x5xi32>
    %c2_i32_257 = arith.constant 2 : i32
    %579 = vector.broadcast %c2_i32_257 : i32 to vector<6x5xi32>
    %580 = arith.muli %579, %578 : vector<6x5xi32>
    %c1_i32_258 = arith.constant 1 : i32
    %581 = vector.broadcast %c1_i32_258 : i32 to vector<6x5xi32>
    %582 = arith.addi %580, %581 : vector<6x5xi32>
    %583 = arith.cmpi eq, %567, %582 : vector<6x5xi32>
    %584 = arith.andi %576, %583 : vector<6x5xi1>
    %585 = arith.ori %574, %584 : vector<6x5xi1>
    %cst_259 = arith.constant 1.000000e+00 : f32
    %cst_260 = arith.constant 0.000000e+00 : f32
    %586 = vector.broadcast %cst_259 : f32 to vector<6x5xf32>
    %587 = vector.broadcast %cst_260 : f32 to vector<6x5xf32>
    %588 = arith.select %585, %586, %587 : vector<6x5xi1>, vector<6x5xf32>
    %c0_261 = arith.constant 0 : index
    %c0_262 = arith.constant 0 : index
    %589 = vector.load %arg5[%c0_261, %c0_262] : memref<16x324xf32, #tpu.memory_space<vmem>>, vector<16x6xf32>
    %cst_263 = arith.constant dense<0.000000e+00> : vector<16x5xf32>
    %590 = tpu.matmul %589, %588, %cst_263 {dimension_numbers = #tpu.dot_dimension_numbers<[1], [0], [0], [1], [0, 0, 1, 1], [], []>} : vector<16x6xf32>, vector<6x5xf32>, vector<16x5xf32> -> vector<16x5xf32>
    %c0_264 = arith.constant 0 : index
    %c6_265 = arith.constant 6 : index
    %591 = vector.load %arg5[%c0_264, %c6_265] : memref<16x324xf32, #tpu.memory_space<vmem>>, vector<16x6xf32>
    %cst_266 = arith.constant dense<0.000000e+00> : vector<16x5xf32>
    %592 = tpu.matmul %591, %588, %cst_266 {dimension_numbers = #tpu.dot_dimension_numbers<[1], [0], [0], [1], [0, 0, 1, 1], [], []>} : vector<16x6xf32>, vector<6x5xf32>, vector<16x5xf32> -> vector<16x5xf32>
    %c0_267 = arith.constant 0 : index
    %c12_268 = arith.constant 12 : index
    %593 = vector.load %arg5[%c0_267, %c12_268] : memref<16x324xf32, #tpu.memory_space<vmem>>, vector<16x6xf32>
    %cst_269 = arith.constant dense<0.000000e+00> : vector<16x5xf32>
    %594 = tpu.matmul %593, %588, %cst_269 {dimension_numbers = #tpu.dot_dimension_numbers<[1], [0], [0], [1], [0, 0, 1, 1], [], []>} : vector<16x6xf32>, vector<6x5xf32>, vector<16x5xf32> -> vector<16x5xf32>
    %c0_270 = arith.constant 0 : index
    %c18_271 = arith.constant 18 : index
    %595 = vector.load %arg5[%c0_270, %c18_271] : memref<16x324xf32, #tpu.memory_space<vmem>>, vector<16x6xf32>
    %cst_272 = arith.constant dense<0.000000e+00> : vector<16x5xf32>
    %596 = tpu.matmul %595, %588, %cst_272 {dimension_numbers = #tpu.dot_dimension_numbers<[1], [0], [0], [1], [0, 0, 1, 1], [], []>} : vector<16x6xf32>, vector<6x5xf32>, vector<16x5xf32> -> vector<16x5xf32>
    %c0_273 = arith.constant 0 : index
    %c24 = arith.constant 24 : index
    %597 = vector.load %arg5[%c0_273, %c24] : memref<16x324xf32, #tpu.memory_space<vmem>>, vector<16x6xf32>
    %cst_274 = arith.constant dense<0.000000e+00> : vector<16x5xf32>
    %598 = tpu.matmul %597, %588, %cst_274 {dimension_numbers = #tpu.dot_dimension_numbers<[1], [0], [0], [1], [0, 0, 1, 1], [], []>} : vector<16x6xf32>, vector<6x5xf32>, vector<16x5xf32> -> vector<16x5xf32>
    %cst_275 = arith.constant 0.000000e+00 : f32
    %599 = vector.broadcast %cst_275 : f32 to vector<16x16xf32>
    %c0_276 = arith.constant 0 : index
    %c0_277 = arith.constant 0 : index
    %600 = vector.load %arg5[%c0_276, %c0_277] : memref<16x324xf32, #tpu.memory_space<vmem>>, vector<16x16xf32>
    tpu.vector_store %arg5[%c0_276, %c0_277], %599 {strides = array<i32>} : memref<16x324xf32, #tpu.memory_space<vmem>>, vector<16x16xf32>,
    %601 = vector.extract_strided_slice %590 {offsets = [0, 0], sizes = [16, 2], strides = [1, 1]} : vector<16x5xf32> to vector<16x2xf32>
    %602 = vector.extract_strided_slice %590 {offsets = [0, 3], sizes = [16, 2], strides = [1, 1]} : vector<16x5xf32> to vector<16x2xf32>
    %603 = vector.extract_strided_slice %590 {offsets = [0, 1], sizes = [16, 2], strides = [1, 1]} : vector<16x5xf32> to vector<16x2xf32>
    %604 = vector.extract_strided_slice %592 {offsets = [0, 0], sizes = [16, 2], strides = [1, 1]} : vector<16x5xf32> to vector<16x2xf32>
    %605 = vector.extract_strided_slice %592 {offsets = [0, 3], sizes = [16, 2], strides = [1, 1]} : vector<16x5xf32> to vector<16x2xf32>
    %606 = vector.extract_strided_slice %592 {offsets = [0, 1], sizes = [16, 2], strides = [1, 1]} : vector<16x5xf32> to vector<16x2xf32>
    %607 = vector.extract_strided_slice %594 {offsets = [0, 0], sizes = [16, 2], strides = [1, 1]} : vector<16x5xf32> to vector<16x2xf32>
    %608 = vector.extract_strided_slice %594 {offsets = [0, 3], sizes = [16, 2], strides = [1, 1]} : vector<16x5xf32> to vector<16x2xf32>
    %609 = vector.extract_strided_slice %594 {offsets = [0, 1], sizes = [16, 2], strides = [1, 1]} : vector<16x5xf32> to vector<16x2xf32>
    %610 = tpu.concatenate %601, %602, %603, %604, %605, %606, %607, %608, %609 in 0 : vector<16x2xf32>, vector<16x2xf32>, vector<16x2xf32>, vector<16x2xf32>, vector<16x2xf32>, vector<16x2xf32>, vector<16x2xf32>, vector<16x2xf32>, vector<16x2xf32> -> vector<144x2xf32>
    %cst_278 = arith.constant dense<0.000000e+00> : vector<16x2xf32>
    %611 = tpu.matmul %566, %610, %cst_278 {dimension_numbers = #tpu.dot_dimension_numbers<[1], [0], [0], [1], [0, 0, 1, 1], [], []>} : vector<16x144xf32>, vector<144x2xf32>, vector<16x2xf32> -> vector<16x2xf32>
    %612 = vector.broadcast %565 : vector<16x1xf32> to vector<16x2xf32>
    %613 = arith.addf %611, %612 : vector<16x2xf32>
    %614 = arith.negf %613 : vector<16x2xf32>
    %615 = math.exp %614 : vector<16x2xf32>
    %cst_279 = arith.constant 1.000000e+00 : f32
    %616 = vector.broadcast %cst_279 : f32 to vector<16x2xf32>
    %617 = arith.addf %616, %615 : vector<16x2xf32>
    %618 = arith.divf %616, %617 : vector<16x2xf32>
    %619 = arith.mulf %613, %618 : vector<16x2xf32>
    %c0_280 = arith.constant 0 : index
    %c5_281 = arith.constant 5 : index
    %620 = vector.load %arg5[%c0_280, %c5_281] : memref<16x324xf32, #tpu.memory_space<vmem>>, vector<16x2xf32>
    tpu.vector_store %arg5[%c0_280, %c5_281], %619 {strides = array<i32>} : memref<16x324xf32, #tpu.memory_space<vmem>>, vector<16x2xf32>,
    %621 = vector.extract_strided_slice %594 {offsets = [0, 0], sizes = [16, 2], strides = [1, 1]} : vector<16x5xf32> to vector<16x2xf32>
    %622 = vector.extract_strided_slice %594 {offsets = [0, 3], sizes = [16, 2], strides = [1, 1]} : vector<16x5xf32> to vector<16x2xf32>
    %623 = vector.extract_strided_slice %594 {offsets = [0, 1], sizes = [16, 2], strides = [1, 1]} : vector<16x5xf32> to vector<16x2xf32>
    %624 = vector.extract_strided_slice %596 {offsets = [0, 0], sizes = [16, 2], strides = [1, 1]} : vector<16x5xf32> to vector<16x2xf32>
    %625 = vector.extract_strided_slice %596 {offsets = [0, 3], sizes = [16, 2], strides = [1, 1]} : vector<16x5xf32> to vector<16x2xf32>
    %626 = vector.extract_strided_slice %596 {offsets = [0, 1], sizes = [16, 2], strides = [1, 1]} : vector<16x5xf32> to vector<16x2xf32>
    %627 = vector.extract_strided_slice %598 {offsets = [0, 0], sizes = [16, 2], strides = [1, 1]} : vector<16x5xf32> to vector<16x2xf32>
    %628 = vector.extract_strided_slice %598 {offsets = [0, 3], sizes = [16, 2], strides = [1, 1]} : vector<16x5xf32> to vector<16x2xf32>
    %629 = vector.extract_strided_slice %598 {offsets = [0, 1], sizes = [16, 2], strides = [1, 1]} : vector<16x5xf32> to vector<16x2xf32>
    %630 = tpu.concatenate %621, %622, %623, %624, %625, %626, %627, %628, %629 in 0 : vector<16x2xf32>, vector<16x2xf32>, vector<16x2xf32>, vector<16x2xf32>, vector<16x2xf32>, vector<16x2xf32>, vector<16x2xf32>, vector<16x2xf32>, vector<16x2xf32> -> vector<144x2xf32>
    %cst_282 = arith.constant dense<0.000000e+00> : vector<16x2xf32>
    %631 = tpu.matmul %566, %630, %cst_282 {dimension_numbers = #tpu.dot_dimension_numbers<[1], [0], [0], [1], [0, 0, 1, 1], [], []>} : vector<16x144xf32>, vector<144x2xf32>, vector<16x2xf32> -> vector<16x2xf32>
    %632 = vector.broadcast %565 : vector<16x1xf32> to vector<16x2xf32>
    %633 = arith.addf %631, %632 : vector<16x2xf32>
    %634 = arith.negf %633 : vector<16x2xf32>
    %635 = math.exp %634 : vector<16x2xf32>
    %cst_283 = arith.constant 1.000000e+00 : f32
    %636 = vector.broadcast %cst_283 : f32 to vector<16x2xf32>
    %637 = arith.addf %636, %635 : vector<16x2xf32>
    %638 = arith.divf %636, %637 : vector<16x2xf32>
    %639 = arith.mulf %633, %638 : vector<16x2xf32>
    %c0_284 = arith.constant 0 : index
    %c9 = arith.constant 9 : index
    %640 = vector.load %arg5[%c0_284, %c9] : memref<16x324xf32, #tpu.memory_space<vmem>>, vector<16x2xf32>
    tpu.vector_store %arg5[%c0_284, %c9], %639 {strides = array<i32>} : memref<16x324xf32, #tpu.memory_space<vmem>>, vector<16x2xf32>,
    %c0_285 = arith.constant 0 : index
    %c8_286 = arith.constant 8 : index
    %641 = vector.load %arg3[%c0_285, %c8_286] : memref<16x10xf32, #tpu.memory_space<vmem>>, vector<16x1xf32>
    %c0_287 = arith.constant 0 : index
    %c2048 = arith.constant 2048 : index
    %642 = vector.load %arg2[%c0_287, %c2048] : memref<16x2560xf32, #tpu.memory_space<vmem>>, vector<16x16xf32>
    %c0_288 = arith.constant 0 : index
    %c5_289 = arith.constant 5 : index
    %643 = vector.load %arg5[%c0_288, %c5_289] : memref<16x324xf32, #tpu.memory_space<vmem>>, vector<16x6xf32>
    %cst_290 = arith.constant dense<0.000000e+00> : vector<16x6xf32>
    %644 = tpu.matmul %642, %643, %cst_290 {dimension_numbers = #tpu.dot_dimension_numbers<[1], [0], [0], [1], [0, 0, 1, 1], [], []>} : vector<16x16xf32>, vector<16x6xf32>, vector<16x6xf32> -> vector<16x6xf32>
    %645 = vector.broadcast %641 : vector<16x1xf32> to vector<16x6xf32>
    %646 = arith.addf %644, %645 : vector<16x6xf32>
    %647 = arith.negf %646 : vector<16x6xf32>
    %648 = math.exp %647 : vector<16x6xf32>
    %cst_291 = arith.constant 1.000000e+00 : f32
    %649 = vector.broadcast %cst_291 : f32 to vector<16x6xf32>
    %650 = arith.addf %649, %648 : vector<16x6xf32>
    %651 = arith.divf %649, %650 : vector<16x6xf32>
    %652 = arith.mulf %646, %651 : vector<16x6xf32>
    %653 = tpu.iota {dimensions = array<i32: 1>} : vector<1x6xi32>
    %c4_i32_292 = arith.constant 4 : i32
    %c0_i32_293 = arith.constant 0 : i32
    %654 = arith.cmpi eq, %c4_i32_292, %c0_i32_293 : i32
    %c1_i32_294 = arith.constant 1 : i32
    %655 = arith.select %654, %c1_i32_294, %c4_i32_292 : i32
    %656 = vector.broadcast %655 : i32 to vector<1x6xi32>
    %657 = arith.remsi %653, %656 : vector<1x6xi32>
    %c0_i32_295 = arith.constant 0 : i32
    %658 = vector.broadcast %c0_i32_295 : i32 to vector<1x6xi32>
    %659 = arith.cmpi ne, %657, %658 : vector<1x6xi32>
    %c0_i32_296 = arith.constant 0 : i32
    %660 = vector.broadcast %c0_i32_296 : i32 to vector<1x6xi32>
    %661 = arith.cmpi slt, %657, %660 : vector<1x6xi32>
    %c0_i32_297 = arith.constant 0 : i32
    %662 = arith.cmpi slt, %655, %c0_i32_297 : i32
    %663 = vector.broadcast %662 : i1 to vector<1x6xi1>
    %664 = vector.broadcast %663 : vector<1x6xi1> to vector<1x6xi1>
    %665 = arith.xori %661, %664 : vector<1x6xi1>
    %666 = arith.andi %665, %659 : vector<1x6xi1>
    %667 = vector.broadcast %655 : i32 to vector<1x6xi32>
    %668 = arith.addi %657, %667 : vector<1x6xi32>
    %669 = arith.select %666, %668, %657 : vector<1x6xi1>, vector<1x6xi32>
    %c2_i32_298 = arith.constant 2 : i32
    %670 = vector.broadcast %c2_i32_298 : i32 to vector<1x6xi32>
    %671 = arith.cmpi slt, %669, %670 : vector<1x6xi32>
    %cst_299 = arith.constant 0.000000e+00 : f32
    %672 = vector.shape_cast %671 : vector<1x6xi1> to vector<1x6xi1>
    %673 = vector.broadcast %672 : vector<1x6xi1> to vector<16x6xi1>
    %674 = vector.broadcast %cst_299 : f32 to vector<16x6xf32>
    %675 = arith.select %673, %652, %674 : vector<16x6xi1>, vector<16x6xf32>
    %c0_300 = arith.constant 0 : index
    %c5_301 = arith.constant 5 : index
    %676 = vector.load %arg5[%c0_300, %c5_301] : memref<16x324xf32, #tpu.memory_space<vmem>>, vector<16x6xf32>
    tpu.vector_store %arg5[%c0_300, %c5_301], %675 {strides = array<i32>} : memref<16x324xf32, #tpu.memory_space<vmem>>, vector<16x6xf32>,
    %c0_302 = arith.constant 0 : index
    %c9_303 = arith.constant 9 : index
    %677 = vector.load %arg3[%c0_302, %c9_303] : memref<16x10xf32, #tpu.memory_space<vmem>>, vector<16x1xf32>
    %c0_304 = arith.constant 0 : index
    %c2304 = arith.constant 2304 : index
    %678 = vector.load %arg2[%c0_304, %c2304] : memref<16x2560xf32, #tpu.memory_space<vmem>>, vector<16x144xf32>
    %c0_305 = arith.constant 0 : index
    %c0_306 = arith.constant 0 : index
    %679 = vector.load %arg5[%c0_305, %c0_306] : memref<16x324xf32, #tpu.memory_space<vmem>>, vector<16x6xf32>
    %c0_307 = arith.constant 0 : index
    %c1_308 = arith.constant 1 : index
    %680 = vector.load %arg5[%c0_307, %c1_308] : memref<16x324xf32, #tpu.memory_space<vmem>>, vector<16x6xf32>
    %c0_309 = arith.constant 0 : index
    %c2_310 = arith.constant 2 : index
    %681 = vector.load %arg5[%c0_309, %c2_310] : memref<16x324xf32, #tpu.memory_space<vmem>>, vector<16x6xf32>
    %c0_311 = arith.constant 0 : index
    %c4_312 = arith.constant 4 : index
    %682 = vector.load %arg5[%c0_311, %c4_312] : memref<16x324xf32, #tpu.memory_space<vmem>>, vector<16x6xf32>
    %c0_313 = arith.constant 0 : index
    %c5_314 = arith.constant 5 : index
    %683 = vector.load %arg5[%c0_313, %c5_314] : memref<16x324xf32, #tpu.memory_space<vmem>>, vector<16x6xf32>
    %c0_315 = arith.constant 0 : index
    %c6_316 = arith.constant 6 : index
    %684 = vector.load %arg5[%c0_315, %c6_316] : memref<16x324xf32, #tpu.memory_space<vmem>>, vector<16x6xf32>
    %c0_317 = arith.constant 0 : index
    %c8_318 = arith.constant 8 : index
    %685 = vector.load %arg5[%c0_317, %c8_318] : memref<16x324xf32, #tpu.memory_space<vmem>>, vector<16x6xf32>
    %c0_319 = arith.constant 0 : index
    %c9_320 = arith.constant 9 : index
    %686 = vector.load %arg5[%c0_319, %c9_320] : memref<16x324xf32, #tpu.memory_space<vmem>>, vector<16x6xf32>
    %c0_321 = arith.constant 0 : index
    %c10_322 = arith.constant 10 : index
    %687 = vector.load %arg5[%c0_321, %c10_322] : memref<16x324xf32, #tpu.memory_space<vmem>>, vector<16x6xf32>
    %688 = tpu.concatenate %679, %680, %681, %682, %683, %684, %685, %686, %687 in 0 : vector<16x6xf32>, vector<16x6xf32>, vector<16x6xf32>, vector<16x6xf32>, vector<16x6xf32>, vector<16x6xf32>, vector<16x6xf32>, vector<16x6xf32>, vector<16x6xf32> -> vector<144x6xf32>
    %cst_323 = arith.constant dense<0.000000e+00> : vector<16x6xf32>
    %689 = tpu.matmul %678, %688, %cst_323 {dimension_numbers = #tpu.dot_dimension_numbers<[1], [0], [0], [1], [0, 0, 1, 1], [], []>} : vector<16x144xf32>, vector<144x6xf32>, vector<16x6xf32> -> vector<16x6xf32>
    %690 = vector.broadcast %677 : vector<16x1xf32> to vector<16x6xf32>
    %691 = arith.addf %689, %690 : vector<16x6xf32>
    %692 = vector.extract_strided_slice %691 {offsets = [0, 0], sizes = [16, 2], strides = [1, 1]} : vector<16x6xf32> to vector<16x2xf32>
    %c0_324 = arith.constant 0 : index
    %c0_325 = arith.constant 0 : index
    %c0_326 = arith.constant 0 : index
    %693 = vector.load %arg4[%c0_324, %c0_325, %c0_326] : memref<1x16x4xf32, #tpu.memory_space<vmem>>, vector<1x16x2xf32>
    %694 = vector.shape_cast %693 : vector<1x16x2xf32> to vector<16x2xf32>
    %695 = vector.shape_cast %692 : vector<16x2xf32> to vector<1x16x2xf32>
    tpu.vector_store %arg4[%c0_324, %c0_325, %c0_326], %695 {strides = array<i32>} : memref<1x16x4xf32, #tpu.memory_space<vmem>>, vector<1x16x2xf32>,
    %696 = vector.extract_strided_slice %691 {offsets = [0, 4], sizes = [16, 2], strides = [1, 1]} : vector<16x6xf32> to vector<16x2xf32>
    %c0_327 = arith.constant 0 : index
    %c0_328 = arith.constant 0 : index
    %c2_329 = arith.constant 2 : index
    %697 = vector.load %arg4[%c0_327, %c0_328, %c2_329] : memref<1x16x4xf32, #tpu.memory_space<vmem>>, vector<1x16x2xf32>
    %698 = vector.shape_cast %697 : vector<1x16x2xf32> to vector<16x2xf32>
    %699 = vector.shape_cast %696 : vector<16x2xf32> to vector<1x16x2xf32>
    tpu.vector_store %arg4[%c0_327, %c0_328, %c2_329], %699 {strides = array<i32>} : memref<1x16x4xf32, #tpu.memory_space<vmem>>, vector<1x16x2xf32>,
    return
  }
  func.func @transform_0(%arg0: i32) -> (i32, i32, i32) {
    %c0_i32 = arith.constant 0 : i32
    %c0_i32_0 = arith.constant 0 : i32
    %c0_i32_1 = arith.constant 0 : i32
    return %arg0, %c0_i32, %c0_i32_0 : i32, i32, i32
  }
  func.func @transform_1(%arg0: i32) -> (i32, i32) {
    %c0_i32 = arith.constant 0 : i32
    %c0_i32_0 = arith.constant 0 : i32
    %c0_i32_1 = arith.constant 0 : i32
    return %c0_i32, %c0_i32_0 : i32, i32
  }
  func.func @transform_2(%arg0: i32) -> (i32, i32) {
    %c0_i32 = arith.constant 0 : i32
    %c0_i32_0 = arith.constant 0 : i32
    %c0_i32_1 = arith.constant 0 : i32
    return %c0_i32, %c0_i32_0 : i32, i32
  }
  func.func @transform_3(%arg0: i32) -> (i32, i32, i32) {
    %c0_i32 = arith.constant 0 : i32
    %c0_i32_0 = arith.constant 0 : i32
    %c0_i32_1 = arith.constant 0 : i32
    return %arg0, %c0_i32, %c0_i32_0 : i32, i32, i32
  }
}

</mosaic_0001>

<llo_original>
// kernel: cond_downsample_block.1
$region0: #{cond_downsample_block.1}
  #allocation0 [shape = 'u32[]', space=smem, size = 0x4, offset = 0x4, fixed_abs, tag = 'smem constant byte address 0x4 - core index']
  #allocation1 [shape = 'u32[144,128]{1,0:T(1,128)}', space=vmem, size = 0x12000, scoped, tag = 'internal scratch']
  #allocation2 [shape = 'f32[16,324]{1,0:T(8,128)}', space=vmem, size = 0x6000, scoped, tag = 'scratch operand']
  %s0 = inlined_call_operand.vmem [shape: f32[2,3,324], index: 0, kind: input, shape index: {}]
  %s1 = inlined_call_operand.vmem [shape: f32[16,2560], index: 1, kind: input, shape index: {}]
  %s2 = inlined_call_operand.vmem [shape: f32[16,10], index: 2, kind: input, shape index: {}]
  %s3 = inlined_call_operand.vmem [shape: f32[2,16,4], index: 3, kind: output, shape index: {}]
  %s4 = sld [smem:[#allocation0]]
  $region45: #{cond_downsample_block.1} parent=0
    _
  %s6 = ssub.s32 1, %s4
  %s7 = scalar_select 0, %s6, %s4
  loop: start=0, step=1, limit=4
  $region2: #{cond_downsample_block.1} parent=0 // loop_pre_header
    _
  $region3: #{cond_downsample_block.1} parent=0 // loop_header
    %s9 = sphi 0, %s13
    %p10 = scmp.ge.s32.totalorder %s9, 4
    %s19 = sphi 0, %s21
    %s22 = sphi 0, %s19
    %s23 = sphi 0, %s22
    %s39 = sphi 0, %s23
    %s43 = sphi 0, %s43
    %s45 = sphi 0, %s43
    %s46 = sphi 0, %s45
    %s60 = sphi 0, %s46
    %s64 = sphi 0, %s64
    %s66 = sphi 0, %s64
    %s67 = sphi 0, %s66
    %s81 = sphi 0, %s67
    %s87 = sphi 0, %s89
    %s90 = sphi 0, %s87
    %s91 = sphi 0, %s90
    %s107 = sphi 0, %s91
  $region4: #{cond_downsample_block.1} parent=0 // loop_header_branch
    %12 = sbr.rel (%p10) target = $region8
  $region5: #{cond_downsample_block.1} parent=0 // loop_body
    %s14 = ssub.s32 %s9, 1
    %s15 = ssub.s32 %s9, 2
    %s16 = sadd.s32 %s9, 1
    %s17 = ssub.s32 %s9, %s16
    %p18 = scmp.eq.s32.totalorder %s17, 0
    %s20 = sadd.s32 %s19, 1
    %s21 = scalar_select %p18, %s19, %s20
    %p24 = pneg %p18
    %p25 = scmp.eq.s32.totalorder %s9, 1
    %p26 = por %p24, %p25
    %p27 = scmp.ne.s32.totalorder %s19, %s22
    %p28 = scmp.eq.s32.totalorder %s9, 0
    %p29 = por %p27, %p28
    %p30 = scmp.ne.s32.totalorder %s19, %s22
    %p31 = scmp.eq.s32.totalorder %s14, 1
    %p32 = por %p30, %p31
    %p33 = scmp.ne.s32.totalorder %s22, %s23
    %p34 = scmp.eq.s32.totalorder %s14, 0
    %p35 = por %p33, %p34
    %p36 = scmp.ne.s32.totalorder %s22, %s23
    %p37 = scmp.eq.s32.totalorder %s15, 1
    %p38 = por %p36, %p37
    %p40 = scmp.ne.s32.totalorder %s23, %s39
    %p41 = scmp.eq.s32.totalorder %s15, 0
    %p42 = por %p40, %p41
    %s44 = sadd.s32 %s43, 1
    %p47 = scmp.eq.s32.totalorder %s9, 1
    %p48 = scmp.ne.s32.totalorder %s43, %s45
    %p49 = scmp.eq.s32.totalorder %s9, 0
    %p50 = por %p48, %p49
    %p51 = scmp.ne.s32.totalorder %s43, %s45
    %p52 = scmp.eq.s32.totalorder %s14, 1
    %p53 = por %p51, %p52
    %p54 = scmp.ne.s32.totalorder %s45, %s46
    %p55 = scmp.eq.s32.totalorder %s14, 0
    %p56 = por %p54, %p55
    %p57 = scmp.ne.s32.totalorder %s45, %s46
    %p58 = scmp.eq.s32.totalorder %s15, 1
    %p59 = por %p57, %p58
    %p61 = scmp.ne.s32.totalorder %s46, %s60
    %p62 = scmp.eq.s32.totalorder %s15, 0
    %p63 = por %p61, %p62
    %s65 = sadd.s32 %s64, 1
    %p68 = scmp.eq.s32.totalorder %s9, 1
    %p69 = scmp.ne.s32.totalorder %s64, %s66
    %p70 = scmp.eq.s32.totalorder %s9, 0
    %p71 = por %p69, %p70
    %p72 = scmp.ne.s32.totalorder %s64, %s66
    %p73 = scmp.eq.s32.totalorder %s14, 1
    %p74 = por %p72, %p73
    %p75 = scmp.ne.s32.totalorder %s66, %s67
    %p76 = scmp.eq.s32.totalorder %s14, 0
    %p77 = por %p75, %p76
    %p78 = scmp.ne.s32.totalorder %s66, %s67
    %p79 = scmp.eq.s32.totalorder %s15, 1
    %p80 = por %p78, %p79
    %p82 = scmp.ne.s32.totalorder %s67, %s81
    %p83 = scmp.eq.s32.totalorder %s15, 0
    %p84 = por %p82, %p83
    %s85 = ssub.s32 %s9, %s16
    %p86 = scmp.eq.s32.totalorder %s85, 0
    %s88 = sadd.s32 %s87, 1
    %s89 = scalar_select %p86, %s87, %s88
    %p92 = pneg %p86
    %p93 = scmp.eq.s32.totalorder %s9, 1
    %p94 = por %p92, %p93
    %p95 = scmp.ne.s32.totalorder %s87, %s90
    %p96 = scmp.eq.s32.totalorder %s9, 0
    %p97 = por %p95, %p96
    %p98 = scmp.ne.s32.totalorder %s87, %s90
    %p99 = scmp.eq.s32.totalorder %s14, 1
    %p100 = por %p98, %p99
    %p101 = scmp.ne.s32.totalorder %s90, %s91
    %p102 = scmp.eq.s32.totalorder %s14, 0
    %p103 = por %p101, %p102
    %p104 = scmp.ne.s32.totalorder %s90, %s91
    %p105 = scmp.eq.s32.totalorder %s15, 1
    %p106 = por %p104, %p105
    %p108 = scmp.ne.s32.totalorder %s91, %s107
    %p109 = scmp.eq.s32.totalorder %s15, 0
    %p110 = por %p108, %p109
    %p111 = scmp.le.s32.totalorder 1, %s9
    %p112 = scmp.lt.s32.totalorder %s9, 3
    %p113 = pnand %p111, %p112
    %p114 = pneg %p113
    // Predicated region
    $region9: #{cond_downsample_block.1} parent=5 // pred_check
      _
    $region10: #{cond_downsample_block.1} parent=5 // pred_check_branch
      %116 = sbr.rel (%p113) target = $region12
    $region11: #{cond_downsample_block.1} parent=5 // pred_region
      %s117 = ssub.s32 %s9, 1
      // Predicated region
      $region13: #{cond_downsample_block.1} parent=11 // pred_check
        %p118 = pneg %p56
      $region14: #{cond_downsample_block.1} parent=11 // pred_check_branch
        %120 = sbr.rel (%p118) target = $region16
      $region15: #{cond_downsample_block.1} parent=11 // pred_region
        _
      $region16: #{cond_downsample_block.1} parent=11 // pred_fallthru
        _
      // Predicated region
      $region17: #{cond_downsample_block.1} parent=11 // pred_check
        %p121 = pneg %p77
      $region18: #{cond_downsample_block.1} parent=11 // pred_check_branch
        %123 = sbr.rel (%p121) target = $region20
      $region19: #{cond_downsample_block.1} parent=11 // pred_region
        _
      $region20: #{cond_downsample_block.1} parent=11 // pred_fallthru
        _
    $region12: #{cond_downsample_block.1} parent=5 // pred_fallthru
      _
    %p124 = scmp.lt.s32.totalorder %s9, 2
    // Predicated region
    $region21: #{cond_downsample_block.1} parent=5 // pred_check
      %p125 = pneg %p124
    $region22: #{cond_downsample_block.1} parent=5 // pred_check_branch
      %127 = sbr.rel (%p125) target = $region24
    $region23: #{cond_downsample_block.1} parent=5 // pred_region
      // Predicated region
      $region25: #{cond_downsample_block.1} parent=23 // pred_check
        %p128 = pneg %p29
      $region26: #{cond_downsample_block.1} parent=23 // pred_check_branch
        %130 = sbr.rel (%p128) target = $region28
      $region27: #{cond_downsample_block.1} parent=23 // pred_region
        %p131 = scmp.lt.s32.totalorder %s9, 1
        %s132 = scalar_select %p131, %s9, 1
        %s133 = smul.addr %s132, 3
        %s134 = smul.addr %s133, 4
        %s135 = scalar_lea.vmem %s0, %s134
      $region28: #{cond_downsample_block.1} parent=23 // pred_fallthru
        _
    $region24: #{cond_downsample_block.1} parent=5 // pred_fallthru
      _
    %p136 = scmp.le.s32.totalorder 1, %s9
    %p137 = scmp.lt.s32.totalorder %s9, 3
    %p138 = pnand %p136, %p137
    %p139 = pneg %p138
    // Predicated region
    $region29: #{cond_downsample_block.1} parent=5 // pred_check
      _
    $region30: #{cond_downsample_block.1} parent=5 // pred_check_branch
      %141 = sbr.rel (%p138) target = $region32
    $region31: #{cond_downsample_block.1} parent=5 // pred_region
      %s142 = ssub.s32 %s9, 1
      %p143 = scmp.lt.s32.totalorder %s14, 1
      %s144 = scalar_select %p143, %s14, 1
      %s145 = smul.addr %s144, 3
      %s146 = smul.addr %s145, 4
      %s147 = scalar_lea.vmem %s0, %s146
      %p148 = pneg %p35
      %p149 = pneg %p32
      %p150 = pneg %p56
      %p151 = pneg %p53
      %p152 = pneg %p77
      %p153 = pneg %p74
      %p154 = pneg %p103
      %p155 = pneg %p100
      %p156 = scmp.lt.s32.totalorder %s14, 1
      %s157 = scalar_select %p156, %s14, 1
      %s158 = smul.addr %s157, 2
      %s159 = smul.addr %s158, 8
      %s160 = scalar_lea.vmem %s3, %s159
      %p161 = scmp.lt.s32.totalorder %s14, 1
      %s162 = scalar_select %p161, %s14, 1
      %s163 = smul.addr %s162, 3
      %s164 = smul.addr %s163, 4
      %s165 = scalar_lea.vmem %s0, %s164
      %p166 = scmp.lt.s32.totalorder %s14, 1
      %s167 = scalar_select %p166, %s14, 1
      %s168 = smul.addr %s167, 2
      %s169 = smul.addr %s168, 8
      %s170 = scalar_lea.vmem %s3, %s169
      %171 = vst [vmem:[#allocation2] sm:$0xff] 0.0
      %172 = vst [vmem:[#allocation2 + $0x8] sm:$0xff] 0.0
      %vm173 = vcmask 556032
      %174 = vst.msk [vmem:[#allocation2 + $0x10] sm:$0xff] %vm173, 0.0
      %175 = vst [vmem:[#allocation2 + $0x18] sm:$0xff] 0.0
      %176 = vst [vmem:[#allocation2 + $0x20] sm:$0xff] 0.0
      %177 = vst.msk [vmem:[#allocation2 + $0x28] sm:$0xff] %vm173, 0.0
      %v178 = vld [vmem:[%s165] sm:$0x77]
      %v179 = vld [vmem:[%s165 + $0x8] sm:$0x7]
      %v181 = vcombine.high %v178, %v178
      %183 = vst [vmem:[#allocation2] sm:$0x7] %v178
      %184 = vst [vmem:[#allocation2 + $0x8] sm:$0x7] %v181
      %vm185 = vcmask 550912
      %186 = vst.msk [vmem:[#allocation2 + $0x10] sm:$0x7] %vm185, %v179
      %v187 = vld [vmem:[%s2] sm:$0xff]
      %v188 = vld [vmem:[%s2 + $0x8] sm:$0xff]
      %v189 = vld [vmem:[%s1] sm:$0xff]
      %v190 = vld [vmem:[%s1 + $0x8] sm:$0xff]
      %v191 = vld [vmem:[%s1 + $0xa0] sm:$0xff]
      %v192 = vld [vmem:[%s1 + $0xa8] sm:$0xff]
      %v193 = vld [vmem:[#allocation2] sm:$0xff]
      %v194 = vld [vmem:[#allocation2 + $0x8] sm:$0xff]
      %v195 = vld [vmem:[#allocation2 + $0x10] sm:$0xff]
      %v196 = vld [vmem:[#allocation2 + $0x18] sm:$0xff]
      %v197 = vld [vmem:[#allocation2 + $0x20] sm:$0xff]
      %v198 = vld [vmem:[#allocation2 + $0x28] sm:$0xff]
      %205 = vrot.lane.b32.xlu0 %v193, 127
      %v206 = vpop.permute.xlu0 %205
      %207 = vrot.lane.b32.xlu0 %v194, 127
      %v208 = vpop.permute.xlu0 %207
      %209 = vrot.lane.b32.xlu0 %v195, 127
      %v210 = vpop.permute.xlu0 %209
      %211 = vrot.lane.b32.xlu0 %v196, 127
      %v212 = vpop.permute.xlu0 %211
      %213 = vrot.lane.b32.xlu0 %v197, 127
      %v214 = vpop.permute.xlu0 %213
      %215 = vrot.lane.b32.xlu0 %v198, 127
      %v216 = vpop.permute.xlu0 %215
      %vm217 = vcmask 1039360
      %v218 = vsel %vm217, %v206, %v208
      %v219 = vsel %vm217, %v208, %v210
      %v220 = vsel %vm217, %v212, %v214
      %v221 = vsel %vm217, %v214, %v216
      %228 = vrot.lane.b32.xlu0 %v193, 126
      %v229 = vpop.permute.xlu0 %228
      %230 = vrot.lane.b32.xlu0 %v194, 126
      %v231 = vpop.permute.xlu0 %230
      %232 = vrot.lane.b32.xlu0 %v195, 126
      %v233 = vpop.permute.xlu0 %232
      %234 = vrot.lane.b32.xlu0 %v196, 126
      %v235 = vpop.permute.xlu0 %234
      %236 = vrot.lane.b32.xlu0 %v197, 126
      %v237 = vpop.permute.xlu0 %236
      %238 = vrot.lane.b32.xlu0 %v198, 126
      %v239 = vpop.permute.xlu0 %238
      %vm240 = vcmask 1031168
      %v241 = vsel %vm240, %v229, %v231
      %v242 = vsel %vm240, %v231, %v233
      %v243 = vsel %vm240, %v235, %v237
      %v244 = vsel %vm240, %v237, %v239
      %251 = vrot.lane.b32.xlu0 %v193, 110
      %v252 = vpop.permute.xlu0 %251
      %253 = vrot.lane.b32.xlu0 %v194, 110
      %v254 = vpop.permute.xlu0 %253
      %255 = vrot.lane.b32.xlu0 %v195, 110
      %v256 = vpop.permute.xlu0 %255
      %257 = vrot.lane.b32.xlu0 %v196, 110
      %v258 = vpop.permute.xlu0 %257
      %259 = vrot.lane.b32.xlu0 %v197, 110
      %v260 = vpop.permute.xlu0 %259
      %261 = vrot.lane.b32.xlu0 %v198, 110
      %v262 = vpop.permute.xlu0 %261
      %vm263 = vcmask 900096
      %v264 = vsel %vm263, %v252, %v254
      %v265 = vsel %vm263, %v254, %v256
      %v266 = vsel %vm263, %v258, %v260
      %v267 = vsel %vm263, %v260, %v262
      %274 = vrot.lane.b32.xlu0 %v193, 109
      %v275 = vpop.permute.xlu0 %274
      %276 = vrot.lane.b32.xlu0 %v194, 109
      %v277 = vpop.permute.xlu0 %276
      %278 = vrot.lane.b32.xlu0 %v195, 109
      %v279 = vpop.permute.xlu0 %278
      %280 = vrot.lane.b32.xlu0 %v196, 109
      %v281 = vpop.permute.xlu0 %280
      %282 = vrot.lane.b32.xlu0 %v197, 109
      %v283 = vpop.permute.xlu0 %282
      %284 = vrot.lane.b32.xlu0 %v198, 109
      %v285 = vpop.permute.xlu0 %284
      %vm286 = vcmask 891904
      %v287 = vsel %vm286, %v275, %v277
      %v288 = vsel %vm286, %v277, %v279
      %v289 = vsel %vm286, %v281, %v283
      %v290 = vsel %vm286, %v283, %v285
      %297 = vrot.lane.b32.xlu0 %v193, 108
      %v298 = vpop.permute.xlu0 %297
      %299 = vrot.lane.b32.xlu0 %v194, 108
      %v300 = vpop.permute.xlu0 %299
      %301 = vrot.lane.b32.xlu0 %v195, 108
      %v302 = vpop.permute.xlu0 %301
      %303 = vrot.lane.b32.xlu0 %v196, 108
      %v304 = vpop.permute.xlu0 %303
      %305 = vrot.lane.b32.xlu0 %v197, 108
      %v306 = vpop.permute.xlu0 %305
      %307 = vrot.lane.b32.xlu0 %v198, 108
      %v308 = vpop.permute.xlu0 %307
      %vm309 = vcmask 883712
      %v310 = vsel %vm309, %v298, %v300
      %v311 = vsel %vm309, %v300, %v302
      %v312 = vsel %vm309, %v304, %v306
      %v313 = vsel %vm309, %v306, %v308
      %320 = vrot.lane.b32.xlu0 %v193, 92
      %v321 = vpop.permute.xlu0 %320
      %322 = vrot.lane.b32.xlu0 %v194, 92
      %v323 = vpop.permute.xlu0 %322
      %324 = vrot.lane.b32.xlu0 %v195, 92
      %v325 = vpop.permute.xlu0 %324
      %326 = vrot.lane.b32.xlu0 %v196, 92
      %v327 = vpop.permute.xlu0 %326
      %328 = vrot.lane.b32.xlu0 %v197, 92
      %v329 = vpop.permute.xlu0 %328
      %330 = vrot.lane.b32.xlu0 %v198, 92
      %v331 = vpop.permute.xlu0 %330
      %vm332 = vcmask 752640
      %v333 = vsel %vm332, %v321, %v323
      %v334 = vsel %vm332, %v323, %v325
      %v335 = vsel %vm332, %v327, %v329
      %v336 = vsel %vm332, %v329, %v331
      %343 = vrot.lane.b32.xlu0 %v193, 91
      %v344 = vpop.permute.xlu0 %343
      %345 = vrot.lane.b32.xlu0 %v194, 91
      %v346 = vpop.permute.xlu0 %345
      %347 = vrot.lane.b32.xlu0 %v195, 91
      %v348 = vpop.permute.xlu0 %347
      %349 = vrot.lane.b32.xlu0 %v196, 91
      %v350 = vpop.permute.xlu0 %349
      %351 = vrot.lane.b32.xlu0 %v197, 91
      %v352 = vpop.permute.xlu0 %351
      %353 = vrot.lane.b32.xlu0 %v198, 91
      %v354 = vpop.permute.xlu0 %353
      %vm355 = vcmask 744448
      %v356 = vsel %vm355, %v344, %v346
      %v357 = vsel %vm355, %v346, %v348
      %v358 = vsel %vm355, %v350, %v352
      %v359 = vsel %vm355, %v352, %v354
      %366 = vrot.lane.b32.xlu0 %v193, 90
      %v367 = vpop.permute.xlu0 %366
      %368 = vrot.lane.b32.xlu0 %v194, 90
      %v369 = vpop.permute.xlu0 %368
      %370 = vrot.lane.b32.xlu0 %v195, 90
      %v371 = vpop.permute.xlu0 %370
      %372 = vrot.lane.b32.xlu0 %v196, 90
      %v373 = vpop.permute.xlu0 %372
      %374 = vrot.lane.b32.xlu0 %v197, 90
      %v375 = vpop.permute.xlu0 %374
      %376 = vrot.lane.b32.xlu0 %v198, 90
      %v377 = vpop.permute.xlu0 %376
      %vm378 = vcmask 736256
      %v379 = vsel %vm378, %v367, %v369
      %v380 = vsel %vm378, %v369, %v371
      %v381 = vsel %vm378, %v373, %v375
      %v382 = vsel %vm378, %v375, %v377
      %390 = vset.pattern.permute.xlu0 0
      %391 = vperm.xlu0 %390, %v187
      %v392 = vpop.permute.xlu0 %391
      %395 = vset.pattern.permute.xlu0 0
      %396 = vperm.xlu0 %395, %v188
      %v397 = vpop.permute.xlu0 %396
      %vm399 = vcmask 130048
      %v401 = vsel %vm399, %v190, 0
      %v404 = vsel %vm399, %v192, 0
      %406 = vmatprep.subr.mxu0 %v194
      %407 = vmatpush1.msra.mxu0 %v193
      %408 = vmatprep.subr.mxu0 %v197
      %409 = vmatpush1.msra.mxu0 %v196
      %410 = vmatprep.subr.mxu0 %v219
      %411 = vmatpush1.msra.mxu0 %v218
      %412 = vmatprep.subr.mxu0 %v221
      %413 = vmatpush1.msra.mxu0 %v220
      %414 = vmatprep.subr.mxu0 %v242
      %415 = vmatpush1.msra.mxu0 %v241
      %416 = vmatprep.subr.mxu0 %v244
      %417 = vmatpush1.msra.mxu0 %v243
      %418 = vmatprep.subr.mxu0 %v265
      %419 = vmatpush1.msra.mxu0 %v264
      %420 = vmatprep.subr.mxu0 %v267
      %421 = vmatpush1.msra.mxu0 %v266
      %422 = vmatprep.subr.mxu0 %v288
      %423 = vmatpush1.msra.mxu0 %v287
      %424 = vmatprep.subr.mxu0 %v290
      %425 = vmatpush1.msra.mxu0 %v289
      %426 = vmatprep.subr.mxu0 %v311
      %427 = vmatpush1.msra.mxu0 %v310
      %428 = vmatprep.subr.mxu0 %v313
      %429 = vmatpush1.msra.mxu0 %v312
      %430 = vmatprep.subr.mxu0 %v334
      %431 = vmatpush1.msra.mxu0 %v333
      %432 = vmatprep.subr.mxu0 %v336
      %433 = vmatpush1.msra.mxu0 %v335
      %434 = vmatprep.subr.mxu0 %v357
      %435 = vmatpush1.msra.mxu0 %v356
      %436 = vmatprep.subr.mxu0 %v359
      %437 = vmatpush1.msra.mxu0 %v358
      %438 = vmatprep.subr.mxu0 %v380
      %439 = vmatpush1.msra.mxu0 %v379
      %440 = vmatprep.subr.mxu0 %v382
      %441 = vmatpush1.msra.mxu0 %v381
      %442 = vmatprep.subr.mxu0 0.0
      %443 = vmatpush1.msra.mxu0 0.0
      %444 = vmatprep.subr.mxu0 0.0
      %445 = vmatpush1.msra.mxu0 0.0
      %446 = vmatprep.subr.mxu0 0.0
      %447 = vmatpush1.msra.mxu0 0.0
      %448 = vmatprep.subr.mxu0 0.0
      %449 = vmatpush1.msra.mxu0 0.0
      %450 = vmatprep.subr.mxu0 0.0
      %451 = vmatpush1.msra.mxu0 0.0
      %452 = vmatprep.subr.mxu0 0.0
      %453 = vmatpush1.msra.mxu0 0.0
      %454 = vmatprep.subr.mxu0 0.0
      %455 = vmatpush1.msra.mxu0 0.0
      %456 = vmatprep.subr.mxu0 0.0
      %457 = vmatpush1.msra.mxu0 0.0
      %458 = vmatprep.subr.mxu0 0.0
      %459 = vmatpush1.msra.mxu0 0.0
      %460 = vmatprep.subr.mxu0 0.0
      %461 = vmatpush1.msra.mxu0 0.0
      %462 = vmatprep.subr.mxu0 0.0
      %463 = vmatpush1.msra.mxu0 0.0
      %464 = vmatprep.subr.mxu0 0.0
      %465 = vmatpush1.msra.mxu0 0.0
      %466 = vmatprep.subr.mxu0 0.0
      %467 = vmatpush1.msra.mxu0 0.0
      %468 = vmatprep.subr.mxu0 0.0
      %469 = vmatpush1.msra.mxu0 0.0
      %470 = vmatprep.mubr.f32.mxu0 %v401
      %471 = vmatmul.mubr.f32.gmra.mrb[0].mxu0 %v189
      %v472 = vpop.f32.mrb[0].mxu0
      %v473 = vadd.f32 %v392, %v472
      %v474 = vpop.f32.mrb[0].mxu0
      %v475 = vadd.f32 %v392, %v474
      %476 = vmatprep.mubr.f32.mxu0 %v404
      %477 = vmatmul.mubr.f32.gmra.mrb[0].mxu0 %v191
      %v478 = vpop.f32.mrb[0].mxu0
      %v479 = vadd.f32 %v397, %v478
      %v480 = vpop.f32.mrb[0].mxu0
      %v481 = vadd.f32 %v397, %v480
      %482 = vdwg.mxu0
      %483 = vmatprep.subr.mxu0 0.0
      %484 = vmatpush1.msra.mxu0 %v195
      %485 = vmatprep.subr.mxu0 0.0
      %486 = vmatpush1.msra.mxu0 %v198
      %487 = vmatprep.subr.mxu0 0.0
      %488 = vmatpush1.msra.mxu0 %v210
      %489 = vmatprep.subr.mxu0 0.0
      %490 = vmatpush1.msra.mxu0 %v216
      %491 = vmatprep.subr.mxu0 0.0
      %492 = vmatpush1.msra.mxu0 %v233
      %493 = vmatprep.subr.mxu0 0.0
      %494 = vmatpush1.msra.mxu0 %v239
      %495 = vmatprep.subr.mxu0 0.0
      %496 = vmatpush1.msra.mxu0 %v256
      %497 = vmatprep.subr.mxu0 0.0
      %498 = vmatpush1.msra.mxu0 %v262
      %499 = vmatprep.subr.mxu0 0.0
      %500 = vmatpush1.msra.mxu0 %v279
      %501 = vmatprep.subr.mxu0 0.0
      %502 = vmatpush1.msra.mxu0 %v285
      %503 = vmatprep.subr.mxu0 0.0
      %504 = vmatpush1.msra.mxu0 %v302
      %505 = vmatprep.subr.mxu0 0.0
      %506 = vmatpush1.msra.mxu0 %v308
      %507 = vmatprep.subr.mxu0 0.0
      %508 = vmatpush1.msra.mxu0 %v325
      %509 = vmatprep.subr.mxu0 0.0
      %510 = vmatpush1.msra.mxu0 %v331
      %511 = vmatprep.subr.mxu0 0.0
      %512 = vmatpush1.msra.mxu0 %v348
      %513 = vmatprep.subr.mxu0 0.0
      %514 = vmatpush1.msra.mxu0 %v354
      %515 = vmatprep.subr.mxu0 0.0
      %516 = vmatpush1.msra.mxu0 %v371
      %517 = vmatprep.subr.mxu0 0.0
      %518 = vmatpush1.msra.mxu0 %v377
      %519 = vmatprep.subr.mxu0 0.0
      %520 = vmatpush1.msra.mxu0 0.0
      %521 = vmatprep.subr.mxu0 0.0
      %522 = vmatpush1.msra.mxu0 0.0
      %523 = vmatprep.subr.mxu0 0.0
      %524 = vmatpush1.msra.mxu0 0.0
      %525 = vmatprep.subr.mxu0 0.0
      %526 = vmatpush1.msra.mxu0 0.0
      %527 = vmatprep.subr.mxu0 0.0
      %528 = vmatpush1.msra.mxu0 0.0
      %529 = vmatprep.subr.mxu0 0.0
      %530 = vmatpush1.msra.mxu0 0.0
      %531 = vmatprep.subr.mxu0 0.0
      %532 = vmatpush1.msra.mxu0 0.0
      %533 = vmatprep.subr.mxu0 0.0
      %534 = vmatpush1.msra.mxu0 0.0
      %535 = vmatprep.subr.mxu0 0.0
      %536 = vmatpush1.msra.mxu0 0.0
      %537 = vmatprep.subr.mxu0 0.0
      %538 = vmatpush1.msra.mxu0 0.0
      %539 = vmatprep.subr.mxu0 0.0
      %540 = vmatpush1.msra.mxu0 0.0
      %541 = vmatprep.subr.mxu0 0.0
      %542 = vmatpush1.msra.mxu0 0.0
      %543 = vmatprep.subr.mxu0 0.0
      %544 = vmatpush1.msra.mxu0 0.0
      %545 = vmatprep.subr.mxu0 0.0
      %546 = vmatpush1.msra.mxu0 0.0
      %547 = vmatprep.mubr.f32.mxu0 %v401
      %548 = vmatmul.mubr.f32.gmra.mrb[0].mxu0 %v189
      %v549 = vpop.f32.mrb[0].mxu0
      %v550 = vadd.f32 %v392, %v549
      %v551 = vpop.f32.mrb[0].mxu0
      %552 = vmatprep.mubr.f32.mxu0 %v404
      %553 = vmatmul.mubr.f32.gmra.mrb[0].mxu0 %v191
      %v554 = vpop.f32.mrb[0].mxu0
      %v555 = vadd.f32 %v397, %v554
      %v556 = vpop.f32.mrb[0].mxu0
      %557 = vdwg.mxu0
      %v558 = vxor.u32 %v473, 2147483648
      %v559 = vxor.u32 %v475, 2147483648
      %v560 = vxor.u32 %v550, 2147483648
      %v561 = vxor.u32 %v479, 2147483648
      %v562 = vxor.u32 %v481, 2147483648
      %v563 = vxor.u32 %v555, 2147483648
      %v564 = vmul.f32 %v558, 1.442695
      %v565 = vpow.pop %v564
      %v566 = vmul.f32 %v559, 1.442695
      %v567 = vpow.pop %v566
      %v568 = vmul.f32 %v560, 1.442695
      %v569 = vpow.pop %v568
      %v570 = vmul.f32 %v561, 1.442695
      %v571 = vpow.pop %v570
      %v572 = vmul.f32 %v562, 1.442695
      %v573 = vpow.pop %v572
      %v574 = vmul.f32 %v563, 1.442695
      %v575 = vpow.pop %v574
      %v576 = vadd.f32 %v565, 1.0
      %v577 = vadd.f32 %v567, 1.0
      %v578 = vadd.f32 %v569, 1.0
      %v579 = vadd.f32 %v571, 1.0
      %v580 = vadd.f32 %v573, 1.0
      %v581 = vadd.f32 %v575, 1.0
      %v582 = vrcp.pop %v576
      %v583 = vmul.f32 1.0, %v582
      %v584 = vrcp.pop %v577
      %v585 = vmul.f32 1.0, %v584
      %v586 = vrcp.pop %v578
      %v587 = vmul.f32 1.0, %v586
      %v588 = vrcp.pop %v579
      %v589 = vmul.f32 1.0, %v588
      %v590 = vrcp.pop %v580
      %v591 = vmul.f32 1.0, %v590
      %v592 = vrcp.pop %v581
      %v593 = vmul.f32 1.0, %v592
      %v594 = vmul.f32 %v473, %v583
      %v595 = vmul.f32 %v475, %v585
      %v596 = vmul.f32 %v550, %v587
      %v597 = vmul.f32 %v479, %v589
      %v598 = vmul.f32 %v481, %v591
      %v599 = vmul.f32 %v555, %v593
      %v600 = vlaneseq
      %v601 = vand.u32 %v600, 127
      %v602 = vadd.s32 %v601, 128
      %v603 = vadd.s32 %v601, 256
      %vm604 = vcmp.lt.s32.totalorder %v601, 0
      %v605 = vsub.s32 0, %v601
      %v606 = vsel %vm604, %v605, %v601
      %v607 = vmul.u32.u64.compose %v606, 3817748708
      %v608 = vextract.low.u32 %v607
      %v609 = vextract.high.u32 %v607
      %v610 = vshrl.u32 %v609, 4
      %v611 = vmul.u32 %v610, 18
      %v612 = vsub.s32 %v606, %v611
      %v613 = vsub.s32 0, %v612
      %v614 = vsel %vm604, %v613, %v612
      %vm615 = vcmp.lt.s32.totalorder %v602, 0
      %v616 = vsub.s32 0, %v602
      %v617 = vsel %vm615, %v616, %v602
      %v618 = vmul.u32.u64.compose %v617, 3817748708
      %v619 = vextract.low.u32 %v618
      %v620 = vextract.high.u32 %v618
      %v621 = vshrl.u32 %v620, 4
      %v622 = vmul.u32 %v621, 18
      %v623 = vsub.s32 %v617, %v622
      %v624 = vsub.s32 0, %v623
      %v625 = vsel %vm615, %v624, %v623
      %vm626 = vcmp.lt.s32.totalorder %v603, 0
      %v627 = vsub.s32 0, %v603
      %v628 = vsel %vm626, %v627, %v603
      %v629 = vmul.u32.u64.compose %v628, 3817748708
      %v630 = vextract.low.u32 %v629
      %v631 = vextract.high.u32 %v629
      %v632 = vshrl.u32 %v631, 4
      %v633 = vmul.u32 %v632, 18
      %v634 = vsub.s32 %v628, %v633
      %v635 = vsub.s32 0, %v634
      %v636 = vsel %vm626, %v635, %v634
      %vm637 = vcmp.ne.s32.totalorder %v614, 0
      %vm638 = vcmp.ne.s32.totalorder %v625, 0
      %vm639 = vcmp.ne.s32.totalorder %v636, 0
      %vm640 = vcmp.lt.s32.totalorder %v614, 0
      %vm641 = vcmp.lt.s32.totalorder %v625, 0
      %vm642 = vcmp.lt.s32.totalorder %v636, 0
      %vm643 = vmand %vm640, %vm637
      %vm644 = vmand %vm641, %vm638
      %vm645 = vmand %vm642, %vm639
      %v646 = vadd.s32 %v614, 18
      %v647 = vadd.s32 %v625, 18
      %v648 = vadd.s32 %v636, 18
      %v649 = vsel %vm643, %v646, %v614
      %v650 = vsel %vm644, %v647, %v625
      %v651 = vsel %vm645, %v648, %v636
      %vm652 = vcmp.lt.s32.totalorder %v649, 16
      %vm653 = vcmp.lt.s32.totalorder %v650, 16
      %vm654 = vcmp.lt.s32.totalorder %v651, 16
      %v655 = vsel %vm652, 1, 0
      %v656 = vsel %vm653, 1, 0
      %v657 = vsel %vm654, 1, 0
      %vm658 = vcmp.eq.s32.totalorder %v655, 1
      %vm659 = vcmp.eq.s32.totalorder %v656, 1
      %vm660 = vcmp.eq.s32.totalorder %v657, 1
      %v661 = vsel %vm658, %v594, 0.0
      %v662 = vsel %vm659, %v595, 0.0
      %v663 = vsel %vm660, %v596, 0.0
      %v664 = vsel %vm658, %v597, 0.0
      %v665 = vsel %vm659, %v598, 0.0
      %v666 = vsel %vm660, %v599, 0.0
      %673 = vrot.lane.b32.xlu0 %v661, 19
      %v674 = vpop.permute.xlu0 %673
      %675 = vrot.lane.b32.xlu0 %v662, 19
      %v676 = vpop.permute.xlu0 %675
      %677 = vrot.lane.b32.xlu0 %v663, 19
      %v678 = vpop.permute.xlu0 %677
      %679 = vrot.lane.b32.xlu0 %v664, 19
      %v680 = vpop.permute.xlu0 %679
      %681 = vrot.lane.b32.xlu0 %v665, 19
      %v682 = vpop.permute.xlu0 %681
      %683 = vrot.lane.b32.xlu0 %v666, 19
      %v684 = vpop.permute.xlu0 %683
      %vm685 = vcmask 154624
      %v686 = vsel %vm685, %v674, %v676
      %v687 = vsel %vm685, %v676, %v678
      %v688 = vsel %vm685, %v680, %v682
      %v689 = vsel %vm685, %v682, %v684
      %vm696 = vcmask 1047704
      %697 = vst.msk [vmem:[#allocation2] sm:$0xff] %vm696, %v674
      %698 = vst [vmem:[#allocation2 + $0x8] sm:$0xff] %v686
      %vm699 = vcmask 400384
      %700 = vst.msk [vmem:[#allocation2 + $0x10] sm:$0xff] %vm699, %v687
      %701 = vst.msk [vmem:[#allocation2 + $0x18] sm:$0xff] %vm696, %v680
      %702 = vst [vmem:[#allocation2 + $0x20] sm:$0xff] %v688
      %703 = vst.msk [vmem:[#allocation2 + $0x28] sm:$0xff] %vm699, %v689
      %v704 = vld [vmem:[%s2] sm:$0xff]
      %v705 = vld [vmem:[%s2 + $0x8] sm:$0xff]
      %v706 = vld [vmem:[%s1 + $0x10] sm:$0xff]
      %v707 = vld [vmem:[%s1 + $0xb0] sm:$0xff]
      %v708 = vld [vmem:[#allocation2] sm:$0xff]
      %v709 = vld [vmem:[#allocation2 + $0x8] sm:$0xff]
      %v710 = vld [vmem:[#allocation2 + $0x10] sm:$0xff]
      %v711 = vld [vmem:[#allocation2 + $0x18] sm:$0xff]
      %v712 = vld [vmem:[#allocation2 + $0x20] sm:$0xff]
      %v713 = vld [vmem:[#allocation2 + $0x28] sm:$0xff]
      %715 = vset.pattern.permute.xlu0 1
      %716 = vperm.xlu0 %715, %v704
      %v717 = vpop.permute.xlu0 %716
      %720 = vset.pattern.permute.xlu0 1
      %721 = vperm.xlu0 %720, %v705
      %v722 = vpop.permute.xlu0 %721
      %730 = vrot.lane.b32.xlu0 %v708, 109
      %v731 = vpop.permute.xlu0 %730
      %732 = vrot.lane.b32.xlu0 %v709, 109
      %v733 = vpop.permute.xlu0 %732
      %734 = vrot.lane.b32.xlu0 %v710, 109
      %v735 = vpop.permute.xlu0 %734
      %736 = vrot.lane.b32.xlu0 %v711, 109
      %v737 = vpop.permute.xlu0 %736
      %738 = vrot.lane.b32.xlu0 %v712, 109
      %v739 = vpop.permute.xlu0 %738
      %740 = vrot.lane.b32.xlu0 %v713, 109
      %v741 = vpop.permute.xlu0 %740
      %v742 = vsel %vm286, %v731, %v733
      %v743 = vsel %vm286, %v733, %v735
      %v744 = vsel %vm286, %v737, %v739
      %v745 = vsel %vm286, %v739, %v741
      %v753 = vsel %vm399, %v706, 0
      %v756 = vsel %vm399, %v707, 0
      %758 = vmatprep.subr.mxu0 %v743
      %759 = vmatpush1.msra.mxu0 %v742
      %760 = vmatprep.subr.mxu0 %v745
      %761 = vmatpush1.msra.mxu0 %v744
      %762 = vmatprep.subr.mxu0 0.0
      %763 = vmatpush1.msra.mxu0 0.0
      %764 = vmatprep.subr.mxu0 0.0
      %765 = vmatpush1.msra.mxu0 0.0
      %766 = vmatprep.subr.mxu0 0.0
      %767 = vmatpush1.msra.mxu0 0.0
      %768 = vmatprep.subr.mxu0 0.0
      %769 = vmatpush1.msra.mxu0 0.0
      %770 = vmatprep.subr.mxu0 0.0
      %771 = vmatpush1.msra.mxu0 0.0
      %772 = vmatprep.subr.mxu0 0.0
      %773 = vmatpush1.msra.mxu0 0.0
      %774 = vmatprep.subr.mxu0 0.0
      %775 = vmatpush1.msra.mxu0 0.0
      %776 = vmatprep.subr.mxu0 0.0
      %777 = vmatpush1.msra.mxu0 0.0
      %778 = vmatprep.subr.mxu0 0.0
      %779 = vmatpush1.msra.mxu0 0.0
      %780 = vmatprep.subr.mxu0 0.0
      %781 = vmatpush1.msra.mxu0 0.0
      %782 = vmatprep.subr.mxu0 0.0
      %783 = vmatpush1.msra.mxu0 0.0
      %784 = vmatprep.subr.mxu0 0.0
      %785 = vmatpush1.msra.mxu0 0.0
      %786 = vmatprep.subr.mxu0 0.0
      %787 = vmatpush1.msra.mxu0 0.0
      %788 = vmatprep.subr.mxu0 0.0
      %789 = vmatpush1.msra.mxu0 0.0
      %790 = vmatprep.subr.mxu0 0.0
      %791 = vmatpush1.msra.mxu0 0.0
      %792 = vmatprep.subr.mxu0 0.0
      %793 = vmatpush1.msra.mxu0 0.0
      %794 = vmatprep.subr.mxu0 0.0
      %795 = vmatpush1.msra.mxu0 0.0
      %796 = vmatprep.subr.mxu0 0.0
      %797 = vmatpush1.msra.mxu0 0.0
      %798 = vmatprep.subr.mxu0 0.0
      %799 = vmatpush1.msra.mxu0 0.0
      %800 = vmatprep.subr.mxu0 0.0
      %801 = vmatpush1.msra.mxu0 0.0
      %802 = vmatprep.subr.mxu0 0.0
      %803 = vmatpush1.msra.mxu0 0.0
      %804 = vmatprep.subr.mxu0 0.0
      %805 = vmatpush1.msra.mxu0 0.0
      %806 = vmatprep.subr.mxu0 0.0
      %807 = vmatpush1.msra.mxu0 0.0
      %808 = vmatprep.subr.mxu0 0.0
      %809 = vmatpush1.msra.mxu0 0.0
      %810 = vmatprep.subr.mxu0 0.0
      %811 = vmatpush1.msra.mxu0 0.0
      %812 = vmatprep.subr.mxu0 0.0
      %813 = vmatpush1.msra.mxu0 0.0
      %814 = vmatprep.subr.mxu0 0.0
      %815 = vmatpush1.msra.mxu0 0.0
      %816 = vmatprep.subr.mxu0 0.0
      %817 = vmatpush1.msra.mxu0 0.0
      %818 = vmatprep.subr.mxu0 0.0
      %819 = vmatpush1.msra.mxu0 0.0
      %820 = vmatprep.subr.mxu0 0.0
      %821 = vmatpush1.msra.mxu0 0.0
      %822 = vmatprep.mubr.f32.mxu0 0.0
      %823 = vmatmul.mubr.f32.gmra.mrb[0].mxu0 %v753
      %v824 = vpop.f32.mrb[0].mxu0
      %v825 = vadd.f32 %v717, %v824
      %v826 = vpop.f32.mrb[0].mxu0
      %v827 = vadd.f32 %v717, %v826
      %828 = vmatprep.mubr.f32.mxu0 0.0
      %829 = vmatmul.mubr.f32.gmra.mrb[0].mxu0 %v756
      %v830 = vpop.f32.mrb[0].mxu0
      %v831 = vadd.f32 %v722, %v830
      %v832 = vpop.f32.mrb[0].mxu0
      %v833 = vadd.f32 %v722, %v832
      %834 = vdwg.mxu0
      %835 = vmatprep.subr.mxu0 0.0
      %836 = vmatpush1.msra.mxu0 %v735
      %837 = vmatprep.subr.mxu0 0.0
      %838 = vmatpush1.msra.mxu0 %v741
      %839 = vmatprep.subr.mxu0 0.0
      %840 = vmatpush1.msra.mxu0 0.0
      %841 = vmatprep.subr.mxu0 0.0
      %842 = vmatpush1.msra.mxu0 0.0
      %843 = vmatprep.subr.mxu0 0.0
      %844 = vmatpush1.msra.mxu0 0.0
      %845 = vmatprep.subr.mxu0 0.0
      %846 = vmatpush1.msra.mxu0 0.0
      %847 = vmatprep.subr.mxu0 0.0
      %848 = vmatpush1.msra.mxu0 0.0
      %849 = vmatprep.subr.mxu0 0.0
      %850 = vmatpush1.msra.mxu0 0.0
      %851 = vmatprep.subr.mxu0 0.0
      %852 = vmatpush1.msra.mxu0 0.0
      %853 = vmatprep.subr.mxu0 0.0
      %854 = vmatpush1.msra.mxu0 0.0
      %855 = vmatprep.subr.mxu0 0.0
      %856 = vmatpush1.msra.mxu0 0.0
      %857 = vmatprep.subr.mxu0 0.0
      %858 = vmatpush1.msra.mxu0 0.0
      %859 = vmatprep.subr.mxu0 0.0
      %860 = vmatpush1.msra.mxu0 0.0
      %861 = vmatprep.subr.mxu0 0.0
      %862 = vmatpush1.msra.mxu0 0.0
      %863 = vmatprep.subr.mxu0 0.0
      %864 = vmatpush1.msra.mxu0 0.0
      %865 = vmatprep.subr.mxu0 0.0
      %866 = vmatpush1.msra.mxu0 0.0
      %867 = vmatprep.subr.mxu0 0.0
      %868 = vmatpush1.msra.mxu0 0.0
      %869 = vmatprep.subr.mxu0 0.0
      %870 = vmatpush1.msra.mxu0 0.0
      %871 = vmatprep.subr.mxu0 0.0
      %872 = vmatpush1.msra.mxu0 0.0
      %873 = vmatprep.subr.mxu0 0.0
      %874 = vmatpush1.msra.mxu0 0.0
      %875 = vmatprep.subr.mxu0 0.0
      %876 = vmatpush1.msra.mxu0 0.0
      %877 = vmatprep.subr.mxu0 0.0
      %878 = vmatpush1.msra.mxu0 0.0
      %879 = vmatprep.subr.mxu0 0.0
      %880 = vmatpush1.msra.mxu0 0.0
      %881 = vmatprep.subr.mxu0 0.0
      %882 = vmatpush1.msra.mxu0 0.0
      %883 = vmatprep.subr.mxu0 0.0
      %884 = vmatpush1.msra.mxu0 0.0
      %885 = vmatprep.subr.mxu0 0.0
      %886 = vmatpush1.msra.mxu0 0.0
      %887 = vmatprep.subr.mxu0 0.0
      %888 = vmatpush1.msra.mxu0 0.0
      %889 = vmatprep.subr.mxu0 0.0
      %890 = vmatpush1.msra.mxu0 0.0
      %891 = vmatprep.subr.mxu0 0.0
      %892 = vmatpush1.msra.mxu0 0.0
      %893 = vmatprep.subr.mxu0 0.0
      %894 = vmatpush1.msra.mxu0 0.0
      %895 = vmatprep.subr.mxu0 0.0
      %896 = vmatpush1.msra.mxu0 0.0
      %897 = vmatprep.subr.mxu0 0.0
      %898 = vmatpush1.msra.mxu0 0.0
      %899 = vmatprep.mubr.f32.mxu0 0.0
      %900 = vmatmul.mubr.f32.gmra.mrb[0].mxu0 %v753
      %v901 = vpop.f32.mrb[0].mxu0
      %v902 = vadd.f32 %v717, %v901
      %v903 = vpop.f32.mrb[0].mxu0
      %904 = vmatprep.mubr.f32.mxu0 0.0
      %905 = vmatmul.mubr.f32.gmra.mrb[0].mxu0 %v756
      %v906 = vpop.f32.mrb[0].mxu0
      %v907 = vadd.f32 %v722, %v906
      %v908 = vpop.f32.mrb[0].mxu0
      %909 = vdwg.mxu0
      %v910 = vxor.u32 %v825, 2147483648
      %v911 = vxor.u32 %v827, 2147483648
      %v912 = vxor.u32 %v902, 2147483648
      %v913 = vxor.u32 %v831, 2147483648
      %v914 = vxor.u32 %v833, 2147483648
      %v915 = vxor.u32 %v907, 2147483648
      %v916 = vmul.f32 %v910, 1.442695
      %v917 = vpow.pop %v916
      %v918 = vmul.f32 %v911, 1.442695
      %v919 = vpow.pop %v918
      %v920 = vmul.f32 %v912, 1.442695
      %v921 = vpow.pop %v920
      %v922 = vmul.f32 %v913, 1.442695
      %v923 = vpow.pop %v922
      %v924 = vmul.f32 %v914, 1.442695
      %v925 = vpow.pop %v924
      %v926 = vmul.f32 %v915, 1.442695
      %v927 = vpow.pop %v926
      %v928 = vadd.f32 %v917, 1.0
      %v929 = vadd.f32 %v919, 1.0
      %v930 = vadd.f32 %v921, 1.0
      %v931 = vadd.f32 %v923, 1.0
      %v932 = vadd.f32 %v925, 1.0
      %v933 = vadd.f32 %v927, 1.0
      %v934 = vrcp.pop %v928
      %v935 = vmul.f32 1.0, %v934
      %v936 = vrcp.pop %v929
      %v937 = vmul.f32 1.0, %v936
      %v938 = vrcp.pop %v930
      %v939 = vmul.f32 1.0, %v938
      %v940 = vrcp.pop %v931
      %v941 = vmul.f32 1.0, %v940
      %v942 = vrcp.pop %v932
      %v943 = vmul.f32 1.0, %v942
      %v944 = vrcp.pop %v933
      %v945 = vmul.f32 1.0, %v944
      %v946 = vmul.f32 %v825, %v935
      %v947 = vmul.f32 %v827, %v937
      %v948 = vmul.f32 %v902, %v939
      %v949 = vmul.f32 %v831, %v941
      %v950 = vmul.f32 %v833, %v943
      %v951 = vmul.f32 %v907, %v945
      %v952 = vsel %vm658, %v946, 0.0
      %v953 = vsel %vm659, %v947, 0.0
      %v954 = vsel %vm660, %v948, 0.0
      %v955 = vsel %vm658, %v949, 0.0
      %v956 = vsel %vm659, %v950, 0.0
      %v957 = vsel %vm660, %v951, 0.0
      %964 = vrot.lane.b32.xlu0 %v952, 19
      %v965 = vpop.permute.xlu0 %964
      %966 = vrot.lane.b32.xlu0 %v953, 19
      %v967 = vpop.permute.xlu0 %966
      %968 = vrot.lane.b32.xlu0 %v954, 19
      %v969 = vpop.permute.xlu0 %968
      %970 = vrot.lane.b32.xlu0 %v955, 19
      %v971 = vpop.permute.xlu0 %970
      %972 = vrot.lane.b32.xlu0 %v956, 19
      %v973 = vpop.permute.xlu0 %972
      %974 = vrot.lane.b32.xlu0 %v957, 19
      %v975 = vpop.permute.xlu0 %974
      %v976 = vsel %vm685, %v965, %v967
      %v977 = vsel %vm685, %v967, %v969
      %v978 = vsel %vm685, %v971, %v973
      %v979 = vsel %vm685, %v973, %v975
      %986 = vst.msk [vmem:[#allocation2] sm:$0xff] %vm696, %v965
      %987 = vst [vmem:[#allocation2 + $0x8] sm:$0xff] %v976
      %988 = vst.msk [vmem:[#allocation2 + $0x10] sm:$0xff] %vm699, %v977
      %989 = vst.msk [vmem:[#allocation2 + $0x18] sm:$0xff] %vm696, %v971
      %990 = vst [vmem:[#allocation2 + $0x20] sm:$0xff] %v978
      %991 = vst.msk [vmem:[#allocation2 + $0x28] sm:$0xff] %vm699, %v979
      %v992 = vld [vmem:[%s2] sm:$0xff]
      %v993 = vld [vmem:[%s2 + $0x8] sm:$0xff]
      %v994 = vld [vmem:[%s1 + $0x20] sm:$0xff]
      %v995 = vld [vmem:[%s1 + $0x28] sm:$0xff]
      %v996 = vld [vmem:[%s1 + $0xc0] sm:$0xff]
      %v997 = vld [vmem:[%s1 + $0xc8] sm:$0xff]
      %v998 = vld [vmem:[#allocation2] sm:$0xff]
      %v999 = vld [vmem:[#allocation2 + $0x8] sm:$0xff]
      %v1000 = vld [vmem:[#allocation2 + $0x10] sm:$0xff]
      %v1001 = vld [vmem:[#allocation2 + $0x18] sm:$0xff]
      %v1002 = vld [vmem:[#allocation2 + $0x20] sm:$0xff]
      %v1003 = vld [vmem:[#allocation2 + $0x28] sm:$0xff]
      %1010 = vrot.lane.b32.xlu0 %v998, 127
      %v1011 = vpop.permute.xlu0 %1010
      %1012 = vrot.lane.b32.xlu0 %v999, 127
      %v1013 = vpop.permute.xlu0 %1012
      %1014 = vrot.lane.b32.xlu0 %v1000, 127
      %v1015 = vpop.permute.xlu0 %1014
      %1016 = vrot.lane.b32.xlu0 %v1001, 127
      %v1017 = vpop.permute.xlu0 %1016
      %1018 = vrot.lane.b32.xlu0 %v1002, 127
      %v1019 = vpop.permute.xlu0 %1018
      %1020 = vrot.lane.b32.xlu0 %v1003, 127
      %v1021 = vpop.permute.xlu0 %1020
      %v1022 = vsel %vm217, %v1011, %v1013
      %v1023 = vsel %vm217, %v1013, %v1015
      %v1024 = vsel %vm217, %v1017, %v1019
      %v1025 = vsel %vm217, %v1019, %v1021
      %1032 = vrot.lane.b32.xlu0 %v998, 126
      %v1033 = vpop.permute.xlu0 %1032
      %1034 = vrot.lane.b32.xlu0 %v999, 126
      %v1035 = vpop.permute.xlu0 %1034
      %1036 = vrot.lane.b32.xlu0 %v1000, 126
      %v1037 = vpop.permute.xlu0 %1036
      %1038 = vrot.lane.b32.xlu0 %v1001, 126
      %v1039 = vpop.permute.xlu0 %1038
      %1040 = vrot.lane.b32.xlu0 %v1002, 126
      %v1041 = vpop.permute.xlu0 %1040
      %1042 = vrot.lane.b32.xlu0 %v1003, 126
      %v1043 = vpop.permute.xlu0 %1042
      %v1044 = vsel %vm240, %v1033, %v1035
      %v1045 = vsel %vm240, %v1035, %v1037
      %v1046 = vsel %vm240, %v1039, %v1041
      %v1047 = vsel %vm240, %v1041, %v1043
      %1054 = vrot.lane.b32.xlu0 %v998, 110
      %v1055 = vpop.permute.xlu0 %1054
      %1056 = vrot.lane.b32.xlu0 %v999, 110
      %v1057 = vpop.permute.xlu0 %1056
      %1058 = vrot.lane.b32.xlu0 %v1000, 110
      %v1059 = vpop.permute.xlu0 %1058
      %1060 = vrot.lane.b32.xlu0 %v1001, 110
      %v1061 = vpop.permute.xlu0 %1060
      %1062 = vrot.lane.b32.xlu0 %v1002, 110
      %v1063 = vpop.permute.xlu0 %1062
      %1064 = vrot.lane.b32.xlu0 %v1003, 110
      %v1065 = vpop.permute.xlu0 %1064
      %v1066 = vsel %vm263, %v1055, %v1057
      %v1067 = vsel %vm263, %v1057, %v1059
      %v1068 = vsel %vm263, %v1061, %v1063
      %v1069 = vsel %vm263, %v1063, %v1065
      %1076 = vrot.lane.b32.xlu0 %v998, 109
      %v1077 = vpop.permute.xlu0 %1076
      %1078 = vrot.lane.b32.xlu0 %v999, 109
      %v1079 = vpop.permute.xlu0 %1078
      %1080 = vrot.lane.b32.xlu0 %v1000, 109
      %v1081 = vpop.permute.xlu0 %1080
      %1082 = vrot.lane.b32.xlu0 %v1001, 109
      %v1083 = vpop.permute.xlu0 %1082
      %1084 = vrot.lane.b32.xlu0 %v1002, 109
      %v1085 = vpop.permute.xlu0 %1084
      %1086 = vrot.lane.b32.xlu0 %v1003, 109
      %v1087 = vpop.permute.xlu0 %1086
      %v1088 = vsel %vm286, %v1077, %v1079
      %v1089 = vsel %vm286, %v1079, %v1081
      %v1090 = vsel %vm286, %v1083, %v1085
      %v1091 = vsel %vm286, %v1085, %v1087
      %1098 = vrot.lane.b32.xlu0 %v998, 108
      %v1099 = vpop.permute.xlu0 %1098
      %1100 = vrot.lane.b32.xlu0 %v999, 108
      %v1101 = vpop.permute.xlu0 %1100
      %1102 = vrot.lane.b32.xlu0 %v1000, 108
      %v1103 = vpop.permute.xlu0 %1102
      %1104 = vrot.lane.b32.xlu0 %v1001, 108
      %v1105 = vpop.permute.xlu0 %1104
      %1106 = vrot.lane.b32.xlu0 %v1002, 108
      %v1107 = vpop.permute.xlu0 %1106
      %1108 = vrot.lane.b32.xlu0 %v1003, 108
      %v1109 = vpop.permute.xlu0 %1108
      %v1110 = vsel %vm309, %v1099, %v1101
      %v1111 = vsel %vm309, %v1101, %v1103
      %v1112 = vsel %vm309, %v1105, %v1107
      %v1113 = vsel %vm309, %v1107, %v1109
      %1120 = vrot.lane.b32.xlu0 %v998, 92
      %v1121 = vpop.permute.xlu0 %1120
      %1122 = vrot.lane.b32.xlu0 %v999, 92
      %v1123 = vpop.permute.xlu0 %1122
      %1124 = vrot.lane.b32.xlu0 %v1000, 92
      %v1125 = vpop.permute.xlu0 %1124
      %1126 = vrot.lane.b32.xlu0 %v1001, 92
      %v1127 = vpop.permute.xlu0 %1126
      %1128 = vrot.lane.b32.xlu0 %v1002, 92
      %v1129 = vpop.permute.xlu0 %1128
      %1130 = vrot.lane.b32.xlu0 %v1003, 92
      %v1131 = vpop.permute.xlu0 %1130
      %v1132 = vsel %vm332, %v1121, %v1123
      %v1133 = vsel %vm332, %v1123, %v1125
      %v1134 = vsel %vm332, %v1127, %v1129
      %v1135 = vsel %vm332, %v1129, %v1131
      %1142 = vrot.lane.b32.xlu0 %v998, 91
      %v1143 = vpop.permute.xlu0 %1142
      %1144 = vrot.lane.b32.xlu0 %v999, 91
      %v1145 = vpop.permute.xlu0 %1144
      %1146 = vrot.lane.b32.xlu0 %v1000, 91
      %v1147 = vpop.permute.xlu0 %1146
      %1148 = vrot.lane.b32.xlu0 %v1001, 91
      %v1149 = vpop.permute.xlu0 %1148
      %1150 = vrot.lane.b32.xlu0 %v1002, 91
      %v1151 = vpop.permute.xlu0 %1150
      %1152 = vrot.lane.b32.xlu0 %v1003, 91
      %v1153 = vpop.permute.xlu0 %1152
      %v1154 = vsel %vm355, %v1143, %v1145
      %v1155 = vsel %vm355, %v1145, %v1147
      %v1156 = vsel %vm355, %v1149, %v1151
      %v1157 = vsel %vm355, %v1151, %v1153
      %1164 = vrot.lane.b32.xlu0 %v998, 90
      %v1165 = vpop.permute.xlu0 %1164
      %1166 = vrot.lane.b32.xlu0 %v999, 90
      %v1167 = vpop.permute.xlu0 %1166
      %1168 = vrot.lane.b32.xlu0 %v1000, 90
      %v1169 = vpop.permute.xlu0 %1168
      %1170 = vrot.lane.b32.xlu0 %v1001, 90
      %v1171 = vpop.permute.xlu0 %1170
      %1172 = vrot.lane.b32.xlu0 %v1002, 90
      %v1173 = vpop.permute.xlu0 %1172
      %1174 = vrot.lane.b32.xlu0 %v1003, 90
      %v1175 = vpop.permute.xlu0 %1174
      %v1176 = vsel %vm378, %v1165, %v1167
      %v1177 = vsel %vm378, %v1167, %v1169
      %v1178 = vsel %vm378, %v1171, %v1173
      %v1179 = vsel %vm378, %v1173, %v1175
      %1187 = vset.pattern.permute.xlu0 2
      %1188 = vperm.xlu0 %1187, %v992
      %v1189 = vpop.permute.xlu0 %1188
      %1192 = vset.pattern.permute.xlu0 2
      %1193 = vperm.xlu0 %1192, %v993
      %v1194 = vpop.permute.xlu0 %1193
      %v1197 = vsel %vm399, %v995, 0
      %v1200 = vsel %vm399, %v997, 0
      %1202 = vmatprep.subr.mxu0 %v999
      %1203 = vmatpush1.msra.mxu0 %v998
      %1204 = vmatprep.subr.mxu0 %v1002
      %1205 = vmatpush1.msra.mxu0 %v1001
      %1206 = vmatprep.subr.mxu0 %v1023
      %1207 = vmatpush1.msra.mxu0 %v1022
      %1208 = vmatprep.subr.mxu0 %v1025
      %1209 = vmatpush1.msra.mxu0 %v1024
      %1210 = vmatprep.subr.mxu0 %v1045
      %1211 = vmatpush1.msra.mxu0 %v1044
      %1212 = vmatprep.subr.mxu0 %v1047
      %1213 = vmatpush1.msra.mxu0 %v1046
      %1214 = vmatprep.subr.mxu0 %v1067
      %1215 = vmatpush1.msra.mxu0 %v1066
      %1216 = vmatprep.subr.mxu0 %v1069
      %1217 = vmatpush1.msra.mxu0 %v1068
      %1218 = vmatprep.subr.mxu0 %v1089
      %1219 = vmatpush1.msra.mxu0 %v1088
      %1220 = vmatprep.subr.mxu0 %v1091
      %1221 = vmatpush1.msra.mxu0 %v1090
      %1222 = vmatprep.subr.mxu0 %v1111
      %1223 = vmatpush1.msra.mxu0 %v1110
      %1224 = vmatprep.subr.mxu0 %v1113
      %1225 = vmatpush1.msra.mxu0 %v1112
      %1226 = vmatprep.subr.mxu0 %v1133
      %1227 = vmatpush1.msra.mxu0 %v1132
      %1228 = vmatprep.subr.mxu0 %v1135
      %1229 = vmatpush1.msra.mxu0 %v1134
      %1230 = vmatprep.subr.mxu0 %v1155
      %1231 = vmatpush1.msra.mxu0 %v1154
      %1232 = vmatprep.subr.mxu0 %v1157
      %1233 = vmatpush1.msra.mxu0 %v1156
      %1234 = vmatprep.subr.mxu0 %v1177
      %1235 = vmatpush1.msra.mxu0 %v1176
      %1236 = vmatprep.subr.mxu0 %v1179
      %1237 = vmatpush1.msra.mxu0 %v1178
      %1238 = vmatprep.subr.mxu0 0.0
      %1239 = vmatpush1.msra.mxu0 0.0
      %1240 = vmatprep.subr.mxu0 0.0
      %1241 = vmatpush1.msra.mxu0 0.0
      %1242 = vmatprep.subr.mxu0 0.0
      %1243 = vmatpush1.msra.mxu0 0.0
      %1244 = vmatprep.subr.mxu0 0.0
      %1245 = vmatpush1.msra.mxu0 0.0
      %1246 = vmatprep.subr.mxu0 0.0
      %1247 = vmatpush1.msra.mxu0 0.0
      %1248 = vmatprep.subr.mxu0 0.0
      %1249 = vmatpush1.msra.mxu0 0.0
      %1250 = vmatprep.subr.mxu0 0.0
      %1251 = vmatpush1.msra.mxu0 0.0
      %1252 = vmatprep.subr.mxu0 0.0
      %1253 = vmatpush1.msra.mxu0 0.0
      %1254 = vmatprep.subr.mxu0 0.0
      %1255 = vmatpush1.msra.mxu0 0.0
      %1256 = vmatprep.subr.mxu0 0.0
      %1257 = vmatpush1.msra.mxu0 0.0
      %1258 = vmatprep.subr.mxu0 0.0
      %1259 = vmatpush1.msra.mxu0 0.0
      %1260 = vmatprep.subr.mxu0 0.0
      %1261 = vmatpush1.msra.mxu0 0.0
      %1262 = vmatprep.subr.mxu0 0.0
      %1263 = vmatpush1.msra.mxu0 0.0
      %1264 = vmatprep.subr.mxu0 0.0
      %1265 = vmatpush1.msra.mxu0 0.0
      %1266 = vmatprep.mubr.f32.mxu0 %v1197
      %1267 = vmatmul.mubr.f32.gmra.mrb[0].mxu0 %v994
      %v1268 = vpop.f32.mrb[0].mxu0
      %v1269 = vadd.f32 %v1189, %v1268
      %v1270 = vpop.f32.mrb[0].mxu0
      %v1271 = vadd.f32 %v1189, %v1270
      %1272 = vmatprep.mubr.f32.mxu0 %v1200
      %1273 = vmatmul.mubr.f32.gmra.mrb[0].mxu0 %v996
      %v1274 = vpop.f32.mrb[0].mxu0
      %v1275 = vadd.f32 %v1194, %v1274
      %v1276 = vpop.f32.mrb[0].mxu0
      %v1277 = vadd.f32 %v1194, %v1276
      %1278 = vdwg.mxu0
      %1279 = vmatprep.subr.mxu0 0.0
      %1280 = vmatpush1.msra.mxu0 %v1000
      %1281 = vmatprep.subr.mxu0 0.0
      %1282 = vmatpush1.msra.mxu0 %v1003
      %1283 = vmatprep.subr.mxu0 0.0
      %1284 = vmatpush1.msra.mxu0 %v1015
      %1285 = vmatprep.subr.mxu0 0.0
      %1286 = vmatpush1.msra.mxu0 %v1021
      %1287 = vmatprep.subr.mxu0 0.0
      %1288 = vmatpush1.msra.mxu0 %v1037
      %1289 = vmatprep.subr.mxu0 0.0
      %1290 = vmatpush1.msra.mxu0 %v1043
      %1291 = vmatprep.subr.mxu0 0.0
      %1292 = vmatpush1.msra.mxu0 %v1059
      %1293 = vmatprep.subr.mxu0 0.0
      %1294 = vmatpush1.msra.mxu0 %v1065
      %1295 = vmatprep.subr.mxu0 0.0
      %1296 = vmatpush1.msra.mxu0 %v1081
      %1297 = vmatprep.subr.mxu0 0.0
      %1298 = vmatpush1.msra.mxu0 %v1087
      %1299 = vmatprep.subr.mxu0 0.0
      %1300 = vmatpush1.msra.mxu0 %v1103
      %1301 = vmatprep.subr.mxu0 0.0
      %1302 = vmatpush1.msra.mxu0 %v1109
      %1303 = vmatprep.subr.mxu0 0.0
      %1304 = vmatpush1.msra.mxu0 %v1125
      %1305 = vmatprep.subr.mxu0 0.0
      %1306 = vmatpush1.msra.mxu0 %v1131
      %1307 = vmatprep.subr.mxu0 0.0
      %1308 = vmatpush1.msra.mxu0 %v1147
      %1309 = vmatprep.subr.mxu0 0.0
      %1310 = vmatpush1.msra.mxu0 %v1153
      %1311 = vmatprep.subr.mxu0 0.0
      %1312 = vmatpush1.msra.mxu0 %v1169
      %1313 = vmatprep.subr.mxu0 0.0
      %1314 = vmatpush1.msra.mxu0 %v1175
      %1315 = vmatprep.subr.mxu0 0.0
      %1316 = vmatpush1.msra.mxu0 0.0
      %1317 = vmatprep.subr.mxu0 0.0
      %1318 = vmatpush1.msra.mxu0 0.0
      %1319 = vmatprep.subr.mxu0 0.0
      %1320 = vmatpush1.msra.mxu0 0.0
      %1321 = vmatprep.subr.mxu0 0.0
      %1322 = vmatpush1.msra.mxu0 0.0
      %1323 = vmatprep.subr.mxu0 0.0
      %1324 = vmatpush1.msra.mxu0 0.0
      %1325 = vmatprep.subr.mxu0 0.0
      %1326 = vmatpush1.msra.mxu0 0.0
      %1327 = vmatprep.subr.mxu0 0.0
      %1328 = vmatpush1.msra.mxu0 0.0
      %1329 = vmatprep.subr.mxu0 0.0
      %1330 = vmatpush1.msra.mxu0 0.0
      %1331 = vmatprep.subr.mxu0 0.0
      %1332 = vmatpush1.msra.mxu0 0.0
      %1333 = vmatprep.subr.mxu0 0.0
      %1334 = vmatpush1.msra.mxu0 0.0
      %1335 = vmatprep.subr.mxu0 0.0
      %1336 = vmatpush1.msra.mxu0 0.0
      %1337 = vmatprep.subr.mxu0 0.0
      %1338 = vmatpush1.msra.mxu0 0.0
      %1339 = vmatprep.subr.mxu0 0.0
      %1340 = vmatpush1.msra.mxu0 0.0
      %1341 = vmatprep.subr.mxu0 0.0
      %1342 = vmatpush1.msra.mxu0 0.0
      %1343 = vmatprep.mubr.f32.mxu0 %v1197
      %1344 = vmatmul.mubr.f32.gmra.mrb[0].mxu0 %v994
      %v1345 = vpop.f32.mrb[0].mxu0
      %v1346 = vadd.f32 %v1189, %v1345
      %v1347 = vpop.f32.mrb[0].mxu0
      %1348 = vmatprep.mubr.f32.mxu0 %v1200
      %1349 = vmatmul.mubr.f32.gmra.mrb[0].mxu0 %v996
      %v1350 = vpop.f32.mrb[0].mxu0
      %v1351 = vadd.f32 %v1194, %v1350
      %v1352 = vpop.f32.mrb[0].mxu0
      %1353 = vdwg.mxu0
      %v1354 = vxor.u32 %v1269, 2147483648
      %v1355 = vxor.u32 %v1271, 2147483648
      %v1356 = vxor.u32 %v1346, 2147483648
      %v1357 = vxor.u32 %v1275, 2147483648
      %v1358 = vxor.u32 %v1277, 2147483648
      %v1359 = vxor.u32 %v1351, 2147483648
      %v1360 = vmul.f32 %v1354, 1.442695
      %v1361 = vpow.pop %v1360
      %v1362 = vmul.f32 %v1355, 1.442695
      %v1363 = vpow.pop %v1362
      %v1364 = vmul.f32 %v1356, 1.442695
      %v1365 = vpow.pop %v1364
      %v1366 = vmul.f32 %v1357, 1.442695
      %v1367 = vpow.pop %v1366
      %v1368 = vmul.f32 %v1358, 1.442695
      %v1369 = vpow.pop %v1368
      %v1370 = vmul.f32 %v1359, 1.442695
      %v1371 = vpow.pop %v1370
      %v1372 = vadd.f32 %v1361, 1.0
      %v1373 = vadd.f32 %v1363, 1.0
      %v1374 = vadd.f32 %v1365, 1.0
      %v1375 = vadd.f32 %v1367, 1.0
      %v1376 = vadd.f32 %v1369, 1.0
      %v1377 = vadd.f32 %v1371, 1.0
      %v1378 = vrcp.pop %v1372
      %v1379 = vmul.f32 1.0, %v1378
      %v1380 = vrcp.pop %v1373
      %v1381 = vmul.f32 1.0, %v1380
      %v1382 = vrcp.pop %v1374
      %v1383 = vmul.f32 1.0, %v1382
      %v1384 = vrcp.pop %v1375
      %v1385 = vmul.f32 1.0, %v1384
      %v1386 = vrcp.pop %v1376
      %v1387 = vmul.f32 1.0, %v1386
      %v1388 = vrcp.pop %v1377
      %v1389 = vmul.f32 1.0, %v1388
      %v1390 = vmul.f32 %v1269, %v1379
      %v1391 = vmul.f32 %v1271, %v1381
      %v1392 = vmul.f32 %v1346, %v1383
      %v1393 = vmul.f32 %v1275, %v1385
      %v1394 = vmul.f32 %v1277, %v1387
      %v1395 = vmul.f32 %v1351, %v1389
      %v1396 = vsel %vm658, %v1390, 0.0
      %v1397 = vsel %vm659, %v1391, 0.0
      %v1398 = vsel %vm660, %v1392, 0.0
      %v1399 = vsel %vm658, %v1393, 0.0
      %v1400 = vsel %vm659, %v1394, 0.0
      %v1401 = vsel %vm660, %v1395, 0.0
      %1408 = vrot.lane.b32.xlu0 %v1396, 19
      %v1409 = vpop.permute.xlu0 %1408
      %1410 = vrot.lane.b32.xlu0 %v1397, 19
      %v1411 = vpop.permute.xlu0 %1410
      %1412 = vrot.lane.b32.xlu0 %v1398, 19
      %v1413 = vpop.permute.xlu0 %1412
      %1414 = vrot.lane.b32.xlu0 %v1399, 19
      %v1415 = vpop.permute.xlu0 %1414
      %1416 = vrot.lane.b32.xlu0 %v1400, 19
      %v1417 = vpop.permute.xlu0 %1416
      %1418 = vrot.lane.b32.xlu0 %v1401, 19
      %v1419 = vpop.permute.xlu0 %1418
      %v1420 = vsel %vm685, %v1409, %v1411
      %v1421 = vsel %vm685, %v1411, %v1413
      %v1422 = vsel %vm685, %v1415, %v1417
      %v1423 = vsel %vm685, %v1417, %v1419
      %1430 = vst.msk [vmem:[#allocation2] sm:$0xff] %vm696, %v1409
      %1431 = vst [vmem:[#allocation2 + $0x8] sm:$0xff] %v1420
      %1432 = vst.msk [vmem:[#allocation2 + $0x10] sm:$0xff] %vm699, %v1421
      %1433 = vst.msk [vmem:[#allocation2 + $0x18] sm:$0xff] %vm696, %v1415
      %1434 = vst [vmem:[#allocation2 + $0x20] sm:$0xff] %v1422
      %1435 = vst.msk [vmem:[#allocation2 + $0x28] sm:$0xff] %vm699, %v1423
      %v1436 = vld [vmem:[%s2] sm:$0xff]
      %v1437 = vld [vmem:[%s2 + $0x8] sm:$0xff]
      %v1438 = vld [vmem:[%s1 + $0x30] sm:$0xff]
      %v1439 = vld [vmem:[%s1 + $0x38] sm:$0xff]
      %v1440 = vld [vmem:[%s1 + $0xd0] sm:$0xff]
      %v1441 = vld [vmem:[%s1 + $0xd8] sm:$0xff]
      %v1442 = vlaneseq
      %v1443 = vshrl.u32 %v1442, 7
      %v1444 = vadd.s32 %v1443, 8
      %v1445 = vadd.s32 %v1443, 16
      %vm1446 = vcmp.le.s32.totalorder %v601, 8
      %v1447 = vmul.u32 %v601, 2
      %vm1448 = vcmp.eq.s32.totalorder %v1443, %v1447
      %vm1449 = vcmp.eq.s32.totalorder %v1444, %v1447
      %vm1450 = vcmp.eq.s32.totalorder %v1445, %v1447
      %vm1451 = vmand %vm1446, %vm1448
      %vm1452 = vmand %vm1446, %vm1449
      %vm1453 = vmand %vm1446, %vm1450
      %vm1454 = vcmp.gt.s32.totalorder %v601, 8
      %v1455 = vsub.s32 %v601, 9
      %v1456 = vmul.u32 %v1455, 2
      %v1457 = vadd.s32 %v1456, 1
      %vm1458 = vcmp.eq.s32.totalorder %v1443, %v1457
      %vm1459 = vcmp.eq.s32.totalorder %v1444, %v1457
      %vm1460 = vcmp.eq.s32.totalorder %v1445, %v1457
      %vm1461 = vmand %vm1454, %vm1458
      %vm1462 = vmand %vm1454, %vm1459
      %vm1463 = vmand %vm1454, %vm1460
      %vm1464 = vmor %vm1451, %vm1461
      %vm1465 = vmor %vm1452, %vm1462
      %vm1466 = vmor %vm1453, %vm1463
      %v1467 = vsel %vm1464, 1.0, 0.0
      %v1468 = vsel %vm1465, 1.0, 0.0
      %v1469 = vsel %vm1466, 1.0, 0.0
      %v1470 = vld [vmem:[#allocation2] sm:$0xff]
      %v1471 = vld [vmem:[#allocation2 + $0x18] sm:$0xff]
      %vm1472 = vcmask 146432
      %v1474 = vsel %vm1472, %v1470, 0
      %v1477 = vsel %vm1472, %v1471, 0
      %vm1479 = vcmask 1041408
      %v1481 = vsel %vm1479, %v1469, 0
      %1483 = vmatprep.subr.mxu0 0.0
      %1484 = vmatpush1.msra.mxu0 %v1467
      %1485 = vmatprep.subr.mxu0 0.0
      %1486 = vmatpush1.msra.mxu0 %v1468
      %1487 = vmatprep.subr.mxu0 0.0
      %1488 = vmatpush1.msra.mxu0 %v1481
      %1489 = vmatprep.subr.mxu0 0.0
      %1490 = vmatpush1.msra.mxu0 0.0
      %1491 = vmatprep.subr.mxu0 0.0
      %1492 = vmatpush1.msra.mxu0 0.0
      %1493 = vmatprep.subr.mxu0 0.0
      %1494 = vmatpush1.msra.mxu0 0.0
      %1495 = vmatprep.subr.mxu0 0.0
      %1496 = vmatpush1.msra.mxu0 0.0
      %1497 = vmatprep.subr.mxu0 0.0
      %1498 = vmatpush1.msra.mxu0 0.0
      %1499 = vmatprep.subr.mxu0 0.0
      %1500 = vmatpush1.msra.mxu0 0.0
      %1501 = vmatprep.subr.mxu0 0.0
      %1502 = vmatpush1.msra.mxu0 0.0
      %1503 = vmatprep.subr.mxu0 0.0
      %1504 = vmatpush1.msra.mxu0 0.0
      %1505 = vmatprep.subr.mxu0 0.0
      %1506 = vmatpush1.msra.mxu0 0.0
      %1507 = vmatprep.subr.mxu0 0.0
      %1508 = vmatpush1.msra.mxu0 0.0
      %1509 = vmatprep.subr.mxu0 0.0
      %1510 = vmatpush1.msra.mxu0 0.0
      %1511 = vmatprep.subr.mxu0 0.0
      %1512 = vmatpush1.msra.mxu0 0.0
      %1513 = vmatprep.subr.mxu0 0.0
      %1514 = vmatpush1.msra.mxu0 0.0
      %1515 = vmatprep.subr.mxu0 0.0
      %1516 = vmatpush1.msra.mxu0 0.0
      %1517 = vmatprep.subr.mxu0 0.0
      %1518 = vmatpush1.msra.mxu0 0.0
      %1519 = vmatprep.subr.mxu0 0.0
      %1520 = vmatpush1.msra.mxu0 0.0
      %1521 = vmatprep.subr.mxu0 0.0
      %1522 = vmatpush1.msra.mxu0 0.0
      %1523 = vmatprep.subr.mxu0 0.0
      %1524 = vmatpush1.msra.mxu0 0.0
      %1525 = vmatprep.subr.mxu0 0.0
      %1526 = vmatpush1.msra.mxu0 0.0
      %1527 = vmatprep.subr.mxu0 0.0
      %1528 = vmatpush1.msra.mxu0 0.0
      %1529 = vmatprep.subr.mxu0 0.0
      %1530 = vmatpush1.msra.mxu0 0.0
      %1531 = vmatprep.subr.mxu0 0.0
      %1532 = vmatpush1.msra.mxu0 0.0
      %1533 = vmatprep.subr.mxu0 0.0
      %1534 = vmatpush1.msra.mxu0 0.0
      %1535 = vmatprep.subr.mxu0 0.0
      %1536 = vmatpush1.msra.mxu0 0.0
      %1537 = vmatprep.subr.mxu0 0.0
      %1538 = vmatpush1.msra.mxu0 0.0
      %1539 = vmatprep.subr.mxu0 0.0
      %1540 = vmatpush1.msra.mxu0 0.0
      %1541 = vmatprep.subr.mxu0 0.0
      %1542 = vmatpush1.msra.mxu0 0.0
      %1543 = vmatprep.subr.mxu0 0.0
      %1544 = vmatpush1.msra.mxu0 0.0
      %1545 = vmatprep.subr.mxu0 0.0
      %1546 = vmatpush1.msra.mxu0 0.0
      %1547 = vmatprep.mubr.f32.mxu0 0.0
      %1548 = vmatmul.mubr.f32.gmra.mrb[0].mxu0 %v1474
      %v1549 = vpop.f32.mrb[0].mxu0
      %v1550 = vadd.f32 0.0, %v1549
      %v1551 = vpop.f32.mrb[0].mxu0
      %1552 = vmatprep.mubr.f32.mxu0 0.0
      %1553 = vmatmul.mubr.f32.gmra.mrb[0].mxu0 %v1477
      %v1554 = vpop.f32.mrb[0].mxu0
      %v1555 = vadd.f32 0.0, %v1554
      %v1556 = vpop.f32.mrb[0].mxu0
      %1557 = vdwg.mxu0
      %1558 = vrot.lane.b32.xlu0 %v1470, 110
      %v1559 = vpop.permute.xlu0 %1558
      %1560 = vrot.lane.b32.xlu0 %v1471, 110
      %v1561 = vpop.permute.xlu0 %1560
      %v1562 = vsel %vm1472, %v1559, 0
      %v1564 = vsel %vm1472, %v1561, 0
      %1566 = vmatprep.subr.mxu0 0.0
      %1567 = vmatpush1.msra.mxu0 %v1467
      %1568 = vmatprep.subr.mxu0 0.0
      %1569 = vmatpush1.msra.mxu0 %v1468
      %1570 = vmatprep.subr.mxu0 0.0
      %1571 = vmatpush1.msra.mxu0 %v1481
      %1572 = vmatprep.subr.mxu0 0.0
      %1573 = vmatpush1.msra.mxu0 0.0
      %1574 = vmatprep.subr.mxu0 0.0
      %1575 = vmatpush1.msra.mxu0 0.0
      %1576 = vmatprep.subr.mxu0 0.0
      %1577 = vmatpush1.msra.mxu0 0.0
      %1578 = vmatprep.subr.mxu0 0.0
      %1579 = vmatpush1.msra.mxu0 0.0
      %1580 = vmatprep.subr.mxu0 0.0
      %1581 = vmatpush1.msra.mxu0 0.0
      %1582 = vmatprep.subr.mxu0 0.0
      %1583 = vmatpush1.msra.mxu0 0.0
      %1584 = vmatprep.subr.mxu0 0.0
      %1585 = vmatpush1.msra.mxu0 0.0
      %1586 = vmatprep.subr.mxu0 0.0
      %1587 = vmatpush1.msra.mxu0 0.0
      %1588 = vmatprep.subr.mxu0 0.0
      %1589 = vmatpush1.msra.mxu0 0.0
      %1590 = vmatprep.subr.mxu0 0.0
      %1591 = vmatpush1.msra.mxu0 0.0
      %1592 = vmatprep.subr.mxu0 0.0
      %1593 = vmatpush1.msra.mxu0 0.0
      %1594 = vmatprep.subr.mxu0 0.0
      %1595 = vmatpush1.msra.mxu0 0.0
      %1596 = vmatprep.subr.mxu0 0.0
      %1597 = vmatpush1.msra.mxu0 0.0
      %1598 = vmatprep.subr.mxu0 0.0
      %1599 = vmatpush1.msra.mxu0 0.0
      %1600 = vmatprep.subr.mxu0 0.0
      %1601 = vmatpush1.msra.mxu0 0.0
      %1602 = vmatprep.subr.mxu0 0.0
      %1603 = vmatpush1.msra.mxu0 0.0
      %1604 = vmatprep.subr.mxu0 0.0
      %1605 = vmatpush1.msra.mxu0 0.0
      %1606 = vmatprep.subr.mxu0 0.0
      %1607 = vmatpush1.msra.mxu0 0.0
      %1608 = vmatprep.subr.mxu0 0.0
      %1609 = vmatpush1.msra.mxu0 0.0
      %1610 = vmatprep.subr.mxu0 0.0
      %1611 = vmatpush1.msra.mxu0 0.0
      %1612 = vmatprep.subr.mxu0 0.0
      %1613 = vmatpush1.msra.mxu0 0.0
      %1614 = vmatprep.subr.mxu0 0.0
      %1615 = vmatpush1.msra.mxu0 0.0
      %1616 = vmatprep.subr.mxu0 0.0
      %1617 = vmatpush1.msra.mxu0 0.0
      %1618 = vmatprep.subr.mxu0 0.0
      %1619 = vmatpush1.msra.mxu0 0.0
      %1620 = vmatprep.subr.mxu0 0.0
      %1621 = vmatpush1.msra.mxu0 0.0
      %1622 = vmatprep.subr.mxu0 0.0
      %1623 = vmatpush1.msra.mxu0 0.0
      %1624 = vmatprep.subr.mxu0 0.0
      %1625 = vmatpush1.msra.mxu0 0.0
      %1626 = vmatprep.subr.mxu0 0.0
      %1627 = vmatpush1.msra.mxu0 0.0
      %1628 = vmatprep.subr.mxu0 0.0
      %1629 = vmatpush1.msra.mxu0 0.0
      %1630 = vmatprep.mubr.f32.mxu0 0.0
      %1631 = vmatmul.mubr.f32.gmra.mrb[0].mxu0 %v1562
      %v1632 = vpop.f32.mrb[0].mxu0
      %v1633 = vadd.f32 0.0, %v1632
      %v1634 = vpop.f32.mrb[0].mxu0
      %1635 = vmatprep.mubr.f32.mxu0 0.0
      %1636 = vmatmul.mubr.f32.gmra.mrb[0].mxu0 %v1564
      %v1637 = vpop.f32.mrb[0].mxu0
      %v1638 = vadd.f32 0.0, %v1637
      %v1639 = vpop.f32.mrb[0].mxu0
      %1640 = vdwg.mxu0
      %1641 = vrot.lane.b32.xlu0 %v1470, 92
      %v1642 = vpop.permute.xlu0 %1641
      %1643 = vrot.lane.b32.xlu0 %v1471, 92
      %v1644 = vpop.permute.xlu0 %1643
      %v1645 = vsel %vm1472, %v1642, 0
      %v1647 = vsel %vm1472, %v1644, 0
      %1649 = vmatprep.subr.mxu0 0.0
      %1650 = vmatpush1.msra.mxu0 %v1467
      %1651 = vmatprep.subr.mxu0 0.0
      %1652 = vmatpush1.msra.mxu0 %v1468
      %1653 = vmatprep.subr.mxu0 0.0
      %1654 = vmatpush1.msra.mxu0 %v1481
      %1655 = vmatprep.subr.mxu0 0.0
      %1656 = vmatpush1.msra.mxu0 0.0
      %1657 = vmatprep.subr.mxu0 0.0
      %1658 = vmatpush1.msra.mxu0 0.0
      %1659 = vmatprep.subr.mxu0 0.0
      %1660 = vmatpush1.msra.mxu0 0.0
      %1661 = vmatprep.subr.mxu0 0.0
      %1662 = vmatpush1.msra.mxu0 0.0
      %1663 = vmatprep.subr.mxu0 0.0
      %1664 = vmatpush1.msra.mxu0 0.0
      %1665 = vmatprep.subr.mxu0 0.0
      %1666 = vmatpush1.msra.mxu0 0.0
      %1667 = vmatprep.subr.mxu0 0.0
      %1668 = vmatpush1.msra.mxu0 0.0
      %1669 = vmatprep.subr.mxu0 0.0
      %1670 = vmatpush1.msra.mxu0 0.0
      %1671 = vmatprep.subr.mxu0 0.0
      %1672 = vmatpush1.msra.mxu0 0.0
      %1673 = vmatprep.subr.mxu0 0.0
      %1674 = vmatpush1.msra.mxu0 0.0
      %1675 = vmatprep.subr.mxu0 0.0
      %1676 = vmatpush1.msra.mxu0 0.0
      %1677 = vmatprep.subr.mxu0 0.0
      %1678 = vmatpush1.msra.mxu0 0.0
      %1679 = vmatprep.subr.mxu0 0.0
      %1680 = vmatpush1.msra.mxu0 0.0
      %1681 = vmatprep.subr.mxu0 0.0
      %1682 = vmatpush1.msra.mxu0 0.0
      %1683 = vmatprep.subr.mxu0 0.0
      %1684 = vmatpush1.msra.mxu0 0.0
      %1685 = vmatprep.subr.mxu0 0.0
      %1686 = vmatpush1.msra.mxu0 0.0
      %1687 = vmatprep.subr.mxu0 0.0
      %1688 = vmatpush1.msra.mxu0 0.0
      %1689 = vmatprep.subr.mxu0 0.0
      %1690 = vmatpush1.msra.mxu0 0.0
      %1691 = vmatprep.subr.mxu0 0.0
      %1692 = vmatpush1.msra.mxu0 0.0
      %1693 = vmatprep.subr.mxu0 0.0
      %1694 = vmatpush1.msra.mxu0 0.0
      %1695 = vmatprep.subr.mxu0 0.0
      %1696 = vmatpush1.msra.mxu0 0.0
      %1697 = vmatprep.subr.mxu0 0.0
      %1698 = vmatpush1.msra.mxu0 0.0
      %1699 = vmatprep.subr.mxu0 0.0
      %1700 = vmatpush1.msra.mxu0 0.0
      %1701 = vmatprep.subr.mxu0 0.0
      %1702 = vmatpush1.msra.mxu0 0.0
      %1703 = vmatprep.subr.mxu0 0.0
      %1704 = vmatpush1.msra.mxu0 0.0
      %1705 = vmatprep.subr.mxu0 0.0
      %1706 = vmatpush1.msra.mxu0 0.0
      %1707 = vmatprep.subr.mxu0 0.0
      %1708 = vmatpush1.msra.mxu0 0.0
      %1709 = vmatprep.subr.mxu0 0.0
      %1710 = vmatpush1.msra.mxu0 0.0
      %1711 = vmatprep.subr.mxu0 0.0
      %1712 = vmatpush1.msra.mxu0 0.0
      %1713 = vmatprep.mubr.f32.mxu0 0.0
      %1714 = vmatmul.mubr.f32.gmra.mrb[0].mxu0 %v1645
      %v1715 = vpop.f32.mrb[0].mxu0
      %v1716 = vadd.f32 0.0, %v1715
      %v1717 = vpop.f32.mrb[0].mxu0
      %1718 = vmatprep.mubr.f32.mxu0 0.0
      %1719 = vmatmul.mubr.f32.gmra.mrb[0].mxu0 %v1647
      %v1720 = vpop.f32.mrb[0].mxu0
      %v1721 = vadd.f32 0.0, %v1720
      %v1722 = vpop.f32.mrb[0].mxu0
      %1723 = vdwg.mxu0
      %1724 = vrot.lane.b32.xlu0 %v1470, 74
      %v1725 = vpop.permute.xlu0 %1724
      %1726 = vrot.lane.b32.xlu0 %v1471, 74
      %v1727 = vpop.permute.xlu0 %1726
      %v1728 = vsel %vm1472, %v1725, 0
      %v1730 = vsel %vm1472, %v1727, 0
      %1732 = vmatprep.subr.mxu0 0.0
      %1733 = vmatpush1.msra.mxu0 %v1467
      %1734 = vmatprep.subr.mxu0 0.0
      %1735 = vmatpush1.msra.mxu0 %v1468
      %1736 = vmatprep.subr.mxu0 0.0
      %1737 = vmatpush1.msra.mxu0 %v1481
      %1738 = vmatprep.subr.mxu0 0.0
      %1739 = vmatpush1.msra.mxu0 0.0
      %1740 = vmatprep.subr.mxu0 0.0
      %1741 = vmatpush1.msra.mxu0 0.0
      %1742 = vmatprep.subr.mxu0 0.0
      %1743 = vmatpush1.msra.mxu0 0.0
      %1744 = vmatprep.subr.mxu0 0.0
      %1745 = vmatpush1.msra.mxu0 0.0
      %1746 = vmatprep.subr.mxu0 0.0
      %1747 = vmatpush1.msra.mxu0 0.0
      %1748 = vmatprep.subr.mxu0 0.0
      %1749 = vmatpush1.msra.mxu0 0.0
      %1750 = vmatprep.subr.mxu0 0.0
      %1751 = vmatpush1.msra.mxu0 0.0
      %1752 = vmatprep.subr.mxu0 0.0
      %1753 = vmatpush1.msra.mxu0 0.0
      %1754 = vmatprep.subr.mxu0 0.0
      %1755 = vmatpush1.msra.mxu0 0.0
      %1756 = vmatprep.subr.mxu0 0.0
      %1757 = vmatpush1.msra.mxu0 0.0
      %1758 = vmatprep.subr.mxu0 0.0
      %1759 = vmatpush1.msra.mxu0 0.0
      %1760 = vmatprep.subr.mxu0 0.0
      %1761 = vmatpush1.msra.mxu0 0.0
      %1762 = vmatprep.subr.mxu0 0.0
      %1763 = vmatpush1.msra.mxu0 0.0
      %1764 = vmatprep.subr.mxu0 0.0
      %1765 = vmatpush1.msra.mxu0 0.0
      %1766 = vmatprep.subr.mxu0 0.0
      %1767 = vmatpush1.msra.mxu0 0.0
      %1768 = vmatprep.subr.mxu0 0.0
      %1769 = vmatpush1.msra.mxu0 0.0
      %1770 = vmatprep.subr.mxu0 0.0
      %1771 = vmatpush1.msra.mxu0 0.0
      %1772 = vmatprep.subr.mxu0 0.0
      %1773 = vmatpush1.msra.mxu0 0.0
      %1774 = vmatprep.subr.mxu0 0.0
      %1775 = vmatpush1.msra.mxu0 0.0
      %1776 = vmatprep.subr.mxu0 0.0
      %1777 = vmatpush1.msra.mxu0 0.0
      %1778 = vmatprep.subr.mxu0 0.0
      %1779 = vmatpush1.msra.mxu0 0.0
      %1780 = vmatprep.subr.mxu0 0.0
      %1781 = vmatpush1.msra.mxu0 0.0
      %1782 = vmatprep.subr.mxu0 0.0
      %1783 = vmatpush1.msra.mxu0 0.0
      %1784 = vmatprep.subr.mxu0 0.0
      %1785 = vmatpush1.msra.mxu0 0.0
      %1786 = vmatprep.subr.mxu0 0.0
      %1787 = vmatpush1.msra.mxu0 0.0
      %1788 = vmatprep.subr.mxu0 0.0
      %1789 = vmatpush1.msra.mxu0 0.0
      %1790 = vmatprep.subr.mxu0 0.0
      %1791 = vmatpush1.msra.mxu0 0.0
      %1792 = vmatprep.subr.mxu0 0.0
      %1793 = vmatpush1.msra.mxu0 0.0
      %1794 = vmatprep.subr.mxu0 0.0
      %1795 = vmatpush1.msra.mxu0 0.0
      %1796 = vmatprep.mubr.f32.mxu0 0.0
      %1797 = vmatmul.mubr.f32.gmra.mrb[0].mxu0 %v1728
      %v1798 = vpop.f32.mrb[0].mxu0
      %v1799 = vadd.f32 0.0, %v1798
      %v1800 = vpop.f32.mrb[0].mxu0
      %1801 = vmatprep.mubr.f32.mxu0 0.0
      %1802 = vmatmul.mubr.f32.gmra.mrb[0].mxu0 %v1730
      %v1803 = vpop.f32.mrb[0].mxu0
      %v1804 = vadd.f32 0.0, %v1803
      %v1805 = vpop.f32.mrb[0].mxu0
      %1806 = vdwg.mxu0
      %1807 = vrot.lane.b32.xlu0 %v1470, 56
      %v1808 = vpop.permute.xlu0 %1807
      %1809 = vrot.lane.b32.xlu0 %v1471, 56
      %v1810 = vpop.permute.xlu0 %1809
      %v1811 = vsel %vm1472, %v1808, 0
      %v1813 = vsel %vm1472, %v1810, 0
      %1815 = vmatprep.subr.mxu0 0.0
      %1816 = vmatpush1.msra.mxu0 %v1467
      %1817 = vmatprep.subr.mxu0 0.0
      %1818 = vmatpush1.msra.mxu0 %v1468
      %1819 = vmatprep.subr.mxu0 0.0
      %1820 = vmatpush1.msra.mxu0 %v1481
      %1821 = vmatprep.subr.mxu0 0.0
      %1822 = vmatpush1.msra.mxu0 0.0
      %1823 = vmatprep.subr.mxu0 0.0
      %1824 = vmatpush1.msra.mxu0 0.0
      %1825 = vmatprep.subr.mxu0 0.0
      %1826 = vmatpush1.msra.mxu0 0.0
      %1827 = vmatprep.subr.mxu0 0.0
      %1828 = vmatpush1.msra.mxu0 0.0
      %1829 = vmatprep.subr.mxu0 0.0
      %1830 = vmatpush1.msra.mxu0 0.0
      %1831 = vmatprep.subr.mxu0 0.0
      %1832 = vmatpush1.msra.mxu0 0.0
      %1833 = vmatprep.subr.mxu0 0.0
      %1834 = vmatpush1.msra.mxu0 0.0
      %1835 = vmatprep.subr.mxu0 0.0
      %1836 = vmatpush1.msra.mxu0 0.0
      %1837 = vmatprep.subr.mxu0 0.0
      %1838 = vmatpush1.msra.mxu0 0.0
      %1839 = vmatprep.subr.mxu0 0.0
      %1840 = vmatpush1.msra.mxu0 0.0
      %1841 = vmatprep.subr.mxu0 0.0
      %1842 = vmatpush1.msra.mxu0 0.0
      %1843 = vmatprep.subr.mxu0 0.0
      %1844 = vmatpush1.msra.mxu0 0.0
      %1845 = vmatprep.subr.mxu0 0.0
      %1846 = vmatpush1.msra.mxu0 0.0
      %1847 = vmatprep.subr.mxu0 0.0
      %1848 = vmatpush1.msra.mxu0 0.0
      %1849 = vmatprep.subr.mxu0 0.0
      %1850 = vmatpush1.msra.mxu0 0.0
      %1851 = vmatprep.subr.mxu0 0.0
      %1852 = vmatpush1.msra.mxu0 0.0
      %1853 = vmatprep.subr.mxu0 0.0
      %1854 = vmatpush1.msra.mxu0 0.0
      %1855 = vmatprep.subr.mxu0 0.0
      %1856 = vmatpush1.msra.mxu0 0.0
      %1857 = vmatprep.subr.mxu0 0.0
      %1858 = vmatpush1.msra.mxu0 0.0
      %1859 = vmatprep.subr.mxu0 0.0
      %1860 = vmatpush1.msra.mxu0 0.0
      %1861 = vmatprep.subr.mxu0 0.0
      %1862 = vmatpush1.msra.mxu0 0.0
      %1863 = vmatprep.subr.mxu0 0.0
      %1864 = vmatpush1.msra.mxu0 0.0
      %1865 = vmatprep.subr.mxu0 0.0
      %1866 = vmatpush1.msra.mxu0 0.0
      %1867 = vmatprep.subr.mxu0 0.0
      %1868 = vmatpush1.msra.mxu0 0.0
      %1869 = vmatprep.subr.mxu0 0.0
      %1870 = vmatpush1.msra.mxu0 0.0
      %1871 = vmatprep.subr.mxu0 0.0
      %1872 = vmatpush1.msra.mxu0 0.0
      %1873 = vmatprep.subr.mxu0 0.0
      %1874 = vmatpush1.msra.mxu0 0.0
      %1875 = vmatprep.subr.mxu0 0.0
      %1876 = vmatpush1.msra.mxu0 0.0
      %1877 = vmatprep.subr.mxu0 0.0
      %1878 = vmatpush1.msra.mxu0 0.0
      %1879 = vmatprep.mubr.f32.mxu0 0.0
      %1880 = vmatmul.mubr.f32.gmra.mrb[0].mxu0 %v1811
      %v1881 = vpop.f32.mrb[0].mxu0
      %v1882 = vadd.f32 0.0, %v1881
      %v1883 = vpop.f32.mrb[0].mxu0
      %1884 = vmatprep.mubr.f32.mxu0 0.0
      %1885 = vmatmul.mubr.f32.gmra.mrb[0].mxu0 %v1813
      %v1886 = vpop.f32.mrb[0].mxu0
      %v1887 = vadd.f32 0.0, %v1886
      %v1888 = vpop.f32.mrb[0].mxu0
      %1889 = vdwg.mxu0
      %1890 = vrot.lane.b32.xlu0 %v1470, 38
      %v1891 = vpop.permute.xlu0 %1890
      %1892 = vrot.lane.b32.xlu0 %v1471, 38
      %v1893 = vpop.permute.xlu0 %1892
      %v1894 = vsel %vm1472, %v1891, 0
      %v1896 = vsel %vm1472, %v1893, 0
      %1898 = vmatprep.subr.mxu0 0.0
      %1899 = vmatpush1.msra.mxu0 %v1467
      %1900 = vmatprep.subr.mxu0 0.0
      %1901 = vmatpush1.msra.mxu0 %v1468
      %1902 = vmatprep.subr.mxu0 0.0
      %1903 = vmatpush1.msra.mxu0 %v1481
      %1904 = vmatprep.subr.mxu0 0.0
      %1905 = vmatpush1.msra.mxu0 0.0
      %1906 = vmatprep.subr.mxu0 0.0
      %1907 = vmatpush1.msra.mxu0 0.0
      %1908 = vmatprep.subr.mxu0 0.0
      %1909 = vmatpush1.msra.mxu0 0.0
      %1910 = vmatprep.subr.mxu0 0.0
      %1911 = vmatpush1.msra.mxu0 0.0
      %1912 = vmatprep.subr.mxu0 0.0
      %1913 = vmatpush1.msra.mxu0 0.0
      %1914 = vmatprep.subr.mxu0 0.0
      %1915 = vmatpush1.msra.mxu0 0.0
      %1916 = vmatprep.subr.mxu0 0.0
      %1917 = vmatpush1.msra.mxu0 0.0
      %1918 = vmatprep.subr.mxu0 0.0
      %1919 = vmatpush1.msra.mxu0 0.0
      %1920 = vmatprep.subr.mxu0 0.0
      %1921 = vmatpush1.msra.mxu0 0.0
      %1922 = vmatprep.subr.mxu0 0.0
      %1923 = vmatpush1.msra.mxu0 0.0
      %1924 = vmatprep.subr.mxu0 0.0
      %1925 = vmatpush1.msra.mxu0 0.0
      %1926 = vmatprep.subr.mxu0 0.0
      %1927 = vmatpush1.msra.mxu0 0.0
      %1928 = vmatprep.subr.mxu0 0.0
      %1929 = vmatpush1.msra.mxu0 0.0
      %1930 = vmatprep.subr.mxu0 0.0
      %1931 = vmatpush1.msra.mxu0 0.0
      %1932 = vmatprep.subr.mxu0 0.0
      %1933 = vmatpush1.msra.mxu0 0.0
      %1934 = vmatprep.subr.mxu0 0.0
      %1935 = vmatpush1.msra.mxu0 0.0
      %1936 = vmatprep.subr.mxu0 0.0
      %1937 = vmatpush1.msra.mxu0 0.0
      %1938 = vmatprep.subr.mxu0 0.0
      %1939 = vmatpush1.msra.mxu0 0.0
      %1940 = vmatprep.subr.mxu0 0.0
      %1941 = vmatpush1.msra.mxu0 0.0
      %1942 = vmatprep.subr.mxu0 0.0
      %1943 = vmatpush1.msra.mxu0 0.0
      %1944 = vmatprep.subr.mxu0 0.0
      %1945 = vmatpush1.msra.mxu0 0.0
      %1946 = vmatprep.subr.mxu0 0.0
      %1947 = vmatpush1.msra.mxu0 0.0
      %1948 = vmatprep.subr.mxu0 0.0
      %1949 = vmatpush1.msra.mxu0 0.0
      %1950 = vmatprep.subr.mxu0 0.0
      %1951 = vmatpush1.msra.mxu0 0.0
      %1952 = vmatprep.subr.mxu0 0.0
      %1953 = vmatpush1.msra.mxu0 0.0
      %1954 = vmatprep.subr.mxu0 0.0
      %1955 = vmatpush1.msra.mxu0 0.0
      %1956 = vmatprep.subr.mxu0 0.0
      %1957 = vmatpush1.msra.mxu0 0.0
      %1958 = vmatprep.subr.mxu0 0.0
      %1959 = vmatpush1.msra.mxu0 0.0
      %1960 = vmatprep.subr.mxu0 0.0
      %1961 = vmatpush1.msra.mxu0 0.0
      %1962 = vmatprep.mubr.f32.mxu0 0.0
      %1963 = vmatmul.mubr.f32.gmra.mrb[0].mxu0 %v1894
      %v1964 = vpop.f32.mrb[0].mxu0
      %v1965 = vadd.f32 0.0, %v1964
      %v1966 = vpop.f32.mrb[0].mxu0
      %1967 = vmatprep.mubr.f32.mxu0 0.0
      %1968 = vmatmul.mubr.f32.gmra.mrb[0].mxu0 %v1896
      %v1969 = vpop.f32.mrb[0].mxu0
      %v1970 = vadd.f32 0.0, %v1969
      %v1971 = vpop.f32.mrb[0].mxu0
      %1972 = vdwg.mxu0
      %1973 = vrot.lane.b32.xlu0 %v1470, 20
      %v1974 = vpop.permute.xlu0 %1973
      %1975 = vrot.lane.b32.xlu0 %v1471, 20
      %v1976 = vpop.permute.xlu0 %1975
      %v1977 = vsel %vm1472, %v1974, 0
      %v1979 = vsel %vm1472, %v1976, 0
      %1981 = vmatprep.subr.mxu0 0.0
      %1982 = vmatpush1.msra.mxu0 %v1467
      %1983 = vmatprep.subr.mxu0 0.0
      %1984 = vmatpush1.msra.mxu0 %v1468
      %1985 = vmatprep.subr.mxu0 0.0
      %1986 = vmatpush1.msra.mxu0 %v1481
      %1987 = vmatprep.subr.mxu0 0.0
      %1988 = vmatpush1.msra.mxu0 0.0
      %1989 = vmatprep.subr.mxu0 0.0
      %1990 = vmatpush1.msra.mxu0 0.0
      %1991 = vmatprep.subr.mxu0 0.0
      %1992 = vmatpush1.msra.mxu0 0.0
      %1993 = vmatprep.subr.mxu0 0.0
      %1994 = vmatpush1.msra.mxu0 0.0
      %1995 = vmatprep.subr.mxu0 0.0
      %1996 = vmatpush1.msra.mxu0 0.0
      %1997 = vmatprep.subr.mxu0 0.0
      %1998 = vmatpush1.msra.mxu0 0.0
      %1999 = vmatprep.subr.mxu0 0.0
      %2000 = vmatpush1.msra.mxu0 0.0
      %2001 = vmatprep.subr.mxu0 0.0
      %2002 = vmatpush1.msra.mxu0 0.0
      %2003 = vmatprep.subr.mxu0 0.0
      %2004 = vmatpush1.msra.mxu0 0.0
      %2005 = vmatprep.subr.mxu0 0.0
      %2006 = vmatpush1.msra.mxu0 0.0
      %2007 = vmatprep.subr.mxu0 0.0
      %2008 = vmatpush1.msra.mxu0 0.0
      %2009 = vmatprep.subr.mxu0 0.0
      %2010 = vmatpush1.msra.mxu0 0.0
      %2011 = vmatprep.subr.mxu0 0.0
      %2012 = vmatpush1.msra.mxu0 0.0
      %2013 = vmatprep.subr.mxu0 0.0
      %2014 = vmatpush1.msra.mxu0 0.0
      %2015 = vmatprep.subr.mxu0 0.0
      %2016 = vmatpush1.msra.mxu0 0.0
      %2017 = vmatprep.subr.mxu0 0.0
      %2018 = vmatpush1.msra.mxu0 0.0
      %2019 = vmatprep.subr.mxu0 0.0
      %2020 = vmatpush1.msra.mxu0 0.0
      %2021 = vmatprep.subr.mxu0 0.0
      %2022 = vmatpush1.msra.mxu0 0.0
      %2023 = vmatprep.subr.mxu0 0.0
      %2024 = vmatpush1.msra.mxu0 0.0
      %2025 = vmatprep.subr.mxu0 0.0
      %2026 = vmatpush1.msra.mxu0 0.0
      %2027 = vmatprep.subr.mxu0 0.0
      %2028 = vmatpush1.msra.mxu0 0.0
      %2029 = vmatprep.subr.mxu0 0.0
      %2030 = vmatpush1.msra.mxu0 0.0
      %2031 = vmatprep.subr.mxu0 0.0
      %2032 = vmatpush1.msra.mxu0 0.0
      %2033 = vmatprep.subr.mxu0 0.0
      %2034 = vmatpush1.msra.mxu0 0.0
      %2035 = vmatprep.subr.mxu0 0.0
      %2036 = vmatpush1.msra.mxu0 0.0
      %2037 = vmatprep.subr.mxu0 0.0
      %2038 = vmatpush1.msra.mxu0 0.0
      %2039 = vmatprep.subr.mxu0 0.0
      %2040 = vmatpush1.msra.mxu0 0.0
      %2041 = vmatprep.subr.mxu0 0.0
      %2042 = vmatpush1.msra.mxu0 0.0
      %2043 = vmatprep.subr.mxu0 0.0
      %2044 = vmatpush1.msra.mxu0 0.0
      %2045 = vmatprep.mubr.f32.mxu0 0.0
      %2046 = vmatmul.mubr.f32.gmra.mrb[0].mxu0 %v1977
      %v2047 = vpop.f32.mrb[0].mxu0
      %v2048 = vadd.f32 0.0, %v2047
      %v2049 = vpop.f32.mrb[0].mxu0
      %2050 = vmatprep.mubr.f32.mxu0 0.0
      %2051 = vmatmul.mubr.f32.gmra.mrb[0].mxu0 %v1979
      %v2052 = vpop.f32.mrb[0].mxu0
      %v2053 = vadd.f32 0.0, %v2052
      %v2054 = vpop.f32.mrb[0].mxu0
      %2055 = vdwg.mxu0
      %v2056 = vld [vmem:[#allocation2] sm:$0xff]
      %v2057 = vld [vmem:[#allocation2 + $0x8] sm:$0xff]
      %v2058 = vld [vmem:[#allocation2 + $0x18] sm:$0xff]
      %v2059 = vld [vmem:[#allocation2 + $0x20] sm:$0xff]
      %2064 = vrot.lane.b32.xlu0 %v2056, 2
      %v2065 = vpop.permute.xlu0 %2064
      %2066 = vrot.lane.b32.xlu0 %v2057, 2
      %v2067 = vpop.permute.xlu0 %2066
      %2068 = vrot.lane.b32.xlu0 %v2058, 2
      %v2069 = vpop.permute.xlu0 %2068
      %2070 = vrot.lane.b32.xlu0 %v2059, 2
      %v2071 = vpop.permute.xlu0 %2070
      %vm2072 = vcmask 15360
      %v2073 = vsel %vm2072, %v2065, %v2067
      %v2074 = vsel %vm2072, %v2069, %v2071
      %v2075 = vsel %vm1472, %v2073, 0
      %v2077 = vsel %vm1472, %v2074, 0
      %2079 = vmatprep.subr.mxu0 0.0
      %2080 = vmatpush1.msra.mxu0 %v1467
      %2081 = vmatprep.subr.mxu0 0.0
      %2082 = vmatpush1.msra.mxu0 %v1468
      %2083 = vmatprep.subr.mxu0 0.0
      %2084 = vmatpush1.msra.mxu0 %v1481
      %2085 = vmatprep.subr.mxu0 0.0
      %2086 = vmatpush1.msra.mxu0 0.0
      %2087 = vmatprep.subr.mxu0 0.0
      %2088 = vmatpush1.msra.mxu0 0.0
      %2089 = vmatprep.subr.mxu0 0.0
      %2090 = vmatpush1.msra.mxu0 0.0
      %2091 = vmatprep.subr.mxu0 0.0
      %2092 = vmatpush1.msra.mxu0 0.0
      %2093 = vmatprep.subr.mxu0 0.0
      %2094 = vmatpush1.msra.mxu0 0.0
      %2095 = vmatprep.subr.mxu0 0.0
      %2096 = vmatpush1.msra.mxu0 0.0
      %2097 = vmatprep.subr.mxu0 0.0
      %2098 = vmatpush1.msra.mxu0 0.0
      %2099 = vmatprep.subr.mxu0 0.0
      %2100 = vmatpush1.msra.mxu0 0.0
      %2101 = vmatprep.subr.mxu0 0.0
      %2102 = vmatpush1.msra.mxu0 0.0
      %2103 = vmatprep.subr.mxu0 0.0
      %2104 = vmatpush1.msra.mxu0 0.0
      %2105 = vmatprep.subr.mxu0 0.0
      %2106 = vmatpush1.msra.mxu0 0.0
      %2107 = vmatprep.subr.mxu0 0.0
      %2108 = vmatpush1.msra.mxu0 0.0
      %2109 = vmatprep.subr.mxu0 0.0
      %2110 = vmatpush1.msra.mxu0 0.0
      %2111 = vmatprep.subr.mxu0 0.0
      %2112 = vmatpush1.msra.mxu0 0.0
      %2113 = vmatprep.subr.mxu0 0.0
      %2114 = vmatpush1.msra.mxu0 0.0
      %2115 = vmatprep.subr.mxu0 0.0
      %2116 = vmatpush1.msra.mxu0 0.0
      %2117 = vmatprep.subr.mxu0 0.0
      %2118 = vmatpush1.msra.mxu0 0.0
      %2119 = vmatprep.subr.mxu0 0.0
      %2120 = vmatpush1.msra.mxu0 0.0
      %2121 = vmatprep.subr.mxu0 0.0
      %2122 = vmatpush1.msra.mxu0 0.0
      %2123 = vmatprep.subr.mxu0 0.0
      %2124 = vmatpush1.msra.mxu0 0.0
      %2125 = vmatprep.subr.mxu0 0.0
      %2126 = vmatpush1.msra.mxu0 0.0
      %2127 = vmatprep.subr.mxu0 0.0
      %2128 = vmatpush1.msra.mxu0 0.0
      %2129 = vmatprep.subr.mxu0 0.0
      %2130 = vmatpush1.msra.mxu0 0.0
      %2131 = vmatprep.subr.mxu0 0.0
      %2132 = vmatpush1.msra.mxu0 0.0
      %2133 = vmatprep.subr.mxu0 0.0
      %2134 = vmatpush1.msra.mxu0 0.0
      %2135 = vmatprep.subr.mxu0 0.0
      %2136 = vmatpush1.msra.mxu0 0.0
      %2137 = vmatprep.subr.mxu0 0.0
      %2138 = vmatpush1.msra.mxu0 0.0
      %2139 = vmatprep.subr.mxu0 0.0
      %2140 = vmatpush1.msra.mxu0 0.0
      %2141 = vmatprep.subr.mxu0 0.0
      %2142 = vmatpush1.msra.mxu0 0.0
      %2143 = vmatprep.mubr.f32.mxu0 0.0
      %2144 = vmatmul.mubr.f32.gmra.mrb[0].mxu0 %v2075
      %v2145 = vpop.f32.mrb[0].mxu0
      %v2146 = vadd.f32 0.0, %v2145
      %v2147 = vpop.f32.mrb[0].mxu0
      %2148 = vmatprep.mubr.f32.mxu0 0.0
      %2149 = vmatmul.mubr.f32.gmra.mrb[0].mxu0 %v2077
      %v2150 = vpop.f32.mrb[0].mxu0
      %v2151 = vadd.f32 0.0, %v2150
      %v2152 = vpop.f32.mrb[0].mxu0
      %2153 = vdwg.mxu0
      %2154 = vrot.lane.b32.xlu0 %v2057, 112
      %v2155 = vpop.permute.xlu0 %2154
      %2156 = vrot.lane.b32.xlu0 %v2059, 112
      %v2157 = vpop.permute.xlu0 %2156
      %v2158 = vsel %vm1472, %v2155, 0
      %v2160 = vsel %vm1472, %v2157, 0
      %2162 = vmatprep.subr.mxu0 0.0
      %2163 = vmatpush1.msra.mxu0 %v1467
      %2164 = vmatprep.subr.mxu0 0.0
      %2165 = vmatpush1.msra.mxu0 %v1468
      %2166 = vmatprep.subr.mxu0 0.0
      %2167 = vmatpush1.msra.mxu0 %v1481
      %2168 = vmatprep.subr.mxu0 0.0
      %2169 = vmatpush1.msra.mxu0 0.0
      %2170 = vmatprep.subr.mxu0 0.0
      %2171 = vmatpush1.msra.mxu0 0.0
      %2172 = vmatprep.subr.mxu0 0.0
      %2173 = vmatpush1.msra.mxu0 0.0
      %2174 = vmatprep.subr.mxu0 0.0
      %2175 = vmatpush1.msra.mxu0 0.0
      %2176 = vmatprep.subr.mxu0 0.0
      %2177 = vmatpush1.msra.mxu0 0.0
      %2178 = vmatprep.subr.mxu0 0.0
      %2179 = vmatpush1.msra.mxu0 0.0
      %2180 = vmatprep.subr.mxu0 0.0
      %2181 = vmatpush1.msra.mxu0 0.0
      %2182 = vmatprep.subr.mxu0 0.0
      %2183 = vmatpush1.msra.mxu0 0.0
      %2184 = vmatprep.subr.mxu0 0.0
      %2185 = vmatpush1.msra.mxu0 0.0
      %2186 = vmatprep.subr.mxu0 0.0
      %2187 = vmatpush1.msra.mxu0 0.0
      %2188 = vmatprep.subr.mxu0 0.0
      %2189 = vmatpush1.msra.mxu0 0.0
      %2190 = vmatprep.subr.mxu0 0.0
      %2191 = vmatpush1.msra.mxu0 0.0
      %2192 = vmatprep.subr.mxu0 0.0
      %2193 = vmatpush1.msra.mxu0 0.0
      %2194 = vmatprep.subr.mxu0 0.0
      %2195 = vmatpush1.msra.mxu0 0.0
      %2196 = vmatprep.subr.mxu0 0.0
      %2197 = vmatpush1.msra.mxu0 0.0
      %2198 = vmatprep.subr.mxu0 0.0
      %2199 = vmatpush1.msra.mxu0 0.0
      %2200 = vmatprep.subr.mxu0 0.0
      %2201 = vmatpush1.msra.mxu0 0.0
      %2202 = vmatprep.subr.mxu0 0.0
      %2203 = vmatpush1.msra.mxu0 0.0
      %2204 = vmatprep.subr.mxu0 0.0
      %2205 = vmatpush1.msra.mxu0 0.0
      %2206 = vmatprep.subr.mxu0 0.0
      %2207 = vmatpush1.msra.mxu0 0.0
      %2208 = vmatprep.subr.mxu0 0.0
      %2209 = vmatpush1.msra.mxu0 0.0
      %2210 = vmatprep.subr.mxu0 0.0
      %2211 = vmatpush1.msra.mxu0 0.0
      %2212 = vmatprep.subr.mxu0 0.0
      %2213 = vmatpush1.msra.mxu0 0.0
      %2214 = vmatprep.subr.mxu0 0.0
      %2215 = vmatpush1.msra.mxu0 0.0
      %2216 = vmatprep.subr.mxu0 0.0
      %2217 = vmatpush1.msra.mxu0 0.0
      %2218 = vmatprep.subr.mxu0 0.0
      %2219 = vmatpush1.msra.mxu0 0.0
      %2220 = vmatprep.subr.mxu0 0.0
      %2221 = vmatpush1.msra.mxu0 0.0
      %2222 = vmatprep.subr.mxu0 0.0
      %2223 = vmatpush1.msra.mxu0 0.0
      %2224 = vmatprep.subr.mxu0 0.0
      %2225 = vmatpush1.msra.mxu0 0.0
      %2226 = vmatprep.mubr.f32.mxu0 0.0
      %2227 = vmatmul.mubr.f32.gmra.mrb[0].mxu0 %v2158
      %v2228 = vpop.f32.mrb[0].mxu0
      %v2229 = vadd.f32 0.0, %v2228
      %v2230 = vpop.f32.mrb[0].mxu0
      %2231 = vmatprep.mubr.f32.mxu0 0.0
      %2232 = vmatmul.mubr.f32.gmra.mrb[0].mxu0 %v2160
      %v2233 = vpop.f32.mrb[0].mxu0
      %v2234 = vadd.f32 0.0, %v2233
      %v2235 = vpop.f32.mrb[0].mxu0
      %2236 = vdwg.mxu0
      %2237 = vrot.lane.b32.xlu0 %v2057, 94
      %v2238 = vpop.permute.xlu0 %2237
      %2239 = vrot.lane.b32.xlu0 %v2059, 94
      %v2240 = vpop.permute.xlu0 %2239
      %v2241 = vsel %vm1472, %v2238, 0
      %v2243 = vsel %vm1472, %v2240, 0
      %2245 = vmatprep.subr.mxu0 0.0
      %2246 = vmatpush1.msra.mxu0 %v1467
      %2247 = vmatprep.subr.mxu0 0.0
      %2248 = vmatpush1.msra.mxu0 %v1468
      %2249 = vmatprep.subr.mxu0 0.0
      %2250 = vmatpush1.msra.mxu0 %v1481
      %2251 = vmatprep.subr.mxu0 0.0
      %2252 = vmatpush1.msra.mxu0 0.0
      %2253 = vmatprep.subr.mxu0 0.0
      %2254 = vmatpush1.msra.mxu0 0.0
      %2255 = vmatprep.subr.mxu0 0.0
      %2256 = vmatpush1.msra.mxu0 0.0
      %2257 = vmatprep.subr.mxu0 0.0
      %2258 = vmatpush1.msra.mxu0 0.0
      %2259 = vmatprep.subr.mxu0 0.0
      %2260 = vmatpush1.msra.mxu0 0.0
      %2261 = vmatprep.subr.mxu0 0.0
      %2262 = vmatpush1.msra.mxu0 0.0
      %2263 = vmatprep.subr.mxu0 0.0
      %2264 = vmatpush1.msra.mxu0 0.0
      %2265 = vmatprep.subr.mxu0 0.0
      %2266 = vmatpush1.msra.mxu0 0.0
      %2267 = vmatprep.subr.mxu0 0.0
      %2268 = vmatpush1.msra.mxu0 0.0
      %2269 = vmatprep.subr.mxu0 0.0
      %2270 = vmatpush1.msra.mxu0 0.0
      %2271 = vmatprep.subr.mxu0 0.0
      %2272 = vmatpush1.msra.mxu0 0.0
      %2273 = vmatprep.subr.mxu0 0.0
      %2274 = vmatpush1.msra.mxu0 0.0
      %2275 = vmatprep.subr.mxu0 0.0
      %2276 = vmatpush1.msra.mxu0 0.0
      %2277 = vmatprep.subr.mxu0 0.0
      %2278 = vmatpush1.msra.mxu0 0.0
      %2279 = vmatprep.subr.mxu0 0.0
      %2280 = vmatpush1.msra.mxu0 0.0
      %2281 = vmatprep.subr.mxu0 0.0
      %2282 = vmatpush1.msra.mxu0 0.0
      %2283 = vmatprep.subr.mxu0 0.0
      %2284 = vmatpush1.msra.mxu0 0.0
      %2285 = vmatprep.subr.mxu0 0.0
      %2286 = vmatpush1.msra.mxu0 0.0
      %2287 = vmatprep.subr.mxu0 0.0
      %2288 = vmatpush1.msra.mxu0 0.0
      %2289 = vmatprep.subr.mxu0 0.0
      %2290 = vmatpush1.msra.mxu0 0.0
      %2291 = vmatprep.subr.mxu0 0.0
      %2292 = vmatpush1.msra.mxu0 0.0
      %2293 = vmatprep.subr.mxu0 0.0
      %2294 = vmatpush1.msra.mxu0 0.0
      %2295 = vmatprep.subr.mxu0 0.0
      %2296 = vmatpush1.msra.mxu0 0.0
      %2297 = vmatprep.subr.mxu0 0.0
      %2298 = vmatpush1.msra.mxu0 0.0
      %2299 = vmatprep.subr.mxu0 0.0
      %2300 = vmatpush1.msra.mxu0 0.0
      %2301 = vmatprep.subr.mxu0 0.0
      %2302 = vmatpush1.msra.mxu0 0.0
      %2303 = vmatprep.subr.mxu0 0.0
      %2304 = vmatpush1.msra.mxu0 0.0
      %2305 = vmatprep.subr.mxu0 0.0
      %2306 = vmatpush1.msra.mxu0 0.0
      %2307 = vmatprep.subr.mxu0 0.0
      %2308 = vmatpush1.msra.mxu0 0.0
      %2309 = vmatprep.mubr.f32.mxu0 0.0
      %2310 = vmatmul.mubr.f32.gmra.mrb[0].mxu0 %v2241
      %v2311 = vpop.f32.mrb[0].mxu0
      %v2312 = vadd.f32 0.0, %v2311
      %v2313 = vpop.f32.mrb[0].mxu0
      %2314 = vmatprep.mubr.f32.mxu0 0.0
      %2315 = vmatmul.mubr.f32.gmra.mrb[0].mxu0 %v2243
      %v2316 = vpop.f32.mrb[0].mxu0
      %v2317 = vadd.f32 0.0, %v2316
      %v2318 = vpop.f32.mrb[0].mxu0
      %2319 = vdwg.mxu0
      %2320 = vrot.lane.b32.xlu0 %v2057, 76
      %v2321 = vpop.permute.xlu0 %2320
      %2322 = vrot.lane.b32.xlu0 %v2059, 76
      %v2323 = vpop.permute.xlu0 %2322
      %v2324 = vsel %vm1472, %v2321, 0
      %v2326 = vsel %vm1472, %v2323, 0
      %2328 = vmatprep.subr.mxu0 0.0
      %2329 = vmatpush1.msra.mxu0 %v1467
      %2330 = vmatprep.subr.mxu0 0.0
      %2331 = vmatpush1.msra.mxu0 %v1468
      %2332 = vmatprep.subr.mxu0 0.0
      %2333 = vmatpush1.msra.mxu0 %v1481
      %2334 = vmatprep.subr.mxu0 0.0
      %2335 = vmatpush1.msra.mxu0 0.0
      %2336 = vmatprep.subr.mxu0 0.0
      %2337 = vmatpush1.msra.mxu0 0.0
      %2338 = vmatprep.subr.mxu0 0.0
      %2339 = vmatpush1.msra.mxu0 0.0
      %2340 = vmatprep.subr.mxu0 0.0
      %2341 = vmatpush1.msra.mxu0 0.0
      %2342 = vmatprep.subr.mxu0 0.0
      %2343 = vmatpush1.msra.mxu0 0.0
      %2344 = vmatprep.subr.mxu0 0.0
      %2345 = vmatpush1.msra.mxu0 0.0
      %2346 = vmatprep.subr.mxu0 0.0
      %2347 = vmatpush1.msra.mxu0 0.0
      %2348 = vmatprep.subr.mxu0 0.0
      %2349 = vmatpush1.msra.mxu0 0.0
      %2350 = vmatprep.subr.mxu0 0.0
      %2351 = vmatpush1.msra.mxu0 0.0
      %2352 = vmatprep.subr.mxu0 0.0
      %2353 = vmatpush1.msra.mxu0 0.0
      %2354 = vmatprep.subr.mxu0 0.0
      %2355 = vmatpush1.msra.mxu0 0.0
      %2356 = vmatprep.subr.mxu0 0.0
      %2357 = vmatpush1.msra.mxu0 0.0
      %2358 = vmatprep.subr.mxu0 0.0
      %2359 = vmatpush1.msra.mxu0 0.0
      %2360 = vmatprep.subr.mxu0 0.0
      %2361 = vmatpush1.msra.mxu0 0.0
      %2362 = vmatprep.subr.mxu0 0.0
      %2363 = vmatpush1.msra.mxu0 0.0
      %2364 = vmatprep.subr.mxu0 0.0
      %2365 = vmatpush1.msra.mxu0 0.0
      %2366 = vmatprep.subr.mxu0 0.0
      %2367 = vmatpush1.msra.mxu0 0.0
      %2368 = vmatprep.subr.mxu0 0.0
      %2369 = vmatpush1.msra.mxu0 0.0
      %2370 = vmatprep.subr.mxu0 0.0
      %2371 = vmatpush1.msra.mxu0 0.0
      %2372 = vmatprep.subr.mxu0 0.0
      %2373 = vmatpush1.msra.mxu0 0.0
      %2374 = vmatprep.subr.mxu0 0.0
      %2375 = vmatpush1.msra.mxu0 0.0
      %2376 = vmatprep.subr.mxu0 0.0
      %2377 = vmatpush1.msra.mxu0 0.0
      %2378 = vmatprep.subr.mxu0 0.0
      %2379 = vmatpush1.msra.mxu0 0.0
      %2380 = vmatprep.subr.mxu0 0.0
      %2381 = vmatpush1.msra.mxu0 0.0
      %2382 = vmatprep.subr.mxu0 0.0
      %2383 = vmatpush1.msra.mxu0 0.0
      %2384 = vmatprep.subr.mxu0 0.0
      %2385 = vmatpush1.msra.mxu0 0.0
      %2386 = vmatprep.subr.mxu0 0.0
      %2387 = vmatpush1.msra.mxu0 0.0
      %2388 = vmatprep.subr.mxu0 0.0
      %2389 = vmatpush1.msra.mxu0 0.0
      %2390 = vmatprep.subr.mxu0 0.0
      %2391 = vmatpush1.msra.mxu0 0.0
      %2392 = vmatprep.mubr.f32.mxu0 0.0
      %2393 = vmatmul.mubr.f32.gmra.mrb[0].mxu0 %v2324
      %v2394 = vpop.f32.mrb[0].mxu0
      %v2395 = vadd.f32 0.0, %v2394
      %v2396 = vpop.f32.mrb[0].mxu0
      %2397 = vmatprep.mubr.f32.mxu0 0.0
      %2398 = vmatmul.mubr.f32.gmra.mrb[0].mxu0 %v2326
      %v2399 = vpop.f32.mrb[0].mxu0
      %v2400 = vadd.f32 0.0, %v2399
      %v2401 = vpop.f32.mrb[0].mxu0
      %2402 = vdwg.mxu0
      %2403 = vrot.lane.b32.xlu0 %v2057, 58
      %v2404 = vpop.permute.xlu0 %2403
      %2405 = vrot.lane.b32.xlu0 %v2059, 58
      %v2406 = vpop.permute.xlu0 %2405
      %v2407 = vsel %vm1472, %v2404, 0
      %v2409 = vsel %vm1472, %v2406, 0
      %2411 = vmatprep.subr.mxu0 0.0
      %2412 = vmatpush1.msra.mxu0 %v1467
      %2413 = vmatprep.subr.mxu0 0.0
      %2414 = vmatpush1.msra.mxu0 %v1468
      %2415 = vmatprep.subr.mxu0 0.0
      %2416 = vmatpush1.msra.mxu0 %v1481
      %2417 = vmatprep.subr.mxu0 0.0
      %2418 = vmatpush1.msra.mxu0 0.0
      %2419 = vmatprep.subr.mxu0 0.0
      %2420 = vmatpush1.msra.mxu0 0.0
      %2421 = vmatprep.subr.mxu0 0.0
      %2422 = vmatpush1.msra.mxu0 0.0
      %2423 = vmatprep.subr.mxu0 0.0
      %2424 = vmatpush1.msra.mxu0 0.0
      %2425 = vmatprep.subr.mxu0 0.0
      %2426 = vmatpush1.msra.mxu0 0.0
      %2427 = vmatprep.subr.mxu0 0.0
      %2428 = vmatpush1.msra.mxu0 0.0
      %2429 = vmatprep.subr.mxu0 0.0
      %2430 = vmatpush1.msra.mxu0 0.0
      %2431 = vmatprep.subr.mxu0 0.0
      %2432 = vmatpush1.msra.mxu0 0.0
      %2433 = vmatprep.subr.mxu0 0.0
      %2434 = vmatpush1.msra.mxu0 0.0
      %2435 = vmatprep.subr.mxu0 0.0
      %2436 = vmatpush1.msra.mxu0 0.0
      %2437 = vmatprep.subr.mxu0 0.0
      %2438 = vmatpush1.msra.mxu0 0.0
      %2439 = vmatprep.subr.mxu0 0.0
      %2440 = vmatpush1.msra.mxu0 0.0
      %2441 = vmatprep.subr.mxu0 0.0
      %2442 = vmatpush1.msra.mxu0 0.0
      %2443 = vmatprep.subr.mxu0 0.0
      %2444 = vmatpush1.msra.mxu0 0.0
      %2445 = vmatprep.subr.mxu0 0.0
      %2446 = vmatpush1.msra.mxu0 0.0
      %2447 = vmatprep.subr.mxu0 0.0
      %2448 = vmatpush1.msra.mxu0 0.0
      %2449 = vmatprep.subr.mxu0 0.0
      %2450 = vmatpush1.msra.mxu0 0.0
      %2451 = vmatprep.subr.mxu0 0.0
      %2452 = vmatpush1.msra.mxu0 0.0
      %2453 = vmatprep.subr.mxu0 0.0
      %2454 = vmatpush1.msra.mxu0 0.0
      %2455 = vmatprep.subr.mxu0 0.0
      %2456 = vmatpush1.msra.mxu0 0.0
      %2457 = vmatprep.subr.mxu0 0.0
      %2458 = vmatpush1.msra.mxu0 0.0
      %2459 = vmatprep.subr.mxu0 0.0
      %2460 = vmatpush1.msra.mxu0 0.0
      %2461 = vmatprep.subr.mxu0 0.0
      %2462 = vmatpush1.msra.mxu0 0.0
      %2463 = vmatprep.subr.mxu0 0.0
      %2464 = vmatpush1.msra.mxu0 0.0
      %2465 = vmatprep.subr.mxu0 0.0
      %2466 = vmatpush1.msra.mxu0 0.0
      %2467 = vmatprep.subr.mxu0 0.0
      %2468 = vmatpush1.msra.mxu0 0.0
      %2469 = vmatprep.subr.mxu0 0.0
      %2470 = vmatpush1.msra.mxu0 0.0
      %2471 = vmatprep.subr.mxu0 0.0
      %2472 = vmatpush1.msra.mxu0 0.0
      %2473 = vmatprep.subr.mxu0 0.0
      %2474 = vmatpush1.msra.mxu0 0.0
      %2475 = vmatprep.mubr.f32.mxu0 0.0
      %2476 = vmatmul.mubr.f32.gmra.mrb[0].mxu0 %v2407
      %v2477 = vpop.f32.mrb[0].mxu0
      %v2478 = vadd.f32 0.0, %v2477
      %v2479 = vpop.f32.mrb[0].mxu0
      %2480 = vmatprep.mubr.f32.mxu0 0.0
      %2481 = vmatmul.mubr.f32.gmra.mrb[0].mxu0 %v2409
      %v2482 = vpop.f32.mrb[0].mxu0
      %v2483 = vadd.f32 0.0, %v2482
      %v2484 = vpop.f32.mrb[0].mxu0
      %2485 = vdwg.mxu0
      %2486 = vrot.lane.b32.xlu0 %v2057, 40
      %v2487 = vpop.permute.xlu0 %2486
      %2488 = vrot.lane.b32.xlu0 %v2059, 40
      %v2489 = vpop.permute.xlu0 %2488
      %v2490 = vsel %vm1472, %v2487, 0
      %v2492 = vsel %vm1472, %v2489, 0
      %2494 = vmatprep.subr.mxu0 0.0
      %2495 = vmatpush1.msra.mxu0 %v1467
      %2496 = vmatprep.subr.mxu0 0.0
      %2497 = vmatpush1.msra.mxu0 %v1468
      %2498 = vmatprep.subr.mxu0 0.0
      %2499 = vmatpush1.msra.mxu0 %v1481
      %2500 = vmatprep.subr.mxu0 0.0
      %2501 = vmatpush1.msra.mxu0 0.0
      %2502 = vmatprep.subr.mxu0 0.0
      %2503 = vmatpush1.msra.mxu0 0.0
      %2504 = vmatprep.subr.mxu0 0.0
      %2505 = vmatpush1.msra.mxu0 0.0
      %2506 = vmatprep.subr.mxu0 0.0
      %2507 = vmatpush1.msra.mxu0 0.0
      %2508 = vmatprep.subr.mxu0 0.0
      %2509 = vmatpush1.msra.mxu0 0.0
      %2510 = vmatprep.subr.mxu0 0.0
      %2511 = vmatpush1.msra.mxu0 0.0
      %2512 = vmatprep.subr.mxu0 0.0
      %2513 = vmatpush1.msra.mxu0 0.0
      %2514 = vmatprep.subr.mxu0 0.0
      %2515 = vmatpush1.msra.mxu0 0.0
      %2516 = vmatprep.subr.mxu0 0.0
      %2517 = vmatpush1.msra.mxu0 0.0
      %2518 = vmatprep.subr.mxu0 0.0
      %2519 = vmatpush1.msra.mxu0 0.0
      %2520 = vmatprep.subr.mxu0 0.0
      %2521 = vmatpush1.msra.mxu0 0.0
      %2522 = vmatprep.subr.mxu0 0.0
      %2523 = vmatpush1.msra.mxu0 0.0
      %2524 = vmatprep.subr.mxu0 0.0
      %2525 = vmatpush1.msra.mxu0 0.0
      %2526 = vmatprep.subr.mxu0 0.0
      %2527 = vmatpush1.msra.mxu0 0.0
      %2528 = vmatprep.subr.mxu0 0.0
      %2529 = vmatpush1.msra.mxu0 0.0
      %2530 = vmatprep.subr.mxu0 0.0
      %2531 = vmatpush1.msra.mxu0 0.0
      %2532 = vmatprep.subr.mxu0 0.0
      %2533 = vmatpush1.msra.mxu0 0.0
      %2534 = vmatprep.subr.mxu0 0.0
      %2535 = vmatpush1.msra.mxu0 0.0
      %2536 = vmatprep.subr.mxu0 0.0
      %2537 = vmatpush1.msra.mxu0 0.0
      %2538 = vmatprep.subr.mxu0 0.0
      %2539 = vmatpush1.msra.mxu0 0.0
      %2540 = vmatprep.subr.mxu0 0.0
      %2541 = vmatpush1.msra.mxu0 0.0
      %2542 = vmatprep.subr.mxu0 0.0
      %2543 = vmatpush1.msra.mxu0 0.0
      %2544 = vmatprep.subr.mxu0 0.0
      %2545 = vmatpush1.msra.mxu0 0.0
      %2546 = vmatprep.subr.mxu0 0.0
      %2547 = vmatpush1.msra.mxu0 0.0
      %2548 = vmatprep.subr.mxu0 0.0
      %2549 = vmatpush1.msra.mxu0 0.0
      %2550 = vmatprep.subr.mxu0 0.0
      %2551 = vmatpush1.msra.mxu0 0.0
      %2552 = vmatprep.subr.mxu0 0.0
      %2553 = vmatpush1.msra.mxu0 0.0
      %2554 = vmatprep.subr.mxu0 0.0
      %2555 = vmatpush1.msra.mxu0 0.0
      %2556 = vmatprep.subr.mxu0 0.0
      %2557 = vmatpush1.msra.mxu0 0.0
      %2558 = vmatprep.mubr.f32.mxu0 0.0
      %2559 = vmatmul.mubr.f32.gmra.mrb[0].mxu0 %v2490
      %v2560 = vpop.f32.mrb[0].mxu0
      %v2561 = vadd.f32 0.0, %v2560
      %v2562 = vpop.f32.mrb[0].mxu0
      %2563 = vmatprep.mubr.f32.mxu0 0.0
      %2564 = vmatmul.mubr.f32.gmra.mrb[0].mxu0 %v2492
      %v2565 = vpop.f32.mrb[0].mxu0
      %v2566 = vadd.f32 0.0, %v2565
      %v2567 = vpop.f32.mrb[0].mxu0
      %2568 = vdwg.mxu0
      %2569 = vrot.lane.b32.xlu0 %v2057, 22
      %v2570 = vpop.permute.xlu0 %2569
      %2571 = vrot.lane.b32.xlu0 %v2059, 22
      %v2572 = vpop.permute.xlu0 %2571
      %v2573 = vsel %vm1472, %v2570, 0
      %v2575 = vsel %vm1472, %v2572, 0
      %2577 = vmatprep.subr.mxu0 0.0
      %2578 = vmatpush1.msra.mxu0 %v1467
      %2579 = vmatprep.subr.mxu0 0.0
      %2580 = vmatpush1.msra.mxu0 %v1468
      %2581 = vmatprep.subr.mxu0 0.0
      %2582 = vmatpush1.msra.mxu0 %v1481
      %2583 = vmatprep.subr.mxu0 0.0
      %2584 = vmatpush1.msra.mxu0 0.0
      %2585 = vmatprep.subr.mxu0 0.0
      %2586 = vmatpush1.msra.mxu0 0.0
      %2587 = vmatprep.subr.mxu0 0.0
      %2588 = vmatpush1.msra.mxu0 0.0
      %2589 = vmatprep.subr.mxu0 0.0
      %2590 = vmatpush1.msra.mxu0 0.0
      %2591 = vmatprep.subr.mxu0 0.0
      %2592 = vmatpush1.msra.mxu0 0.0
      %2593 = vmatprep.subr.mxu0 0.0
      %2594 = vmatpush1.msra.mxu0 0.0
      %2595 = vmatprep.subr.mxu0 0.0
      %2596 = vmatpush1.msra.mxu0 0.0
      %2597 = vmatprep.subr.mxu0 0.0
      %2598 = vmatpush1.msra.mxu0 0.0
      %2599 = vmatprep.subr.mxu0 0.0
      %2600 = vmatpush1.msra.mxu0 0.0
      %2601 = vmatprep.subr.mxu0 0.0
      %2602 = vmatpush1.msra.mxu0 0.0
      %2603 = vmatprep.subr.mxu0 0.0
      %2604 = vmatpush1.msra.mxu0 0.0
      %2605 = vmatprep.subr.mxu0 0.0
      %2606 = vmatpush1.msra.mxu0 0.0
      %2607 = vmatprep.subr.mxu0 0.0
      %2608 = vmatpush1.msra.mxu0 0.0
      %2609 = vmatprep.subr.mxu0 0.0
      %2610 = vmatpush1.msra.mxu0 0.0
      %2611 = vmatprep.subr.mxu0 0.0
      %2612 = vmatpush1.msra.mxu0 0.0
      %2613 = vmatprep.subr.mxu0 0.0
      %2614 = vmatpush1.msra.mxu0 0.0
      %2615 = vmatprep.subr.mxu0 0.0
      %2616 = vmatpush1.msra.mxu0 0.0
      %2617 = vmatprep.subr.mxu0 0.0
      %2618 = vmatpush1.msra.mxu0 0.0
      %2619 = vmatprep.subr.mxu0 0.0
      %2620 = vmatpush1.msra.mxu0 0.0
      %2621 = vmatprep.subr.mxu0 0.0
      %2622 = vmatpush1.msra.mxu0 0.0
      %2623 = vmatprep.subr.mxu0 0.0
      %2624 = vmatpush1.msra.mxu0 0.0
      %2625 = vmatprep.subr.mxu0 0.0
      %2626 = vmatpush1.msra.mxu0 0.0
      %2627 = vmatprep.subr.mxu0 0.0
      %2628 = vmatpush1.msra.mxu0 0.0
      %2629 = vmatprep.subr.mxu0 0.0
      %2630 = vmatpush1.msra.mxu0 0.0
      %2631 = vmatprep.subr.mxu0 0.0
      %2632 = vmatpush1.msra.mxu0 0.0
      %2633 = vmatprep.subr.mxu0 0.0
      %2634 = vmatpush1.msra.mxu0 0.0
      %2635 = vmatprep.subr.mxu0 0.0
      %2636 = vmatpush1.msra.mxu0 0.0
      %2637 = vmatprep.subr.mxu0 0.0
      %2638 = vmatpush1.msra.mxu0 0.0
      %2639 = vmatprep.subr.mxu0 0.0
      %2640 = vmatpush1.msra.mxu0 0.0
      %2641 = vmatprep.mubr.f32.mxu0 0.0
      %2642 = vmatmul.mubr.f32.gmra.mrb[0].mxu0 %v2573
      %v2643 = vpop.f32.mrb[0].mxu0
      %v2644 = vadd.f32 0.0, %v2643
      %v2645 = vpop.f32.mrb[0].mxu0
      %2646 = vmatprep.mubr.f32.mxu0 0.0
      %2647 = vmatmul.mubr.f32.gmra.mrb[0].mxu0 %v2575
      %v2648 = vpop.f32.mrb[0].mxu0
      %v2649 = vadd.f32 0.0, %v2648
      %v2650 = vpop.f32.mrb[0].mxu0
      %2651 = vdwg.mxu0
      %v2652 = vld [vmem:[#allocation2 + $0x8] sm:$0xff]
      %v2653 = vld [vmem:[#allocation2 + $0x10] sm:$0xff]
      %v2654 = vld [vmem:[#allocation2 + $0x20] sm:$0xff]
      %v2655 = vld [vmem:[#allocation2 + $0x28] sm:$0xff]
      %2660 = vrot.lane.b32.xlu0 %v2652, 4
      %v2661 = vpop.permute.xlu0 %2660
      %2662 = vrot.lane.b32.xlu0 %v2653, 4
      %v2663 = vpop.permute.xlu0 %2662
      %2664 = vrot.lane.b32.xlu0 %v2654, 4
      %v2665 = vpop.permute.xlu0 %2664
      %2666 = vrot.lane.b32.xlu0 %v2655, 4
      %v2667 = vpop.permute.xlu0 %2666
      %vm2668 = vcmask 31744
      %v2669 = vsel %vm2668, %v2661, %v2663
      %v2670 = vsel %vm2668, %v2665, %v2667
      %v2671 = vsel %vm1472, %v2669, 0
      %v2673 = vsel %vm1472, %v2670, 0
      %2675 = vmatprep.subr.mxu0 0.0
      %2676 = vmatpush1.msra.mxu0 %v1467
      %2677 = vmatprep.subr.mxu0 0.0
      %2678 = vmatpush1.msra.mxu0 %v1468
      %2679 = vmatprep.subr.mxu0 0.0
      %2680 = vmatpush1.msra.mxu0 %v1481
      %2681 = vmatprep.subr.mxu0 0.0
      %2682 = vmatpush1.msra.mxu0 0.0
      %2683 = vmatprep.subr.mxu0 0.0
      %2684 = vmatpush1.msra.mxu0 0.0
      %2685 = vmatprep.subr.mxu0 0.0
      %2686 = vmatpush1.msra.mxu0 0.0
      %2687 = vmatprep.subr.mxu0 0.0
      %2688 = vmatpush1.msra.mxu0 0.0
      %2689 = vmatprep.subr.mxu0 0.0
      %2690 = vmatpush1.msra.mxu0 0.0
      %2691 = vmatprep.subr.mxu0 0.0
      %2692 = vmatpush1.msra.mxu0 0.0
      %2693 = vmatprep.subr.mxu0 0.0
      %2694 = vmatpush1.msra.mxu0 0.0
      %2695 = vmatprep.subr.mxu0 0.0
      %2696 = vmatpush1.msra.mxu0 0.0
      %2697 = vmatprep.subr.mxu0 0.0
      %2698 = vmatpush1.msra.mxu0 0.0
      %2699 = vmatprep.subr.mxu0 0.0
      %2700 = vmatpush1.msra.mxu0 0.0
      %2701 = vmatprep.subr.mxu0 0.0
      %2702 = vmatpush1.msra.mxu0 0.0
      %2703 = vmatprep.subr.mxu0 0.0
      %2704 = vmatpush1.msra.mxu0 0.0
      %2705 = vmatprep.subr.mxu0 0.0
      %2706 = vmatpush1.msra.mxu0 0.0
      %2707 = vmatprep.subr.mxu0 0.0
      %2708 = vmatpush1.msra.mxu0 0.0
      %2709 = vmatprep.subr.mxu0 0.0
      %2710 = vmatpush1.msra.mxu0 0.0
      %2711 = vmatprep.subr.mxu0 0.0
      %2712 = vmatpush1.msra.mxu0 0.0
      %2713 = vmatprep.subr.mxu0 0.0
      %2714 = vmatpush1.msra.mxu0 0.0
      %2715 = vmatprep.subr.mxu0 0.0
      %2716 = vmatpush1.msra.mxu0 0.0
      %2717 = vmatprep.subr.mxu0 0.0
      %2718 = vmatpush1.msra.mxu0 0.0
      %2719 = vmatprep.subr.mxu0 0.0
      %2720 = vmatpush1.msra.mxu0 0.0
      %2721 = vmatprep.subr.mxu0 0.0
      %2722 = vmatpush1.msra.mxu0 0.0
      %2723 = vmatprep.subr.mxu0 0.0
      %2724 = vmatpush1.msra.mxu0 0.0
      %2725 = vmatprep.subr.mxu0 0.0
      %2726 = vmatpush1.msra.mxu0 0.0
      %2727 = vmatprep.subr.mxu0 0.0
      %2728 = vmatpush1.msra.mxu0 0.0
      %2729 = vmatprep.subr.mxu0 0.0
      %2730 = vmatpush1.msra.mxu0 0.0
      %2731 = vmatprep.subr.mxu0 0.0
      %2732 = vmatpush1.msra.mxu0 0.0
      %2733 = vmatprep.subr.mxu0 0.0
      %2734 = vmatpush1.msra.mxu0 0.0
      %2735 = vmatprep.subr.mxu0 0.0
      %2736 = vmatpush1.msra.mxu0 0.0
      %2737 = vmatprep.subr.mxu0 0.0
      %2738 = vmatpush1.msra.mxu0 0.0
      %2739 = vmatprep.mubr.f32.mxu0 0.0
      %2740 = vmatmul.mubr.f32.gmra.mrb[0].mxu0 %v2671
      %v2741 = vpop.f32.mrb[0].mxu0
      %v2742 = vadd.f32 0.0, %v2741
      %v2743 = vpop.f32.mrb[0].mxu0
      %2744 = vmatprep.mubr.f32.mxu0 0.0
      %2745 = vmatmul.mubr.f32.gmra.mrb[0].mxu0 %v2673
      %v2746 = vpop.f32.mrb[0].mxu0
      %v2747 = vadd.f32 0.0, %v2746
      %v2748 = vpop.f32.mrb[0].mxu0
      %2749 = vdwg.mxu0
      %2750 = vrot.lane.b32.xlu0 %v2653, 114
      %v2751 = vpop.permute.xlu0 %2750
      %2752 = vrot.lane.b32.xlu0 %v2655, 114
      %v2753 = vpop.permute.xlu0 %2752
      %v2754 = vsel %vm1472, %v2751, 0
      %v2756 = vsel %vm1472, %v2753, 0
      %2758 = vmatprep.subr.mxu0 0.0
      %2759 = vmatpush1.msra.mxu0 %v1467
      %2760 = vmatprep.subr.mxu0 0.0
      %2761 = vmatpush1.msra.mxu0 %v1468
      %2762 = vmatprep.subr.mxu0 0.0
      %2763 = vmatpush1.msra.mxu0 %v1481
      %2764 = vmatprep.subr.mxu0 0.0
      %2765 = vmatpush1.msra.mxu0 0.0
      %2766 = vmatprep.subr.mxu0 0.0
      %2767 = vmatpush1.msra.mxu0 0.0
      %2768 = vmatprep.subr.mxu0 0.0
      %2769 = vmatpush1.msra.mxu0 0.0
      %2770 = vmatprep.subr.mxu0 0.0
      %2771 = vmatpush1.msra.mxu0 0.0
      %2772 = vmatprep.subr.mxu0 0.0
      %2773 = vmatpush1.msra.mxu0 0.0
      %2774 = vmatprep.subr.mxu0 0.0
      %2775 = vmatpush1.msra.mxu0 0.0
      %2776 = vmatprep.subr.mxu0 0.0
      %2777 = vmatpush1.msra.mxu0 0.0
      %2778 = vmatprep.subr.mxu0 0.0
      %2779 = vmatpush1.msra.mxu0 0.0
      %2780 = vmatprep.subr.mxu0 0.0
      %2781 = vmatpush1.msra.mxu0 0.0
      %2782 = vmatprep.subr.mxu0 0.0
      %2783 = vmatpush1.msra.mxu0 0.0
      %2784 = vmatprep.subr.mxu0 0.0
      %2785 = vmatpush1.msra.mxu0 0.0
      %2786 = vmatprep.subr.mxu0 0.0
      %2787 = vmatpush1.msra.mxu0 0.0
      %2788 = vmatprep.subr.mxu0 0.0
      %2789 = vmatpush1.msra.mxu0 0.0
      %2790 = vmatprep.subr.mxu0 0.0
      %2791 = vmatpush1.msra.mxu0 0.0
      %2792 = vmatprep.subr.mxu0 0.0
      %2793 = vmatpush1.msra.mxu0 0.0
      %2794 = vmatprep.subr.mxu0 0.0
      %2795 = vmatpush1.msra.mxu0 0.0
      %2796 = vmatprep.subr.mxu0 0.0
      %2797 = vmatpush1.msra.mxu0 0.0
      %2798 = vmatprep.subr.mxu0 0.0
      %2799 = vmatpush1.msra.mxu0 0.0
      %2800 = vmatprep.subr.mxu0 0.0
      %2801 = vmatpush1.msra.mxu0 0.0
      %2802 = vmatprep.subr.mxu0 0.0
      %2803 = vmatpush1.msra.mxu0 0.0
      %2804 = vmatprep.subr.mxu0 0.0
      %2805 = vmatpush1.msra.mxu0 0.0
      %2806 = vmatprep.subr.mxu0 0.0
      %2807 = vmatpush1.msra.mxu0 0.0
      %2808 = vmatprep.subr.mxu0 0.0
      %2809 = vmatpush1.msra.mxu0 0.0
      %2810 = vmatprep.subr.mxu0 0.0
      %2811 = vmatpush1.msra.mxu0 0.0
      %2812 = vmatprep.subr.mxu0 0.0
      %2813 = vmatpush1.msra.mxu0 0.0
      %2814 = vmatprep.subr.mxu0 0.0
      %2815 = vmatpush1.msra.mxu0 0.0
      %2816 = vmatprep.subr.mxu0 0.0
      %2817 = vmatpush1.msra.mxu0 0.0
      %2818 = vmatprep.subr.mxu0 0.0
      %2819 = vmatpush1.msra.mxu0 0.0
      %2820 = vmatprep.subr.mxu0 0.0
      %2821 = vmatpush1.msra.mxu0 0.0
      %2822 = vmatprep.mubr.f32.mxu0 0.0
      %2823 = vmatmul.mubr.f32.gmra.mrb[0].mxu0 %v2754
      %v2824 = vpop.f32.mrb[0].mxu0
      %v2825 = vadd.f32 0.0, %v2824
      %v2826 = vpop.f32.mrb[0].mxu0
      %2827 = vmatprep.mubr.f32.mxu0 0.0
      %2828 = vmatmul.mubr.f32.gmra.mrb[0].mxu0 %v2756
      %v2829 = vpop.f32.mrb[0].mxu0
      %v2830 = vadd.f32 0.0, %v2829
      %v2831 = vpop.f32.mrb[0].mxu0
      %2832 = vdwg.mxu0
      %2833 = vrot.lane.b32.xlu0 %v2653, 96
      %v2834 = vpop.permute.xlu0 %2833
      %2835 = vrot.lane.b32.xlu0 %v2655, 96
      %v2836 = vpop.permute.xlu0 %2835
      %v2837 = vsel %vm1472, %v2834, 0
      %v2839 = vsel %vm1472, %v2836, 0
      %2841 = vmatprep.subr.mxu0 0.0
      %2842 = vmatpush1.msra.mxu0 %v1467
      %2843 = vmatprep.subr.mxu0 0.0
      %2844 = vmatpush1.msra.mxu0 %v1468
      %2845 = vmatprep.subr.mxu0 0.0
      %2846 = vmatpush1.msra.mxu0 %v1481
      %2847 = vmatprep.subr.mxu0 0.0
      %2848 = vmatpush1.msra.mxu0 0.0
      %2849 = vmatprep.subr.mxu0 0.0
      %2850 = vmatpush1.msra.mxu0 0.0
      %2851 = vmatprep.subr.mxu0 0.0
      %2852 = vmatpush1.msra.mxu0 0.0
      %2853 = vmatprep.subr.mxu0 0.0
      %2854 = vmatpush1.msra.mxu0 0.0
      %2855 = vmatprep.subr.mxu0 0.0
      %2856 = vmatpush1.msra.mxu0 0.0
      %2857 = vmatprep.subr.mxu0 0.0
      %2858 = vmatpush1.msra.mxu0 0.0
      %2859 = vmatprep.subr.mxu0 0.0
      %2860 = vmatpush1.msra.mxu0 0.0
      %2861 = vmatprep.subr.mxu0 0.0
      %2862 = vmatpush1.msra.mxu0 0.0
      %2863 = vmatprep.subr.mxu0 0.0
      %2864 = vmatpush1.msra.mxu0 0.0
      %2865 = vmatprep.subr.mxu0 0.0
      %2866 = vmatpush1.msra.mxu0 0.0
      %2867 = vmatprep.subr.mxu0 0.0
      %2868 = vmatpush1.msra.mxu0 0.0
      %2869 = vmatprep.subr.mxu0 0.0
      %2870 = vmatpush1.msra.mxu0 0.0
      %2871 = vmatprep.subr.mxu0 0.0
      %2872 = vmatpush1.msra.mxu0 0.0
      %2873 = vmatprep.subr.mxu0 0.0
      %2874 = vmatpush1.msra.mxu0 0.0
      %2875 = vmatprep.subr.mxu0 0.0
      %2876 = vmatpush1.msra.mxu0 0.0
      %2877 = vmatprep.subr.mxu0 0.0
      %2878 = vmatpush1.msra.mxu0 0.0
      %2879 = vmatprep.subr.mxu0 0.0
      %2880 = vmatpush1.msra.mxu0 0.0
      %2881 = vmatprep.subr.mxu0 0.0
      %2882 = vmatpush1.msra.mxu0 0.0
      %2883 = vmatprep.subr.mxu0 0.0
      %2884 = vmatpush1.msra.mxu0 0.0
      %2885 = vmatprep.subr.mxu0 0.0
      %2886 = vmatpush1.msra.mxu0 0.0
      %2887 = vmatprep.subr.mxu0 0.0
      %2888 = vmatpush1.msra.mxu0 0.0
      %2889 = vmatprep.subr.mxu0 0.0
      %2890 = vmatpush1.msra.mxu0 0.0
      %2891 = vmatprep.subr.mxu0 0.0
      %2892 = vmatpush1.msra.mxu0 0.0
      %2893 = vmatprep.subr.mxu0 0.0
      %2894 = vmatpush1.msra.mxu0 0.0
      %2895 = vmatprep.subr.mxu0 0.0
      %2896 = vmatpush1.msra.mxu0 0.0
      %2897 = vmatprep.subr.mxu0 0.0
      %2898 = vmatpush1.msra.mxu0 0.0
      %2899 = vmatprep.subr.mxu0 0.0
      %2900 = vmatpush1.msra.mxu0 0.0
      %2901 = vmatprep.subr.mxu0 0.0
      %2902 = vmatpush1.msra.mxu0 0.0
      %2903 = vmatprep.subr.mxu0 0.0
      %2904 = vmatpush1.msra.mxu0 0.0
      %2905 = vmatprep.mubr.f32.mxu0 0.0
      %2906 = vmatmul.mubr.f32.gmra.mrb[0].mxu0 %v2837
      %v2907 = vpop.f32.mrb[0].mxu0
      %v2908 = vadd.f32 0.0, %v2907
      %v2909 = vpop.f32.mrb[0].mxu0
      %2910 = vmatprep.mubr.f32.mxu0 0.0
      %2911 = vmatmul.mubr.f32.gmra.mrb[0].mxu0 %v2839
      %v2912 = vpop.f32.mrb[0].mxu0
      %v2913 = vadd.f32 0.0, %v2912
      %v2914 = vpop.f32.mrb[0].mxu0
      %2915 = vdwg.mxu0
      %vm2916 = vcmask 818176
      %2917 = vst.msk [vmem:[#allocation2] sm:$0xff] %vm2916, 0.0
      %2918 = vst.msk [vmem:[#allocation2 + $0x18] sm:$0xff] %vm2916, 0.0
      %2921 = vrot.lane.b32.xlu0 %v1550, 119
      %v2922 = vpop.permute.xlu0 %2921
      %2923 = vrot.lane.b32.xlu0 %v1555, 119
      %v2924 = vpop.permute.xlu0 %2923
      %2927 = vrot.lane.b32.xlu0 %v1550, 127
      %v2928 = vpop.permute.xlu0 %2927
      %2929 = vrot.lane.b32.xlu0 %v1555, 127
      %v2930 = vpop.permute.xlu0 %2929
      %2935 = vrot.lane.b32.xlu0 %v1633, 119
      %v2936 = vpop.permute.xlu0 %2935
      %2937 = vrot.lane.b32.xlu0 %v1638, 119
      %v2938 = vpop.permute.xlu0 %2937
      %2941 = vrot.lane.b32.xlu0 %v1633, 127
      %v2942 = vpop.permute.xlu0 %2941
      %2943 = vrot.lane.b32.xlu0 %v1638, 127
      %v2944 = vpop.permute.xlu0 %2943
      %2949 = vrot.lane.b32.xlu0 %v1716, 119
      %v2950 = vpop.permute.xlu0 %2949
      %2951 = vrot.lane.b32.xlu0 %v1721, 119
      %v2952 = vpop.permute.xlu0 %2951
      %2955 = vrot.lane.b32.xlu0 %v1716, 127
      %v2956 = vpop.permute.xlu0 %2955
      %2957 = vrot.lane.b32.xlu0 %v1721, 127
      %v2958 = vpop.permute.xlu0 %2957
      %2962 = vset.pattern.permute.xlu0 3
      %2963 = vperm.xlu0 %2962, %v1436
      %v2964 = vpop.permute.xlu0 %2963
      %2967 = vset.pattern.permute.xlu0 3
      %2968 = vperm.xlu0 %2967, %v1437
      %v2969 = vpop.permute.xlu0 %2968
      %v2972 = vsel %vm399, %v1439, 0
      %v2975 = vsel %vm399, %v1441, 0
      %2977 = vmatprep.subr.mxu0 0.0
      %2978 = vmatpush1.msra.mxu0 %v1550
      %2979 = vmatprep.subr.mxu0 0.0
      %2980 = vmatpush1.msra.mxu0 %v1555
      %2981 = vmatprep.subr.mxu0 0.0
      %2982 = vmatpush1.msra.mxu0 %v2922
      %2983 = vmatprep.subr.mxu0 0.0
      %2984 = vmatpush1.msra.mxu0 %v2924
      %2985 = vmatprep.subr.mxu0 0.0
      %2986 = vmatpush1.msra.mxu0 %v2928
      %2987 = vmatprep.subr.mxu0 0.0
      %2988 = vmatpush1.msra.mxu0 %v2930
      %2989 = vmatprep.subr.mxu0 0.0
      %2990 = vmatpush1.msra.mxu0 %v1633
      %2991 = vmatprep.subr.mxu0 0.0
      %2992 = vmatpush1.msra.mxu0 %v1638
      %2993 = vmatprep.subr.mxu0 0.0
      %2994 = vmatpush1.msra.mxu0 %v2936
      %2995 = vmatprep.subr.mxu0 0.0
      %2996 = vmatpush1.msra.mxu0 %v2938
      %2997 = vmatprep.subr.mxu0 0.0
      %2998 = vmatpush1.msra.mxu0 %v2942
      %2999 = vmatprep.subr.mxu0 0.0
      %3000 = vmatpush1.msra.mxu0 %v2944
      %3001 = vmatprep.subr.mxu0 0.0
      %3002 = vmatpush1.msra.mxu0 %v1716
      %3003 = vmatprep.subr.mxu0 0.0
      %3004 = vmatpush1.msra.mxu0 %v1721
      %3005 = vmatprep.subr.mxu0 0.0
      %3006 = vmatpush1.msra.mxu0 %v2950
      %3007 = vmatprep.subr.mxu0 0.0
      %3008 = vmatpush1.msra.mxu0 %v2952
      %3009 = vmatprep.subr.mxu0 0.0
      %3010 = vmatpush1.msra.mxu0 %v2956
      %3011 = vmatprep.subr.mxu0 0.0
      %3012 = vmatpush1.msra.mxu0 %v2958
      %3013 = vmatprep.subr.mxu0 0.0
      %3014 = vmatpush1.msra.mxu0 0.0
      %3015 = vmatprep.subr.mxu0 0.0
      %3016 = vmatpush1.msra.mxu0 0.0
      %3017 = vmatprep.subr.mxu0 0.0
      %3018 = vmatpush1.msra.mxu0 0.0
      %3019 = vmatprep.subr.mxu0 0.0
      %3020 = vmatpush1.msra.mxu0 0.0
      %3021 = vmatprep.subr.mxu0 0.0
      %3022 = vmatpush1.msra.mxu0 0.0
      %3023 = vmatprep.subr.mxu0 0.0
      %3024 = vmatpush1.msra.mxu0 0.0
      %3025 = vmatprep.subr.mxu0 0.0
      %3026 = vmatpush1.msra.mxu0 0.0
      %3027 = vmatprep.subr.mxu0 0.0
      %3028 = vmatpush1.msra.mxu0 0.0
      %3029 = vmatprep.subr.mxu0 0.0
      %3030 = vmatpush1.msra.mxu0 0.0
      %3031 = vmatprep.subr.mxu0 0.0
      %3032 = vmatpush1.msra.mxu0 0.0
      %3033 = vmatprep.subr.mxu0 0.0
      %3034 = vmatpush1.msra.mxu0 0.0
      %3035 = vmatprep.subr.mxu0 0.0
      %3036 = vmatpush1.msra.mxu0 0.0
      %3037 = vmatprep.subr.mxu0 0.0
      %3038 = vmatpush1.msra.mxu0 0.0
      %3039 = vmatprep.subr.mxu0 0.0
      %3040 = vmatpush1.msra.mxu0 0.0
      %3041 = vmatprep.mubr.f32.mxu0 %v2972
      %3042 = vmatmul.mubr.f32.gmra.mrb[0].mxu0 %v1438
      %v3043 = vpop.f32.mrb[0].mxu0
      %v3044 = vadd.f32 %v2964, %v3043
      %v3045 = vpop.f32.mrb[0].mxu0
      %3046 = vmatprep.mubr.f32.mxu0 %v2975
      %3047 = vmatmul.mubr.f32.gmra.mrb[0].mxu0 %v1440
      %v3048 = vpop.f32.mrb[0].mxu0
      %v3049 = vadd.f32 %v2969, %v3048
      %v3050 = vpop.f32.mrb[0].mxu0
      %3051 = vdwg.mxu0
      %v3052 = vxor.u32 %v3044, 2147483648
      %v3053 = vxor.u32 %v3049, 2147483648
      %v3054 = vmul.f32 %v3052, 1.442695
      %v3055 = vpow.pop %v3054
      %v3056 = vmul.f32 %v3053, 1.442695
      %v3057 = vpow.pop %v3056
      %v3058 = vadd.f32 %v3055, 1.0
      %v3059 = vadd.f32 %v3057, 1.0
      %v3060 = vrcp.pop %v3058
      %v3061 = vmul.f32 1.0, %v3060
      %v3062 = vrcp.pop %v3059
      %v3063 = vmul.f32 1.0, %v3062
      %v3064 = vmul.f32 %v3044, %v3061
      %v3065 = vmul.f32 %v3049, %v3063
      %3068 = vrot.lane.b32.xlu0 %v3064, 11
      %v3069 = vpop.permute.xlu0 %3068
      %3070 = vrot.lane.b32.xlu0 %v3065, 11
      %v3071 = vpop.permute.xlu0 %3070
      %vm3074 = vcmask 154712
      %3075 = vst.msk [vmem:[#allocation2] sm:$0xff] %vm3074, %v3069
      %3076 = vst.msk [vmem:[#allocation2 + $0x18] sm:$0xff] %vm3074, %v3071
      %3079 = vrot.lane.b32.xlu0 %v1799, 119
      %v3080 = vpop.permute.xlu0 %3079
      %3081 = vrot.lane.b32.xlu0 %v1804, 119
      %v3082 = vpop.permute.xlu0 %3081
      %3085 = vrot.lane.b32.xlu0 %v1799, 127
      %v3086 = vpop.permute.xlu0 %3085
      %3087 = vrot.lane.b32.xlu0 %v1804, 127
      %v3088 = vpop.permute.xlu0 %3087
      %3093 = vrot.lane.b32.xlu0 %v1882, 119
      %v3094 = vpop.permute.xlu0 %3093
      %3095 = vrot.lane.b32.xlu0 %v1887, 119
      %v3096 = vpop.permute.xlu0 %3095
      %3099 = vrot.lane.b32.xlu0 %v1882, 127
      %v3100 = vpop.permute.xlu0 %3099
      %3101 = vrot.lane.b32.xlu0 %v1887, 127
      %v3102 = vpop.permute.xlu0 %3101
      %3105 = vmatprep.subr.mxu0 0.0
      %3106 = vmatpush1.msra.mxu0 %v1716
      %3107 = vmatprep.subr.mxu0 0.0
      %3108 = vmatpush1.msra.mxu0 %v1721
      %3109 = vmatprep.subr.mxu0 0.0
      %3110 = vmatpush1.msra.mxu0 %v2950
      %3111 = vmatprep.subr.mxu0 0.0
      %3112 = vmatpush1.msra.mxu0 %v2952
      %3113 = vmatprep.subr.mxu0 0.0
      %3114 = vmatpush1.msra.mxu0 %v2956
      %3115 = vmatprep.subr.mxu0 0.0
      %3116 = vmatpush1.msra.mxu0 %v2958
      %3117 = vmatprep.subr.mxu0 0.0
      %3118 = vmatpush1.msra.mxu0 %v1799
      %3119 = vmatprep.subr.mxu0 0.0
      %3120 = vmatpush1.msra.mxu0 %v1804
      %3121 = vmatprep.subr.mxu0 0.0
      %3122 = vmatpush1.msra.mxu0 %v3080
      %3123 = vmatprep.subr.mxu0 0.0
      %3124 = vmatpush1.msra.mxu0 %v3082
      %3125 = vmatprep.subr.mxu0 0.0
      %3126 = vmatpush1.msra.mxu0 %v3086
      %3127 = vmatprep.subr.mxu0 0.0
      %3128 = vmatpush1.msra.mxu0 %v3088
      %3129 = vmatprep.subr.mxu0 0.0
      %3130 = vmatpush1.msra.mxu0 %v1882
      %3131 = vmatprep.subr.mxu0 0.0
      %3132 = vmatpush1.msra.mxu0 %v1887
      %3133 = vmatprep.subr.mxu0 0.0
      %3134 = vmatpush1.msra.mxu0 %v3094
      %3135 = vmatprep.subr.mxu0 0.0
      %3136 = vmatpush1.msra.mxu0 %v3096
      %3137 = vmatprep.subr.mxu0 0.0
      %3138 = vmatpush1.msra.mxu0 %v3100
      %3139 = vmatprep.subr.mxu0 0.0
      %3140 = vmatpush1.msra.mxu0 %v3102
      %3141 = vmatprep.subr.mxu0 0.0
      %3142 = vmatpush1.msra.mxu0 0.0
      %3143 = vmatprep.subr.mxu0 0.0
      %3144 = vmatpush1.msra.mxu0 0.0
      %3145 = vmatprep.subr.mxu0 0.0
      %3146 = vmatpush1.msra.mxu0 0.0
      %3147 = vmatprep.subr.mxu0 0.0
      %3148 = vmatpush1.msra.mxu0 0.0
      %3149 = vmatprep.subr.mxu0 0.0
      %3150 = vmatpush1.msra.mxu0 0.0
      %3151 = vmatprep.subr.mxu0 0.0
      %3152 = vmatpush1.msra.mxu0 0.0
      %3153 = vmatprep.subr.mxu0 0.0
      %3154 = vmatpush1.msra.mxu0 0.0
      %3155 = vmatprep.subr.mxu0 0.0
      %3156 = vmatpush1.msra.mxu0 0.0
      %3157 = vmatprep.subr.mxu0 0.0
      %3158 = vmatpush1.msra.mxu0 0.0
      %3159 = vmatprep.subr.mxu0 0.0
      %3160 = vmatpush1.msra.mxu0 0.0
      %3161 = vmatprep.subr.mxu0 0.0
      %3162 = vmatpush1.msra.mxu0 0.0
      %3163 = vmatprep.subr.mxu0 0.0
      %3164 = vmatpush1.msra.mxu0 0.0
      %3165 = vmatprep.subr.mxu0 0.0
      %3166 = vmatpush1.msra.mxu0 0.0
      %3167 = vmatprep.subr.mxu0 0.0
      %3168 = vmatpush1.msra.mxu0 0.0
      %3169 = vmatprep.mubr.f32.mxu0 %v2972
      %3170 = vmatmul.mubr.f32.gmra.mrb[0].mxu0 %v1438
      %v3171 = vpop.f32.mrb[0].mxu0
      %v3172 = vadd.f32 %v2964, %v3171
      %v3173 = vpop.f32.mrb[0].mxu0
      %3174 = vmatprep.mubr.f32.mxu0 %v2975
      %3175 = vmatmul.mubr.f32.gmra.mrb[0].mxu0 %v1440
      %v3176 = vpop.f32.mrb[0].mxu0
      %v3177 = vadd.f32 %v2969, %v3176
      %v3178 = vpop.f32.mrb[0].mxu0
      %3179 = vdwg.mxu0
      %v3180 = vxor.u32 %v3172, 2147483648
      %v3181 = vxor.u32 %v3177, 2147483648
      %v3182 = vmul.f32 %v3180, 1.442695
      %v3183 = vpow.pop %v3182
      %v3184 = vmul.f32 %v3181, 1.442695
      %v3185 = vpow.pop %v3184
      %v3186 = vadd.f32 %v3183, 1.0
      %v3187 = vadd.f32 %v3185, 1.0
      %v3188 = vrcp.pop %v3186
      %v3189 = vmul.f32 1.0, %v3188
      %v3190 = vrcp.pop %v3187
      %v3191 = vmul.f32 1.0, %v3190
      %v3192 = vmul.f32 %v3172, %v3189
      %v3193 = vmul.f32 %v3177, %v3191
      %3196 = vrot.lane.b32.xlu0 %v3192, 21
      %v3197 = vpop.permute.xlu0 %3196
      %3198 = vrot.lane.b32.xlu0 %v3193, 21
      %v3199 = vpop.permute.xlu0 %3198
      %vm3202 = vcmask 236712
      %3203 = vst.msk [vmem:[#allocation2] sm:$0xff] %vm3202, %v3197
      %3204 = vst.msk [vmem:[#allocation2 + $0x18] sm:$0xff] %vm3202, %v3199
      %3207 = vrot.lane.b32.xlu0 %v1965, 119
      %v3208 = vpop.permute.xlu0 %3207
      %3209 = vrot.lane.b32.xlu0 %v1970, 119
      %v3210 = vpop.permute.xlu0 %3209
      %3213 = vrot.lane.b32.xlu0 %v1965, 127
      %v3214 = vpop.permute.xlu0 %3213
      %3215 = vrot.lane.b32.xlu0 %v1970, 127
      %v3216 = vpop.permute.xlu0 %3215
      %3221 = vrot.lane.b32.xlu0 %v2048, 119
      %v3222 = vpop.permute.xlu0 %3221
      %3223 = vrot.lane.b32.xlu0 %v2053, 119
      %v3224 = vpop.permute.xlu0 %3223
      %3227 = vrot.lane.b32.xlu0 %v2048, 127
      %v3228 = vpop.permute.xlu0 %3227
      %3229 = vrot.lane.b32.xlu0 %v2053, 127
      %v3230 = vpop.permute.xlu0 %3229
      %3233 = vmatprep.subr.mxu0 0.0
      %3234 = vmatpush1.msra.mxu0 %v1882
      %3235 = vmatprep.subr.mxu0 0.0
      %3236 = vmatpush1.msra.mxu0 %v1887
      %3237 = vmatprep.subr.mxu0 0.0
      %3238 = vmatpush1.msra.mxu0 %v3094
      %3239 = vmatprep.subr.mxu0 0.0
      %3240 = vmatpush1.msra.mxu0 %v3096
      %3241 = vmatprep.subr.mxu0 0.0
      %3242 = vmatpush1.msra.mxu0 %v3100
      %3243 = vmatprep.subr.mxu0 0.0
      %3244 = vmatpush1.msra.mxu0 %v3102
      %3245 = vmatprep.subr.mxu0 0.0
      %3246 = vmatpush1.msra.mxu0 %v1965
      %3247 = vmatprep.subr.mxu0 0.0
      %3248 = vmatpush1.msra.mxu0 %v1970
      %3249 = vmatprep.subr.mxu0 0.0
      %3250 = vmatpush1.msra.mxu0 %v3208
      %3251 = vmatprep.subr.mxu0 0.0
      %3252 = vmatpush1.msra.mxu0 %v3210
      %3253 = vmatprep.subr.mxu0 0.0
      %3254 = vmatpush1.msra.mxu0 %v3214
      %3255 = vmatprep.subr.mxu0 0.0
      %3256 = vmatpush1.msra.mxu0 %v3216
      %3257 = vmatprep.subr.mxu0 0.0
      %3258 = vmatpush1.msra.mxu0 %v2048
      %3259 = vmatprep.subr.mxu0 0.0
      %3260 = vmatpush1.msra.mxu0 %v2053
      %3261 = vmatprep.subr.mxu0 0.0
      %3262 = vmatpush1.msra.mxu0 %v3222
      %3263 = vmatprep.subr.mxu0 0.0
      %3264 = vmatpush1.msra.mxu0 %v3224
      %3265 = vmatprep.subr.mxu0 0.0
      %3266 = vmatpush1.msra.mxu0 %v3228
      %3267 = vmatprep.subr.mxu0 0.0
      %3268 = vmatpush1.msra.mxu0 %v3230
      %3269 = vmatprep.subr.mxu0 0.0
      %3270 = vmatpush1.msra.mxu0 0.0
      %3271 = vmatprep.subr.mxu0 0.0
      %3272 = vmatpush1.msra.mxu0 0.0
      %3273 = vmatprep.subr.mxu0 0.0
      %3274 = vmatpush1.msra.mxu0 0.0
      %3275 = vmatprep.subr.mxu0 0.0
      %3276 = vmatpush1.msra.mxu0 0.0
      %3277 = vmatprep.subr.mxu0 0.0
      %3278 = vmatpush1.msra.mxu0 0.0
      %3279 = vmatprep.subr.mxu0 0.0
      %3280 = vmatpush1.msra.mxu0 0.0
      %3281 = vmatprep.subr.mxu0 0.0
      %3282 = vmatpush1.msra.mxu0 0.0
      %3283 = vmatprep.subr.mxu0 0.0
      %3284 = vmatpush1.msra.mxu0 0.0
      %3285 = vmatprep.subr.mxu0 0.0
      %3286 = vmatpush1.msra.mxu0 0.0
      %3287 = vmatprep.subr.mxu0 0.0
      %3288 = vmatpush1.msra.mxu0 0.0
      %3289 = vmatprep.subr.mxu0 0.0
      %3290 = vmatpush1.msra.mxu0 0.0
      %3291 = vmatprep.subr.mxu0 0.0
      %3292 = vmatpush1.msra.mxu0 0.0
      %3293 = vmatprep.subr.mxu0 0.0
      %3294 = vmatpush1.msra.mxu0 0.0
      %3295 = vmatprep.subr.mxu0 0.0
      %3296 = vmatpush1.msra.mxu0 0.0
      %3297 = vmatprep.mubr.f32.mxu0 %v2972
      %3298 = vmatmul.mubr.f32.gmra.mrb[0].mxu0 %v1438
      %v3299 = vpop.f32.mrb[0].mxu0
      %v3300 = vadd.f32 %v2964, %v3299
      %v3301 = vpop.f32.mrb[0].mxu0
      %3302 = vmatprep.mubr.f32.mxu0 %v2975
      %3303 = vmatmul.mubr.f32.gmra.mrb[0].mxu0 %v1440
      %v3304 = vpop.f32.mrb[0].mxu0
      %v3305 = vadd.f32 %v2969, %v3304
      %v3306 = vpop.f32.mrb[0].mxu0
      %3307 = vdwg.mxu0
      %v3308 = vxor.u32 %v3300, 2147483648
      %v3309 = vxor.u32 %v3305, 2147483648
      %v3310 = vmul.f32 %v3308, 1.442695
      %v3311 = vpow.pop %v3310
      %v3312 = vmul.f32 %v3309, 1.442695
      %v3313 = vpow.pop %v3312
      %v3314 = vadd.f32 %v3311, 1.0
      %v3315 = vadd.f32 %v3313, 1.0
      %v3316 = vrcp.pop %v3314
      %v3317 = vmul.f32 1.0, %v3316
      %v3318 = vrcp.pop %v3315
      %v3319 = vmul.f32 1.0, %v3318
      %v3320 = vmul.f32 %v3300, %v3317
      %v3321 = vmul.f32 %v3305, %v3319
      %3324 = vrot.lane.b32.xlu0 %v3320, 31
      %v3325 = vpop.permute.xlu0 %3324
      %3326 = vrot.lane.b32.xlu0 %v3321, 31
      %v3327 = vpop.permute.xlu0 %3326
      %vm3330 = vcmask 318712
      %3331 = vst.msk [vmem:[#allocation2] sm:$0xff] %vm3330, %v3325
      %3332 = vst.msk [vmem:[#allocation2 + $0x18] sm:$0xff] %vm3330, %v3327
      %3335 = vrot.lane.b32.xlu0 %v2146, 119
      %v3336 = vpop.permute.xlu0 %3335
      %3337 = vrot.lane.b32.xlu0 %v2151, 119
      %v3338 = vpop.permute.xlu0 %3337
      %3341 = vrot.lane.b32.xlu0 %v2146, 127
      %v3342 = vpop.permute.xlu0 %3341
      %3343 = vrot.lane.b32.xlu0 %v2151, 127
      %v3344 = vpop.permute.xlu0 %3343
      %3349 = vrot.lane.b32.xlu0 %v2229, 119
      %v3350 = vpop.permute.xlu0 %3349
      %3351 = vrot.lane.b32.xlu0 %v2234, 119
      %v3352 = vpop.permute.xlu0 %3351
      %3355 = vrot.lane.b32.xlu0 %v2229, 127
      %v3356 = vpop.permute.xlu0 %3355
      %3357 = vrot.lane.b32.xlu0 %v2234, 127
      %v3358 = vpop.permute.xlu0 %3357
      %3361 = vmatprep.subr.mxu0 0.0
      %3362 = vmatpush1.msra.mxu0 %v2048
      %3363 = vmatprep.subr.mxu0 0.0
      %3364 = vmatpush1.msra.mxu0 %v2053
      %3365 = vmatprep.subr.mxu0 0.0
      %3366 = vmatpush1.msra.mxu0 %v3222
      %3367 = vmatprep.subr.mxu0 0.0
      %3368 = vmatpush1.msra.mxu0 %v3224
      %3369 = vmatprep.subr.mxu0 0.0
      %3370 = vmatpush1.msra.mxu0 %v3228
      %3371 = vmatprep.subr.mxu0 0.0
      %3372 = vmatpush1.msra.mxu0 %v3230
      %3373 = vmatprep.subr.mxu0 0.0
      %3374 = vmatpush1.msra.mxu0 %v2146
      %3375 = vmatprep.subr.mxu0 0.0
      %3376 = vmatpush1.msra.mxu0 %v2151
      %3377 = vmatprep.subr.mxu0 0.0
      %3378 = vmatpush1.msra.mxu0 %v3336
      %3379 = vmatprep.subr.mxu0 0.0
      %3380 = vmatpush1.msra.mxu0 %v3338
      %3381 = vmatprep.subr.mxu0 0.0
      %3382 = vmatpush1.msra.mxu0 %v3342
      %3383 = vmatprep.subr.mxu0 0.0
      %3384 = vmatpush1.msra.mxu0 %v3344
      %3385 = vmatprep.subr.mxu0 0.0
      %3386 = vmatpush1.msra.mxu0 %v2229
      %3387 = vmatprep.subr.mxu0 0.0
      %3388 = vmatpush1.msra.mxu0 %v2234
      %3389 = vmatprep.subr.mxu0 0.0
      %3390 = vmatpush1.msra.mxu0 %v3350
      %3391 = vmatprep.subr.mxu0 0.0
      %3392 = vmatpush1.msra.mxu0 %v3352
      %3393 = vmatprep.subr.mxu0 0.0
      %3394 = vmatpush1.msra.mxu0 %v3356
      %3395 = vmatprep.subr.mxu0 0.0
      %3396 = vmatpush1.msra.mxu0 %v3358
      %3397 = vmatprep.subr.mxu0 0.0
      %3398 = vmatpush1.msra.mxu0 0.0
      %3399 = vmatprep.subr.mxu0 0.0
      %3400 = vmatpush1.msra.mxu0 0.0
      %3401 = vmatprep.subr.mxu0 0.0
      %3402 = vmatpush1.msra.mxu0 0.0
      %3403 = vmatprep.subr.mxu0 0.0
      %3404 = vmatpush1.msra.mxu0 0.0
      %3405 = vmatprep.subr.mxu0 0.0
      %3406 = vmatpush1.msra.mxu0 0.0
      %3407 = vmatprep.subr.mxu0 0.0
      %3408 = vmatpush1.msra.mxu0 0.0
      %3409 = vmatprep.subr.mxu0 0.0
      %3410 = vmatpush1.msra.mxu0 0.0
      %3411 = vmatprep.subr.mxu0 0.0
      %3412 = vmatpush1.msra.mxu0 0.0
      %3413 = vmatprep.subr.mxu0 0.0
      %3414 = vmatpush1.msra.mxu0 0.0
      %3415 = vmatprep.subr.mxu0 0.0
      %3416 = vmatpush1.msra.mxu0 0.0
      %3417 = vmatprep.subr.mxu0 0.0
      %3418 = vmatpush1.msra.mxu0 0.0
      %3419 = vmatprep.subr.mxu0 0.0
      %3420 = vmatpush1.msra.mxu0 0.0
      %3421 = vmatprep.subr.mxu0 0.0
      %3422 = vmatpush1.msra.mxu0 0.0
      %3423 = vmatprep.subr.mxu0 0.0
      %3424 = vmatpush1.msra.mxu0 0.0
      %3425 = vmatprep.mubr.f32.mxu0 %v2972
      %3426 = vmatmul.mubr.f32.gmra.mrb[0].mxu0 %v1438
      %v3427 = vpop.f32.mrb[0].mxu0
      %v3428 = vadd.f32 %v2964, %v3427
      %v3429 = vpop.f32.mrb[0].mxu0
      %3430 = vmatprep.mubr.f32.mxu0 %v2975
      %3431 = vmatmul.mubr.f32.gmra.mrb[0].mxu0 %v1440
      %v3432 = vpop.f32.mrb[0].mxu0
      %v3433 = vadd.f32 %v2969, %v3432
      %v3434 = vpop.f32.mrb[0].mxu0
      %3435 = vdwg.mxu0
      %v3436 = vxor.u32 %v3428, 2147483648
      %v3437 = vxor.u32 %v3433, 2147483648
      %v3438 = vmul.f32 %v3436, 1.442695
      %v3439 = vpow.pop %v3438
      %v3440 = vmul.f32 %v3437, 1.442695
      %v3441 = vpow.pop %v3440
      %v3442 = vadd.f32 %v3439, 1.0
      %v3443 = vadd.f32 %v3441, 1.0
      %v3444 = vrcp.pop %v3442
      %v3445 = vmul.f32 1.0, %v3444
      %v3446 = vrcp.pop %v3443
      %v3447 = vmul.f32 1.0, %v3446
      %v3448 = vmul.f32 %v3428, %v3445
      %v3449 = vmul.f32 %v3433, %v3447
      %3452 = vrot.lane.b32.xlu0 %v3448, 41
      %v3453 = vpop.permute.xlu0 %3452
      %3454 = vrot.lane.b32.xlu0 %v3449, 41
      %v3455 = vpop.permute.xlu0 %3454
      %vm3458 = vcmask 400712
      %3459 = vst.msk [vmem:[#allocation2] sm:$0xff] %vm3458, %v3453
      %3460 = vst.msk [vmem:[#allocation2 + $0x18] sm:$0xff] %vm3458, %v3455
      %3463 = vrot.lane.b32.xlu0 %v2312, 119
      %v3464 = vpop.permute.xlu0 %3463
      %3465 = vrot.lane.b32.xlu0 %v2317, 119
      %v3466 = vpop.permute.xlu0 %3465
      %3469 = vrot.lane.b32.xlu0 %v2312, 127
      %v3470 = vpop.permute.xlu0 %3469
      %3471 = vrot.lane.b32.xlu0 %v2317, 127
      %v3472 = vpop.permute.xlu0 %3471
      %3477 = vrot.lane.b32.xlu0 %v2395, 119
      %v3478 = vpop.permute.xlu0 %3477
      %3479 = vrot.lane.b32.xlu0 %v2400, 119
      %v3480 = vpop.permute.xlu0 %3479
      %3483 = vrot.lane.b32.xlu0 %v2395, 127
      %v3484 = vpop.permute.xlu0 %3483
      %3485 = vrot.lane.b32.xlu0 %v2400, 127
      %v3486 = vpop.permute.xlu0 %3485
      %3489 = vmatprep.subr.mxu0 0.0
      %3490 = vmatpush1.msra.mxu0 %v2229
      %3491 = vmatprep.subr.mxu0 0.0
      %3492 = vmatpush1.msra.mxu0 %v2234
      %3493 = vmatprep.subr.mxu0 0.0
      %3494 = vmatpush1.msra.mxu0 %v3350
      %3495 = vmatprep.subr.mxu0 0.0
      %3496 = vmatpush1.msra.mxu0 %v3352
      %3497 = vmatprep.subr.mxu0 0.0
      %3498 = vmatpush1.msra.mxu0 %v3356
      %3499 = vmatprep.subr.mxu0 0.0
      %3500 = vmatpush1.msra.mxu0 %v3358
      %3501 = vmatprep.subr.mxu0 0.0
      %3502 = vmatpush1.msra.mxu0 %v2312
      %3503 = vmatprep.subr.mxu0 0.0
      %3504 = vmatpush1.msra.mxu0 %v2317
      %3505 = vmatprep.subr.mxu0 0.0
      %3506 = vmatpush1.msra.mxu0 %v3464
      %3507 = vmatprep.subr.mxu0 0.0
      %3508 = vmatpush1.msra.mxu0 %v3466
      %3509 = vmatprep.subr.mxu0 0.0
      %3510 = vmatpush1.msra.mxu0 %v3470
      %3511 = vmatprep.subr.mxu0 0.0
      %3512 = vmatpush1.msra.mxu0 %v3472
      %3513 = vmatprep.subr.mxu0 0.0
      %3514 = vmatpush1.msra.mxu0 %v2395
      %3515 = vmatprep.subr.mxu0 0.0
      %3516 = vmatpush1.msra.mxu0 %v2400
      %3517 = vmatprep.subr.mxu0 0.0
      %3518 = vmatpush1.msra.mxu0 %v3478
      %3519 = vmatprep.subr.mxu0 0.0
      %3520 = vmatpush1.msra.mxu0 %v3480
      %3521 = vmatprep.subr.mxu0 0.0
      %3522 = vmatpush1.msra.mxu0 %v3484
      %3523 = vmatprep.subr.mxu0 0.0
      %3524 = vmatpush1.msra.mxu0 %v3486
      %3525 = vmatprep.subr.mxu0 0.0
      %3526 = vmatpush1.msra.mxu0 0.0
      %3527 = vmatprep.subr.mxu0 0.0
      %3528 = vmatpush1.msra.mxu0 0.0
      %3529 = vmatprep.subr.mxu0 0.0
      %3530 = vmatpush1.msra.mxu0 0.0
      %3531 = vmatprep.subr.mxu0 0.0
      %3532 = vmatpush1.msra.mxu0 0.0
      %3533 = vmatprep.subr.mxu0 0.0
      %3534 = vmatpush1.msra.mxu0 0.0
      %3535 = vmatprep.subr.mxu0 0.0
      %3536 = vmatpush1.msra.mxu0 0.0
      %3537 = vmatprep.subr.mxu0 0.0
      %3538 = vmatpush1.msra.mxu0 0.0
      %3539 = vmatprep.subr.mxu0 0.0
      %3540 = vmatpush1.msra.mxu0 0.0
      %3541 = vmatprep.subr.mxu0 0.0
      %3542 = vmatpush1.msra.mxu0 0.0
      %3543 = vmatprep.subr.mxu0 0.0
      %3544 = vmatpush1.msra.mxu0 0.0
      %3545 = vmatprep.subr.mxu0 0.0
      %3546 = vmatpush1.msra.mxu0 0.0
      %3547 = vmatprep.subr.mxu0 0.0
      %3548 = vmatpush1.msra.mxu0 0.0
      %3549 = vmatprep.subr.mxu0 0.0
      %3550 = vmatpush1.msra.mxu0 0.0
      %3551 = vmatprep.subr.mxu0 0.0
      %3552 = vmatpush1.msra.mxu0 0.0
      %3553 = vmatprep.mubr.f32.mxu0 %v2972
      %3554 = vmatmul.mubr.f32.gmra.mrb[0].mxu0 %v1438
      %v3555 = vpop.f32.mrb[0].mxu0
      %v3556 = vadd.f32 %v2964, %v3555
      %v3557 = vpop.f32.mrb[0].mxu0
      %3558 = vmatprep.mubr.f32.mxu0 %v2975
      %3559 = vmatmul.mubr.f32.gmra.mrb[0].mxu0 %v1440
      %v3560 = vpop.f32.mrb[0].mxu0
      %v3561 = vadd.f32 %v2969, %v3560
      %v3562 = vpop.f32.mrb[0].mxu0
      %3563 = vdwg.mxu0
      %v3564 = vxor.u32 %v3556, 2147483648
      %v3565 = vxor.u32 %v3561, 2147483648
      %v3566 = vmul.f32 %v3564, 1.442695
      %v3567 = vpow.pop %v3566
      %v3568 = vmul.f32 %v3565, 1.442695
      %v3569 = vpow.pop %v3568
      %v3570 = vadd.f32 %v3567, 1.0
      %v3571 = vadd.f32 %v3569, 1.0
      %v3572 = vrcp.pop %v3570
      %v3573 = vmul.f32 1.0, %v3572
      %v3574 = vrcp.pop %v3571
      %v3575 = vmul.f32 1.0, %v3574
      %v3576 = vmul.f32 %v3556, %v3573
      %v3577 = vmul.f32 %v3561, %v3575
      %3580 = vrot.lane.b32.xlu0 %v3576, 51
      %v3581 = vpop.permute.xlu0 %3580
      %3582 = vrot.lane.b32.xlu0 %v3577, 51
      %v3583 = vpop.permute.xlu0 %3582
      %vm3586 = vcmask 482712
      %3587 = vst.msk [vmem:[#allocation2] sm:$0xff] %vm3586, %v3581
      %3588 = vst.msk [vmem:[#allocation2 + $0x18] sm:$0xff] %vm3586, %v3583
      %3591 = vrot.lane.b32.xlu0 %v2478, 119
      %v3592 = vpop.permute.xlu0 %3591
      %3593 = vrot.lane.b32.xlu0 %v2483, 119
      %v3594 = vpop.permute.xlu0 %3593
      %3597 = vrot.lane.b32.xlu0 %v2478, 127
      %v3598 = vpop.permute.xlu0 %3597
      %3599 = vrot.lane.b32.xlu0 %v2483, 127
      %v3600 = vpop.permute.xlu0 %3599
      %3605 = vrot.lane.b32.xlu0 %v2561, 119
      %v3606 = vpop.permute.xlu0 %3605
      %3607 = vrot.lane.b32.xlu0 %v2566, 119
      %v3608 = vpop.permute.xlu0 %3607
      %3611 = vrot.lane.b32.xlu0 %v2561, 127
      %v3612 = vpop.permute.xlu0 %3611
      %3613 = vrot.lane.b32.xlu0 %v2566, 127
      %v3614 = vpop.permute.xlu0 %3613
      %3617 = vmatprep.subr.mxu0 0.0
      %3618 = vmatpush1.msra.mxu0 %v2395
      %3619 = vmatprep.subr.mxu0 0.0
      %3620 = vmatpush1.msra.mxu0 %v2400
      %3621 = vmatprep.subr.mxu0 0.0
      %3622 = vmatpush1.msra.mxu0 %v3478
      %3623 = vmatprep.subr.mxu0 0.0
      %3624 = vmatpush1.msra.mxu0 %v3480
      %3625 = vmatprep.subr.mxu0 0.0
      %3626 = vmatpush1.msra.mxu0 %v3484
      %3627 = vmatprep.subr.mxu0 0.0
      %3628 = vmatpush1.msra.mxu0 %v3486
      %3629 = vmatprep.subr.mxu0 0.0
      %3630 = vmatpush1.msra.mxu0 %v2478
      %3631 = vmatprep.subr.mxu0 0.0
      %3632 = vmatpush1.msra.mxu0 %v2483
      %3633 = vmatprep.subr.mxu0 0.0
      %3634 = vmatpush1.msra.mxu0 %v3592
      %3635 = vmatprep.subr.mxu0 0.0
      %3636 = vmatpush1.msra.mxu0 %v3594
      %3637 = vmatprep.subr.mxu0 0.0
      %3638 = vmatpush1.msra.mxu0 %v3598
      %3639 = vmatprep.subr.mxu0 0.0
      %3640 = vmatpush1.msra.mxu0 %v3600
      %3641 = vmatprep.subr.mxu0 0.0
      %3642 = vmatpush1.msra.mxu0 %v2561
      %3643 = vmatprep.subr.mxu0 0.0
      %3644 = vmatpush1.msra.mxu0 %v2566
      %3645 = vmatprep.subr.mxu0 0.0
      %3646 = vmatpush1.msra.mxu0 %v3606
      %3647 = vmatprep.subr.mxu0 0.0
      %3648 = vmatpush1.msra.mxu0 %v3608
      %3649 = vmatprep.subr.mxu0 0.0
      %3650 = vmatpush1.msra.mxu0 %v3612
      %3651 = vmatprep.subr.mxu0 0.0
      %3652 = vmatpush1.msra.mxu0 %v3614
      %3653 = vmatprep.subr.mxu0 0.0
      %3654 = vmatpush1.msra.mxu0 0.0
      %3655 = vmatprep.subr.mxu0 0.0
      %3656 = vmatpush1.msra.mxu0 0.0
      %3657 = vmatprep.subr.mxu0 0.0
      %3658 = vmatpush1.msra.mxu0 0.0
      %3659 = vmatprep.subr.mxu0 0.0
      %3660 = vmatpush1.msra.mxu0 0.0
      %3661 = vmatprep.subr.mxu0 0.0
      %3662 = vmatpush1.msra.mxu0 0.0
      %3663 = vmatprep.subr.mxu0 0.0
      %3664 = vmatpush1.msra.mxu0 0.0
      %3665 = vmatprep.subr.mxu0 0.0
      %3666 = vmatpush1.msra.mxu0 0.0
      %3667 = vmatprep.subr.mxu0 0.0
      %3668 = vmatpush1.msra.mxu0 0.0
      %3669 = vmatprep.subr.mxu0 0.0
      %3670 = vmatpush1.msra.mxu0 0.0
      %3671 = vmatprep.subr.mxu0 0.0
      %3672 = vmatpush1.msra.mxu0 0.0
      %3673 = vmatprep.subr.mxu0 0.0
      %3674 = vmatpush1.msra.mxu0 0.0
      %3675 = vmatprep.subr.mxu0 0.0
      %3676 = vmatpush1.msra.mxu0 0.0
      %3677 = vmatprep.subr.mxu0 0.0
      %3678 = vmatpush1.msra.mxu0 0.0
      %3679 = vmatprep.subr.mxu0 0.0
      %3680 = vmatpush1.msra.mxu0 0.0
      %3681 = vmatprep.mubr.f32.mxu0 %v2972
      %3682 = vmatmul.mubr.f32.gmra.mrb[0].mxu0 %v1438
      %v3683 = vpop.f32.mrb[0].mxu0
      %v3684 = vadd.f32 %v2964, %v3683
      %v3685 = vpop.f32.mrb[0].mxu0
      %3686 = vmatprep.mubr.f32.mxu0 %v2975
      %3687 = vmatmul.mubr.f32.gmra.mrb[0].mxu0 %v1440
      %v3688 = vpop.f32.mrb[0].mxu0
      %v3689 = vadd.f32 %v2969, %v3688
      %v3690 = vpop.f32.mrb[0].mxu0
      %3691 = vdwg.mxu0
      %v3692 = vxor.u32 %v3684, 2147483648
      %v3693 = vxor.u32 %v3689, 2147483648
      %v3694 = vmul.f32 %v3692, 1.442695
      %v3695 = vpow.pop %v3694
      %v3696 = vmul.f32 %v3693, 1.442695
      %v3697 = vpow.pop %v3696
      %v3698 = vadd.f32 %v3695, 1.0
      %v3699 = vadd.f32 %v3697, 1.0
      %v3700 = vrcp.pop %v3698
      %v3701 = vmul.f32 1.0, %v3700
      %v3702 = vrcp.pop %v3699
      %v3703 = vmul.f32 1.0, %v3702
      %v3704 = vmul.f32 %v3684, %v3701
      %v3705 = vmul.f32 %v3689, %v3703
      %3708 = vrot.lane.b32.xlu0 %v3704, 61
      %v3709 = vpop.permute.xlu0 %3708
      %3710 = vrot.lane.b32.xlu0 %v3705, 61
      %v3711 = vpop.permute.xlu0 %3710
      %vm3714 = vcmask 564712
      %3715 = vst.msk [vmem:[#allocation2] sm:$0xff] %vm3714, %v3709
      %3716 = vst.msk [vmem:[#allocation2 + $0x18] sm:$0xff] %vm3714, %v3711
      %3719 = vrot.lane.b32.xlu0 %v2644, 119
      %v3720 = vpop.permute.xlu0 %3719
      %3721 = vrot.lane.b32.xlu0 %v2649, 119
      %v3722 = vpop.permute.xlu0 %3721
      %3725 = vrot.lane.b32.xlu0 %v2644, 127
      %v3726 = vpop.permute.xlu0 %3725
      %3727 = vrot.lane.b32.xlu0 %v2649, 127
      %v3728 = vpop.permute.xlu0 %3727
      %3733 = vrot.lane.b32.xlu0 %v2742, 119
      %v3734 = vpop.permute.xlu0 %3733
      %3735 = vrot.lane.b32.xlu0 %v2747, 119
      %v3736 = vpop.permute.xlu0 %3735
      %3739 = vrot.lane.b32.xlu0 %v2742, 127
      %v3740 = vpop.permute.xlu0 %3739
      %3741 = vrot.lane.b32.xlu0 %v2747, 127
      %v3742 = vpop.permute.xlu0 %3741
      %3745 = vmatprep.subr.mxu0 0.0
      %3746 = vmatpush1.msra.mxu0 %v2561
      %3747 = vmatprep.subr.mxu0 0.0
      %3748 = vmatpush1.msra.mxu0 %v2566
      %3749 = vmatprep.subr.mxu0 0.0
      %3750 = vmatpush1.msra.mxu0 %v3606
      %3751 = vmatprep.subr.mxu0 0.0
      %3752 = vmatpush1.msra.mxu0 %v3608
      %3753 = vmatprep.subr.mxu0 0.0
      %3754 = vmatpush1.msra.mxu0 %v3612
      %3755 = vmatprep.subr.mxu0 0.0
      %3756 = vmatpush1.msra.mxu0 %v3614
      %3757 = vmatprep.subr.mxu0 0.0
      %3758 = vmatpush1.msra.mxu0 %v2644
      %3759 = vmatprep.subr.mxu0 0.0
      %3760 = vmatpush1.msra.mxu0 %v2649
      %3761 = vmatprep.subr.mxu0 0.0
      %3762 = vmatpush1.msra.mxu0 %v3720
      %3763 = vmatprep.subr.mxu0 0.0
      %3764 = vmatpush1.msra.mxu0 %v3722
      %3765 = vmatprep.subr.mxu0 0.0
      %3766 = vmatpush1.msra.mxu0 %v3726
      %3767 = vmatprep.subr.mxu0 0.0
      %3768 = vmatpush1.msra.mxu0 %v3728
      %3769 = vmatprep.subr.mxu0 0.0
      %3770 = vmatpush1.msra.mxu0 %v2742
      %3771 = vmatprep.subr.mxu0 0.0
      %3772 = vmatpush1.msra.mxu0 %v2747
      %3773 = vmatprep.subr.mxu0 0.0
      %3774 = vmatpush1.msra.mxu0 %v3734
      %3775 = vmatprep.subr.mxu0 0.0
      %3776 = vmatpush1.msra.mxu0 %v3736
      %3777 = vmatprep.subr.mxu0 0.0
      %3778 = vmatpush1.msra.mxu0 %v3740
      %3779 = vmatprep.subr.mxu0 0.0
      %3780 = vmatpush1.msra.mxu0 %v3742
      %3781 = vmatprep.subr.mxu0 0.0
      %3782 = vmatpush1.msra.mxu0 0.0
      %3783 = vmatprep.subr.mxu0 0.0
      %3784 = vmatpush1.msra.mxu0 0.0
      %3785 = vmatprep.subr.mxu0 0.0
      %3786 = vmatpush1.msra.mxu0 0.0
      %3787 = vmatprep.subr.mxu0 0.0
      %3788 = vmatpush1.msra.mxu0 0.0
      %3789 = vmatprep.subr.mxu0 0.0
      %3790 = vmatpush1.msra.mxu0 0.0
      %3791 = vmatprep.subr.mxu0 0.0
      %3792 = vmatpush1.msra.mxu0 0.0
      %3793 = vmatprep.subr.mxu0 0.0
      %3794 = vmatpush1.msra.mxu0 0.0
      %3795 = vmatprep.subr.mxu0 0.0
      %3796 = vmatpush1.msra.mxu0 0.0
      %3797 = vmatprep.subr.mxu0 0.0
      %3798 = vmatpush1.msra.mxu0 0.0
      %3799 = vmatprep.subr.mxu0 0.0
      %3800 = vmatpush1.msra.mxu0 0.0
      %3801 = vmatprep.subr.mxu0 0.0
      %3802 = vmatpush1.msra.mxu0 0.0
      %3803 = vmatprep.subr.mxu0 0.0
      %3804 = vmatpush1.msra.mxu0 0.0
      %3805 = vmatprep.subr.mxu0 0.0
      %3806 = vmatpush1.msra.mxu0 0.0
      %3807 = vmatprep.subr.mxu0 0.0
      %3808 = vmatpush1.msra.mxu0 0.0
      %3809 = vmatprep.mubr.f32.mxu0 %v2972
      %3810 = vmatmul.mubr.f32.gmra.mrb[0].mxu0 %v1438
      %v3811 = vpop.f32.mrb[0].mxu0
      %v3812 = vadd.f32 %v2964, %v3811
      %v3813 = vpop.f32.mrb[0].mxu0
      %3814 = vmatprep.mubr.f32.mxu0 %v2975
      %3815 = vmatmul.mubr.f32.gmra.mrb[0].mxu0 %v1440
      %v3816 = vpop.f32.mrb[0].mxu0
      %v3817 = vadd.f32 %v2969, %v3816
      %v3818 = vpop.f32.mrb[0].mxu0
      %3819 = vdwg.mxu0
      %v3820 = vxor.u32 %v3812, 2147483648
      %v3821 = vxor.u32 %v3817, 2147483648
      %v3822 = vmul.f32 %v3820, 1.442695
      %v3823 = vpow.pop %v3822
      %v3824 = vmul.f32 %v3821, 1.442695
      %v3825 = vpow.pop %v3824
      %v3826 = vadd.f32 %v3823, 1.0
      %v3827 = vadd.f32 %v3825, 1.0
      %v3828 = vrcp.pop %v3826
      %v3829 = vmul.f32 1.0, %v3828
      %v3830 = vrcp.pop %v3827
      %v3831 = vmul.f32 1.0, %v3830
      %v3832 = vmul.f32 %v3812, %v3829
      %v3833 = vmul.f32 %v3817, %v3831
      %3836 = vrot.lane.b32.xlu0 %v3832, 71
      %v3837 = vpop.permute.xlu0 %3836
      %3838 = vrot.lane.b32.xlu0 %v3833, 71
      %v3839 = vpop.permute.xlu0 %3838
      %vm3842 = vcmask 646712
      %3843 = vst.msk [vmem:[#allocation2] sm:$0xff] %vm3842, %v3837
      %3844 = vst.msk [vmem:[#allocation2 + $0x18] sm:$0xff] %vm3842, %v3839
      %3847 = vrot.lane.b32.xlu0 %v2825, 119
      %v3848 = vpop.permute.xlu0 %3847
      %3849 = vrot.lane.b32.xlu0 %v2830, 119
      %v3850 = vpop.permute.xlu0 %3849
      %3853 = vrot.lane.b32.xlu0 %v2825, 127
      %v3854 = vpop.permute.xlu0 %3853
      %3855 = vrot.lane.b32.xlu0 %v2830, 127
      %v3856 = vpop.permute.xlu0 %3855
      %3861 = vrot.lane.b32.xlu0 %v2908, 119
      %v3862 = vpop.permute.xlu0 %3861
      %3863 = vrot.lane.b32.xlu0 %v2913, 119
      %v3864 = vpop.permute.xlu0 %3863
      %3867 = vrot.lane.b32.xlu0 %v2908, 127
      %v3868 = vpop.permute.xlu0 %3867
      %3869 = vrot.lane.b32.xlu0 %v2913, 127
      %v3870 = vpop.permute.xlu0 %3869
      %3873 = vmatprep.subr.mxu0 0.0
      %3874 = vmatpush1.msra.mxu0 %v2742
      %3875 = vmatprep.subr.mxu0 0.0
      %3876 = vmatpush1.msra.mxu0 %v2747
      %3877 = vmatprep.subr.mxu0 0.0
      %3878 = vmatpush1.msra.mxu0 %v3734
      %3879 = vmatprep.subr.mxu0 0.0
      %3880 = vmatpush1.msra.mxu0 %v3736
      %3881 = vmatprep.subr.mxu0 0.0
      %3882 = vmatpush1.msra.mxu0 %v3740
      %3883 = vmatprep.subr.mxu0 0.0
      %3884 = vmatpush1.msra.mxu0 %v3742
      %3885 = vmatprep.subr.mxu0 0.0
      %3886 = vmatpush1.msra.mxu0 %v2825
      %3887 = vmatprep.subr.mxu0 0.0
      %3888 = vmatpush1.msra.mxu0 %v2830
      %3889 = vmatprep.subr.mxu0 0.0
      %3890 = vmatpush1.msra.mxu0 %v3848
      %3891 = vmatprep.subr.mxu0 0.0
      %3892 = vmatpush1.msra.mxu0 %v3850
      %3893 = vmatprep.subr.mxu0 0.0
      %3894 = vmatpush1.msra.mxu0 %v3854
      %3895 = vmatprep.subr.mxu0 0.0
      %3896 = vmatpush1.msra.mxu0 %v3856
      %3897 = vmatprep.subr.mxu0 0.0
      %3898 = vmatpush1.msra.mxu0 %v2908
      %3899 = vmatprep.subr.mxu0 0.0
      %3900 = vmatpush1.msra.mxu0 %v2913
      %3901 = vmatprep.subr.mxu0 0.0
      %3902 = vmatpush1.msra.mxu0 %v3862
      %3903 = vmatprep.subr.mxu0 0.0
      %3904 = vmatpush1.msra.mxu0 %v3864
      %3905 = vmatprep.subr.mxu0 0.0
      %3906 = vmatpush1.msra.mxu0 %v3868
      %3907 = vmatprep.subr.mxu0 0.0
      %3908 = vmatpush1.msra.mxu0 %v3870
      %3909 = vmatprep.subr.mxu0 0.0
      %3910 = vmatpush1.msra.mxu0 0.0
      %3911 = vmatprep.subr.mxu0 0.0
      %3912 = vmatpush1.msra.mxu0 0.0
      %3913 = vmatprep.subr.mxu0 0.0
      %3914 = vmatpush1.msra.mxu0 0.0
      %3915 = vmatprep.subr.mxu0 0.0
      %3916 = vmatpush1.msra.mxu0 0.0
      %3917 = vmatprep.subr.mxu0 0.0
      %3918 = vmatpush1.msra.mxu0 0.0
      %3919 = vmatprep.subr.mxu0 0.0
      %3920 = vmatpush1.msra.mxu0 0.0
      %3921 = vmatprep.subr.mxu0 0.0
      %3922 = vmatpush1.msra.mxu0 0.0
      %3923 = vmatprep.subr.mxu0 0.0
      %3924 = vmatpush1.msra.mxu0 0.0
      %3925 = vmatprep.subr.mxu0 0.0
      %3926 = vmatpush1.msra.mxu0 0.0
      %3927 = vmatprep.subr.mxu0 0.0
      %3928 = vmatpush1.msra.mxu0 0.0
      %3929 = vmatprep.subr.mxu0 0.0
      %3930 = vmatpush1.msra.mxu0 0.0
      %3931 = vmatprep.subr.mxu0 0.0
      %3932 = vmatpush1.msra.mxu0 0.0
      %3933 = vmatprep.subr.mxu0 0.0
      %3934 = vmatpush1.msra.mxu0 0.0
      %3935 = vmatprep.subr.mxu0 0.0
      %3936 = vmatpush1.msra.mxu0 0.0
      %3937 = vmatprep.mubr.f32.mxu0 %v2972
      %3938 = vmatmul.mubr.f32.gmra.mrb[0].mxu0 %v1438
      %v3939 = vpop.f32.mrb[0].mxu0
      %v3940 = vadd.f32 %v2964, %v3939
      %v3941 = vpop.f32.mrb[0].mxu0
      %3942 = vmatprep.mubr.f32.mxu0 %v2975
      %3943 = vmatmul.mubr.f32.gmra.mrb[0].mxu0 %v1440
      %v3944 = vpop.f32.mrb[0].mxu0
      %v3945 = vadd.f32 %v2969, %v3944
      %v3946 = vpop.f32.mrb[0].mxu0
      %3947 = vdwg.mxu0
      %v3948 = vxor.u32 %v3940, 2147483648
      %v3949 = vxor.u32 %v3945, 2147483648
      %v3950 = vmul.f32 %v3948, 1.442695
      %v3951 = vpow.pop %v3950
      %v3952 = vmul.f32 %v3949, 1.442695
      %v3953 = vpow.pop %v3952
      %v3954 = vadd.f32 %v3951, 1.0
      %v3955 = vadd.f32 %v3953, 1.0
      %v3956 = vrcp.pop %v3954
      %v3957 = vmul.f32 1.0, %v3956
      %v3958 = vrcp.pop %v3955
      %v3959 = vmul.f32 1.0, %v3958
      %v3960 = vmul.f32 %v3940, %v3957
      %v3961 = vmul.f32 %v3945, %v3959
      %3964 = vrot.lane.b32.xlu0 %v3960, 81
      %v3965 = vpop.permute.xlu0 %3964
      %3966 = vrot.lane.b32.xlu0 %v3961, 81
      %v3967 = vpop.permute.xlu0 %3966
      %vm3970 = vcmask 728712
      %3971 = vst.msk [vmem:[#allocation2] sm:$0xff] %vm3970, %v3965
      %3972 = vst.msk [vmem:[#allocation2 + $0x18] sm:$0xff] %vm3970, %v3967
      %v3973 = vld [vmem:[%s2] sm:$0xff]
      %v3974 = vld [vmem:[%s2 + $0x8] sm:$0xff]
      %v3975 = vld [vmem:[%s1 + $0x40] sm:$0xff]
      %v3976 = vld [vmem:[%s1 + $0x48] sm:$0xff]
      %v3977 = vld [vmem:[%s1 + $0xe0] sm:$0xff]
      %v3978 = vld [vmem:[%s1 + $0xe8] sm:$0xff]
      %v3979 = vld [vmem:[#allocation2] sm:$0xff]
      %v3980 = vld [vmem:[#allocation2 + $0x18] sm:$0xff]
      %3983 = vrot.lane.b32.xlu0 %v3979, 127
      %v3984 = vpop.permute.xlu0 %3983
      %3985 = vrot.lane.b32.xlu0 %v3980, 127
      %v3986 = vpop.permute.xlu0 %3985
      %3989 = vrot.lane.b32.xlu0 %v3979, 126
      %v3990 = vpop.permute.xlu0 %3989
      %3991 = vrot.lane.b32.xlu0 %v3980, 126
      %v3992 = vpop.permute.xlu0 %3991
      %3995 = vrot.lane.b32.xlu0 %v3979, 118
      %v3996 = vpop.permute.xlu0 %3995
      %3997 = vrot.lane.b32.xlu0 %v3980, 118
      %v3998 = vpop.permute.xlu0 %3997
      %4001 = vrot.lane.b32.xlu0 %v3979, 117
      %v4002 = vpop.permute.xlu0 %4001
      %4003 = vrot.lane.b32.xlu0 %v3980, 117
      %v4004 = vpop.permute.xlu0 %4003
      %4007 = vrot.lane.b32.xlu0 %v3979, 116
      %v4008 = vpop.permute.xlu0 %4007
      %4009 = vrot.lane.b32.xlu0 %v3980, 116
      %v4010 = vpop.permute.xlu0 %4009
      %4013 = vrot.lane.b32.xlu0 %v3979, 108
      %v4014 = vpop.permute.xlu0 %4013
      %4015 = vrot.lane.b32.xlu0 %v3980, 108
      %v4016 = vpop.permute.xlu0 %4015
      %4019 = vrot.lane.b32.xlu0 %v3979, 107
      %v4020 = vpop.permute.xlu0 %4019
      %4021 = vrot.lane.b32.xlu0 %v3980, 107
      %v4022 = vpop.permute.xlu0 %4021
      %4025 = vrot.lane.b32.xlu0 %v3979, 106
      %v4026 = vpop.permute.xlu0 %4025
      %4027 = vrot.lane.b32.xlu0 %v3980, 106
      %v4028 = vpop.permute.xlu0 %4027
      %4032 = vset.pattern.permute.xlu0 4
      %4033 = vperm.xlu0 %4032, %v3973
      %v4034 = vpop.permute.xlu0 %4033
      %4037 = vset.pattern.permute.xlu0 4
      %4038 = vperm.xlu0 %4037, %v3974
      %v4039 = vpop.permute.xlu0 %4038
      %v4042 = vsel %vm399, %v3976, 0
      %v4045 = vsel %vm399, %v3978, 0
      %4047 = vmatprep.subr.mxu0 0.0
      %4048 = vmatpush1.msra.mxu0 %v3979
      %4049 = vmatprep.subr.mxu0 0.0
      %4050 = vmatpush1.msra.mxu0 %v3980
      %4051 = vmatprep.subr.mxu0 0.0
      %4052 = vmatpush1.msra.mxu0 %v3984
      %4053 = vmatprep.subr.mxu0 0.0
      %4054 = vmatpush1.msra.mxu0 %v3986
      %4055 = vmatprep.subr.mxu0 0.0
      %4056 = vmatpush1.msra.mxu0 %v3990
      %4057 = vmatprep.subr.mxu0 0.0
      %4058 = vmatpush1.msra.mxu0 %v3992
      %4059 = vmatprep.subr.mxu0 0.0
      %4060 = vmatpush1.msra.mxu0 %v3996
      %4061 = vmatprep.subr.mxu0 0.0
      %4062 = vmatpush1.msra.mxu0 %v3998
      %4063 = vmatprep.subr.mxu0 0.0
      %4064 = vmatpush1.msra.mxu0 %v4002
      %4065 = vmatprep.subr.mxu0 0.0
      %4066 = vmatpush1.msra.mxu0 %v4004
      %4067 = vmatprep.subr.mxu0 0.0
      %4068 = vmatpush1.msra.mxu0 %v4008
      %4069 = vmatprep.subr.mxu0 0.0
      %4070 = vmatpush1.msra.mxu0 %v4010
      %4071 = vmatprep.subr.mxu0 0.0
      %4072 = vmatpush1.msra.mxu0 %v4014
      %4073 = vmatprep.subr.mxu0 0.0
      %4074 = vmatpush1.msra.mxu0 %v4016
      %4075 = vmatprep.subr.mxu0 0.0
      %4076 = vmatpush1.msra.mxu0 %v4020
      %4077 = vmatprep.subr.mxu0 0.0
      %4078 = vmatpush1.msra.mxu0 %v4022
      %4079 = vmatprep.subr.mxu0 0.0
      %4080 = vmatpush1.msra.mxu0 %v4026
      %4081 = vmatprep.subr.mxu0 0.0
      %4082 = vmatpush1.msra.mxu0 %v4028
      %4083 = vmatprep.subr.mxu0 0.0
      %4084 = vmatpush1.msra.mxu0 0.0
      %4085 = vmatprep.subr.mxu0 0.0
      %4086 = vmatpush1.msra.mxu0 0.0
      %4087 = vmatprep.subr.mxu0 0.0
      %4088 = vmatpush1.msra.mxu0 0.0
      %4089 = vmatprep.subr.mxu0 0.0
      %4090 = vmatpush1.msra.mxu0 0.0
      %4091 = vmatprep.subr.mxu0 0.0
      %4092 = vmatpush1.msra.mxu0 0.0
      %4093 = vmatprep.subr.mxu0 0.0
      %4094 = vmatpush1.msra.mxu0 0.0
      %4095 = vmatprep.subr.mxu0 0.0
      %4096 = vmatpush1.msra.mxu0 0.0
      %4097 = vmatprep.subr.mxu0 0.0
      %4098 = vmatpush1.msra.mxu0 0.0
      %4099 = vmatprep.subr.mxu0 0.0
      %4100 = vmatpush1.msra.mxu0 0.0
      %4101 = vmatprep.subr.mxu0 0.0
      %4102 = vmatpush1.msra.mxu0 0.0
      %4103 = vmatprep.subr.mxu0 0.0
      %4104 = vmatpush1.msra.mxu0 0.0
      %4105 = vmatprep.subr.mxu0 0.0
      %4106 = vmatpush1.msra.mxu0 0.0
      %4107 = vmatprep.subr.mxu0 0.0
      %4108 = vmatpush1.msra.mxu0 0.0
      %4109 = vmatprep.subr.mxu0 0.0
      %4110 = vmatpush1.msra.mxu0 0.0
      %4111 = vmatprep.mubr.f32.mxu0 %v4042
      %4112 = vmatmul.mubr.f32.gmra.mrb[0].mxu0 %v3975
      %v4113 = vpop.f32.mrb[0].mxu0
      %v4114 = vadd.f32 %v4034, %v4113
      %v4115 = vpop.f32.mrb[0].mxu0
      %4116 = vmatprep.mubr.f32.mxu0 %v4045
      %4117 = vmatmul.mubr.f32.gmra.mrb[0].mxu0 %v3977
      %v4118 = vpop.f32.mrb[0].mxu0
      %v4119 = vadd.f32 %v4039, %v4118
      %v4120 = vpop.f32.mrb[0].mxu0
      %4121 = vdwg.mxu0
      %v4122 = vxor.u32 %v4114, 2147483648
      %v4123 = vxor.u32 %v4119, 2147483648
      %v4124 = vmul.f32 %v4122, 1.442695
      %v4125 = vpow.pop %v4124
      %v4126 = vmul.f32 %v4123, 1.442695
      %v4127 = vpow.pop %v4126
      %v4128 = vadd.f32 %v4125, 1.0
      %v4129 = vadd.f32 %v4127, 1.0
      %v4130 = vrcp.pop %v4128
      %v4131 = vmul.f32 1.0, %v4130
      %v4132 = vrcp.pop %v4129
      %v4133 = vmul.f32 1.0, %v4132
      %v4134 = vmul.f32 %v4114, %v4131
      %v4135 = vmul.f32 %v4119, %v4133
      %vm4136 = vcmp.lt.s32.totalorder %v601, 0
      %v4137 = vsub.s32 0, %v601
      %v4138 = vsel %vm4136, %v4137, %v601
      %v4139 = vmul.u32.u64.compose %v4138, 3435973837
      %v4140 = vextract.low.u32 %v4139
      %v4141 = vextract.high.u32 %v4139
      %v4142 = vshrl.u32 %v4141, 3
      %v4143 = vmul.u32 %v4142, 10
      %v4144 = vsub.s32 %v4138, %v4143
      %v4145 = vsub.s32 0, %v4144
      %v4146 = vsel %vm4136, %v4145, %v4144
      %vm4147 = vcmp.ne.s32.totalorder %v4146, 0
      %vm4148 = vcmp.lt.s32.totalorder %v4146, 0
      %vm4149 = vmand %vm4148, %vm4147
      %v4150 = vadd.s32 %v4146, 10
      %v4151 = vsel %vm4149, %v4150, %v4146
      %vm4152 = vcmp.lt.s32.totalorder %v4151, 8
      %v4153 = vsel %vm4152, 1, 0
      %vm4154 = vcmp.eq.s32.totalorder %v4153, 1
      %v4155 = vsel %vm4154, %v4134, 0.0
      %v4156 = vsel %vm4154, %v4135, 0.0
      %4159 = vrot.lane.b32.xlu0 %v4155, 11
      %v4160 = vpop.permute.xlu0 %4159
      %4161 = vrot.lane.b32.xlu0 %v4156, 11
      %v4162 = vpop.permute.xlu0 %4161
      %vm4165 = vcmask 728152
      %4166 = vst.msk [vmem:[#allocation2] sm:$0xff] %vm4165, %v4160
      %4167 = vst.msk [vmem:[#allocation2 + $0x18] sm:$0xff] %vm4165, %v4162
      %v4168 = vld [vmem:[%s2] sm:$0xff]
      %v4169 = vld [vmem:[%s2 + $0x8] sm:$0xff]
      %v4170 = vld [vmem:[%s1 + $0x50] sm:$0xff]
      %v4171 = vld [vmem:[%s1 + $0x58] sm:$0xff]
      %v4172 = vld [vmem:[%s1 + $0xf0] sm:$0xff]
      %v4173 = vld [vmem:[%s1 + $0xf8] sm:$0xff]
      %vm4174 = vcmp.le.s32.totalorder %v601, 4
      %vm4175 = vmand %vm4174, %vm1448
      %vm4176 = vmand %vm4174, %vm1449
      %vm4177 = vcmp.gt.s32.totalorder %v601, 4
      %v4178 = vsub.s32 %v601, 5
      %v4179 = vmul.u32 %v4178, 2
      %v4180 = vadd.s32 %v4179, 1
      %vm4181 = vcmp.eq.s32.totalorder %v1443, %v4180
      %vm4182 = vcmp.eq.s32.totalorder %v1444, %v4180
      %vm4183 = vmand %vm4177, %vm4181
      %vm4184 = vmand %vm4177, %vm4182
      %vm4185 = vmor %vm4175, %vm4183
      %vm4186 = vmor %vm4176, %vm4184
      %v4187 = vsel %vm4185, 1.0, 0.0
      %v4188 = vsel %vm4186, 1.0, 0.0
      %v4189 = vld [vmem:[#allocation2] sm:$0xff]
      %v4190 = vld [vmem:[#allocation2 + $0x18] sm:$0xff]
      %vm4191 = vcmask 80896
      %v4193 = vsel %vm4191, %v4189, 0
      %v4196 = vsel %vm4191, %v4190, 0
      %v4199 = vsel %vm1479, %v4188, 0
      %4201 = vmatprep.subr.mxu0 0.0
      %4202 = vmatpush1.msra.mxu0 %v4187
      %4203 = vmatprep.subr.mxu0 0.0
      %4204 = vmatpush1.msra.mxu0 %v4199
      %4205 = vmatprep.subr.mxu0 0.0
      %4206 = vmatpush1.msra.mxu0 0.0
      %4207 = vmatprep.subr.mxu0 0.0
      %4208 = vmatpush1.msra.mxu0 0.0
      %4209 = vmatprep.subr.mxu0 0.0
      %4210 = vmatpush1.msra.mxu0 0.0
      %4211 = vmatprep.subr.mxu0 0.0
      %4212 = vmatpush1.msra.mxu0 0.0
      %4213 = vmatprep.subr.mxu0 0.0
      %4214 = vmatpush1.msra.mxu0 0.0
      %4215 = vmatprep.subr.mxu0 0.0
      %4216 = vmatpush1.msra.mxu0 0.0
      %4217 = vmatprep.subr.mxu0 0.0
      %4218 = vmatpush1.msra.mxu0 0.0
      %4219 = vmatprep.subr.mxu0 0.0
      %4220 = vmatpush1.msra.mxu0 0.0
      %4221 = vmatprep.subr.mxu0 0.0
      %4222 = vmatpush1.msra.mxu0 0.0
      %4223 = vmatprep.subr.mxu0 0.0
      %4224 = vmatpush1.msra.mxu0 0.0
      %4225 = vmatprep.subr.mxu0 0.0
      %4226 = vmatpush1.msra.mxu0 0.0
      %4227 = vmatprep.subr.mxu0 0.0
      %4228 = vmatpush1.msra.mxu0 0.0
      %4229 = vmatprep.subr.mxu0 0.0
      %4230 = vmatpush1.msra.mxu0 0.0
      %4231 = vmatprep.subr.mxu0 0.0
      %4232 = vmatpush1.msra.mxu0 0.0
      %4233 = vmatprep.subr.mxu0 0.0
      %4234 = vmatpush1.msra.mxu0 0.0
      %4235 = vmatprep.subr.mxu0 0.0
      %4236 = vmatpush1.msra.mxu0 0.0
      %4237 = vmatprep.subr.mxu0 0.0
      %4238 = vmatpush1.msra.mxu0 0.0
      %4239 = vmatprep.subr.mxu0 0.0
      %4240 = vmatpush1.msra.mxu0 0.0
      %4241 = vmatprep.subr.mxu0 0.0
      %4242 = vmatpush1.msra.mxu0 0.0
      %4243 = vmatprep.subr.mxu0 0.0
      %4244 = vmatpush1.msra.mxu0 0.0
      %4245 = vmatprep.subr.mxu0 0.0
      %4246 = vmatpush1.msra.mxu0 0.0
      %4247 = vmatprep.subr.mxu0 0.0
      %4248 = vmatpush1.msra.mxu0 0.0
      %4249 = vmatprep.subr.mxu0 0.0
      %4250 = vmatpush1.msra.mxu0 0.0
      %4251 = vmatprep.subr.mxu0 0.0
      %4252 = vmatpush1.msra.mxu0 0.0
      %4253 = vmatprep.subr.mxu0 0.0
      %4254 = vmatpush1.msra.mxu0 0.0
      %4255 = vmatprep.subr.mxu0 0.0
      %4256 = vmatpush1.msra.mxu0 0.0
      %4257 = vmatprep.subr.mxu0 0.0
      %4258 = vmatpush1.msra.mxu0 0.0
      %4259 = vmatprep.subr.mxu0 0.0
      %4260 = vmatpush1.msra.mxu0 0.0
      %4261 = vmatprep.subr.mxu0 0.0
      %4262 = vmatpush1.msra.mxu0 0.0
      %4263 = vmatprep.subr.mxu0 0.0
      %4264 = vmatpush1.msra.mxu0 0.0
      %4265 = vmatprep.mubr.f32.mxu0 0.0
      %4266 = vmatmul.mubr.f32.gmra.mrb[0].mxu0 %v4193
      %v4267 = vpop.f32.mrb[0].mxu0
      %v4268 = vadd.f32 0.0, %v4267
      %v4269 = vpop.f32.mrb[0].mxu0
      %4270 = vmatprep.mubr.f32.mxu0 0.0
      %4271 = vmatmul.mubr.f32.gmra.mrb[0].mxu0 %v4196
      %v4272 = vpop.f32.mrb[0].mxu0
      %v4273 = vadd.f32 0.0, %v4272
      %v4274 = vpop.f32.mrb[0].mxu0
      %4275 = vdwg.mxu0
      %4276 = vrot.lane.b32.xlu0 %v4189, 118
      %v4277 = vpop.permute.xlu0 %4276
      %4278 = vrot.lane.b32.xlu0 %v4190, 118
      %v4279 = vpop.permute.xlu0 %4278
      %v4280 = vsel %vm4191, %v4277, 0
      %v4282 = vsel %vm4191, %v4279, 0
      %4284 = vmatprep.subr.mxu0 0.0
      %4285 = vmatpush1.msra.mxu0 %v4187
      %4286 = vmatprep.subr.mxu0 0.0
      %4287 = vmatpush1.msra.mxu0 %v4199
      %4288 = vmatprep.subr.mxu0 0.0
      %4289 = vmatpush1.msra.mxu0 0.0
      %4290 = vmatprep.subr.mxu0 0.0
      %4291 = vmatpush1.msra.mxu0 0.0
      %4292 = vmatprep.subr.mxu0 0.0
      %4293 = vmatpush1.msra.mxu0 0.0
      %4294 = vmatprep.subr.mxu0 0.0
      %4295 = vmatpush1.msra.mxu0 0.0
      %4296 = vmatprep.subr.mxu0 0.0
      %4297 = vmatpush1.msra.mxu0 0.0
      %4298 = vmatprep.subr.mxu0 0.0
      %4299 = vmatpush1.msra.mxu0 0.0
      %4300 = vmatprep.subr.mxu0 0.0
      %4301 = vmatpush1.msra.mxu0 0.0
      %4302 = vmatprep.subr.mxu0 0.0
      %4303 = vmatpush1.msra.mxu0 0.0
      %4304 = vmatprep.subr.mxu0 0.0
      %4305 = vmatpush1.msra.mxu0 0.0
      %4306 = vmatprep.subr.mxu0 0.0
      %4307 = vmatpush1.msra.mxu0 0.0
      %4308 = vmatprep.subr.mxu0 0.0
      %4309 = vmatpush1.msra.mxu0 0.0
      %4310 = vmatprep.subr.mxu0 0.0
      %4311 = vmatpush1.msra.mxu0 0.0
      %4312 = vmatprep.subr.mxu0 0.0
      %4313 = vmatpush1.msra.mxu0 0.0
      %4314 = vmatprep.subr.mxu0 0.0
      %4315 = vmatpush1.msra.mxu0 0.0
      %4316 = vmatprep.subr.mxu0 0.0
      %4317 = vmatpush1.msra.mxu0 0.0
      %4318 = vmatprep.subr.mxu0 0.0
      %4319 = vmatpush1.msra.mxu0 0.0
      %4320 = vmatprep.subr.mxu0 0.0
      %4321 = vmatpush1.msra.mxu0 0.0
      %4322 = vmatprep.subr.mxu0 0.0
      %4323 = vmatpush1.msra.mxu0 0.0
      %4324 = vmatprep.subr.mxu0 0.0
      %4325 = vmatpush1.msra.mxu0 0.0
      %4326 = vmatprep.subr.mxu0 0.0
      %4327 = vmatpush1.msra.mxu0 0.0
      %4328 = vmatprep.subr.mxu0 0.0
      %4329 = vmatpush1.msra.mxu0 0.0
      %4330 = vmatprep.subr.mxu0 0.0
      %4331 = vmatpush1.msra.mxu0 0.0
      %4332 = vmatprep.subr.mxu0 0.0
      %4333 = vmatpush1.msra.mxu0 0.0
      %4334 = vmatprep.subr.mxu0 0.0
      %4335 = vmatpush1.msra.mxu0 0.0
      %4336 = vmatprep.subr.mxu0 0.0
      %4337 = vmatpush1.msra.mxu0 0.0
      %4338 = vmatprep.subr.mxu0 0.0
      %4339 = vmatpush1.msra.mxu0 0.0
      %4340 = vmatprep.subr.mxu0 0.0
      %4341 = vmatpush1.msra.mxu0 0.0
      %4342 = vmatprep.subr.mxu0 0.0
      %4343 = vmatpush1.msra.mxu0 0.0
      %4344 = vmatprep.subr.mxu0 0.0
      %4345 = vmatpush1.msra.mxu0 0.0
      %4346 = vmatprep.subr.mxu0 0.0
      %4347 = vmatpush1.msra.mxu0 0.0
      %4348 = vmatprep.mubr.f32.mxu0 0.0
      %4349 = vmatmul.mubr.f32.gmra.mrb[0].mxu0 %v4280
      %v4350 = vpop.f32.mrb[0].mxu0
      %v4351 = vadd.f32 0.0, %v4350
      %v4352 = vpop.f32.mrb[0].mxu0
      %4353 = vmatprep.mubr.f32.mxu0 0.0
      %4354 = vmatmul.mubr.f32.gmra.mrb[0].mxu0 %v4282
      %v4355 = vpop.f32.mrb[0].mxu0
      %v4356 = vadd.f32 0.0, %v4355
      %v4357 = vpop.f32.mrb[0].mxu0
      %4358 = vdwg.mxu0
      %4359 = vrot.lane.b32.xlu0 %v4189, 108
      %v4360 = vpop.permute.xlu0 %4359
      %4361 = vrot.lane.b32.xlu0 %v4190, 108
      %v4362 = vpop.permute.xlu0 %4361
      %v4363 = vsel %vm4191, %v4360, 0
      %v4365 = vsel %vm4191, %v4362, 0
      %4367 = vmatprep.subr.mxu0 0.0
      %4368 = vmatpush1.msra.mxu0 %v4187
      %4369 = vmatprep.subr.mxu0 0.0
      %4370 = vmatpush1.msra.mxu0 %v4199
      %4371 = vmatprep.subr.mxu0 0.0
      %4372 = vmatpush1.msra.mxu0 0.0
      %4373 = vmatprep.subr.mxu0 0.0
      %4374 = vmatpush1.msra.mxu0 0.0
      %4375 = vmatprep.subr.mxu0 0.0
      %4376 = vmatpush1.msra.mxu0 0.0
      %4377 = vmatprep.subr.mxu0 0.0
      %4378 = vmatpush1.msra.mxu0 0.0
      %4379 = vmatprep.subr.mxu0 0.0
      %4380 = vmatpush1.msra.mxu0 0.0
      %4381 = vmatprep.subr.mxu0 0.0
      %4382 = vmatpush1.msra.mxu0 0.0
      %4383 = vmatprep.subr.mxu0 0.0
      %4384 = vmatpush1.msra.mxu0 0.0
      %4385 = vmatprep.subr.mxu0 0.0
      %4386 = vmatpush1.msra.mxu0 0.0
      %4387 = vmatprep.subr.mxu0 0.0
      %4388 = vmatpush1.msra.mxu0 0.0
      %4389 = vmatprep.subr.mxu0 0.0
      %4390 = vmatpush1.msra.mxu0 0.0
      %4391 = vmatprep.subr.mxu0 0.0
      %4392 = vmatpush1.msra.mxu0 0.0
      %4393 = vmatprep.subr.mxu0 0.0
      %4394 = vmatpush1.msra.mxu0 0.0
      %4395 = vmatprep.subr.mxu0 0.0
      %4396 = vmatpush1.msra.mxu0 0.0
      %4397 = vmatprep.subr.mxu0 0.0
      %4398 = vmatpush1.msra.mxu0 0.0
      %4399 = vmatprep.subr.mxu0 0.0
      %4400 = vmatpush1.msra.mxu0 0.0
      %4401 = vmatprep.subr.mxu0 0.0
      %4402 = vmatpush1.msra.mxu0 0.0
      %4403 = vmatprep.subr.mxu0 0.0
      %4404 = vmatpush1.msra.mxu0 0.0
      %4405 = vmatprep.subr.mxu0 0.0
      %4406 = vmatpush1.msra.mxu0 0.0
      %4407 = vmatprep.subr.mxu0 0.0
      %4408 = vmatpush1.msra.mxu0 0.0
      %4409 = vmatprep.subr.mxu0 0.0
      %4410 = vmatpush1.msra.mxu0 0.0
      %4411 = vmatprep.subr.mxu0 0.0
      %4412 = vmatpush1.msra.mxu0 0.0
      %4413 = vmatprep.subr.mxu0 0.0
      %4414 = vmatpush1.msra.mxu0 0.0
      %4415 = vmatprep.subr.mxu0 0.0
      %4416 = vmatpush1.msra.mxu0 0.0
      %4417 = vmatprep.subr.mxu0 0.0
      %4418 = vmatpush1.msra.mxu0 0.0
      %4419 = vmatprep.subr.mxu0 0.0
      %4420 = vmatpush1.msra.mxu0 0.0
      %4421 = vmatprep.subr.mxu0 0.0
      %4422 = vmatpush1.msra.mxu0 0.0
      %4423 = vmatprep.subr.mxu0 0.0
      %4424 = vmatpush1.msra.mxu0 0.0
      %4425 = vmatprep.subr.mxu0 0.0
      %4426 = vmatpush1.msra.mxu0 0.0
      %4427 = vmatprep.subr.mxu0 0.0
      %4428 = vmatpush1.msra.mxu0 0.0
      %4429 = vmatprep.subr.mxu0 0.0
      %4430 = vmatpush1.msra.mxu0 0.0
      %4431 = vmatprep.mubr.f32.mxu0 0.0
      %4432 = vmatmul.mubr.f32.gmra.mrb[0].mxu0 %v4363
      %v4433 = vpop.f32.mrb[0].mxu0
      %v4434 = vadd.f32 0.0, %v4433
      %v4435 = vpop.f32.mrb[0].mxu0
      %4436 = vmatprep.mubr.f32.mxu0 0.0
      %4437 = vmatmul.mubr.f32.gmra.mrb[0].mxu0 %v4365
      %v4438 = vpop.f32.mrb[0].mxu0
      %v4439 = vadd.f32 0.0, %v4438
      %v4440 = vpop.f32.mrb[0].mxu0
      %4441 = vdwg.mxu0
      %4442 = vrot.lane.b32.xlu0 %v4189, 98
      %v4443 = vpop.permute.xlu0 %4442
      %4444 = vrot.lane.b32.xlu0 %v4190, 98
      %v4445 = vpop.permute.xlu0 %4444
      %v4446 = vsel %vm4191, %v4443, 0
      %v4448 = vsel %vm4191, %v4445, 0
      %4450 = vmatprep.subr.mxu0 0.0
      %4451 = vmatpush1.msra.mxu0 %v4187
      %4452 = vmatprep.subr.mxu0 0.0
      %4453 = vmatpush1.msra.mxu0 %v4199
      %4454 = vmatprep.subr.mxu0 0.0
      %4455 = vmatpush1.msra.mxu0 0.0
      %4456 = vmatprep.subr.mxu0 0.0
      %4457 = vmatpush1.msra.mxu0 0.0
      %4458 = vmatprep.subr.mxu0 0.0
      %4459 = vmatpush1.msra.mxu0 0.0
      %4460 = vmatprep.subr.mxu0 0.0
      %4461 = vmatpush1.msra.mxu0 0.0
      %4462 = vmatprep.subr.mxu0 0.0
      %4463 = vmatpush1.msra.mxu0 0.0
      %4464 = vmatprep.subr.mxu0 0.0
      %4465 = vmatpush1.msra.mxu0 0.0
      %4466 = vmatprep.subr.mxu0 0.0
      %4467 = vmatpush1.msra.mxu0 0.0
      %4468 = vmatprep.subr.mxu0 0.0
      %4469 = vmatpush1.msra.mxu0 0.0
      %4470 = vmatprep.subr.mxu0 0.0
      %4471 = vmatpush1.msra.mxu0 0.0
      %4472 = vmatprep.subr.mxu0 0.0
      %4473 = vmatpush1.msra.mxu0 0.0
      %4474 = vmatprep.subr.mxu0 0.0
      %4475 = vmatpush1.msra.mxu0 0.0
      %4476 = vmatprep.subr.mxu0 0.0
      %4477 = vmatpush1.msra.mxu0 0.0
      %4478 = vmatprep.subr.mxu0 0.0
      %4479 = vmatpush1.msra.mxu0 0.0
      %4480 = vmatprep.subr.mxu0 0.0
      %4481 = vmatpush1.msra.mxu0 0.0
      %4482 = vmatprep.subr.mxu0 0.0
      %4483 = vmatpush1.msra.mxu0 0.0
      %4484 = vmatprep.subr.mxu0 0.0
      %4485 = vmatpush1.msra.mxu0 0.0
      %4486 = vmatprep.subr.mxu0 0.0
      %4487 = vmatpush1.msra.mxu0 0.0
      %4488 = vmatprep.subr.mxu0 0.0
      %4489 = vmatpush1.msra.mxu0 0.0
      %4490 = vmatprep.subr.mxu0 0.0
      %4491 = vmatpush1.msra.mxu0 0.0
      %4492 = vmatprep.subr.mxu0 0.0
      %4493 = vmatpush1.msra.mxu0 0.0
      %4494 = vmatprep.subr.mxu0 0.0
      %4495 = vmatpush1.msra.mxu0 0.0
      %4496 = vmatprep.subr.mxu0 0.0
      %4497 = vmatpush1.msra.mxu0 0.0
      %4498 = vmatprep.subr.mxu0 0.0
      %4499 = vmatpush1.msra.mxu0 0.0
      %4500 = vmatprep.subr.mxu0 0.0
      %4501 = vmatpush1.msra.mxu0 0.0
      %4502 = vmatprep.subr.mxu0 0.0
      %4503 = vmatpush1.msra.mxu0 0.0
      %4504 = vmatprep.subr.mxu0 0.0
      %4505 = vmatpush1.msra.mxu0 0.0
      %4506 = vmatprep.subr.mxu0 0.0
      %4507 = vmatpush1.msra.mxu0 0.0
      %4508 = vmatprep.subr.mxu0 0.0
      %4509 = vmatpush1.msra.mxu0 0.0
      %4510 = vmatprep.subr.mxu0 0.0
      %4511 = vmatpush1.msra.mxu0 0.0
      %4512 = vmatprep.subr.mxu0 0.0
      %4513 = vmatpush1.msra.mxu0 0.0
      %4514 = vmatprep.mubr.f32.mxu0 0.0
      %4515 = vmatmul.mubr.f32.gmra.mrb[0].mxu0 %v4446
      %v4516 = vpop.f32.mrb[0].mxu0
      %v4517 = vadd.f32 0.0, %v4516
      %v4518 = vpop.f32.mrb[0].mxu0
      %4519 = vmatprep.mubr.f32.mxu0 0.0
      %4520 = vmatmul.mubr.f32.gmra.mrb[0].mxu0 %v4448
      %v4521 = vpop.f32.mrb[0].mxu0
      %v4522 = vadd.f32 0.0, %v4521
      %v4523 = vpop.f32.mrb[0].mxu0
      %4524 = vdwg.mxu0
      %4525 = vrot.lane.b32.xlu0 %v4189, 88
      %v4526 = vpop.permute.xlu0 %4525
      %4527 = vrot.lane.b32.xlu0 %v4190, 88
      %v4528 = vpop.permute.xlu0 %4527
      %v4529 = vsel %vm4191, %v4526, 0
      %v4531 = vsel %vm4191, %v4528, 0
      %4533 = vmatprep.subr.mxu0 0.0
      %4534 = vmatpush1.msra.mxu0 %v4187
      %4535 = vmatprep.subr.mxu0 0.0
      %4536 = vmatpush1.msra.mxu0 %v4199
      %4537 = vmatprep.subr.mxu0 0.0
      %4538 = vmatpush1.msra.mxu0 0.0
      %4539 = vmatprep.subr.mxu0 0.0
      %4540 = vmatpush1.msra.mxu0 0.0
      %4541 = vmatprep.subr.mxu0 0.0
      %4542 = vmatpush1.msra.mxu0 0.0
      %4543 = vmatprep.subr.mxu0 0.0
      %4544 = vmatpush1.msra.mxu0 0.0
      %4545 = vmatprep.subr.mxu0 0.0
      %4546 = vmatpush1.msra.mxu0 0.0
      %4547 = vmatprep.subr.mxu0 0.0
      %4548 = vmatpush1.msra.mxu0 0.0
      %4549 = vmatprep.subr.mxu0 0.0
      %4550 = vmatpush1.msra.mxu0 0.0
      %4551 = vmatprep.subr.mxu0 0.0
      %4552 = vmatpush1.msra.mxu0 0.0
      %4553 = vmatprep.subr.mxu0 0.0
      %4554 = vmatpush1.msra.mxu0 0.0
      %4555 = vmatprep.subr.mxu0 0.0
      %4556 = vmatpush1.msra.mxu0 0.0
      %4557 = vmatprep.subr.mxu0 0.0
      %4558 = vmatpush1.msra.mxu0 0.0
      %4559 = vmatprep.subr.mxu0 0.0
      %4560 = vmatpush1.msra.mxu0 0.0
      %4561 = vmatprep.subr.mxu0 0.0
      %4562 = vmatpush1.msra.mxu0 0.0
      %4563 = vmatprep.subr.mxu0 0.0
      %4564 = vmatpush1.msra.mxu0 0.0
      %4565 = vmatprep.subr.mxu0 0.0
      %4566 = vmatpush1.msra.mxu0 0.0
      %4567 = vmatprep.subr.mxu0 0.0
      %4568 = vmatpush1.msra.mxu0 0.0
      %4569 = vmatprep.subr.mxu0 0.0
      %4570 = vmatpush1.msra.mxu0 0.0
      %4571 = vmatprep.subr.mxu0 0.0
      %4572 = vmatpush1.msra.mxu0 0.0
      %4573 = vmatprep.subr.mxu0 0.0
      %4574 = vmatpush1.msra.mxu0 0.0
      %4575 = vmatprep.subr.mxu0 0.0
      %4576 = vmatpush1.msra.mxu0 0.0
      %4577 = vmatprep.subr.mxu0 0.0
      %4578 = vmatpush1.msra.mxu0 0.0
      %4579 = vmatprep.subr.mxu0 0.0
      %4580 = vmatpush1.msra.mxu0 0.0
      %4581 = vmatprep.subr.mxu0 0.0
      %4582 = vmatpush1.msra.mxu0 0.0
      %4583 = vmatprep.subr.mxu0 0.0
      %4584 = vmatpush1.msra.mxu0 0.0
      %4585 = vmatprep.subr.mxu0 0.0
      %4586 = vmatpush1.msra.mxu0 0.0
      %4587 = vmatprep.subr.mxu0 0.0
      %4588 = vmatpush1.msra.mxu0 0.0
      %4589 = vmatprep.subr.mxu0 0.0
      %4590 = vmatpush1.msra.mxu0 0.0
      %4591 = vmatprep.subr.mxu0 0.0
      %4592 = vmatpush1.msra.mxu0 0.0
      %4593 = vmatprep.subr.mxu0 0.0
      %4594 = vmatpush1.msra.mxu0 0.0
      %4595 = vmatprep.subr.mxu0 0.0
      %4596 = vmatpush1.msra.mxu0 0.0
      %4597 = vmatprep.mubr.f32.mxu0 0.0
      %4598 = vmatmul.mubr.f32.gmra.mrb[0].mxu0 %v4529
      %v4599 = vpop.f32.mrb[0].mxu0
      %v4600 = vadd.f32 0.0, %v4599
      %v4601 = vpop.f32.mrb[0].mxu0
      %4602 = vmatprep.mubr.f32.mxu0 0.0
      %4603 = vmatmul.mubr.f32.gmra.mrb[0].mxu0 %v4531
      %v4604 = vpop.f32.mrb[0].mxu0
      %v4605 = vadd.f32 0.0, %v4604
      %v4606 = vpop.f32.mrb[0].mxu0
      %4607 = vdwg.mxu0
      %4608 = vrot.lane.b32.xlu0 %v4189, 78
      %v4609 = vpop.permute.xlu0 %4608
      %4610 = vrot.lane.b32.xlu0 %v4190, 78
      %v4611 = vpop.permute.xlu0 %4610
      %v4612 = vsel %vm4191, %v4609, 0
      %v4614 = vsel %vm4191, %v4611, 0
      %4616 = vmatprep.subr.mxu0 0.0
      %4617 = vmatpush1.msra.mxu0 %v4187
      %4618 = vmatprep.subr.mxu0 0.0
      %4619 = vmatpush1.msra.mxu0 %v4199
      %4620 = vmatprep.subr.mxu0 0.0
      %4621 = vmatpush1.msra.mxu0 0.0
      %4622 = vmatprep.subr.mxu0 0.0
      %4623 = vmatpush1.msra.mxu0 0.0
      %4624 = vmatprep.subr.mxu0 0.0
      %4625 = vmatpush1.msra.mxu0 0.0
      %4626 = vmatprep.subr.mxu0 0.0
      %4627 = vmatpush1.msra.mxu0 0.0
      %4628 = vmatprep.subr.mxu0 0.0
      %4629 = vmatpush1.msra.mxu0 0.0
      %4630 = vmatprep.subr.mxu0 0.0
      %4631 = vmatpush1.msra.mxu0 0.0
      %4632 = vmatprep.subr.mxu0 0.0
      %4633 = vmatpush1.msra.mxu0 0.0
      %4634 = vmatprep.subr.mxu0 0.0
      %4635 = vmatpush1.msra.mxu0 0.0
      %4636 = vmatprep.subr.mxu0 0.0
      %4637 = vmatpush1.msra.mxu0 0.0
      %4638 = vmatprep.subr.mxu0 0.0
      %4639 = vmatpush1.msra.mxu0 0.0
      %4640 = vmatprep.subr.mxu0 0.0
      %4641 = vmatpush1.msra.mxu0 0.0
      %4642 = vmatprep.subr.mxu0 0.0
      %4643 = vmatpush1.msra.mxu0 0.0
      %4644 = vmatprep.subr.mxu0 0.0
      %4645 = vmatpush1.msra.mxu0 0.0
      %4646 = vmatprep.subr.mxu0 0.0
      %4647 = vmatpush1.msra.mxu0 0.0
      %4648 = vmatprep.subr.mxu0 0.0
      %4649 = vmatpush1.msra.mxu0 0.0
      %4650 = vmatprep.subr.mxu0 0.0
      %4651 = vmatpush1.msra.mxu0 0.0
      %4652 = vmatprep.subr.mxu0 0.0
      %4653 = vmatpush1.msra.mxu0 0.0
      %4654 = vmatprep.subr.mxu0 0.0
      %4655 = vmatpush1.msra.mxu0 0.0
      %4656 = vmatprep.subr.mxu0 0.0
      %4657 = vmatpush1.msra.mxu0 0.0
      %4658 = vmatprep.subr.mxu0 0.0
      %4659 = vmatpush1.msra.mxu0 0.0
      %4660 = vmatprep.subr.mxu0 0.0
      %4661 = vmatpush1.msra.mxu0 0.0
      %4662 = vmatprep.subr.mxu0 0.0
      %4663 = vmatpush1.msra.mxu0 0.0
      %4664 = vmatprep.subr.mxu0 0.0
      %4665 = vmatpush1.msra.mxu0 0.0
      %4666 = vmatprep.subr.mxu0 0.0
      %4667 = vmatpush1.msra.mxu0 0.0
      %4668 = vmatprep.subr.mxu0 0.0
      %4669 = vmatpush1.msra.mxu0 0.0
      %4670 = vmatprep.subr.mxu0 0.0
      %4671 = vmatpush1.msra.mxu0 0.0
      %4672 = vmatprep.subr.mxu0 0.0
      %4673 = vmatpush1.msra.mxu0 0.0
      %4674 = vmatprep.subr.mxu0 0.0
      %4675 = vmatpush1.msra.mxu0 0.0
      %4676 = vmatprep.subr.mxu0 0.0
      %4677 = vmatpush1.msra.mxu0 0.0
      %4678 = vmatprep.subr.mxu0 0.0
      %4679 = vmatpush1.msra.mxu0 0.0
      %4680 = vmatprep.mubr.f32.mxu0 0.0
      %4681 = vmatmul.mubr.f32.gmra.mrb[0].mxu0 %v4612
      %v4682 = vpop.f32.mrb[0].mxu0
      %v4683 = vadd.f32 0.0, %v4682
      %v4684 = vpop.f32.mrb[0].mxu0
      %4685 = vmatprep.mubr.f32.mxu0 0.0
      %4686 = vmatmul.mubr.f32.gmra.mrb[0].mxu0 %v4614
      %v4687 = vpop.f32.mrb[0].mxu0
      %v4688 = vadd.f32 0.0, %v4687
      %v4689 = vpop.f32.mrb[0].mxu0
      %4690 = vdwg.mxu0
      %4691 = vrot.lane.b32.xlu0 %v4189, 68
      %v4692 = vpop.permute.xlu0 %4691
      %4693 = vrot.lane.b32.xlu0 %v4190, 68
      %v4694 = vpop.permute.xlu0 %4693
      %v4695 = vsel %vm4191, %v4692, 0
      %v4697 = vsel %vm4191, %v4694, 0
      %4699 = vmatprep.subr.mxu0 0.0
      %4700 = vmatpush1.msra.mxu0 %v4187
      %4701 = vmatprep.subr.mxu0 0.0
      %4702 = vmatpush1.msra.mxu0 %v4199
      %4703 = vmatprep.subr.mxu0 0.0
      %4704 = vmatpush1.msra.mxu0 0.0
      %4705 = vmatprep.subr.mxu0 0.0
      %4706 = vmatpush1.msra.mxu0 0.0
      %4707 = vmatprep.subr.mxu0 0.0
      %4708 = vmatpush1.msra.mxu0 0.0
      %4709 = vmatprep.subr.mxu0 0.0
      %4710 = vmatpush1.msra.mxu0 0.0
      %4711 = vmatprep.subr.mxu0 0.0
      %4712 = vmatpush1.msra.mxu0 0.0
      %4713 = vmatprep.subr.mxu0 0.0
      %4714 = vmatpush1.msra.mxu0 0.0
      %4715 = vmatprep.subr.mxu0 0.0
      %4716 = vmatpush1.msra.mxu0 0.0
      %4717 = vmatprep.subr.mxu0 0.0
      %4718 = vmatpush1.msra.mxu0 0.0
      %4719 = vmatprep.subr.mxu0 0.0
      %4720 = vmatpush1.msra.mxu0 0.0
      %4721 = vmatprep.subr.mxu0 0.0
      %4722 = vmatpush1.msra.mxu0 0.0
      %4723 = vmatprep.subr.mxu0 0.0
      %4724 = vmatpush1.msra.mxu0 0.0
      %4725 = vmatprep.subr.mxu0 0.0
      %4726 = vmatpush1.msra.mxu0 0.0
      %4727 = vmatprep.subr.mxu0 0.0
      %4728 = vmatpush1.msra.mxu0 0.0
      %4729 = vmatprep.subr.mxu0 0.0
      %4730 = vmatpush1.msra.mxu0 0.0
      %4731 = vmatprep.subr.mxu0 0.0
      %4732 = vmatpush1.msra.mxu0 0.0
      %4733 = vmatprep.subr.mxu0 0.0
      %4734 = vmatpush1.msra.mxu0 0.0
      %4735 = vmatprep.subr.mxu0 0.0
      %4736 = vmatpush1.msra.mxu0 0.0
      %4737 = vmatprep.subr.mxu0 0.0
      %4738 = vmatpush1.msra.mxu0 0.0
      %4739 = vmatprep.subr.mxu0 0.0
      %4740 = vmatpush1.msra.mxu0 0.0
      %4741 = vmatprep.subr.mxu0 0.0
      %4742 = vmatpush1.msra.mxu0 0.0
      %4743 = vmatprep.subr.mxu0 0.0
      %4744 = vmatpush1.msra.mxu0 0.0
      %4745 = vmatprep.subr.mxu0 0.0
      %4746 = vmatpush1.msra.mxu0 0.0
      %4747 = vmatprep.subr.mxu0 0.0
      %4748 = vmatpush1.msra.mxu0 0.0
      %4749 = vmatprep.subr.mxu0 0.0
      %4750 = vmatpush1.msra.mxu0 0.0
      %4751 = vmatprep.subr.mxu0 0.0
      %4752 = vmatpush1.msra.mxu0 0.0
      %4753 = vmatprep.subr.mxu0 0.0
      %4754 = vmatpush1.msra.mxu0 0.0
      %4755 = vmatprep.subr.mxu0 0.0
      %4756 = vmatpush1.msra.mxu0 0.0
      %4757 = vmatprep.subr.mxu0 0.0
      %4758 = vmatpush1.msra.mxu0 0.0
      %4759 = vmatprep.subr.mxu0 0.0
      %4760 = vmatpush1.msra.mxu0 0.0
      %4761 = vmatprep.subr.mxu0 0.0
      %4762 = vmatpush1.msra.mxu0 0.0
      %4763 = vmatprep.mubr.f32.mxu0 0.0
      %4764 = vmatmul.mubr.f32.gmra.mrb[0].mxu0 %v4695
      %v4765 = vpop.f32.mrb[0].mxu0
      %v4766 = vadd.f32 0.0, %v4765
      %v4767 = vpop.f32.mrb[0].mxu0
      %4768 = vmatprep.mubr.f32.mxu0 0.0
      %4769 = vmatmul.mubr.f32.gmra.mrb[0].mxu0 %v4697
      %v4770 = vpop.f32.mrb[0].mxu0
      %v4771 = vadd.f32 0.0, %v4770
      %v4772 = vpop.f32.mrb[0].mxu0
      %4773 = vdwg.mxu0
      %4774 = vrot.lane.b32.xlu0 %v4189, 58
      %v4775 = vpop.permute.xlu0 %4774
      %4776 = vrot.lane.b32.xlu0 %v4190, 58
      %v4777 = vpop.permute.xlu0 %4776
      %v4778 = vsel %vm4191, %v4775, 0
      %v4780 = vsel %vm4191, %v4777, 0
      %4782 = vmatprep.subr.mxu0 0.0
      %4783 = vmatpush1.msra.mxu0 %v4187
      %4784 = vmatprep.subr.mxu0 0.0
      %4785 = vmatpush1.msra.mxu0 %v4199
      %4786 = vmatprep.subr.mxu0 0.0
      %4787 = vmatpush1.msra.mxu0 0.0
      %4788 = vmatprep.subr.mxu0 0.0
      %4789 = vmatpush1.msra.mxu0 0.0
      %4790 = vmatprep.subr.mxu0 0.0
      %4791 = vmatpush1.msra.mxu0 0.0
      %4792 = vmatprep.subr.mxu0 0.0
      %4793 = vmatpush1.msra.mxu0 0.0
      %4794 = vmatprep.subr.mxu0 0.0
      %4795 = vmatpush1.msra.mxu0 0.0
      %4796 = vmatprep.subr.mxu0 0.0
      %4797 = vmatpush1.msra.mxu0 0.0
      %4798 = vmatprep.subr.mxu0 0.0
      %4799 = vmatpush1.msra.mxu0 0.0
      %4800 = vmatprep.subr.mxu0 0.0
      %4801 = vmatpush1.msra.mxu0 0.0
      %4802 = vmatprep.subr.mxu0 0.0
      %4803 = vmatpush1.msra.mxu0 0.0
      %4804 = vmatprep.subr.mxu0 0.0
      %4805 = vmatpush1.msra.mxu0 0.0
      %4806 = vmatprep.subr.mxu0 0.0
      %4807 = vmatpush1.msra.mxu0 0.0
      %4808 = vmatprep.subr.mxu0 0.0
      %4809 = vmatpush1.msra.mxu0 0.0
      %4810 = vmatprep.subr.mxu0 0.0
      %4811 = vmatpush1.msra.mxu0 0.0
      %4812 = vmatprep.subr.mxu0 0.0
      %4813 = vmatpush1.msra.mxu0 0.0
      %4814 = vmatprep.subr.mxu0 0.0
      %4815 = vmatpush1.msra.mxu0 0.0
      %4816 = vmatprep.subr.mxu0 0.0
      %4817 = vmatpush1.msra.mxu0 0.0
      %4818 = vmatprep.subr.mxu0 0.0
      %4819 = vmatpush1.msra.mxu0 0.0
      %4820 = vmatprep.subr.mxu0 0.0
      %4821 = vmatpush1.msra.mxu0 0.0
      %4822 = vmatprep.subr.mxu0 0.0
      %4823 = vmatpush1.msra.mxu0 0.0
      %4824 = vmatprep.subr.mxu0 0.0
      %4825 = vmatpush1.msra.mxu0 0.0
      %4826 = vmatprep.subr.mxu0 0.0
      %4827 = vmatpush1.msra.mxu0 0.0
      %4828 = vmatprep.subr.mxu0 0.0
      %4829 = vmatpush1.msra.mxu0 0.0
      %4830 = vmatprep.subr.mxu0 0.0
      %4831 = vmatpush1.msra.mxu0 0.0
      %4832 = vmatprep.subr.mxu0 0.0
      %4833 = vmatpush1.msra.mxu0 0.0
      %4834 = vmatprep.subr.mxu0 0.0
      %4835 = vmatpush1.msra.mxu0 0.0
      %4836 = vmatprep.subr.mxu0 0.0
      %4837 = vmatpush1.msra.mxu0 0.0
      %4838 = vmatprep.subr.mxu0 0.0
      %4839 = vmatpush1.msra.mxu0 0.0
      %4840 = vmatprep.subr.mxu0 0.0
      %4841 = vmatpush1.msra.mxu0 0.0
      %4842 = vmatprep.subr.mxu0 0.0
      %4843 = vmatpush1.msra.mxu0 0.0
      %4844 = vmatprep.subr.mxu0 0.0
      %4845 = vmatpush1.msra.mxu0 0.0
      %4846 = vmatprep.mubr.f32.mxu0 0.0
      %4847 = vmatmul.mubr.f32.gmra.mrb[0].mxu0 %v4778
      %v4848 = vpop.f32.mrb[0].mxu0
      %v4849 = vadd.f32 0.0, %v4848
      %v4850 = vpop.f32.mrb[0].mxu0
      %4851 = vmatprep.mubr.f32.mxu0 0.0
      %4852 = vmatmul.mubr.f32.gmra.mrb[0].mxu0 %v4780
      %v4853 = vpop.f32.mrb[0].mxu0
      %v4854 = vadd.f32 0.0, %v4853
      %v4855 = vpop.f32.mrb[0].mxu0
      %4856 = vdwg.mxu0
      %4857 = vrot.lane.b32.xlu0 %v4189, 48
      %v4858 = vpop.permute.xlu0 %4857
      %4859 = vrot.lane.b32.xlu0 %v4190, 48
      %v4860 = vpop.permute.xlu0 %4859
      %v4861 = vsel %vm4191, %v4858, 0
      %v4863 = vsel %vm4191, %v4860, 0
      %4865 = vmatprep.subr.mxu0 0.0
      %4866 = vmatpush1.msra.mxu0 %v4187
      %4867 = vmatprep.subr.mxu0 0.0
      %4868 = vmatpush1.msra.mxu0 %v4199
      %4869 = vmatprep.subr.mxu0 0.0
      %4870 = vmatpush1.msra.mxu0 0.0
      %4871 = vmatprep.subr.mxu0 0.0
      %4872 = vmatpush1.msra.mxu0 0.0
      %4873 = vmatprep.subr.mxu0 0.0
      %4874 = vmatpush1.msra.mxu0 0.0
      %4875 = vmatprep.subr.mxu0 0.0
      %4876 = vmatpush1.msra.mxu0 0.0
      %4877 = vmatprep.subr.mxu0 0.0
      %4878 = vmatpush1.msra.mxu0 0.0
      %4879 = vmatprep.subr.mxu0 0.0
      %4880 = vmatpush1.msra.mxu0 0.0
      %4881 = vmatprep.subr.mxu0 0.0
      %4882 = vmatpush1.msra.mxu0 0.0
      %4883 = vmatprep.subr.mxu0 0.0
      %4884 = vmatpush1.msra.mxu0 0.0
      %4885 = vmatprep.subr.mxu0 0.0
      %4886 = vmatpush1.msra.mxu0 0.0
      %4887 = vmatprep.subr.mxu0 0.0
      %4888 = vmatpush1.msra.mxu0 0.0
      %4889 = vmatprep.subr.mxu0 0.0
      %4890 = vmatpush1.msra.mxu0 0.0
      %4891 = vmatprep.subr.mxu0 0.0
      %4892 = vmatpush1.msra.mxu0 0.0
      %4893 = vmatprep.subr.mxu0 0.0
      %4894 = vmatpush1.msra.mxu0 0.0
      %4895 = vmatprep.subr.mxu0 0.0
      %4896 = vmatpush1.msra.mxu0 0.0
      %4897 = vmatprep.subr.mxu0 0.0
      %4898 = vmatpush1.msra.mxu0 0.0
      %4899 = vmatprep.subr.mxu0 0.0
      %4900 = vmatpush1.msra.mxu0 0.0
      %4901 = vmatprep.subr.mxu0 0.0
      %4902 = vmatpush1.msra.mxu0 0.0
      %4903 = vmatprep.subr.mxu0 0.0
      %4904 = vmatpush1.msra.mxu0 0.0
      %4905 = vmatprep.subr.mxu0 0.0
      %4906 = vmatpush1.msra.mxu0 0.0
      %4907 = vmatprep.subr.mxu0 0.0
      %4908 = vmatpush1.msra.mxu0 0.0
      %4909 = vmatprep.subr.mxu0 0.0
      %4910 = vmatpush1.msra.mxu0 0.0
      %4911 = vmatprep.subr.mxu0 0.0
      %4912 = vmatpush1.msra.mxu0 0.0
      %4913 = vmatprep.subr.mxu0 0.0
      %4914 = vmatpush1.msra.mxu0 0.0
      %4915 = vmatprep.subr.mxu0 0.0
      %4916 = vmatpush1.msra.mxu0 0.0
      %4917 = vmatprep.subr.mxu0 0.0
      %4918 = vmatpush1.msra.mxu0 0.0
      %4919 = vmatprep.subr.mxu0 0.0
      %4920 = vmatpush1.msra.mxu0 0.0
      %4921 = vmatprep.subr.mxu0 0.0
      %4922 = vmatpush1.msra.mxu0 0.0
      %4923 = vmatprep.subr.mxu0 0.0
      %4924 = vmatpush1.msra.mxu0 0.0
      %4925 = vmatprep.subr.mxu0 0.0
      %4926 = vmatpush1.msra.mxu0 0.0
      %4927 = vmatprep.subr.mxu0 0.0
      %4928 = vmatpush1.msra.mxu0 0.0
      %4929 = vmatprep.mubr.f32.mxu0 0.0
      %4930 = vmatmul.mubr.f32.gmra.mrb[0].mxu0 %v4861
      %v4931 = vpop.f32.mrb[0].mxu0
      %v4932 = vadd.f32 0.0, %v4931
      %v4933 = vpop.f32.mrb[0].mxu0
      %4934 = vmatprep.mubr.f32.mxu0 0.0
      %4935 = vmatmul.mubr.f32.gmra.mrb[0].mxu0 %v4863
      %v4936 = vpop.f32.mrb[0].mxu0
      %v4937 = vadd.f32 0.0, %v4936
      %v4938 = vpop.f32.mrb[0].mxu0
      %4939 = vdwg.mxu0
      %vm4940 = vcmask 293888
      %4941 = vst.msk [vmem:[#allocation2] sm:$0xff] %vm4940, 0.0
      %4942 = vst.msk [vmem:[#allocation2 + $0x18] sm:$0xff] %vm4940, 0.0
      %4945 = vrot.lane.b32.xlu0 %v4268, 123
      %v4946 = vpop.permute.xlu0 %4945
      %4947 = vrot.lane.b32.xlu0 %v4273, 123
      %v4948 = vpop.permute.xlu0 %4947
      %4951 = vrot.lane.b32.xlu0 %v4268, 127
      %v4952 = vpop.permute.xlu0 %4951
      %4953 = vrot.lane.b32.xlu0 %v4273, 127
      %v4954 = vpop.permute.xlu0 %4953
      %4959 = vrot.lane.b32.xlu0 %v4351, 123
      %v4960 = vpop.permute.xlu0 %4959
      %4961 = vrot.lane.b32.xlu0 %v4356, 123
      %v4962 = vpop.permute.xlu0 %4961
      %4965 = vrot.lane.b32.xlu0 %v4351, 127
      %v4966 = vpop.permute.xlu0 %4965
      %4967 = vrot.lane.b32.xlu0 %v4356, 127
      %v4968 = vpop.permute.xlu0 %4967
      %4973 = vrot.lane.b32.xlu0 %v4434, 123
      %v4974 = vpop.permute.xlu0 %4973
      %4975 = vrot.lane.b32.xlu0 %v4439, 123
      %v4976 = vpop.permute.xlu0 %4975
      %4979 = vrot.lane.b32.xlu0 %v4434, 127
      %v4980 = vpop.permute.xlu0 %4979
      %4981 = vrot.lane.b32.xlu0 %v4439, 127
      %v4982 = vpop.permute.xlu0 %4981
      %4986 = vset.pattern.permute.xlu0 5
      %4987 = vperm.xlu0 %4986, %v4168
      %v4988 = vpop.permute.xlu0 %4987
      %4991 = vset.pattern.permute.xlu0 5
      %4992 = vperm.xlu0 %4991, %v4169
      %v4993 = vpop.permute.xlu0 %4992
      %v4996 = vsel %vm399, %v4171, 0
      %v4999 = vsel %vm399, %v4173, 0
      %5001 = vmatprep.subr.mxu0 0.0
      %5002 = vmatpush1.msra.mxu0 %v4268
      %5003 = vmatprep.subr.mxu0 0.0
      %5004 = vmatpush1.msra.mxu0 %v4273
      %5005 = vmatprep.subr.mxu0 0.0
      %5006 = vmatpush1.msra.mxu0 %v4946
      %5007 = vmatprep.subr.mxu0 0.0
      %5008 = vmatpush1.msra.mxu0 %v4948
      %5009 = vmatprep.subr.mxu0 0.0
      %5010 = vmatpush1.msra.mxu0 %v4952
      %5011 = vmatprep.subr.mxu0 0.0
      %5012 = vmatpush1.msra.mxu0 %v4954
      %5013 = vmatprep.subr.mxu0 0.0
      %5014 = vmatpush1.msra.mxu0 %v4351
      %5015 = vmatprep.subr.mxu0 0.0
      %5016 = vmatpush1.msra.mxu0 %v4356
      %5017 = vmatprep.subr.mxu0 0.0
      %5018 = vmatpush1.msra.mxu0 %v4960
      %5019 = vmatprep.subr.mxu0 0.0
      %5020 = vmatpush1.msra.mxu0 %v4962
      %5021 = vmatprep.subr.mxu0 0.0
      %5022 = vmatpush1.msra.mxu0 %v4966
      %5023 = vmatprep.subr.mxu0 0.0
      %5024 = vmatpush1.msra.mxu0 %v4968
      %5025 = vmatprep.subr.mxu0 0.0
      %5026 = vmatpush1.msra.mxu0 %v4434
      %5027 = vmatprep.subr.mxu0 0.0
      %5028 = vmatpush1.msra.mxu0 %v4439
      %5029 = vmatprep.subr.mxu0 0.0
      %5030 = vmatpush1.msra.mxu0 %v4974
      %5031 = vmatprep.subr.mxu0 0.0
      %5032 = vmatpush1.msra.mxu0 %v4976
      %5033 = vmatprep.subr.mxu0 0.0
      %5034 = vmatpush1.msra.mxu0 %v4980
      %5035 = vmatprep.subr.mxu0 0.0
      %5036 = vmatpush1.msra.mxu0 %v4982
      %5037 = vmatprep.subr.mxu0 0.0
      %5038 = vmatpush1.msra.mxu0 0.0
      %5039 = vmatprep.subr.mxu0 0.0
      %5040 = vmatpush1.msra.mxu0 0.0
      %5041 = vmatprep.subr.mxu0 0.0
      %5042 = vmatpush1.msra.mxu0 0.0
      %5043 = vmatprep.subr.mxu0 0.0
      %5044 = vmatpush1.msra.mxu0 0.0
      %5045 = vmatprep.subr.mxu0 0.0
      %5046 = vmatpush1.msra.mxu0 0.0
      %5047 = vmatprep.subr.mxu0 0.0
      %5048 = vmatpush1.msra.mxu0 0.0
      %5049 = vmatprep.subr.mxu0 0.0
      %5050 = vmatpush1.msra.mxu0 0.0
      %5051 = vmatprep.subr.mxu0 0.0
      %5052 = vmatpush1.msra.mxu0 0.0
      %5053 = vmatprep.subr.mxu0 0.0
      %5054 = vmatpush1.msra.mxu0 0.0
      %5055 = vmatprep.subr.mxu0 0.0
      %5056 = vmatpush1.msra.mxu0 0.0
      %5057 = vmatprep.subr.mxu0 0.0
      %5058 = vmatpush1.msra.mxu0 0.0
      %5059 = vmatprep.subr.mxu0 0.0
      %5060 = vmatpush1.msra.mxu0 0.0
      %5061 = vmatprep.subr.mxu0 0.0
      %5062 = vmatpush1.msra.mxu0 0.0
      %5063 = vmatprep.subr.mxu0 0.0
      %5064 = vmatpush1.msra.mxu0 0.0
      %5065 = vmatprep.mubr.f32.mxu0 %v4996
      %5066 = vmatmul.mubr.f32.gmra.mrb[0].mxu0 %v4170
      %v5067 = vpop.f32.mrb[0].mxu0
      %v5068 = vadd.f32 %v4988, %v5067
      %v5069 = vpop.f32.mrb[0].mxu0
      %5070 = vmatprep.mubr.f32.mxu0 %v4999
      %5071 = vmatmul.mubr.f32.gmra.mrb[0].mxu0 %v4172
      %v5072 = vpop.f32.mrb[0].mxu0
      %v5073 = vadd.f32 %v4993, %v5072
      %v5074 = vpop.f32.mrb[0].mxu0
      %5075 = vdwg.mxu0
      %v5076 = vxor.u32 %v5068, 2147483648
      %v5077 = vxor.u32 %v5073, 2147483648
      %v5078 = vmul.f32 %v5076, 1.442695
      %v5079 = vpow.pop %v5078
      %v5080 = vmul.f32 %v5077, 1.442695
      %v5081 = vpow.pop %v5080
      %v5082 = vadd.f32 %v5079, 1.0
      %v5083 = vadd.f32 %v5081, 1.0
      %v5084 = vrcp.pop %v5082
      %v5085 = vmul.f32 1.0, %v5084
      %v5086 = vrcp.pop %v5083
      %v5087 = vmul.f32 1.0, %v5086
      %v5088 = vmul.f32 %v5068, %v5085
      %v5089 = vmul.f32 %v5073, %v5087
      %5092 = vrot.lane.b32.xlu0 %v5088, 7
      %v5093 = vpop.permute.xlu0 %5092
      %5094 = vrot.lane.b32.xlu0 %v5089, 7
      %v5095 = vpop.permute.xlu0 %5094
      %vm5098 = vcmask 89144
      %5099 = vst.msk [vmem:[#allocation2] sm:$0xff] %vm5098, %v5093
      %5100 = vst.msk [vmem:[#allocation2 + $0x18] sm:$0xff] %vm5098, %v5095
      %5103 = vrot.lane.b32.xlu0 %v4517, 123
      %v5104 = vpop.permute.xlu0 %5103
      %5105 = vrot.lane.b32.xlu0 %v4522, 123
      %v5106 = vpop.permute.xlu0 %5105
      %5109 = vrot.lane.b32.xlu0 %v4517, 127
      %v5110 = vpop.permute.xlu0 %5109
      %5111 = vrot.lane.b32.xlu0 %v4522, 127
      %v5112 = vpop.permute.xlu0 %5111
      %5117 = vrot.lane.b32.xlu0 %v4600, 123
      %v5118 = vpop.permute.xlu0 %5117
      %5119 = vrot.lane.b32.xlu0 %v4605, 123
      %v5120 = vpop.permute.xlu0 %5119
      %5123 = vrot.lane.b32.xlu0 %v4600, 127
      %v5124 = vpop.permute.xlu0 %5123
      %5125 = vrot.lane.b32.xlu0 %v4605, 127
      %v5126 = vpop.permute.xlu0 %5125
      %5129 = vmatprep.subr.mxu0 0.0
      %5130 = vmatpush1.msra.mxu0 %v4434
      %5131 = vmatprep.subr.mxu0 0.0
      %5132 = vmatpush1.msra.mxu0 %v4439
      %5133 = vmatprep.subr.mxu0 0.0
      %5134 = vmatpush1.msra.mxu0 %v4974
      %5135 = vmatprep.subr.mxu0 0.0
      %5136 = vmatpush1.msra.mxu0 %v4976
      %5137 = vmatprep.subr.mxu0 0.0
      %5138 = vmatpush1.msra.mxu0 %v4980
      %5139 = vmatprep.subr.mxu0 0.0
      %5140 = vmatpush1.msra.mxu0 %v4982
      %5141 = vmatprep.subr.mxu0 0.0
      %5142 = vmatpush1.msra.mxu0 %v4517
      %5143 = vmatprep.subr.mxu0 0.0
      %5144 = vmatpush1.msra.mxu0 %v4522
      %5145 = vmatprep.subr.mxu0 0.0
      %5146 = vmatpush1.msra.mxu0 %v5104
      %5147 = vmatprep.subr.mxu0 0.0
      %5148 = vmatpush1.msra.mxu0 %v5106
      %5149 = vmatprep.subr.mxu0 0.0
      %5150 = vmatpush1.msra.mxu0 %v5110
      %5151 = vmatprep.subr.mxu0 0.0
      %5152 = vmatpush1.msra.mxu0 %v5112
      %5153 = vmatprep.subr.mxu0 0.0
      %5154 = vmatpush1.msra.mxu0 %v4600
      %5155 = vmatprep.subr.mxu0 0.0
      %5156 = vmatpush1.msra.mxu0 %v4605
      %5157 = vmatprep.subr.mxu0 0.0
      %5158 = vmatpush1.msra.mxu0 %v5118
      %5159 = vmatprep.subr.mxu0 0.0
      %5160 = vmatpush1.msra.mxu0 %v5120
      %5161 = vmatprep.subr.mxu0 0.0
      %5162 = vmatpush1.msra.mxu0 %v5124
      %5163 = vmatprep.subr.mxu0 0.0
      %5164 = vmatpush1.msra.mxu0 %v5126
      %5165 = vmatprep.subr.mxu0 0.0
      %5166 = vmatpush1.msra.mxu0 0.0
      %5167 = vmatprep.subr.mxu0 0.0
      %5168 = vmatpush1.msra.mxu0 0.0
      %5169 = vmatprep.subr.mxu0 0.0
      %5170 = vmatpush1.msra.mxu0 0.0
      %5171 = vmatprep.subr.mxu0 0.0
      %5172 = vmatpush1.msra.mxu0 0.0
      %5173 = vmatprep.subr.mxu0 0.0
      %5174 = vmatpush1.msra.mxu0 0.0
      %5175 = vmatprep.subr.mxu0 0.0
      %5176 = vmatpush1.msra.mxu0 0.0
      %5177 = vmatprep.subr.mxu0 0.0
      %5178 = vmatpush1.msra.mxu0 0.0
      %5179 = vmatprep.subr.mxu0 0.0
      %5180 = vmatpush1.msra.mxu0 0.0
      %5181 = vmatprep.subr.mxu0 0.0
      %5182 = vmatpush1.msra.mxu0 0.0
      %5183 = vmatprep.subr.mxu0 0.0
      %5184 = vmatpush1.msra.mxu0 0.0
      %5185 = vmatprep.subr.mxu0 0.0
      %5186 = vmatpush1.msra.mxu0 0.0
      %5187 = vmatprep.subr.mxu0 0.0
      %5188 = vmatpush1.msra.mxu0 0.0
      %5189 = vmatprep.subr.mxu0 0.0
      %5190 = vmatpush1.msra.mxu0 0.0
      %5191 = vmatprep.subr.mxu0 0.0
      %5192 = vmatpush1.msra.mxu0 0.0
      %5193 = vmatprep.mubr.f32.mxu0 %v4996
      %5194 = vmatmul.mubr.f32.gmra.mrb[0].mxu0 %v4170
      %v5195 = vpop.f32.mrb[0].mxu0
      %v5196 = vadd.f32 %v4988, %v5195
      %v5197 = vpop.f32.mrb[0].mxu0
      %5198 = vmatprep.mubr.f32.mxu0 %v4999
      %5199 = vmatmul.mubr.f32.gmra.mrb[0].mxu0 %v4172
      %v5200 = vpop.f32.mrb[0].mxu0
      %v5201 = vadd.f32 %v4993, %v5200
      %v5202 = vpop.f32.mrb[0].mxu0
      %5203 = vdwg.mxu0
      %v5204 = vxor.u32 %v5196, 2147483648
      %v5205 = vxor.u32 %v5201, 2147483648
      %v5206 = vmul.f32 %v5204, 1.442695
      %v5207 = vpow.pop %v5206
      %v5208 = vmul.f32 %v5205, 1.442695
      %v5209 = vpow.pop %v5208
      %v5210 = vadd.f32 %v5207, 1.0
      %v5211 = vadd.f32 %v5209, 1.0
      %v5212 = vrcp.pop %v5210
      %v5213 = vmul.f32 1.0, %v5212
      %v5214 = vrcp.pop %v5211
      %v5215 = vmul.f32 1.0, %v5214
      %v5216 = vmul.f32 %v5196, %v5213
      %v5217 = vmul.f32 %v5201, %v5215
      %5220 = vrot.lane.b32.xlu0 %v5216, 13
      %v5221 = vpop.permute.xlu0 %5220
      %5222 = vrot.lane.b32.xlu0 %v5217, 13
      %v5223 = vpop.permute.xlu0 %5222
      %vm5226 = vcmask 138344
      %5227 = vst.msk [vmem:[#allocation2] sm:$0xff] %vm5226, %v5221
      %5228 = vst.msk [vmem:[#allocation2 + $0x18] sm:$0xff] %vm5226, %v5223
      %5231 = vrot.lane.b32.xlu0 %v4683, 123
      %v5232 = vpop.permute.xlu0 %5231
      %5233 = vrot.lane.b32.xlu0 %v4688, 123
      %v5234 = vpop.permute.xlu0 %5233
      %5237 = vrot.lane.b32.xlu0 %v4683, 127
      %v5238 = vpop.permute.xlu0 %5237
      %5239 = vrot.lane.b32.xlu0 %v4688, 127
      %v5240 = vpop.permute.xlu0 %5239
      %5245 = vrot.lane.b32.xlu0 %v4766, 123
      %v5246 = vpop.permute.xlu0 %5245
      %5247 = vrot.lane.b32.xlu0 %v4771, 123
      %v5248 = vpop.permute.xlu0 %5247
      %5251 = vrot.lane.b32.xlu0 %v4766, 127
      %v5252 = vpop.permute.xlu0 %5251
      %5253 = vrot.lane.b32.xlu0 %v4771, 127
      %v5254 = vpop.permute.xlu0 %5253
      %5257 = vmatprep.subr.mxu0 0.0
      %5258 = vmatpush1.msra.mxu0 %v4600
      %5259 = vmatprep.subr.mxu0 0.0
      %5260 = vmatpush1.msra.mxu0 %v4605
      %5261 = vmatprep.subr.mxu0 0.0
      %5262 = vmatpush1.msra.mxu0 %v5118
      %5263 = vmatprep.subr.mxu0 0.0
      %5264 = vmatpush1.msra.mxu0 %v5120
      %5265 = vmatprep.subr.mxu0 0.0
      %5266 = vmatpush1.msra.mxu0 %v5124
      %5267 = vmatprep.subr.mxu0 0.0
      %5268 = vmatpush1.msra.mxu0 %v5126
      %5269 = vmatprep.subr.mxu0 0.0
      %5270 = vmatpush1.msra.mxu0 %v4683
      %5271 = vmatprep.subr.mxu0 0.0
      %5272 = vmatpush1.msra.mxu0 %v4688
      %5273 = vmatprep.subr.mxu0 0.0
      %5274 = vmatpush1.msra.mxu0 %v5232
      %5275 = vmatprep.subr.mxu0 0.0
      %5276 = vmatpush1.msra.mxu0 %v5234
      %5277 = vmatprep.subr.mxu0 0.0
      %5278 = vmatpush1.msra.mxu0 %v5238
      %5279 = vmatprep.subr.mxu0 0.0
      %5280 = vmatpush1.msra.mxu0 %v5240
      %5281 = vmatprep.subr.mxu0 0.0
      %5282 = vmatpush1.msra.mxu0 %v4766
      %5283 = vmatprep.subr.mxu0 0.0
      %5284 = vmatpush1.msra.mxu0 %v4771
      %5285 = vmatprep.subr.mxu0 0.0
      %5286 = vmatpush1.msra.mxu0 %v5246
      %5287 = vmatprep.subr.mxu0 0.0
      %5288 = vmatpush1.msra.mxu0 %v5248
      %5289 = vmatprep.subr.mxu0 0.0
      %5290 = vmatpush1.msra.mxu0 %v5252
      %5291 = vmatprep.subr.mxu0 0.0
      %5292 = vmatpush1.msra.mxu0 %v5254
      %5293 = vmatprep.subr.mxu0 0.0
      %5294 = vmatpush1.msra.mxu0 0.0
      %5295 = vmatprep.subr.mxu0 0.0
      %5296 = vmatpush1.msra.mxu0 0.0
      %5297 = vmatprep.subr.mxu0 0.0
      %5298 = vmatpush1.msra.mxu0 0.0
      %5299 = vmatprep.subr.mxu0 0.0
      %5300 = vmatpush1.msra.mxu0 0.0
      %5301 = vmatprep.subr.mxu0 0.0
      %5302 = vmatpush1.msra.mxu0 0.0
      %5303 = vmatprep.subr.mxu0 0.0
      %5304 = vmatpush1.msra.mxu0 0.0
      %5305 = vmatprep.subr.mxu0 0.0
      %5306 = vmatpush1.msra.mxu0 0.0
      %5307 = vmatprep.subr.mxu0 0.0
      %5308 = vmatpush1.msra.mxu0 0.0
      %5309 = vmatprep.subr.mxu0 0.0
      %5310 = vmatpush1.msra.mxu0 0.0
      %5311 = vmatprep.subr.mxu0 0.0
      %5312 = vmatpush1.msra.mxu0 0.0
      %5313 = vmatprep.subr.mxu0 0.0
      %5314 = vmatpush1.msra.mxu0 0.0
      %5315 = vmatprep.subr.mxu0 0.0
      %5316 = vmatpush1.msra.mxu0 0.0
      %5317 = vmatprep.subr.mxu0 0.0
      %5318 = vmatpush1.msra.mxu0 0.0
      %5319 = vmatprep.subr.mxu0 0.0
      %5320 = vmatpush1.msra.mxu0 0.0
      %5321 = vmatprep.mubr.f32.mxu0 %v4996
      %5322 = vmatmul.mubr.f32.gmra.mrb[0].mxu0 %v4170
      %v5323 = vpop.f32.mrb[0].mxu0
      %v5324 = vadd.f32 %v4988, %v5323
      %v5325 = vpop.f32.mrb[0].mxu0
      %5326 = vmatprep.mubr.f32.mxu0 %v4999
      %5327 = vmatmul.mubr.f32.gmra.mrb[0].mxu0 %v4172
      %v5328 = vpop.f32.mrb[0].mxu0
      %v5329 = vadd.f32 %v4993, %v5328
      %v5330 = vpop.f32.mrb[0].mxu0
      %5331 = vdwg.mxu0
      %v5332 = vxor.u32 %v5324, 2147483648
      %v5333 = vxor.u32 %v5329, 2147483648
      %v5334 = vmul.f32 %v5332, 1.442695
      %v5335 = vpow.pop %v5334
      %v5336 = vmul.f32 %v5333, 1.442695
      %v5337 = vpow.pop %v5336
      %v5338 = vadd.f32 %v5335, 1.0
      %v5339 = vadd.f32 %v5337, 1.0
      %v5340 = vrcp.pop %v5338
      %v5341 = vmul.f32 1.0, %v5340
      %v5342 = vrcp.pop %v5339
      %v5343 = vmul.f32 1.0, %v5342
      %v5344 = vmul.f32 %v5324, %v5341
      %v5345 = vmul.f32 %v5329, %v5343
      %5348 = vrot.lane.b32.xlu0 %v5344, 19
      %v5349 = vpop.permute.xlu0 %5348
      %5350 = vrot.lane.b32.xlu0 %v5345, 19
      %v5351 = vpop.permute.xlu0 %5350
      %vm5354 = vcmask 187544
      %5355 = vst.msk [vmem:[#allocation2] sm:$0xff] %vm5354, %v5349
      %5356 = vst.msk [vmem:[#allocation2 + $0x18] sm:$0xff] %vm5354, %v5351
      %5359 = vrot.lane.b32.xlu0 %v4849, 123
      %v5360 = vpop.permute.xlu0 %5359
      %5361 = vrot.lane.b32.xlu0 %v4854, 123
      %v5362 = vpop.permute.xlu0 %5361
      %5365 = vrot.lane.b32.xlu0 %v4849, 127
      %v5366 = vpop.permute.xlu0 %5365
      %5367 = vrot.lane.b32.xlu0 %v4854, 127
      %v5368 = vpop.permute.xlu0 %5367
      %5373 = vrot.lane.b32.xlu0 %v4932, 123
      %v5374 = vpop.permute.xlu0 %5373
      %5375 = vrot.lane.b32.xlu0 %v4937, 123
      %v5376 = vpop.permute.xlu0 %5375
      %5379 = vrot.lane.b32.xlu0 %v4932, 127
      %v5380 = vpop.permute.xlu0 %5379
      %5381 = vrot.lane.b32.xlu0 %v4937, 127
      %v5382 = vpop.permute.xlu0 %5381
      %5385 = vmatprep.subr.mxu0 0.0
      %5386 = vmatpush1.msra.mxu0 %v4766
      %5387 = vmatprep.subr.mxu0 0.0
      %5388 = vmatpush1.msra.mxu0 %v4771
      %5389 = vmatprep.subr.mxu0 0.0
      %5390 = vmatpush1.msra.mxu0 %v5246
      %5391 = vmatprep.subr.mxu0 0.0
      %5392 = vmatpush1.msra.mxu0 %v5248
      %5393 = vmatprep.subr.mxu0 0.0
      %5394 = vmatpush1.msra.mxu0 %v5252
      %5395 = vmatprep.subr.mxu0 0.0
      %5396 = vmatpush1.msra.mxu0 %v5254
      %5397 = vmatprep.subr.mxu0 0.0
      %5398 = vmatpush1.msra.mxu0 %v4849
      %5399 = vmatprep.subr.mxu0 0.0
      %5400 = vmatpush1.msra.mxu0 %v4854
      %5401 = vmatprep.subr.mxu0 0.0
      %5402 = vmatpush1.msra.mxu0 %v5360
      %5403 = vmatprep.subr.mxu0 0.0
      %5404 = vmatpush1.msra.mxu0 %v5362
      %5405 = vmatprep.subr.mxu0 0.0
      %5406 = vmatpush1.msra.mxu0 %v5366
      %5407 = vmatprep.subr.mxu0 0.0
      %5408 = vmatpush1.msra.mxu0 %v5368
      %5409 = vmatprep.subr.mxu0 0.0
      %5410 = vmatpush1.msra.mxu0 %v4932
      %5411 = vmatprep.subr.mxu0 0.0
      %5412 = vmatpush1.msra.mxu0 %v4937
      %5413 = vmatprep.subr.mxu0 0.0
      %5414 = vmatpush1.msra.mxu0 %v5374
      %5415 = vmatprep.subr.mxu0 0.0
      %5416 = vmatpush1.msra.mxu0 %v5376
      %5417 = vmatprep.subr.mxu0 0.0
      %5418 = vmatpush1.msra.mxu0 %v5380
      %5419 = vmatprep.subr.mxu0 0.0
      %5420 = vmatpush1.msra.mxu0 %v5382
      %5421 = vmatprep.subr.mxu0 0.0
      %5422 = vmatpush1.msra.mxu0 0.0
      %5423 = vmatprep.subr.mxu0 0.0
      %5424 = vmatpush1.msra.mxu0 0.0
      %5425 = vmatprep.subr.mxu0 0.0
      %5426 = vmatpush1.msra.mxu0 0.0
      %5427 = vmatprep.subr.mxu0 0.0
      %5428 = vmatpush1.msra.mxu0 0.0
      %5429 = vmatprep.subr.mxu0 0.0
      %5430 = vmatpush1.msra.mxu0 0.0
      %5431 = vmatprep.subr.mxu0 0.0
      %5432 = vmatpush1.msra.mxu0 0.0
      %5433 = vmatprep.subr.mxu0 0.0
      %5434 = vmatpush1.msra.mxu0 0.0
      %5435 = vmatprep.subr.mxu0 0.0
      %5436 = vmatpush1.msra.mxu0 0.0
      %5437 = vmatprep.subr.mxu0 0.0
      %5438 = vmatpush1.msra.mxu0 0.0
      %5439 = vmatprep.subr.mxu0 0.0
      %5440 = vmatpush1.msra.mxu0 0.0
      %5441 = vmatprep.subr.mxu0 0.0
      %5442 = vmatpush1.msra.mxu0 0.0
      %5443 = vmatprep.subr.mxu0 0.0
      %5444 = vmatpush1.msra.mxu0 0.0
      %5445 = vmatprep.subr.mxu0 0.0
      %5446 = vmatpush1.msra.mxu0 0.0
      %5447 = vmatprep.subr.mxu0 0.0
      %5448 = vmatpush1.msra.mxu0 0.0
      %5449 = vmatprep.mubr.f32.mxu0 %v4996
      %5450 = vmatmul.mubr.f32.gmra.mrb[0].mxu0 %v4170
      %v5451 = vpop.f32.mrb[0].mxu0
      %v5452 = vadd.f32 %v4988, %v5451
      %v5453 = vpop.f32.mrb[0].mxu0
      %5454 = vmatprep.mubr.f32.mxu0 %v4999
      %5455 = vmatmul.mubr.f32.gmra.mrb[0].mxu0 %v4172
      %v5456 = vpop.f32.mrb[0].mxu0
      %v5457 = vadd.f32 %v4993, %v5456
      %v5458 = vpop.f32.mrb[0].mxu0
      %5459 = vdwg.mxu0
      %v5460 = vxor.u32 %v5452, 2147483648
      %v5461 = vxor.u32 %v5457, 2147483648
      %v5462 = vmul.f32 %v5460, 1.442695
      %v5463 = vpow.pop %v5462
      %v5464 = vmul.f32 %v5461, 1.442695
      %v5465 = vpow.pop %v5464
      %v5466 = vadd.f32 %v5463, 1.0
      %v5467 = vadd.f32 %v5465, 1.0
      %v5468 = vrcp.pop %v5466
      %v5469 = vmul.f32 1.0, %v5468
      %v5470 = vrcp.pop %v5467
      %v5471 = vmul.f32 1.0, %v5470
      %v5472 = vmul.f32 %v5452, %v5469
      %v5473 = vmul.f32 %v5457, %v5471
      %5476 = vrot.lane.b32.xlu0 %v5472, 25
      %v5477 = vpop.permute.xlu0 %5476
      %5478 = vrot.lane.b32.xlu0 %v5473, 25
      %v5479 = vpop.permute.xlu0 %5478
      %vm5482 = vcmask 236744
      %5483 = vst.msk [vmem:[#allocation2] sm:$0xff] %vm5482, %v5477
      %5484 = vst.msk [vmem:[#allocation2 + $0x18] sm:$0xff] %vm5482, %v5479
      %v5485 = vld [vmem:[%s2] sm:$0xff]
      %v5486 = vld [vmem:[%s2 + $0x8] sm:$0xff]
      %v5487 = vld [vmem:[%s1 + $0x60] sm:$0xff]
      %v5488 = vld [vmem:[%s1 + $0x68] sm:$0xff]
      %v5489 = vld [vmem:[%s1 + $0x100] sm:$0xff]
      %v5490 = vld [vmem:[%s1 + $0x108] sm:$0xff]
      %v5491 = vld [vmem:[#allocation2] sm:$0xff]
      %v5492 = vld [vmem:[#allocation2 + $0x18] sm:$0xff]
      %5495 = vrot.lane.b32.xlu0 %v5491, 127
      %v5496 = vpop.permute.xlu0 %5495
      %5497 = vrot.lane.b32.xlu0 %v5492, 127
      %v5498 = vpop.permute.xlu0 %5497
      %5501 = vrot.lane.b32.xlu0 %v5491, 126
      %v5502 = vpop.permute.xlu0 %5501
      %5503 = vrot.lane.b32.xlu0 %v5492, 126
      %v5504 = vpop.permute.xlu0 %5503
      %5507 = vrot.lane.b32.xlu0 %v5491, 122
      %v5508 = vpop.permute.xlu0 %5507
      %5509 = vrot.lane.b32.xlu0 %v5492, 122
      %v5510 = vpop.permute.xlu0 %5509
      %5513 = vrot.lane.b32.xlu0 %v5491, 121
      %v5514 = vpop.permute.xlu0 %5513
      %5515 = vrot.lane.b32.xlu0 %v5492, 121
      %v5516 = vpop.permute.xlu0 %5515
      %5519 = vrot.lane.b32.xlu0 %v5491, 120
      %v5520 = vpop.permute.xlu0 %5519
      %5521 = vrot.lane.b32.xlu0 %v5492, 120
      %v5522 = vpop.permute.xlu0 %5521
      %5525 = vrot.lane.b32.xlu0 %v5491, 116
      %v5526 = vpop.permute.xlu0 %5525
      %5527 = vrot.lane.b32.xlu0 %v5492, 116
      %v5528 = vpop.permute.xlu0 %5527
      %5531 = vrot.lane.b32.xlu0 %v5491, 115
      %v5532 = vpop.permute.xlu0 %5531
      %5533 = vrot.lane.b32.xlu0 %v5492, 115
      %v5534 = vpop.permute.xlu0 %5533
      %5537 = vrot.lane.b32.xlu0 %v5491, 114
      %v5538 = vpop.permute.xlu0 %5537
      %5539 = vrot.lane.b32.xlu0 %v5492, 114
      %v5540 = vpop.permute.xlu0 %5539
      %5544 = vset.pattern.permute.xlu0 6
      %5545 = vperm.xlu0 %5544, %v5485
      %v5546 = vpop.permute.xlu0 %5545
      %5549 = vset.pattern.permute.xlu0 6
      %5550 = vperm.xlu0 %5549, %v5486
      %v5551 = vpop.permute.xlu0 %5550
      %v5554 = vsel %vm399, %v5488, 0
      %v5557 = vsel %vm399, %v5490, 0
      %5559 = vmatprep.subr.mxu0 0.0
      %5560 = vmatpush1.msra.mxu0 %v5491
      %5561 = vmatprep.subr.mxu0 0.0
      %5562 = vmatpush1.msra.mxu0 %v5492
      %5563 = vmatprep.subr.mxu0 0.0
      %5564 = vmatpush1.msra.mxu0 %v5496
      %5565 = vmatprep.subr.mxu0 0.0
      %5566 = vmatpush1.msra.mxu0 %v5498
      %5567 = vmatprep.subr.mxu0 0.0
      %5568 = vmatpush1.msra.mxu0 %v5502
      %5569 = vmatprep.subr.mxu0 0.0
      %5570 = vmatpush1.msra.mxu0 %v5504
      %5571 = vmatprep.subr.mxu0 0.0
      %5572 = vmatpush1.msra.mxu0 %v5508
      %5573 = vmatprep.subr.mxu0 0.0
      %5574 = vmatpush1.msra.mxu0 %v5510
      %5575 = vmatprep.subr.mxu0 0.0
      %5576 = vmatpush1.msra.mxu0 %v5514
      %5577 = vmatprep.subr.mxu0 0.0
      %5578 = vmatpush1.msra.mxu0 %v5516
      %5579 = vmatprep.subr.mxu0 0.0
      %5580 = vmatpush1.msra.mxu0 %v5520
      %5581 = vmatprep.subr.mxu0 0.0
      %5582 = vmatpush1.msra.mxu0 %v5522
      %5583 = vmatprep.subr.mxu0 0.0
      %5584 = vmatpush1.msra.mxu0 %v5526
      %5585 = vmatprep.subr.mxu0 0.0
      %5586 = vmatpush1.msra.mxu0 %v5528
      %5587 = vmatprep.subr.mxu0 0.0
      %5588 = vmatpush1.msra.mxu0 %v5532
      %5589 = vmatprep.subr.mxu0 0.0
      %5590 = vmatpush1.msra.mxu0 %v5534
      %5591 = vmatprep.subr.mxu0 0.0
      %5592 = vmatpush1.msra.mxu0 %v5538
      %5593 = vmatprep.subr.mxu0 0.0
      %5594 = vmatpush1.msra.mxu0 %v5540
      %5595 = vmatprep.subr.mxu0 0.0
      %5596 = vmatpush1.msra.mxu0 0.0
      %5597 = vmatprep.subr.mxu0 0.0
      %5598 = vmatpush1.msra.mxu0 0.0
      %5599 = vmatprep.subr.mxu0 0.0
      %5600 = vmatpush1.msra.mxu0 0.0
      %5601 = vmatprep.subr.mxu0 0.0
      %5602 = vmatpush1.msra.mxu0 0.0
      %5603 = vmatprep.subr.mxu0 0.0
      %5604 = vmatpush1.msra.mxu0 0.0
      %5605 = vmatprep.subr.mxu0 0.0
      %5606 = vmatpush1.msra.mxu0 0.0
      %5607 = vmatprep.subr.mxu0 0.0
      %5608 = vmatpush1.msra.mxu0 0.0
      %5609 = vmatprep.subr.mxu0 0.0
      %5610 = vmatpush1.msra.mxu0 0.0
      %5611 = vmatprep.subr.mxu0 0.0
      %5612 = vmatpush1.msra.mxu0 0.0
      %5613 = vmatprep.subr.mxu0 0.0
      %5614 = vmatpush1.msra.mxu0 0.0
      %5615 = vmatprep.subr.mxu0 0.0
      %5616 = vmatpush1.msra.mxu0 0.0
      %5617 = vmatprep.subr.mxu0 0.0
      %5618 = vmatpush1.msra.mxu0 0.0
      %5619 = vmatprep.subr.mxu0 0.0
      %5620 = vmatpush1.msra.mxu0 0.0
      %5621 = vmatprep.subr.mxu0 0.0
      %5622 = vmatpush1.msra.mxu0 0.0
      %5623 = vmatprep.mubr.f32.mxu0 %v5554
      %5624 = vmatmul.mubr.f32.gmra.mrb[0].mxu0 %v5487
      %v5625 = vpop.f32.mrb[0].mxu0
      %v5626 = vadd.f32 %v5546, %v5625
      %v5627 = vpop.f32.mrb[0].mxu0
      %5628 = vmatprep.mubr.f32.mxu0 %v5557
      %5629 = vmatmul.mubr.f32.gmra.mrb[0].mxu0 %v5489
      %v5630 = vpop.f32.mrb[0].mxu0
      %v5631 = vadd.f32 %v5551, %v5630
      %v5632 = vpop.f32.mrb[0].mxu0
      %5633 = vdwg.mxu0
      %v5634 = vxor.u32 %v5626, 2147483648
      %v5635 = vxor.u32 %v5631, 2147483648
      %v5636 = vmul.f32 %v5634, 1.442695
      %v5637 = vpow.pop %v5636
      %v5638 = vmul.f32 %v5635, 1.442695
      %v5639 = vpow.pop %v5638
      %v5640 = vadd.f32 %v5637, 1.0
      %v5641 = vadd.f32 %v5639, 1.0
      %v5642 = vrcp.pop %v5640
      %v5643 = vmul.f32 1.0, %v5642
      %v5644 = vrcp.pop %v5641
      %v5645 = vmul.f32 1.0, %v5644
      %v5646 = vmul.f32 %v5626, %v5643
      %v5647 = vmul.f32 %v5631, %v5645
      %vm5648 = vcmp.lt.s32.totalorder %v601, 0
      %v5649 = vsub.s32 0, %v601
      %v5650 = vsel %vm5648, %v5649, %v601
      %v5651 = vmul.u32.u64.compose %v5650, 2863311531
      %v5652 = vextract.low.u32 %v5651
      %v5653 = vextract.high.u32 %v5651
      %v5654 = vshrl.u32 %v5653, 2
      %v5655 = vmul.u32 %v5654, 6
      %v5656 = vsub.s32 %v5650, %v5655
      %v5657 = vsub.s32 0, %v5656
      %v5658 = vsel %vm5648, %v5657, %v5656
      %vm5659 = vcmp.ne.s32.totalorder %v5658, 0
      %vm5660 = vcmp.lt.s32.totalorder %v5658, 0
      %vm5661 = vmand %vm5660, %vm5659
      %v5662 = vadd.s32 %v5658, 6
      %v5663 = vsel %vm5661, %v5662, %v5658
      %vm5664 = vcmp.lt.s32.totalorder %v5663, 4
      %v5665 = vsel %vm5664, 1, 0
      %vm5666 = vcmp.eq.s32.totalorder %v5665, 1
      %v5667 = vsel %vm5666, %v5646, 0.0
      %v5668 = vsel %vm5666, %v5647, 0.0
      %5671 = vrot.lane.b32.xlu0 %v5667, 7
      %v5672 = vpop.permute.xlu0 %5671
      %5673 = vrot.lane.b32.xlu0 %v5668, 7
      %v5674 = vpop.permute.xlu0 %5673
      %vm5677 = vcmask 236600
      %5678 = vst.msk [vmem:[#allocation2] sm:$0xff] %vm5677, %v5672
      %5679 = vst.msk [vmem:[#allocation2 + $0x18] sm:$0xff] %vm5677, %v5674
      %v5680 = vld [vmem:[%s2] sm:$0xff]
      %v5681 = vld [vmem:[%s2 + $0x8] sm:$0xff]
      %v5682 = vld [vmem:[%s1 + $0x70] sm:$0xff]
      %v5683 = vld [vmem:[%s1 + $0x78] sm:$0xff]
      %v5684 = vld [vmem:[%s1 + $0x110] sm:$0xff]
      %v5685 = vld [vmem:[%s1 + $0x118] sm:$0xff]
      %vm5686 = vcmp.le.s32.totalorder %v601, 2
      %vm5687 = vmand %vm5686, %vm1448
      %vm5688 = vcmp.gt.s32.totalorder %v601, 2
      %v5689 = vsub.s32 %v601, 3
      %v5690 = vmul.u32 %v5689, 2
      %v5691 = vadd.s32 %v5690, 1
      %vm5692 = vcmp.eq.s32.totalorder %v1443, %v5691
      %vm5693 = vmand %vm5688, %vm5692
      %vm5694 = vmor %vm5687, %vm5693
      %v5695 = vsel %vm5694, 1.0, 0.0
      %v5696 = vld [vmem:[#allocation2] sm:$0xff]
      %v5697 = vld [vmem:[#allocation2 + $0x18] sm:$0xff]
      %vm5698 = vcmask 48128
      %v5700 = vsel %vm5698, %v5696, 0
      %v5703 = vsel %vm5698, %v5697, 0
      %vm5705 = vcmask 1045504
      %v5707 = vsel %vm5705, %v5695, 0
      %5709 = vmatprep.subr.mxu0 0.0
      %5710 = vmatpush1.msra.mxu0 %v5707
      %5711 = vmatprep.subr.mxu0 0.0
      %5712 = vmatpush1.msra.mxu0 0.0
      %5713 = vmatprep.subr.mxu0 0.0
      %5714 = vmatpush1.msra.mxu0 0.0
      %5715 = vmatprep.subr.mxu0 0.0
      %5716 = vmatpush1.msra.mxu0 0.0
      %5717 = vmatprep.subr.mxu0 0.0
      %5718 = vmatpush1.msra.mxu0 0.0
      %5719 = vmatprep.subr.mxu0 0.0
      %5720 = vmatpush1.msra.mxu0 0.0
      %5721 = vmatprep.subr.mxu0 0.0
      %5722 = vmatpush1.msra.mxu0 0.0
      %5723 = vmatprep.subr.mxu0 0.0
      %5724 = vmatpush1.msra.mxu0 0.0
      %5725 = vmatprep.subr.mxu0 0.0
      %5726 = vmatpush1.msra.mxu0 0.0
      %5727 = vmatprep.subr.mxu0 0.0
      %5728 = vmatpush1.msra.mxu0 0.0
      %5729 = vmatprep.subr.mxu0 0.0
      %5730 = vmatpush1.msra.mxu0 0.0
      %5731 = vmatprep.subr.mxu0 0.0
      %5732 = vmatpush1.msra.mxu0 0.0
      %5733 = vmatprep.subr.mxu0 0.0
      %5734 = vmatpush1.msra.mxu0 0.0
      %5735 = vmatprep.subr.mxu0 0.0
      %5736 = vmatpush1.msra.mxu0 0.0
      %5737 = vmatprep.subr.mxu0 0.0
      %5738 = vmatpush1.msra.mxu0 0.0
      %5739 = vmatprep.subr.mxu0 0.0
      %5740 = vmatpush1.msra.mxu0 0.0
      %5741 = vmatprep.subr.mxu0 0.0
      %5742 = vmatpush1.msra.mxu0 0.0
      %5743 = vmatprep.subr.mxu0 0.0
      %5744 = vmatpush1.msra.mxu0 0.0
      %5745 = vmatprep.subr.mxu0 0.0
      %5746 = vmatpush1.msra.mxu0 0.0
      %5747 = vmatprep.subr.mxu0 0.0
      %5748 = vmatpush1.msra.mxu0 0.0
      %5749 = vmatprep.subr.mxu0 0.0
      %5750 = vmatpush1.msra.mxu0 0.0
      %5751 = vmatprep.subr.mxu0 0.0
      %5752 = vmatpush1.msra.mxu0 0.0
      %5753 = vmatprep.subr.mxu0 0.0
      %5754 = vmatpush1.msra.mxu0 0.0
      %5755 = vmatprep.subr.mxu0 0.0
      %5756 = vmatpush1.msra.mxu0 0.0
      %5757 = vmatprep.subr.mxu0 0.0
      %5758 = vmatpush1.msra.mxu0 0.0
      %5759 = vmatprep.subr.mxu0 0.0
      %5760 = vmatpush1.msra.mxu0 0.0
      %5761 = vmatprep.subr.mxu0 0.0
      %5762 = vmatpush1.msra.mxu0 0.0
      %5763 = vmatprep.subr.mxu0 0.0
      %5764 = vmatpush1.msra.mxu0 0.0
      %5765 = vmatprep.subr.mxu0 0.0
      %5766 = vmatpush1.msra.mxu0 0.0
      %5767 = vmatprep.subr.mxu0 0.0
      %5768 = vmatpush1.msra.mxu0 0.0
      %5769 = vmatprep.subr.mxu0 0.0
      %5770 = vmatpush1.msra.mxu0 0.0
      %5771 = vmatprep.subr.mxu0 0.0
      %5772 = vmatpush1.msra.mxu0 0.0
      %5773 = vmatprep.mubr.f32.mxu0 0.0
      %5774 = vmatmul.mubr.f32.gmra.mrb[0].mxu0 %v5700
      %v5775 = vpop.f32.mrb[0].mxu0
      %v5776 = vadd.f32 0.0, %v5775
      %v5777 = vpop.f32.mrb[0].mxu0
      %5778 = vmatprep.mubr.f32.mxu0 0.0
      %5779 = vmatmul.mubr.f32.gmra.mrb[0].mxu0 %v5703
      %v5780 = vpop.f32.mrb[0].mxu0
      %v5781 = vadd.f32 0.0, %v5780
      %v5782 = vpop.f32.mrb[0].mxu0
      %5783 = vdwg.mxu0
      %5784 = vrot.lane.b32.xlu0 %v5696, 122
      %v5785 = vpop.permute.xlu0 %5784
      %5786 = vrot.lane.b32.xlu0 %v5697, 122
      %v5787 = vpop.permute.xlu0 %5786
      %v5788 = vsel %vm5698, %v5785, 0
      %v5790 = vsel %vm5698, %v5787, 0
      %5792 = vmatprep.subr.mxu0 0.0
      %5793 = vmatpush1.msra.mxu0 %v5707
      %5794 = vmatprep.subr.mxu0 0.0
      %5795 = vmatpush1.msra.mxu0 0.0
      %5796 = vmatprep.subr.mxu0 0.0
      %5797 = vmatpush1.msra.mxu0 0.0
      %5798 = vmatprep.subr.mxu0 0.0
      %5799 = vmatpush1.msra.mxu0 0.0
      %5800 = vmatprep.subr.mxu0 0.0
      %5801 = vmatpush1.msra.mxu0 0.0
      %5802 = vmatprep.subr.mxu0 0.0
      %5803 = vmatpush1.msra.mxu0 0.0
      %5804 = vmatprep.subr.mxu0 0.0
      %5805 = vmatpush1.msra.mxu0 0.0
      %5806 = vmatprep.subr.mxu0 0.0
      %5807 = vmatpush1.msra.mxu0 0.0
      %5808 = vmatprep.subr.mxu0 0.0
      %5809 = vmatpush1.msra.mxu0 0.0
      %5810 = vmatprep.subr.mxu0 0.0
      %5811 = vmatpush1.msra.mxu0 0.0
      %5812 = vmatprep.subr.mxu0 0.0
      %5813 = vmatpush1.msra.mxu0 0.0
      %5814 = vmatprep.subr.mxu0 0.0
      %5815 = vmatpush1.msra.mxu0 0.0
      %5816 = vmatprep.subr.mxu0 0.0
      %5817 = vmatpush1.msra.mxu0 0.0
      %5818 = vmatprep.subr.mxu0 0.0
      %5819 = vmatpush1.msra.mxu0 0.0
      %5820 = vmatprep.subr.mxu0 0.0
      %5821 = vmatpush1.msra.mxu0 0.0
      %5822 = vmatprep.subr.mxu0 0.0
      %5823 = vmatpush1.msra.mxu0 0.0
      %5824 = vmatprep.subr.mxu0 0.0
      %5825 = vmatpush1.msra.mxu0 0.0
      %5826 = vmatprep.subr.mxu0 0.0
      %5827 = vmatpush1.msra.mxu0 0.0
      %5828 = vmatprep.subr.mxu0 0.0
      %5829 = vmatpush1.msra.mxu0 0.0
      %5830 = vmatprep.subr.mxu0 0.0
      %5831 = vmatpush1.msra.mxu0 0.0
      %5832 = vmatprep.subr.mxu0 0.0
      %5833 = vmatpush1.msra.mxu0 0.0
      %5834 = vmatprep.subr.mxu0 0.0
      %5835 = vmatpush1.msra.mxu0 0.0
      %5836 = vmatprep.subr.mxu0 0.0
      %5837 = vmatpush1.msra.mxu0 0.0
      %5838 = vmatprep.subr.mxu0 0.0
      %5839 = vmatpush1.msra.mxu0 0.0
      %5840 = vmatprep.subr.mxu0 0.0
      %5841 = vmatpush1.msra.mxu0 0.0
      %5842 = vmatprep.subr.mxu0 0.0
      %5843 = vmatpush1.msra.mxu0 0.0
      %5844 = vmatprep.subr.mxu0 0.0
      %5845 = vmatpush1.msra.mxu0 0.0
      %5846 = vmatprep.subr.mxu0 0.0
      %5847 = vmatpush1.msra.mxu0 0.0
      %5848 = vmatprep.subr.mxu0 0.0
      %5849 = vmatpush1.msra.mxu0 0.0
      %5850 = vmatprep.subr.mxu0 0.0
      %5851 = vmatpush1.msra.mxu0 0.0
      %5852 = vmatprep.subr.mxu0 0.0
      %5853 = vmatpush1.msra.mxu0 0.0
      %5854 = vmatprep.subr.mxu0 0.0
      %5855 = vmatpush1.msra.mxu0 0.0
      %5856 = vmatprep.mubr.f32.mxu0 0.0
      %5857 = vmatmul.mubr.f32.gmra.mrb[0].mxu0 %v5788
      %v5858 = vpop.f32.mrb[0].mxu0
      %v5859 = vadd.f32 0.0, %v5858
      %v5860 = vpop.f32.mrb[0].mxu0
      %5861 = vmatprep.mubr.f32.mxu0 0.0
      %5862 = vmatmul.mubr.f32.gmra.mrb[0].mxu0 %v5790
      %v5863 = vpop.f32.mrb[0].mxu0
      %v5864 = vadd.f32 0.0, %v5863
      %v5865 = vpop.f32.mrb[0].mxu0
      %5866 = vdwg.mxu0
      %5867 = vrot.lane.b32.xlu0 %v5696, 116
      %v5868 = vpop.permute.xlu0 %5867
      %5869 = vrot.lane.b32.xlu0 %v5697, 116
      %v5870 = vpop.permute.xlu0 %5869
      %v5871 = vsel %vm5698, %v5868, 0
      %v5873 = vsel %vm5698, %v5870, 0
      %5875 = vmatprep.subr.mxu0 0.0
      %5876 = vmatpush1.msra.mxu0 %v5707
      %5877 = vmatprep.subr.mxu0 0.0
      %5878 = vmatpush1.msra.mxu0 0.0
      %5879 = vmatprep.subr.mxu0 0.0
      %5880 = vmatpush1.msra.mxu0 0.0
      %5881 = vmatprep.subr.mxu0 0.0
      %5882 = vmatpush1.msra.mxu0 0.0
      %5883 = vmatprep.subr.mxu0 0.0
      %5884 = vmatpush1.msra.mxu0 0.0
      %5885 = vmatprep.subr.mxu0 0.0
      %5886 = vmatpush1.msra.mxu0 0.0
      %5887 = vmatprep.subr.mxu0 0.0
      %5888 = vmatpush1.msra.mxu0 0.0
      %5889 = vmatprep.subr.mxu0 0.0
      %5890 = vmatpush1.msra.mxu0 0.0
      %5891 = vmatprep.subr.mxu0 0.0
      %5892 = vmatpush1.msra.mxu0 0.0
      %5893 = vmatprep.subr.mxu0 0.0
      %5894 = vmatpush1.msra.mxu0 0.0
      %5895 = vmatprep.subr.mxu0 0.0
      %5896 = vmatpush1.msra.mxu0 0.0
      %5897 = vmatprep.subr.mxu0 0.0
      %5898 = vmatpush1.msra.mxu0 0.0
      %5899 = vmatprep.subr.mxu0 0.0
      %5900 = vmatpush1.msra.mxu0 0.0
      %5901 = vmatprep.subr.mxu0 0.0
      %5902 = vmatpush1.msra.mxu0 0.0
      %5903 = vmatprep.subr.mxu0 0.0
      %5904 = vmatpush1.msra.mxu0 0.0
      %5905 = vmatprep.subr.mxu0 0.0
      %5906 = vmatpush1.msra.mxu0 0.0
      %5907 = vmatprep.subr.mxu0 0.0
      %5908 = vmatpush1.msra.mxu0 0.0
      %5909 = vmatprep.subr.mxu0 0.0
      %5910 = vmatpush1.msra.mxu0 0.0
      %5911 = vmatprep.subr.mxu0 0.0
      %5912 = vmatpush1.msra.mxu0 0.0
      %5913 = vmatprep.subr.mxu0 0.0
      %5914 = vmatpush1.msra.mxu0 0.0
      %5915 = vmatprep.subr.mxu0 0.0
      %5916 = vmatpush1.msra.mxu0 0.0
      %5917 = vmatprep.subr.mxu0 0.0
      %5918 = vmatpush1.msra.mxu0 0.0
      %5919 = vmatprep.subr.mxu0 0.0
      %5920 = vmatpush1.msra.mxu0 0.0
      %5921 = vmatprep.subr.mxu0 0.0
      %5922 = vmatpush1.msra.mxu0 0.0
      %5923 = vmatprep.subr.mxu0 0.0
      %5924 = vmatpush1.msra.mxu0 0.0
      %5925 = vmatprep.subr.mxu0 0.0
      %5926 = vmatpush1.msra.mxu0 0.0
      %5927 = vmatprep.subr.mxu0 0.0
      %5928 = vmatpush1.msra.mxu0 0.0
      %5929 = vmatprep.subr.mxu0 0.0
      %5930 = vmatpush1.msra.mxu0 0.0
      %5931 = vmatprep.subr.mxu0 0.0
      %5932 = vmatpush1.msra.mxu0 0.0
      %5933 = vmatprep.subr.mxu0 0.0
      %5934 = vmatpush1.msra.mxu0 0.0
      %5935 = vmatprep.subr.mxu0 0.0
      %5936 = vmatpush1.msra.mxu0 0.0
      %5937 = vmatprep.subr.mxu0 0.0
      %5938 = vmatpush1.msra.mxu0 0.0
      %5939 = vmatprep.mubr.f32.mxu0 0.0
      %5940 = vmatmul.mubr.f32.gmra.mrb[0].mxu0 %v5871
      %v5941 = vpop.f32.mrb[0].mxu0
      %v5942 = vadd.f32 0.0, %v5941
      %v5943 = vpop.f32.mrb[0].mxu0
      %5944 = vmatprep.mubr.f32.mxu0 0.0
      %5945 = vmatmul.mubr.f32.gmra.mrb[0].mxu0 %v5873
      %v5946 = vpop.f32.mrb[0].mxu0
      %v5947 = vadd.f32 0.0, %v5946
      %v5948 = vpop.f32.mrb[0].mxu0
      %5949 = vdwg.mxu0
      %5950 = vrot.lane.b32.xlu0 %v5696, 110
      %v5951 = vpop.permute.xlu0 %5950
      %5952 = vrot.lane.b32.xlu0 %v5697, 110
      %v5953 = vpop.permute.xlu0 %5952
      %v5954 = vsel %vm5698, %v5951, 0
      %v5956 = vsel %vm5698, %v5953, 0
      %5958 = vmatprep.subr.mxu0 0.0
      %5959 = vmatpush1.msra.mxu0 %v5707
      %5960 = vmatprep.subr.mxu0 0.0
      %5961 = vmatpush1.msra.mxu0 0.0
      %5962 = vmatprep.subr.mxu0 0.0
      %5963 = vmatpush1.msra.mxu0 0.0
      %5964 = vmatprep.subr.mxu0 0.0
      %5965 = vmatpush1.msra.mxu0 0.0
      %5966 = vmatprep.subr.mxu0 0.0
      %5967 = vmatpush1.msra.mxu0 0.0
      %5968 = vmatprep.subr.mxu0 0.0
      %5969 = vmatpush1.msra.mxu0 0.0
      %5970 = vmatprep.subr.mxu0 0.0
      %5971 = vmatpush1.msra.mxu0 0.0
      %5972 = vmatprep.subr.mxu0 0.0
      %5973 = vmatpush1.msra.mxu0 0.0
      %5974 = vmatprep.subr.mxu0 0.0
      %5975 = vmatpush1.msra.mxu0 0.0
      %5976 = vmatprep.subr.mxu0 0.0
      %5977 = vmatpush1.msra.mxu0 0.0
      %5978 = vmatprep.subr.mxu0 0.0
      %5979 = vmatpush1.msra.mxu0 0.0
      %5980 = vmatprep.subr.mxu0 0.0
      %5981 = vmatpush1.msra.mxu0 0.0
      %5982 = vmatprep.subr.mxu0 0.0
      %5983 = vmatpush1.msra.mxu0 0.0
      %5984 = vmatprep.subr.mxu0 0.0
      %5985 = vmatpush1.msra.mxu0 0.0
      %5986 = vmatprep.subr.mxu0 0.0
      %5987 = vmatpush1.msra.mxu0 0.0
      %5988 = vmatprep.subr.mxu0 0.0
      %5989 = vmatpush1.msra.mxu0 0.0
      %5990 = vmatprep.subr.mxu0 0.0
      %5991 = vmatpush1.msra.mxu0 0.0
      %5992 = vmatprep.subr.mxu0 0.0
      %5993 = vmatpush1.msra.mxu0 0.0
      %5994 = vmatprep.subr.mxu0 0.0
      %5995 = vmatpush1.msra.mxu0 0.0
      %5996 = vmatprep.subr.mxu0 0.0
      %5997 = vmatpush1.msra.mxu0 0.0
      %5998 = vmatprep.subr.mxu0 0.0
      %5999 = vmatpush1.msra.mxu0 0.0
      %6000 = vmatprep.subr.mxu0 0.0
      %6001 = vmatpush1.msra.mxu0 0.0
      %6002 = vmatprep.subr.mxu0 0.0
      %6003 = vmatpush1.msra.mxu0 0.0
      %6004 = vmatprep.subr.mxu0 0.0
      %6005 = vmatpush1.msra.mxu0 0.0
      %6006 = vmatprep.subr.mxu0 0.0
      %6007 = vmatpush1.msra.mxu0 0.0
      %6008 = vmatprep.subr.mxu0 0.0
      %6009 = vmatpush1.msra.mxu0 0.0
      %6010 = vmatprep.subr.mxu0 0.0
      %6011 = vmatpush1.msra.mxu0 0.0
      %6012 = vmatprep.subr.mxu0 0.0
      %6013 = vmatpush1.msra.mxu0 0.0
      %6014 = vmatprep.subr.mxu0 0.0
      %6015 = vmatpush1.msra.mxu0 0.0
      %6016 = vmatprep.subr.mxu0 0.0
      %6017 = vmatpush1.msra.mxu0 0.0
      %6018 = vmatprep.subr.mxu0 0.0
      %6019 = vmatpush1.msra.mxu0 0.0
      %6020 = vmatprep.subr.mxu0 0.0
      %6021 = vmatpush1.msra.mxu0 0.0
      %6022 = vmatprep.mubr.f32.mxu0 0.0
      %6023 = vmatmul.mubr.f32.gmra.mrb[0].mxu0 %v5954
      %v6024 = vpop.f32.mrb[0].mxu0
      %v6025 = vadd.f32 0.0, %v6024
      %v6026 = vpop.f32.mrb[0].mxu0
      %6027 = vmatprep.mubr.f32.mxu0 0.0
      %6028 = vmatmul.mubr.f32.gmra.mrb[0].mxu0 %v5956
      %v6029 = vpop.f32.mrb[0].mxu0
      %v6030 = vadd.f32 0.0, %v6029
      %v6031 = vpop.f32.mrb[0].mxu0
      %6032 = vdwg.mxu0
      %6033 = vrot.lane.b32.xlu0 %v5696, 104
      %v6034 = vpop.permute.xlu0 %6033
      %6035 = vrot.lane.b32.xlu0 %v5697, 104
      %v6036 = vpop.permute.xlu0 %6035
      %v6037 = vsel %vm5698, %v6034, 0
      %v6039 = vsel %vm5698, %v6036, 0
      %6041 = vmatprep.subr.mxu0 0.0
      %6042 = vmatpush1.msra.mxu0 %v5707
      %6043 = vmatprep.subr.mxu0 0.0
      %6044 = vmatpush1.msra.mxu0 0.0
      %6045 = vmatprep.subr.mxu0 0.0
      %6046 = vmatpush1.msra.mxu0 0.0
      %6047 = vmatprep.subr.mxu0 0.0
      %6048 = vmatpush1.msra.mxu0 0.0
      %6049 = vmatprep.subr.mxu0 0.0
      %6050 = vmatpush1.msra.mxu0 0.0
      %6051 = vmatprep.subr.mxu0 0.0
      %6052 = vmatpush1.msra.mxu0 0.0
      %6053 = vmatprep.subr.mxu0 0.0
      %6054 = vmatpush1.msra.mxu0 0.0
      %6055 = vmatprep.subr.mxu0 0.0
      %6056 = vmatpush1.msra.mxu0 0.0
      %6057 = vmatprep.subr.mxu0 0.0
      %6058 = vmatpush1.msra.mxu0 0.0
      %6059 = vmatprep.subr.mxu0 0.0
      %6060 = vmatpush1.msra.mxu0 0.0
      %6061 = vmatprep.subr.mxu0 0.0
      %6062 = vmatpush1.msra.mxu0 0.0
      %6063 = vmatprep.subr.mxu0 0.0
      %6064 = vmatpush1.msra.mxu0 0.0
      %6065 = vmatprep.subr.mxu0 0.0
      %6066 = vmatpush1.msra.mxu0 0.0
      %6067 = vmatprep.subr.mxu0 0.0
      %6068 = vmatpush1.msra.mxu0 0.0
      %6069 = vmatprep.subr.mxu0 0.0
      %6070 = vmatpush1.msra.mxu0 0.0
      %6071 = vmatprep.subr.mxu0 0.0
      %6072 = vmatpush1.msra.mxu0 0.0
      %6073 = vmatprep.subr.mxu0 0.0
      %6074 = vmatpush1.msra.mxu0 0.0
      %6075 = vmatprep.subr.mxu0 0.0
      %6076 = vmatpush1.msra.mxu0 0.0
      %6077 = vmatprep.subr.mxu0 0.0
      %6078 = vmatpush1.msra.mxu0 0.0
      %6079 = vmatprep.subr.mxu0 0.0
      %6080 = vmatpush1.msra.mxu0 0.0
      %6081 = vmatprep.subr.mxu0 0.0
      %6082 = vmatpush1.msra.mxu0 0.0
      %6083 = vmatprep.subr.mxu0 0.0
      %6084 = vmatpush1.msra.mxu0 0.0
      %6085 = vmatprep.subr.mxu0 0.0
      %6086 = vmatpush1.msra.mxu0 0.0
      %6087 = vmatprep.subr.mxu0 0.0
      %6088 = vmatpush1.msra.mxu0 0.0
      %6089 = vmatprep.subr.mxu0 0.0
      %6090 = vmatpush1.msra.mxu0 0.0
      %6091 = vmatprep.subr.mxu0 0.0
      %6092 = vmatpush1.msra.mxu0 0.0
      %6093 = vmatprep.subr.mxu0 0.0
      %6094 = vmatpush1.msra.mxu0 0.0
      %6095 = vmatprep.subr.mxu0 0.0
      %6096 = vmatpush1.msra.mxu0 0.0
      %6097 = vmatprep.subr.mxu0 0.0
      %6098 = vmatpush1.msra.mxu0 0.0
      %6099 = vmatprep.subr.mxu0 0.0
      %6100 = vmatpush1.msra.mxu0 0.0
      %6101 = vmatprep.subr.mxu0 0.0
      %6102 = vmatpush1.msra.mxu0 0.0
      %6103 = vmatprep.subr.mxu0 0.0
      %6104 = vmatpush1.msra.mxu0 0.0
      %6105 = vmatprep.mubr.f32.mxu0 0.0
      %6106 = vmatmul.mubr.f32.gmra.mrb[0].mxu0 %v6037
      %v6107 = vpop.f32.mrb[0].mxu0
      %v6108 = vadd.f32 0.0, %v6107
      %v6109 = vpop.f32.mrb[0].mxu0
      %6110 = vmatprep.mubr.f32.mxu0 0.0
      %6111 = vmatmul.mubr.f32.gmra.mrb[0].mxu0 %v6039
      %v6112 = vpop.f32.mrb[0].mxu0
      %v6113 = vadd.f32 0.0, %v6112
      %v6114 = vpop.f32.mrb[0].mxu0
      %6115 = vdwg.mxu0
      %6116 = vst.msk [vmem:[#allocation2] sm:$0xff] %vm399, 0.0
      %6117 = vst.msk [vmem:[#allocation2 + $0x18] sm:$0xff] %vm399, 0.0
      %6120 = vrot.lane.b32.xlu0 %v5776, 125
      %v6121 = vpop.permute.xlu0 %6120
      %6122 = vrot.lane.b32.xlu0 %v5781, 125
      %v6123 = vpop.permute.xlu0 %6122
      %6126 = vrot.lane.b32.xlu0 %v5776, 127
      %v6127 = vpop.permute.xlu0 %6126
      %6128 = vrot.lane.b32.xlu0 %v5781, 127
      %v6129 = vpop.permute.xlu0 %6128
      %6134 = vrot.lane.b32.xlu0 %v5859, 125
      %v6135 = vpop.permute.xlu0 %6134
      %6136 = vrot.lane.b32.xlu0 %v5864, 125
      %v6137 = vpop.permute.xlu0 %6136
      %6140 = vrot.lane.b32.xlu0 %v5859, 127
      %v6141 = vpop.permute.xlu0 %6140
      %6142 = vrot.lane.b32.xlu0 %v5864, 127
      %v6143 = vpop.permute.xlu0 %6142
      %6148 = vrot.lane.b32.xlu0 %v5942, 125
      %v6149 = vpop.permute.xlu0 %6148
      %6150 = vrot.lane.b32.xlu0 %v5947, 125
      %v6151 = vpop.permute.xlu0 %6150
      %6154 = vrot.lane.b32.xlu0 %v5942, 127
      %v6155 = vpop.permute.xlu0 %6154
      %6156 = vrot.lane.b32.xlu0 %v5947, 127
      %v6157 = vpop.permute.xlu0 %6156
      %6161 = vset.pattern.permute.xlu0 7
      %6162 = vperm.xlu0 %6161, %v5680
      %v6163 = vpop.permute.xlu0 %6162
      %6166 = vset.pattern.permute.xlu0 7
      %6167 = vperm.xlu0 %6166, %v5681
      %v6168 = vpop.permute.xlu0 %6167
      %v6171 = vsel %vm399, %v5683, 0
      %v6174 = vsel %vm399, %v5685, 0
      %6176 = vmatprep.subr.mxu0 0.0
      %6177 = vmatpush1.msra.mxu0 %v5776
      %6178 = vmatprep.subr.mxu0 0.0
      %6179 = vmatpush1.msra.mxu0 %v5781
      %6180 = vmatprep.subr.mxu0 0.0
      %6181 = vmatpush1.msra.mxu0 %v6121
      %6182 = vmatprep.subr.mxu0 0.0
      %6183 = vmatpush1.msra.mxu0 %v6123
      %6184 = vmatprep.subr.mxu0 0.0
      %6185 = vmatpush1.msra.mxu0 %v6127
      %6186 = vmatprep.subr.mxu0 0.0
      %6187 = vmatpush1.msra.mxu0 %v6129
      %6188 = vmatprep.subr.mxu0 0.0
      %6189 = vmatpush1.msra.mxu0 %v5859
      %6190 = vmatprep.subr.mxu0 0.0
      %6191 = vmatpush1.msra.mxu0 %v5864
      %6192 = vmatprep.subr.mxu0 0.0
      %6193 = vmatpush1.msra.mxu0 %v6135
      %6194 = vmatprep.subr.mxu0 0.0
      %6195 = vmatpush1.msra.mxu0 %v6137
      %6196 = vmatprep.subr.mxu0 0.0
      %6197 = vmatpush1.msra.mxu0 %v6141
      %6198 = vmatprep.subr.mxu0 0.0
      %6199 = vmatpush1.msra.mxu0 %v6143
      %6200 = vmatprep.subr.mxu0 0.0
      %6201 = vmatpush1.msra.mxu0 %v5942
      %6202 = vmatprep.subr.mxu0 0.0
      %6203 = vmatpush1.msra.mxu0 %v5947
      %6204 = vmatprep.subr.mxu0 0.0
      %6205 = vmatpush1.msra.mxu0 %v6149
      %6206 = vmatprep.subr.mxu0 0.0
      %6207 = vmatpush1.msra.mxu0 %v6151
      %6208 = vmatprep.subr.mxu0 0.0
      %6209 = vmatpush1.msra.mxu0 %v6155
      %6210 = vmatprep.subr.mxu0 0.0
      %6211 = vmatpush1.msra.mxu0 %v6157
      %6212 = vmatprep.subr.mxu0 0.0
      %6213 = vmatpush1.msra.mxu0 0.0
      %6214 = vmatprep.subr.mxu0 0.0
      %6215 = vmatpush1.msra.mxu0 0.0
      %6216 = vmatprep.subr.mxu0 0.0
      %6217 = vmatpush1.msra.mxu0 0.0
      %6218 = vmatprep.subr.mxu0 0.0
      %6219 = vmatpush1.msra.mxu0 0.0
      %6220 = vmatprep.subr.mxu0 0.0
      %6221 = vmatpush1.msra.mxu0 0.0
      %6222 = vmatprep.subr.mxu0 0.0
      %6223 = vmatpush1.msra.mxu0 0.0
      %6224 = vmatprep.subr.mxu0 0.0
      %6225 = vmatpush1.msra.mxu0 0.0
      %6226 = vmatprep.subr.mxu0 0.0
      %6227 = vmatpush1.msra.mxu0 0.0
      %6228 = vmatprep.subr.mxu0 0.0
      %6229 = vmatpush1.msra.mxu0 0.0
      %6230 = vmatprep.subr.mxu0 0.0
      %6231 = vmatpush1.msra.mxu0 0.0
      %6232 = vmatprep.subr.mxu0 0.0
      %6233 = vmatpush1.msra.mxu0 0.0
      %6234 = vmatprep.subr.mxu0 0.0
      %6235 = vmatpush1.msra.mxu0 0.0
      %6236 = vmatprep.subr.mxu0 0.0
      %6237 = vmatpush1.msra.mxu0 0.0
      %6238 = vmatprep.subr.mxu0 0.0
      %6239 = vmatpush1.msra.mxu0 0.0
      %6240 = vmatprep.mubr.f32.mxu0 %v6171
      %6241 = vmatmul.mubr.f32.gmra.mrb[0].mxu0 %v5682
      %v6242 = vpop.f32.mrb[0].mxu0
      %v6243 = vadd.f32 %v6163, %v6242
      %v6244 = vpop.f32.mrb[0].mxu0
      %6245 = vmatprep.mubr.f32.mxu0 %v6174
      %6246 = vmatmul.mubr.f32.gmra.mrb[0].mxu0 %v5684
      %v6247 = vpop.f32.mrb[0].mxu0
      %v6248 = vadd.f32 %v6168, %v6247
      %v6249 = vpop.f32.mrb[0].mxu0
      %6250 = vdwg.mxu0
      %v6251 = vxor.u32 %v6243, 2147483648
      %v6252 = vxor.u32 %v6248, 2147483648
      %v6253 = vmul.f32 %v6251, 1.442695
      %v6254 = vpow.pop %v6253
      %v6255 = vmul.f32 %v6252, 1.442695
      %v6256 = vpow.pop %v6255
      %v6257 = vadd.f32 %v6254, 1.0
      %v6258 = vadd.f32 %v6256, 1.0
      %v6259 = vrcp.pop %v6257
      %v6260 = vmul.f32 1.0, %v6259
      %v6261 = vrcp.pop %v6258
      %v6262 = vmul.f32 1.0, %v6261
      %v6263 = vmul.f32 %v6243, %v6260
      %v6264 = vmul.f32 %v6248, %v6262
      %6267 = vrot.lane.b32.xlu0 %v6263, 5
      %v6268 = vpop.permute.xlu0 %6267
      %6269 = vrot.lane.b32.xlu0 %v6264, 5
      %v6270 = vpop.permute.xlu0 %6269
      %vm6273 = vcmask 56360
      %6274 = vst.msk [vmem:[#allocation2] sm:$0xff] %vm6273, %v6268
      %6275 = vst.msk [vmem:[#allocation2 + $0x18] sm:$0xff] %vm6273, %v6270
      %6278 = vrot.lane.b32.xlu0 %v6025, 125
      %v6279 = vpop.permute.xlu0 %6278
      %6280 = vrot.lane.b32.xlu0 %v6030, 125
      %v6281 = vpop.permute.xlu0 %6280
      %6284 = vrot.lane.b32.xlu0 %v6025, 127
      %v6285 = vpop.permute.xlu0 %6284
      %6286 = vrot.lane.b32.xlu0 %v6030, 127
      %v6287 = vpop.permute.xlu0 %6286
      %6292 = vrot.lane.b32.xlu0 %v6108, 125
      %v6293 = vpop.permute.xlu0 %6292
      %6294 = vrot.lane.b32.xlu0 %v6113, 125
      %v6295 = vpop.permute.xlu0 %6294
      %6298 = vrot.lane.b32.xlu0 %v6108, 127
      %v6299 = vpop.permute.xlu0 %6298
      %6300 = vrot.lane.b32.xlu0 %v6113, 127
      %v6301 = vpop.permute.xlu0 %6300
      %6304 = vmatprep.subr.mxu0 0.0
      %6305 = vmatpush1.msra.mxu0 %v5942
      %6306 = vmatprep.subr.mxu0 0.0
      %6307 = vmatpush1.msra.mxu0 %v5947
      %6308 = vmatprep.subr.mxu0 0.0
      %6309 = vmatpush1.msra.mxu0 %v6149
      %6310 = vmatprep.subr.mxu0 0.0
      %6311 = vmatpush1.msra.mxu0 %v6151
      %6312 = vmatprep.subr.mxu0 0.0
      %6313 = vmatpush1.msra.mxu0 %v6155
      %6314 = vmatprep.subr.mxu0 0.0
      %6315 = vmatpush1.msra.mxu0 %v6157
      %6316 = vmatprep.subr.mxu0 0.0
      %6317 = vmatpush1.msra.mxu0 %v6025
      %6318 = vmatprep.subr.mxu0 0.0
      %6319 = vmatpush1.msra.mxu0 %v6030
      %6320 = vmatprep.subr.mxu0 0.0
      %6321 = vmatpush1.msra.mxu0 %v6279
      %6322 = vmatprep.subr.mxu0 0.0
      %6323 = vmatpush1.msra.mxu0 %v6281
      %6324 = vmatprep.subr.mxu0 0.0
      %6325 = vmatpush1.msra.mxu0 %v6285
      %6326 = vmatprep.subr.mxu0 0.0
      %6327 = vmatpush1.msra.mxu0 %v6287
      %6328 = vmatprep.subr.mxu0 0.0
      %6329 = vmatpush1.msra.mxu0 %v6108
      %6330 = vmatprep.subr.mxu0 0.0
      %6331 = vmatpush1.msra.mxu0 %v6113
      %6332 = vmatprep.subr.mxu0 0.0
      %6333 = vmatpush1.msra.mxu0 %v6293
      %6334 = vmatprep.subr.mxu0 0.0
      %6335 = vmatpush1.msra.mxu0 %v6295
      %6336 = vmatprep.subr.mxu0 0.0
      %6337 = vmatpush1.msra.mxu0 %v6299
      %6338 = vmatprep.subr.mxu0 0.0
      %6339 = vmatpush1.msra.mxu0 %v6301
      %6340 = vmatprep.subr.mxu0 0.0
      %6341 = vmatpush1.msra.mxu0 0.0
      %6342 = vmatprep.subr.mxu0 0.0
      %6343 = vmatpush1.msra.mxu0 0.0
      %6344 = vmatprep.subr.mxu0 0.0
      %6345 = vmatpush1.msra.mxu0 0.0
      %6346 = vmatprep.subr.mxu0 0.0
      %6347 = vmatpush1.msra.mxu0 0.0
      %6348 = vmatprep.subr.mxu0 0.0
      %6349 = vmatpush1.msra.mxu0 0.0
      %6350 = vmatprep.subr.mxu0 0.0
      %6351 = vmatpush1.msra.mxu0 0.0
      %6352 = vmatprep.subr.mxu0 0.0
      %6353 = vmatpush1.msra.mxu0 0.0
      %6354 = vmatprep.subr.mxu0 0.0
      %6355 = vmatpush1.msra.mxu0 0.0
      %6356 = vmatprep.subr.mxu0 0.0
      %6357 = vmatpush1.msra.mxu0 0.0
      %6358 = vmatprep.subr.mxu0 0.0
      %6359 = vmatpush1.msra.mxu0 0.0
      %6360 = vmatprep.subr.mxu0 0.0
      %6361 = vmatpush1.msra.mxu0 0.0
      %6362 = vmatprep.subr.mxu0 0.0
      %6363 = vmatpush1.msra.mxu0 0.0
      %6364 = vmatprep.subr.mxu0 0.0
      %6365 = vmatpush1.msra.mxu0 0.0
      %6366 = vmatprep.subr.mxu0 0.0
      %6367 = vmatpush1.msra.mxu0 0.0
      %6368 = vmatprep.mubr.f32.mxu0 %v6171
      %6369 = vmatmul.mubr.f32.gmra.mrb[0].mxu0 %v5682
      %v6370 = vpop.f32.mrb[0].mxu0
      %v6371 = vadd.f32 %v6163, %v6370
      %v6372 = vpop.f32.mrb[0].mxu0
      %6373 = vmatprep.mubr.f32.mxu0 %v6174
      %6374 = vmatmul.mubr.f32.gmra.mrb[0].mxu0 %v5684
      %v6375 = vpop.f32.mrb[0].mxu0
      %v6376 = vadd.f32 %v6168, %v6375
      %v6377 = vpop.f32.mrb[0].mxu0
      %6378 = vdwg.mxu0
      %v6379 = vxor.u32 %v6371, 2147483648
      %v6380 = vxor.u32 %v6376, 2147483648
      %v6381 = vmul.f32 %v6379, 1.442695
      %v6382 = vpow.pop %v6381
      %v6383 = vmul.f32 %v6380, 1.442695
      %v6384 = vpow.pop %v6383
      %v6385 = vadd.f32 %v6382, 1.0
      %v6386 = vadd.f32 %v6384, 1.0
      %v6387 = vrcp.pop %v6385
      %v6388 = vmul.f32 1.0, %v6387
      %v6389 = vrcp.pop %v6386
      %v6390 = vmul.f32 1.0, %v6389
      %v6391 = vmul.f32 %v6371, %v6388
      %v6392 = vmul.f32 %v6376, %v6390
      %6395 = vrot.lane.b32.xlu0 %v6391, 9
      %v6396 = vpop.permute.xlu0 %6395
      %6397 = vrot.lane.b32.xlu0 %v6392, 9
      %v6398 = vpop.permute.xlu0 %6397
      %vm6401 = vcmask 89160
      %6402 = vst.msk [vmem:[#allocation2] sm:$0xff] %vm6401, %v6396
      %6403 = vst.msk [vmem:[#allocation2 + $0x18] sm:$0xff] %vm6401, %v6398
      %v6404 = vld [vmem:[%s2] sm:$0xff]
      %v6405 = vld [vmem:[%s2 + $0x8] sm:$0xff]
      %v6406 = vld [vmem:[%s1 + $0x80] sm:$0xff]
      %v6407 = vld [vmem:[%s1 + $0x120] sm:$0xff]
      %v6408 = vld [vmem:[#allocation2] sm:$0xff]
      %v6409 = vld [vmem:[#allocation2 + $0x18] sm:$0xff]
      %6411 = vset.pattern.permute.xlu0 8
      %6412 = vperm.xlu0 %6411, %v6404
      %v6413 = vpop.permute.xlu0 %6412
      %6416 = vset.pattern.permute.xlu0 8
      %6417 = vperm.xlu0 %6416, %v6405
      %v6418 = vpop.permute.xlu0 %6417
      %6422 = vrot.lane.b32.xlu0 %v6408, 123
      %v6423 = vpop.permute.xlu0 %6422
      %6424 = vrot.lane.b32.xlu0 %v6409, 123
      %v6425 = vpop.permute.xlu0 %6424
      %v6429 = vsel %vm399, %v6406, 0
      %v6432 = vsel %vm399, %v6407, 0
      %6434 = vmatprep.subr.mxu0 0.0
      %6435 = vmatpush1.msra.mxu0 %v6423
      %6436 = vmatprep.subr.mxu0 0.0
      %6437 = vmatpush1.msra.mxu0 %v6425
      %6438 = vmatprep.subr.mxu0 0.0
      %6439 = vmatpush1.msra.mxu0 0.0
      %6440 = vmatprep.subr.mxu0 0.0
      %6441 = vmatpush1.msra.mxu0 0.0
      %6442 = vmatprep.subr.mxu0 0.0
      %6443 = vmatpush1.msra.mxu0 0.0
      %6444 = vmatprep.subr.mxu0 0.0
      %6445 = vmatpush1.msra.mxu0 0.0
      %6446 = vmatprep.subr.mxu0 0.0
      %6447 = vmatpush1.msra.mxu0 0.0
      %6448 = vmatprep.subr.mxu0 0.0
      %6449 = vmatpush1.msra.mxu0 0.0
      %6450 = vmatprep.subr.mxu0 0.0
      %6451 = vmatpush1.msra.mxu0 0.0
      %6452 = vmatprep.subr.mxu0 0.0
      %6453 = vmatpush1.msra.mxu0 0.0
      %6454 = vmatprep.subr.mxu0 0.0
      %6455 = vmatpush1.msra.mxu0 0.0
      %6456 = vmatprep.subr.mxu0 0.0
      %6457 = vmatpush1.msra.mxu0 0.0
      %6458 = vmatprep.subr.mxu0 0.0
      %6459 = vmatpush1.msra.mxu0 0.0
      %6460 = vmatprep.subr.mxu0 0.0
      %6461 = vmatpush1.msra.mxu0 0.0
      %6462 = vmatprep.subr.mxu0 0.0
      %6463 = vmatpush1.msra.mxu0 0.0
      %6464 = vmatprep.subr.mxu0 0.0
      %6465 = vmatpush1.msra.mxu0 0.0
      %6466 = vmatprep.subr.mxu0 0.0
      %6467 = vmatpush1.msra.mxu0 0.0
      %6468 = vmatprep.subr.mxu0 0.0
      %6469 = vmatpush1.msra.mxu0 0.0
      %6470 = vmatprep.subr.mxu0 0.0
      %6471 = vmatpush1.msra.mxu0 0.0
      %6472 = vmatprep.subr.mxu0 0.0
      %6473 = vmatpush1.msra.mxu0 0.0
      %6474 = vmatprep.subr.mxu0 0.0
      %6475 = vmatpush1.msra.mxu0 0.0
      %6476 = vmatprep.subr.mxu0 0.0
      %6477 = vmatpush1.msra.mxu0 0.0
      %6478 = vmatprep.subr.mxu0 0.0
      %6479 = vmatpush1.msra.mxu0 0.0
      %6480 = vmatprep.subr.mxu0 0.0
      %6481 = vmatpush1.msra.mxu0 0.0
      %6482 = vmatprep.subr.mxu0 0.0
      %6483 = vmatpush1.msra.mxu0 0.0
      %6484 = vmatprep.subr.mxu0 0.0
      %6485 = vmatpush1.msra.mxu0 0.0
      %6486 = vmatprep.subr.mxu0 0.0
      %6487 = vmatpush1.msra.mxu0 0.0
      %6488 = vmatprep.subr.mxu0 0.0
      %6489 = vmatpush1.msra.mxu0 0.0
      %6490 = vmatprep.subr.mxu0 0.0
      %6491 = vmatpush1.msra.mxu0 0.0
      %6492 = vmatprep.subr.mxu0 0.0
      %6493 = vmatpush1.msra.mxu0 0.0
      %6494 = vmatprep.subr.mxu0 0.0
      %6495 = vmatpush1.msra.mxu0 0.0
      %6496 = vmatprep.subr.mxu0 0.0
      %6497 = vmatpush1.msra.mxu0 0.0
      %6498 = vmatprep.mubr.f32.mxu0 0.0
      %6499 = vmatmul.mubr.f32.gmra.mrb[0].mxu0 %v6429
      %v6500 = vpop.f32.mrb[0].mxu0
      %v6501 = vadd.f32 %v6413, %v6500
      %v6502 = vpop.f32.mrb[0].mxu0
      %6503 = vmatprep.mubr.f32.mxu0 0.0
      %6504 = vmatmul.mubr.f32.gmra.mrb[0].mxu0 %v6432
      %v6505 = vpop.f32.mrb[0].mxu0
      %v6506 = vadd.f32 %v6418, %v6505
      %v6507 = vpop.f32.mrb[0].mxu0
      %6508 = vdwg.mxu0
      %v6509 = vxor.u32 %v6501, 2147483648
      %v6510 = vxor.u32 %v6506, 2147483648
      %v6511 = vmul.f32 %v6509, 1.442695
      %v6512 = vpow.pop %v6511
      %v6513 = vmul.f32 %v6510, 1.442695
      %v6514 = vpow.pop %v6513
      %v6515 = vadd.f32 %v6512, 1.0
      %v6516 = vadd.f32 %v6514, 1.0
      %v6517 = vrcp.pop %v6515
      %v6518 = vmul.f32 1.0, %v6517
      %v6519 = vrcp.pop %v6516
      %v6520 = vmul.f32 1.0, %v6519
      %v6521 = vmul.f32 %v6501, %v6518
      %v6522 = vmul.f32 %v6506, %v6520
      %vm6523 = vcmp.lt.s32.totalorder %v601, 0
      %v6524 = vsub.s32 0, %v601
      %v6525 = vsel %vm6523, %v6524, %v601
      %v6526 = vshrl.u32 %v6525, 2
      %v6527 = vand.u32 %v6525, 3
      %v6528 = vsub.s32 0, %v6527
      %v6529 = vsel %vm6523, %v6528, %v6527
      %vm6530 = vcmp.ne.s32.totalorder %v6529, 0
      %vm6531 = vcmp.lt.s32.totalorder %v6529, 0
      %vm6532 = vmand %vm6531, %vm6530
      %v6533 = vadd.s32 %v6529, 4
      %v6534 = vsel %vm6532, %v6533, %v6529
      %vm6535 = vcmp.lt.s32.totalorder %v6534, 2
      %v6536 = vsel %vm6535, 1, 0
      %vm6537 = vcmp.eq.s32.totalorder %v6536, 1
      %v6538 = vsel %vm6537, %v6521, 0.0
      %v6539 = vsel %vm6537, %v6522, 0.0
      %6542 = vrot.lane.b32.xlu0 %v6538, 5
      %v6543 = vpop.permute.xlu0 %6542
      %6544 = vrot.lane.b32.xlu0 %v6539, 5
      %v6545 = vpop.permute.xlu0 %6544
      %vm6548 = vcmask 89128
      %6549 = vst.msk [vmem:[#allocation2] sm:$0xff] %vm6548, %v6543
      %6550 = vst.msk [vmem:[#allocation2 + $0x18] sm:$0xff] %vm6548, %v6545
      %v6551 = vld [vmem:[%s2] sm:$0xff]
      %v6552 = vld [vmem:[%s2 + $0x8] sm:$0xff]
      %v6553 = vld [vmem:[%s1 + $0x90] sm:$0xff]
      %v6554 = vld [vmem:[%s1 + $0x98] sm:$0xff]
      %v6555 = vld [vmem:[%s1 + $0x130] sm:$0xff]
      %v6556 = vld [vmem:[%s1 + $0x138] sm:$0xff]
      %v6557 = vld [vmem:[#allocation2] sm:$0xff]
      %v6558 = vld [vmem:[#allocation2 + $0x18] sm:$0xff]
      %6561 = vrot.lane.b32.xlu0 %v6557, 127
      %v6562 = vpop.permute.xlu0 %6561
      %6563 = vrot.lane.b32.xlu0 %v6558, 127
      %v6564 = vpop.permute.xlu0 %6563
      %6567 = vrot.lane.b32.xlu0 %v6557, 126
      %v6568 = vpop.permute.xlu0 %6567
      %6569 = vrot.lane.b32.xlu0 %v6558, 126
      %v6570 = vpop.permute.xlu0 %6569
      %6573 = vrot.lane.b32.xlu0 %v6557, 124
      %v6574 = vpop.permute.xlu0 %6573
      %6575 = vrot.lane.b32.xlu0 %v6558, 124
      %v6576 = vpop.permute.xlu0 %6575
      %6579 = vrot.lane.b32.xlu0 %v6557, 123
      %v6580 = vpop.permute.xlu0 %6579
      %6581 = vrot.lane.b32.xlu0 %v6558, 123
      %v6582 = vpop.permute.xlu0 %6581
      %6585 = vrot.lane.b32.xlu0 %v6557, 122
      %v6586 = vpop.permute.xlu0 %6585
      %6587 = vrot.lane.b32.xlu0 %v6558, 122
      %v6588 = vpop.permute.xlu0 %6587
      %6591 = vrot.lane.b32.xlu0 %v6557, 120
      %v6592 = vpop.permute.xlu0 %6591
      %6593 = vrot.lane.b32.xlu0 %v6558, 120
      %v6594 = vpop.permute.xlu0 %6593
      %6597 = vrot.lane.b32.xlu0 %v6557, 119
      %v6598 = vpop.permute.xlu0 %6597
      %6599 = vrot.lane.b32.xlu0 %v6558, 119
      %v6600 = vpop.permute.xlu0 %6599
      %6603 = vrot.lane.b32.xlu0 %v6557, 118
      %v6604 = vpop.permute.xlu0 %6603
      %6605 = vrot.lane.b32.xlu0 %v6558, 118
      %v6606 = vpop.permute.xlu0 %6605
      %6610 = vset.pattern.permute.xlu0 9
      %6611 = vperm.xlu0 %6610, %v6551
      %v6612 = vpop.permute.xlu0 %6611
      %6615 = vset.pattern.permute.xlu0 9
      %6616 = vperm.xlu0 %6615, %v6552
      %v6617 = vpop.permute.xlu0 %6616
      %v6620 = vsel %vm399, %v6554, 0
      %v6623 = vsel %vm399, %v6556, 0
      %6625 = vmatprep.subr.mxu0 0.0
      %6626 = vmatpush1.msra.mxu0 %v6557
      %6627 = vmatprep.subr.mxu0 0.0
      %6628 = vmatpush1.msra.mxu0 %v6558
      %6629 = vmatprep.subr.mxu0 0.0
      %6630 = vmatpush1.msra.mxu0 %v6562
      %6631 = vmatprep.subr.mxu0 0.0
      %6632 = vmatpush1.msra.mxu0 %v6564
      %6633 = vmatprep.subr.mxu0 0.0
      %6634 = vmatpush1.msra.mxu0 %v6568
      %6635 = vmatprep.subr.mxu0 0.0
      %6636 = vmatpush1.msra.mxu0 %v6570
      %6637 = vmatprep.subr.mxu0 0.0
      %6638 = vmatpush1.msra.mxu0 %v6574
      %6639 = vmatprep.subr.mxu0 0.0
      %6640 = vmatpush1.msra.mxu0 %v6576
      %6641 = vmatprep.subr.mxu0 0.0
      %6642 = vmatpush1.msra.mxu0 %v6580
      %6643 = vmatprep.subr.mxu0 0.0
      %6644 = vmatpush1.msra.mxu0 %v6582
      %6645 = vmatprep.subr.mxu0 0.0
      %6646 = vmatpush1.msra.mxu0 %v6586
      %6647 = vmatprep.subr.mxu0 0.0
      %6648 = vmatpush1.msra.mxu0 %v6588
      %6649 = vmatprep.subr.mxu0 0.0
      %6650 = vmatpush1.msra.mxu0 %v6592
      %6651 = vmatprep.subr.mxu0 0.0
      %6652 = vmatpush1.msra.mxu0 %v6594
      %6653 = vmatprep.subr.mxu0 0.0
      %6654 = vmatpush1.msra.mxu0 %v6598
      %6655 = vmatprep.subr.mxu0 0.0
      %6656 = vmatpush1.msra.mxu0 %v6600
      %6657 = vmatprep.subr.mxu0 0.0
      %6658 = vmatpush1.msra.mxu0 %v6604
      %6659 = vmatprep.subr.mxu0 0.0
      %6660 = vmatpush1.msra.mxu0 %v6606
      %6661 = vmatprep.subr.mxu0 0.0
      %6662 = vmatpush1.msra.mxu0 0.0
      %6663 = vmatprep.subr.mxu0 0.0
      %6664 = vmatpush1.msra.mxu0 0.0
      %6665 = vmatprep.subr.mxu0 0.0
      %6666 = vmatpush1.msra.mxu0 0.0
      %6667 = vmatprep.subr.mxu0 0.0
      %6668 = vmatpush1.msra.mxu0 0.0
      %6669 = vmatprep.subr.mxu0 0.0
      %6670 = vmatpush1.msra.mxu0 0.0
      %6671 = vmatprep.subr.mxu0 0.0
      %6672 = vmatpush1.msra.mxu0 0.0
      %6673 = vmatprep.subr.mxu0 0.0
      %6674 = vmatpush1.msra.mxu0 0.0
      %6675 = vmatprep.subr.mxu0 0.0
      %6676 = vmatpush1.msra.mxu0 0.0
      %6677 = vmatprep.subr.mxu0 0.0
      %6678 = vmatpush1.msra.mxu0 0.0
      %6679 = vmatprep.subr.mxu0 0.0
      %6680 = vmatpush1.msra.mxu0 0.0
      %6681 = vmatprep.subr.mxu0 0.0
      %6682 = vmatpush1.msra.mxu0 0.0
      %6683 = vmatprep.subr.mxu0 0.0
      %6684 = vmatpush1.msra.mxu0 0.0
      %6685 = vmatprep.subr.mxu0 0.0
      %6686 = vmatpush1.msra.mxu0 0.0
      %6687 = vmatprep.subr.mxu0 0.0
      %6688 = vmatpush1.msra.mxu0 0.0
      %6689 = vmatprep.mubr.f32.mxu0 %v6620
      %6690 = vmatmul.mubr.f32.gmra.mrb[0].mxu0 %v6553
      %v6691 = vpop.f32.mrb[0].mxu0
      %v6692 = vadd.f32 %v6612, %v6691
      %v6693 = vpop.f32.mrb[0].mxu0
      %6694 = vmatprep.mubr.f32.mxu0 %v6623
      %6695 = vmatmul.mubr.f32.gmra.mrb[0].mxu0 %v6555
      %v6696 = vpop.f32.mrb[0].mxu0
      %v6697 = vadd.f32 %v6617, %v6696
      %v6698 = vpop.f32.mrb[0].mxu0
      %6699 = vdwg.mxu0
      %6700 = vst.msk [vmem:[%s170] sm:$0xff] %vm2072, %v6692
      %6701 = vst.msk [vmem:[%s170 + $0x8] sm:$0xff] %vm2072, %v6697
      %6704 = vrot.lane.b32.xlu0 %v6692, 126
      %v6705 = vpop.permute.xlu0 %6704
      %6706 = vrot.lane.b32.xlu0 %v6697, 126
      %v6707 = vpop.permute.xlu0 %6706
      %vm6710 = vcmask 31760
      %6711 = vst.msk [vmem:[%s170] sm:$0xff] %vm6710, %v6705
      %6712 = vst.msk [vmem:[%s170 + $0x8] sm:$0xff] %vm6710, %v6707
      %p6713 = scmp.lt.s32.totalorder %s14, 1
      %s6714 = scalar_select %p6713, %s14, 1
      %s6715 = smul.addr %s6714, 2
      %s6716 = smul.addr %s6715, 8
      %s6717 = scalar_lea.vmem %s3, %s6716
      // Predicated region
      $region33: #{cond_downsample_block.1} parent=31 // pred_check
        %p6718 = pneg %p100
      $region34: #{cond_downsample_block.1} parent=31 // pred_check_branch
        %6720 = sbr.rel (%p6718) target = $region36
      $region35: #{cond_downsample_block.1} parent=31 // pred_region
        _
      $region36: #{cond_downsample_block.1} parent=31 // pred_fallthru
        _
    $region32: #{cond_downsample_block.1} parent=5 // pred_fallthru
      _
    %p6721 = scmp.le.s32.totalorder 2, %s9
    // Predicated region
    $region37: #{cond_downsample_block.1} parent=5 // pred_check
      %p6722 = pneg %p6721
    $region38: #{cond_downsample_block.1} parent=5 // pred_check_branch
      %6724 = sbr.rel (%p6722) target = $region40
    $region39: #{cond_downsample_block.1} parent=5 // pred_region
      %s6725 = ssub.s32 %s9, 2
      // Predicated region
      $region41: #{cond_downsample_block.1} parent=39 // pred_check
        %p6726 = pneg %p106
      $region42: #{cond_downsample_block.1} parent=39 // pred_check_branch
        %6728 = sbr.rel (%p6726) target = $region44
      $region43: #{cond_downsample_block.1} parent=39 // pred_region
        %p6729 = scmp.lt.s32.totalorder %s15, 1
        %s6730 = scalar_select %p6729, %s15, 1
        %s6731 = smul.addr %s6730, 2
        %s6732 = smul.addr %s6731, 8
        %s6733 = scalar_lea.vmem %s3, %s6732
      $region44: #{cond_downsample_block.1} parent=39 // pred_fallthru
        _
    $region40: #{cond_downsample_block.1} parent=5 // pred_fallthru
      _
  $region6: #{cond_downsample_block.1} parent=0 // loop_footer
    %s13 = sadd.s32 1, %s9
  $region7: #{cond_downsample_block.1} parent=0 // loop_footer_branch
    %8 = sbr.rel target = $region3
  $region8: #{cond_downsample_block.1} parent=0 // loop_exit
    _

</llo_original>
